<compile_context>
chip_gen: v5e
topology: v5e:2x2
jax: 0.10.0
libtpu: 0.0.40
codegen_flags: <defaults>
</compile_context>

<pallas_src>
import functools
import math

import jax
import jax.numpy as jnp
from jax.experimental import pallas as pl
from jax.experimental.pallas import tpu as pltpu  # noqa: F401  (TPU-specific params at scale)

# ---------------- synthetic small config ----------------
VOCAB = 50      # len(dictionary)
D = 32          # embedding_size
H = 2           # n_heads
DH = D // H     # dim per head
FFN = 64        # ffn_size
LAYERS = 2      # n_layers
PAD = 0         # pad idx (null token)
MAXPOS = 64     # n_positions
EPS = 1e-5      # layer-norm eps
BF16 = jnp.bfloat16


def _round_up(x, m):
    return ((x + m - 1) // m) * m


# ---------------- in-kernel helpers ----------------
def _layer_norm(v, g, b):
    mu = jnp.mean(v, axis=-1, keepdims=True)
    var = jnp.mean(jnp.square(v - mu), axis=-1, keepdims=True)
    return (v - mu) * jax.lax.rsqrt(var + EPS) * g + b


def _encoder_stack(x2, kbias, rmask, n, s,
                   wq_ref, wk_ref, wv_ref, bqkv_ref, wo_ref,
                   w1_ref, b1_ref, w2_ref, vec_ref):
    """Multi-layer post-LN ('aiayn') transformer stack over x2 = [n*s, D] (f32).

    Matmul operands are cast to bf16 (f32 accumulation); LN/softmax/residuals stay f32.
    Heads are projected straight into per-head [*, DH] tensors and folded back through
    per-head output projections (summed over heads), so no lane slicing / concat appears.
    """
    ns = n * s
    scale = 1.0 / math.sqrt(DH)
    n_layers = wq_ref.shape[0]

    for l in range(n_layers):                    # LAYERS=2: static unroll, static indices
        wq = wq_ref[l]                           # [H, D, DH]  bf16
        wk = wk_ref[l]                           # [H, D, DH]  bf16
        wv = wv_ref[l]                           # [H, D, DH]  bf16
        wo = wo_ref[l]                           # [H, DH, D]  bf16
        bqkv = bqkv_ref[l]                       # [3, H, DH]  f32
        w1 = w1_ref[l]                           # [D, FFN]    bf16
        b1 = b1_ref[l]                           # [1, FFN]    f32
        w2 = w2_ref[l]                           # [FFN, D]    bf16
        vec = vec_ref[l]                         # [6, D] f32: bo, b2, g1, be1, g2, be2
        bo, b2 = vec[0:1], vec[1:2]
        g1, be1 = vec[2:3], vec[3:4]
        g2, be2 = vec[4:5], vec[5:6]

        x_bf = x2.astype(BF16)                   # one cast per layer for all projections
        attn = bo                                # output-projection bias, added once
        for h in range(H):                       # H=2: tiny static loop
            qh = jnp.dot(x_bf, wq[h], preferred_element_type=jnp.float32) + bqkv[0, h:h + 1, :]
            kh = jnp.dot(x_bf, wk[h], preferred_element_type=jnp.float32) + bqkv[1, h:h + 1, :]
            vh = jnp.dot(x_bf, wv[h], preferred_element_type=jnp.float32) + bqkv[2, h:h + 1, :]
            qh = (qh * scale).reshape(n, s, DH)  # leading-dim relabel (s multiple of 8)
            kh = kh.reshape(n, s, DH)
            vh = vh.reshape(n, s, DH)

            sc = jnp.einsum('nqd,nkd->nqk', qh.astype(BF16), kh.astype(BF16),
                            preferred_element_type=jnp.float32)       # [n, s, s]
            sc = sc + kbias                      # additive mask bias (hoisted, no where/select)
            sc = sc - jnp.max(sc, axis=-1, keepdims=True)
            p = jnp.exp(sc)
            p = p * pl.reciprocal(jnp.sum(p, axis=-1, keepdims=True), approx=True)
            oh = jnp.einsum('nqk,nkd->nqd', p.astype(BF16), vh.astype(BF16),
                            preferred_element_type=jnp.float32)       # [n, s, DH]
            # per-head output projection, summed over heads == concat(heads) @ Wo
            attn = attn + jnp.dot(oh.reshape(ns, DH).astype(BF16), wo[h],
                                  preferred_element_type=jnp.float32)

        x2 = _layer_norm(x2 + attn, g1, be1)

        hid = jnp.maximum(
            jnp.dot(x2.astype(BF16), w1, preferred_element_type=jnp.float32) + b1, 0.0)
        ff = jnp.dot(hid.astype(BF16), w2, preferred_element_type=jnp.float32) + b2
        x2 = _layer_norm(x2 + ff, g2, be2)

        # zero out pad rows between layers (matches ParlAI post-layer masking)
        x2 = x2 * rmask
    return x2


# ---------------- fused whole-model kernel ----------------
def memnet_kernel(x_ref, kmask_c_ref, rmask_c_ref, kmask_d_ref, rmask_d_ref,
                  cwq, cwk, cwv, cbqkv, cwo, cw1, cb1, cw2, cvec,
                  dwq, dwk, dwv, dbqkv, dwo, dw1, db1, dw2, dvec,
                  cands_ref, ctx_ref, *, B, ctx_pos):
    """Whole TransformerMemNetModel forward in ONE launch.

    x_ref     : [B*Sc, S, D]  embedded tokens, grouped per batch element as
                [mem_0..mem_{M-1}, context, dummy all-pad rows] (Sc = round_up(M+1, 8)).
    kmask_*   : [*, 1, S]     1.0 = real token / position (context / candidate encoder).
    rmask_*   : [rows, 1]     flattened row masks.
    cands_ref : [B, Sc, D]    candidate-encoder sequence output (padded rows zero).
    ctx_ref   : [B, D]        context-encoder masked mean of the context sequence.
    """
    Nc, S_in, Dm = x_ref.shape
    Sc = Nc // B

    # ---- phase 1: context encoder over context + memories (+ dummy pad rows) ----
    kmask_c = kmask_c_ref[...]                         # [Nc, 1, S]
    kbias_c = (kmask_c - 1.0) * 1e30                   # hoisted additive attention bias
    rmask_c = rmask_c_ref[...]                         # [Nc*S, 1]
    x2 = x_ref[...].reshape(Nc * S_in, Dm)
    x2 = _encoder_stack(x2, kbias_c, rmask_c, Nc, S_in,
                        cwq, cwk, cwv, cbqkv, cwo, cw1, cb1, cw2, cvec)

    # masked mean over the sequence axis; exact division (integer token count), clamp a la ParlAI.
    # Note: dummy all-pad rows have every key masked -> uniform softmax over zero values; their
    # means are exactly zero and they are masked out again in the candidate encoder below.
    x3 = x2.reshape(Nc, S_in, Dm)
    den = jnp.maximum(jnp.sum(kmask_c[:, 0, :], axis=-1, keepdims=True), 1e-7)   # [Nc, 1]
    h = jnp.sum(x3, axis=1) / den                      # [Nc, D]   sentence embeddings

    # ---- phase 2: candidate encoder over [mem_h..., ctx_h, 0...] per batch element ----
    # h is already ordered so this is a pure multiple-of-8 leading-dim relabel reshape.
    ctx_ref[...] = h.reshape(B, Sc, Dm)[:, ctx_pos, :]  # context mean sits at position M

    kmask_d = kmask_d_ref[...]                         # [B, 1, Sc]
    kbias_d = (kmask_d - 1.0) * 1e30
    rmask_d = rmask_d_ref[...]                         # [B*Sc, 1]
    c2 = h * rmask_d                                   # explicit zero of dummy rows
    c2 = _encoder_stack(c2, kbias_d, rmask_d, B, Sc,
                        dwq, dwk, dwv, dbqkv, dwo, dw1, db1, dw2, dvec)
    cands_ref[...] = c2.reshape(B, Sc, Dm)


# ---------------- model forward (wrapper) ----------------
def mem_net_forward(xs, mems, params):
    """xs: [B, S] int32, mems: [B, M, S] int32."""
    B, S = xs.shape
    _, M, _ = mems.shape
    Sc = _round_up(M + 1, 8)          # padded candidate-sequence length == rows per batch group
    s_pad = _round_up(S, 8)           # sublane-aligned token-sequence length

    # Group token rows per batch element as [mem_0..mem_{M-1}, context, dummy all-pad rows]:
    # the context encoder encodes everything in one pass and the [B*Sc, D] means ARE the
    # (padded) candidate-encoder input -- no regrouping beyond a relabel reshape in the kernel.
    pad_rows = jnp.full((B, Sc - (M + 1), S), PAD, dtype=xs.dtype)
    toks = jnp.concatenate([mems, xs[:, None, :], pad_rows], axis=1).reshape(B * Sc, S)
    if s_pad != S:
        toks = jnp.pad(toks, ((0, 0), (0, s_pad - S)), constant_values=PAD)

    mask = (toks != PAD).astype(jnp.float32)                           # [B*Sc, s_pad]
    x = jnp.take(params["emb"], toks, axis=0) * math.sqrt(D)           # embeddings_scale
    x = x + params["ctx_enc"]["pos"][None, :s_pad, :]
    x = x * mask[..., None]

    kmask_c = mask.reshape(B * Sc, 1, s_pad)
    rmask_c = mask.reshape(B * Sc * s_pad, 1)
    # candidate-encoder masks: first M+1 positions real, the rest is padding
    cmask = (jnp.arange(Sc) < (M + 1)).astype(jnp.float32)
    kmask_d = jnp.broadcast_to(cmask.reshape(1, 1, Sc), (B, 1, Sc))
    rmask_d = jnp.broadcast_to(cmask.reshape(1, Sc), (B, Sc)).reshape(B * Sc, 1)

    ce, de = params["ctx_enc"], params["cand_enc"]
    kernel = functools.partial(memnet_kernel, B=B, ctx_pos=M)
    cands_pad, ctx_h = pl.pallas_call(
        kernel,
        out_shape=(jax.ShapeDtypeStruct((B, Sc, D), jnp.float32),
                   jax.ShapeDtypeStruct((B, D), jnp.float32)),
    )(x, kmask_c, rmask_c, kmask_d, rmask_d,
      ce["wq"], ce["wk"], ce["wv"], ce["bqkv"], ce["wo"],
      ce["w1"], ce["b1"], ce["w2"], ce["vec"],
      de["wq"], de["wk"], de["wv"], de["bqkv"], de["wo"],
      de["w1"], de["b1"], de["w2"], de["vec"])

    cands_h = cands_pad[:, :M + 1, :]                                  # [B, M+1, D]
    # normalize_sent_emb = False
    output = jnp.concatenate([cands_h[:, -1], ctx_h], axis=1)          # [B, 2D]
    return output, cands_h


# ---------------- deterministic parameter init ----------------
def init_params(key):
    keys = list(jax.random.split(key, 512))
    it = iter(keys)

    def nrm(shape, scale):
        return jax.random.normal(next(it), shape, jnp.float32) * scale

    emb = jax.random.normal(next(it), (VOCAB, D), jnp.float32) * (D ** -0.5)
    emb = emb.at[PAD].set(0.0)

    def make_layer():
        # per-head projection / output weights -> no lane-boundary slicing in the kernel;
        # matmul weights stored bf16 (MXU-native), biases / LN params stay f32.
        wq = nrm((H, D, DH), D ** -0.5)
        wk = nrm((H, D, DH), D ** -0.5)
        wv = nrm((H, D, DH), D ** -0.5)
        wo = nrm((H, DH, D), D ** -0.5)
        w1 = nrm((D, FFN), D ** -0.5)
        w2 = nrm((FFN, D), FFN ** -0.5)
        zD = jnp.zeros((1, D), jnp.float32)
        oD = jnp.ones((1, D), jnp.float32)
        return dict(
            wq=wq.astype(BF16), wk=wk.astype(BF16), wv=wv.astype(BF16), wo=wo.astype(BF16),
            bqkv=jnp.zeros((3, H, DH), jnp.float32),                   # q/k/v biases
            w1=w1.astype(BF16), b1=jnp.zeros((1, FFN), jnp.float32),
            w2=w2.astype(BF16),
            # packed per-layer D-wide vectors: bo, b2, g1(LN1), be1, g2(LN2), be2
            vec=jnp.concatenate([zD, zD, oD, zD, oD, zD], axis=0),     # [6, D]
        )

    def make_encoder():
        layers = [make_layer() for _ in range(LAYERS)]
        stacked = {k: jnp.stack([lyr[k] for lyr in layers], axis=0) for k in layers[0]}
        stacked["pos"] = nrm((MAXPOS, D), 0.02)
        return stacked

    return dict(emb=emb, ctx_enc=make_encoder(), cand_enc=make_encoder())


# ---------------- main ----------------
if __name__ == "__main__":
    key = jax.random.PRNGKey(0)
    kp, kx, km = jax.random.split(key, 3)
    params = init_params(kp)

    B, M, S = 2, 3, 8
    xs = jax.random.randint(kx, (B, S), 1, VOCAB, dtype=jnp.int32)
    xs = xs.at[:, -2:].set(PAD)                       # some padding in the context
    mems = jax.random.randint(km, (B, M, S), 1, VOCAB, dtype=jnp.int32)
    mems = mems.at[:, :, -3:].set(PAD)                # some padding in the memories

    fwd = jax.jit(mem_net_forward)
    output, cands_h = fwd(xs, mems, params)
    jax.block_until_ready((output, cands_h))

    assert output.shape == (B, 2 * D)
    assert cands_h.shape == (B, M + 1, D)
    assert bool(jnp.all(jnp.isfinite(output))) and bool(jnp.all(jnp.isfinite(cands_h)))
    print("KERNEL_OK")
</pallas_src>

<mosaic_0001>
module attributes {stable_mosaic.version = 11 : i64} {
  func.func @memnet_kernel(%arg0: memref<16x8x32xf32, #tpu.memory_space<vmem>>, %arg1: memref<16x1x8xf32, #tpu.memory_space<vmem>>, %arg2: memref<128x1xf32, #tpu.memory_space<vmem>>, %arg3: memref<2x1x8xf32, #tpu.memory_space<vmem>>, %arg4: memref<16x1xf32, #tpu.memory_space<vmem>>, %arg5: memref<2x2x32x16xbf16, #tpu.memory_space<vmem>>, %arg6: memref<2x2x32x16xbf16, #tpu.memory_space<vmem>>, %arg7: memref<2x2x32x16xbf16, #tpu.memory_space<vmem>>, %arg8: memref<2x3x2x16xf32, #tpu.memory_space<vmem>>, %arg9: memref<2x2x16x32xbf16, #tpu.memory_space<vmem>>, %arg10: memref<2x32x64xbf16, #tpu.memory_space<vmem>>, %arg11: memref<2x1x64xf32, #tpu.memory_space<vmem>>, %arg12: memref<2x64x32xbf16, #tpu.memory_space<vmem>>, %arg13: memref<2x6x32xf32, #tpu.memory_space<vmem>>, %arg14: memref<2x2x32x16xbf16, #tpu.memory_space<vmem>>, %arg15: memref<2x2x32x16xbf16, #tpu.memory_space<vmem>>, %arg16: memref<2x2x32x16xbf16, #tpu.memory_space<vmem>>, %arg17: memref<2x3x2x16xf32, #tpu.memory_space<vmem>>, %arg18: memref<2x2x16x32xbf16, #tpu.memory_space<vmem>>, %arg19: memref<2x32x64xbf16, #tpu.memory_space<vmem>>, %arg20: memref<2x1x64xf32, #tpu.memory_space<vmem>>, %arg21: memref<2x64x32xbf16, #tpu.memory_space<vmem>>, %arg22: memref<2x6x32xf32, #tpu.memory_space<vmem>>, %arg23: memref<2x8x32xf32, #tpu.memory_space<vmem>>, %arg24: memref<2x32xf32, #tpu.memory_space<vmem>>) attributes {dimension_semantics = [], scalar_prefetch = 0 : i64, scratch_operands = 0 : i64, tpu.core_type = #tpu.core_type<tc>} {
    %c0 = arith.constant 0 : index
    %c0_0 = arith.constant 0 : index
    %c0_1 = arith.constant 0 : index
    %0 = vector.load %arg1[%c0, %c0_0, %c0_1] : memref<16x1x8xf32, #tpu.memory_space<vmem>>, vector<16x1x8xf32>
    %cst = arith.constant 1.000000e+00 : f32
    %1 = vector.broadcast %cst : f32 to vector<16x1x8xf32>
    %2 = arith.subf %0, %1 : vector<16x1x8xf32>
    %cst_2 = arith.constant 1.000000e+30 : f32
    %3 = vector.broadcast %cst_2 : f32 to vector<16x1x8xf32>
    %4 = arith.mulf %2, %3 : vector<16x1x8xf32>
    %c0_3 = arith.constant 0 : index
    %c0_4 = arith.constant 0 : index
    %5 = vector.load %arg2[%c0_3, %c0_4] : memref<128x1xf32, #tpu.memory_space<vmem>>, vector<128x1xf32>
    %c0_5 = arith.constant 0 : index
    %c0_6 = arith.constant 0 : index
    %c0_7 = arith.constant 0 : index
    %6 = vector.load %arg0[%c0_5, %c0_6, %c0_7] : memref<16x8x32xf32, #tpu.memory_space<vmem>>, vector<16x8x32xf32>
    %7 = vector.shape_cast %6 : vector<16x8x32xf32> to vector<128x32xf32>
    %c0_8 = arith.constant 0 : index
    %c0_9 = arith.constant 0 : index
    %c0_10 = arith.constant 0 : index
    %c0_11 = arith.constant 0 : index
    %8 = vector.load %arg5[%c0_8, %c0_9, %c0_10, %c0_11] : memref<2x2x32x16xbf16, #tpu.memory_space<vmem>>, vector<1x2x32x16xbf16>
    %9 = vector.shape_cast %8 : vector<1x2x32x16xbf16> to vector<2x32x16xbf16>
    %c0_12 = arith.constant 0 : index
    %c0_13 = arith.constant 0 : index
    %c0_14 = arith.constant 0 : index
    %c0_15 = arith.constant 0 : index
    %10 = vector.load %arg6[%c0_12, %c0_13, %c0_14, %c0_15] : memref<2x2x32x16xbf16, #tpu.memory_space<vmem>>, vector<1x2x32x16xbf16>
    %11 = vector.shape_cast %10 : vector<1x2x32x16xbf16> to vector<2x32x16xbf16>
    %c0_16 = arith.constant 0 : index
    %c0_17 = arith.constant 0 : index
    %c0_18 = arith.constant 0 : index
    %c0_19 = arith.constant 0 : index
    %12 = vector.load %arg7[%c0_16, %c0_17, %c0_18, %c0_19] : memref<2x2x32x16xbf16, #tpu.memory_space<vmem>>, vector<1x2x32x16xbf16>
    %13 = vector.shape_cast %12 : vector<1x2x32x16xbf16> to vector<2x32x16xbf16>
    %c0_20 = arith.constant 0 : index
    %c0_21 = arith.constant 0 : index
    %c0_22 = arith.constant 0 : index
    %c0_23 = arith.constant 0 : index
    %14 = vector.load %arg9[%c0_20, %c0_21, %c0_22, %c0_23] : memref<2x2x16x32xbf16, #tpu.memory_space<vmem>>, vector<1x2x16x32xbf16>
    %15 = vector.shape_cast %14 : vector<1x2x16x32xbf16> to vector<2x16x32xbf16>
    %c0_24 = arith.constant 0 : index
    %c0_25 = arith.constant 0 : index
    %c0_26 = arith.constant 0 : index
    %c0_27 = arith.constant 0 : index
    %16 = vector.load %arg8[%c0_24, %c0_25, %c0_26, %c0_27] : memref<2x3x2x16xf32, #tpu.memory_space<vmem>>, vector<1x3x2x16xf32>
    %17 = vector.shape_cast %16 : vector<1x3x2x16xf32> to vector<3x2x16xf32>
    %c0_28 = arith.constant 0 : index
    %c0_29 = arith.constant 0 : index
    %c0_30 = arith.constant 0 : index
    %18 = vector.load %arg10[%c0_28, %c0_29, %c0_30] : memref<2x32x64xbf16, #tpu.memory_space<vmem>>, vector<1x32x64xbf16>
    %19 = vector.shape_cast %18 : vector<1x32x64xbf16> to vector<32x64xbf16>
    %c0_31 = arith.constant 0 : index
    %c0_32 = arith.constant 0 : index
    %c0_33 = arith.constant 0 : index
    %20 = vector.load %arg11[%c0_31, %c0_32, %c0_33] : memref<2x1x64xf32, #tpu.memory_space<vmem>>, vector<1x1x64xf32>
    %21 = vector.shape_cast %20 : vector<1x1x64xf32> to vector<1x64xf32>
    %c0_34 = arith.constant 0 : index
    %c0_35 = arith.constant 0 : index
    %c0_36 = arith.constant 0 : index
    %22 = vector.load %arg12[%c0_34, %c0_35, %c0_36] : memref<2x64x32xbf16, #tpu.memory_space<vmem>>, vector<1x64x32xbf16>
    %23 = vector.shape_cast %22 : vector<1x64x32xbf16> to vector<64x32xbf16>
    %c0_37 = arith.constant 0 : index
    %c0_38 = arith.constant 0 : index
    %c0_39 = arith.constant 0 : index
    %24 = vector.load %arg13[%c0_37, %c0_38, %c0_39] : memref<2x6x32xf32, #tpu.memory_space<vmem>>, vector<1x6x32xf32>
    %25 = vector.shape_cast %24 : vector<1x6x32xf32> to vector<6x32xf32>
    %26 = vector.extract_strided_slice %25 {offsets = [0, 0], sizes = [1, 32], strides = [1, 1]} : vector<6x32xf32> to vector<1x32xf32>
    %27 = vector.extract_strided_slice %25 {offsets = [1, 0], sizes = [1, 32], strides = [1, 1]} : vector<6x32xf32> to vector<1x32xf32>
    %28 = vector.extract_strided_slice %25 {offsets = [2, 0], sizes = [1, 32], strides = [1, 1]} : vector<6x32xf32> to vector<1x32xf32>
    %29 = vector.extract_strided_slice %25 {offsets = [3, 0], sizes = [1, 32], strides = [1, 1]} : vector<6x32xf32> to vector<1x32xf32>
    %30 = vector.extract_strided_slice %25 {offsets = [4, 0], sizes = [1, 32], strides = [1, 1]} : vector<6x32xf32> to vector<1x32xf32>
    %31 = vector.extract_strided_slice %25 {offsets = [5, 0], sizes = [1, 32], strides = [1, 1]} : vector<6x32xf32> to vector<1x32xf32>
    %32 = arith.truncf %7 : vector<128x32xf32> to vector<128x32xbf16>
    %33 = vector.extract_strided_slice %9 {offsets = [0, 0, 0], sizes = [1, 32, 16], strides = [1, 1, 1]} : vector<2x32x16xbf16> to vector<1x32x16xbf16>
    %34 = vector.shape_cast %33 : vector<1x32x16xbf16> to vector<32x16xbf16>
    %cst_40 = arith.constant dense<0.000000e+00> : vector<128x16xf32>
    %35 = tpu.matmul %32, %34, %cst_40 {dimension_numbers = #tpu.dot_dimension_numbers<[1], [0], [0], [1], [0, 0, 1, 1], [], []>} : vector<128x32xbf16>, vector<32x16xbf16>, vector<128x16xf32> -> vector<128x16xf32>
    %36 = vector.extract_strided_slice %17 {offsets = [0, 0, 0], sizes = [1, 1, 16], strides = [1, 1, 1]} : vector<3x2x16xf32> to vector<1x1x16xf32>
    %37 = vector.shape_cast %36 : vector<1x1x16xf32> to vector<1x16xf32>
    %38 = vector.broadcast %37 : vector<1x16xf32> to vector<128x16xf32>
    %39 = arith.addf %35, %38 : vector<128x16xf32>
    %40 = vector.extract_strided_slice %11 {offsets = [0, 0, 0], sizes = [1, 32, 16], strides = [1, 1, 1]} : vector<2x32x16xbf16> to vector<1x32x16xbf16>
    %41 = vector.shape_cast %40 : vector<1x32x16xbf16> to vector<32x16xbf16>
    %cst_41 = arith.constant dense<0.000000e+00> : vector<128x16xf32>
    %42 = tpu.matmul %32, %41, %cst_41 {dimension_numbers = #tpu.dot_dimension_numbers<[1], [0], [0], [1], [0, 0, 1, 1], [], []>} : vector<128x32xbf16>, vector<32x16xbf16>, vector<128x16xf32> -> vector<128x16xf32>
    %43 = vector.extract_strided_slice %17 {offsets = [1, 0, 0], sizes = [1, 1, 16], strides = [1, 1, 1]} : vector<3x2x16xf32> to vector<1x1x16xf32>
    %44 = vector.shape_cast %43 : vector<1x1x16xf32> to vector<1x16xf32>
    %45 = vector.broadcast %44 : vector<1x16xf32> to vector<128x16xf32>
    %46 = arith.addf %42, %45 : vector<128x16xf32>
    %47 = vector.extract_strided_slice %13 {offsets = [0, 0, 0], sizes = [1, 32, 16], strides = [1, 1, 1]} : vector<2x32x16xbf16> to vector<1x32x16xbf16>
    %48 = vector.shape_cast %47 : vector<1x32x16xbf16> to vector<32x16xbf16>
    %cst_42 = arith.constant dense<0.000000e+00> : vector<128x16xf32>
    %49 = tpu.matmul %32, %48, %cst_42 {dimension_numbers = #tpu.dot_dimension_numbers<[1], [0], [0], [1], [0, 0, 1, 1], [], []>} : vector<128x32xbf16>, vector<32x16xbf16>, vector<128x16xf32> -> vector<128x16xf32>
    %50 = vector.extract_strided_slice %17 {offsets = [2, 0, 0], sizes = [1, 1, 16], strides = [1, 1, 1]} : vector<3x2x16xf32> to vector<1x1x16xf32>
    %51 = vector.shape_cast %50 : vector<1x1x16xf32> to vector<1x16xf32>
    %52 = vector.broadcast %51 : vector<1x16xf32> to vector<128x16xf32>
    %53 = arith.addf %49, %52 : vector<128x16xf32>
    %cst_43 = arith.constant 2.500000e-01 : f32
    %54 = vector.broadcast %cst_43 : f32 to vector<128x16xf32>
    %55 = arith.mulf %39, %54 : vector<128x16xf32>
    %56 = vector.shape_cast %55 : vector<128x16xf32> to vector<16x8x16xf32>
    %57 = vector.shape_cast %46 : vector<128x16xf32> to vector<16x8x16xf32>
    %58 = vector.shape_cast %53 : vector<128x16xf32> to vector<16x8x16xf32>
    %59 = arith.truncf %56 : vector<16x8x16xf32> to vector<16x8x16xbf16>
    %60 = arith.truncf %57 : vector<16x8x16xf32> to vector<16x8x16xbf16>
    "tpu.trace_start"() <{level = 10 : i32, message = "nqd,nkd->nqk"}> : () -> ()
    %cst_44 = arith.constant dense<0.000000e+00> : vector<16x8x8xf32>
    %61 = tpu.matmul %59, %60, %cst_44 {dimension_numbers = #tpu.dot_dimension_numbers<[2], [2], [1], [1], [0, 0, 0, 1, 1, 1], [0], [0]>} : vector<16x8x16xbf16>, vector<16x8x16xbf16>, vector<16x8x8xf32> -> vector<16x8x8xf32>
    "tpu.trace_stop"() : () -> ()
    %62 = vector.broadcast %4 : vector<16x1x8xf32> to vector<16x8x8xf32>
    %63 = arith.addf %61, %62 : vector<16x8x8xf32>
    %cst_45 = arith.constant dense<0xFF800000> : vector<16x8xf32>
    %64 = vector.multi_reduction <maximumf>, %63, %cst_45 [2] : vector<16x8x8xf32> to vector<16x8xf32>
    %65 = vector.shape_cast %64 : vector<16x8xf32> to vector<16x8x1xf32>
    %66 = vector.broadcast %65 : vector<16x8x1xf32> to vector<16x8x8xf32>
    %67 = arith.subf %63, %66 : vector<16x8x8xf32>
    %68 = math.exp %67 : vector<16x8x8xf32>
    %cst_46 = arith.constant dense<0.000000e+00> : vector<16x8xf32>
    %69 = vector.multi_reduction <add>, %68, %cst_46 [2] : vector<16x8x8xf32> to vector<16x8xf32>
    %70 = vector.shape_cast %69 : vector<16x8xf32> to vector<16x8x1xf32>
    %71 = tpu.reciprocal %70 {approx = true} : vector<16x8x1xf32> -> vector<16x8x1xf32>
    %72 = vector.broadcast %71 : vector<16x8x1xf32> to vector<16x8x8xf32>
    %73 = arith.mulf %68, %72 : vector<16x8x8xf32>
    %74 = arith.truncf %73 : vector<16x8x8xf32> to vector<16x8x8xbf16>
    %75 = arith.truncf %58 : vector<16x8x16xf32> to vector<16x8x16xbf16>
    "tpu.trace_start"() <{level = 10 : i32, message = "nqk,nkd->nqd"}> : () -> ()
    %cst_47 = arith.constant dense<0.000000e+00> : vector<16x8x16xf32>
    %76 = tpu.matmul %74, %75, %cst_47 {dimension_numbers = #tpu.dot_dimension_numbers<[2], [1], [1], [2], [0, 0, 0, 1, 1, 2], [0], [0]>} : vector<16x8x8xbf16>, vector<16x8x16xbf16>, vector<16x8x16xf32> -> vector<16x8x16xf32>
    "tpu.trace_stop"() : () -> ()
    %77 = vector.shape_cast %76 : vector<16x8x16xf32> to vector<128x16xf32>
    %78 = arith.truncf %77 : vector<128x16xf32> to vector<128x16xbf16>
    %79 = vector.extract_strided_slice %15 {offsets = [0, 0, 0], sizes = [1, 16, 32], strides = [1, 1, 1]} : vector<2x16x32xbf16> to vector<1x16x32xbf16>
    %80 = vector.shape_cast %79 : vector<1x16x32xbf16> to vector<16x32xbf16>
    %cst_48 = arith.constant dense<0.000000e+00> : vector<128x32xf32>
    %81 = tpu.matmul %78, %80, %cst_48 {dimension_numbers = #tpu.dot_dimension_numbers<[1], [0], [0], [1], [0, 0, 1, 1], [], []>} : vector<128x16xbf16>, vector<16x32xbf16>, vector<128x32xf32> -> vector<128x32xf32>
    %82 = vector.broadcast %26 : vector<1x32xf32> to vector<128x32xf32>
    %83 = arith.addf %82, %81 : vector<128x32xf32>
    %84 = vector.extract_strided_slice %9 {offsets = [1, 0, 0], sizes = [1, 32, 16], strides = [1, 1, 1]} : vector<2x32x16xbf16> to vector<1x32x16xbf16>
    %85 = vector.shape_cast %84 : vector<1x32x16xbf16> to vector<32x16xbf16>
    %cst_49 = arith.constant dense<0.000000e+00> : vector<128x16xf32>
    %86 = tpu.matmul %32, %85, %cst_49 {dimension_numbers = #tpu.dot_dimension_numbers<[1], [0], [0], [1], [0, 0, 1, 1], [], []>} : vector<128x32xbf16>, vector<32x16xbf16>, vector<128x16xf32> -> vector<128x16xf32>
    %87 = vector.extract_strided_slice %17 {offsets = [0, 1, 0], sizes = [1, 1, 16], strides = [1, 1, 1]} : vector<3x2x16xf32> to vector<1x1x16xf32>
    %88 = vector.shape_cast %87 : vector<1x1x16xf32> to vector<1x16xf32>
    %89 = vector.broadcast %88 : vector<1x16xf32> to vector<128x16xf32>
    %90 = arith.addf %86, %89 : vector<128x16xf32>
    %91 = vector.extract_strided_slice %11 {offsets = [1, 0, 0], sizes = [1, 32, 16], strides = [1, 1, 1]} : vector<2x32x16xbf16> to vector<1x32x16xbf16>
    %92 = vector.shape_cast %91 : vector<1x32x16xbf16> to vector<32x16xbf16>
    %cst_50 = arith.constant dense<0.000000e+00> : vector<128x16xf32>
    %93 = tpu.matmul %32, %92, %cst_50 {dimension_numbers = #tpu.dot_dimension_numbers<[1], [0], [0], [1], [0, 0, 1, 1], [], []>} : vector<128x32xbf16>, vector<32x16xbf16>, vector<128x16xf32> -> vector<128x16xf32>
    %94 = vector.extract_strided_slice %17 {offsets = [1, 1, 0], sizes = [1, 1, 16], strides = [1, 1, 1]} : vector<3x2x16xf32> to vector<1x1x16xf32>
    %95 = vector.shape_cast %94 : vector<1x1x16xf32> to vector<1x16xf32>
    %96 = vector.broadcast %95 : vector<1x16xf32> to vector<128x16xf32>
    %97 = arith.addf %93, %96 : vector<128x16xf32>
    %98 = vector.extract_strided_slice %13 {offsets = [1, 0, 0], sizes = [1, 32, 16], strides = [1, 1, 1]} : vector<2x32x16xbf16> to vector<1x32x16xbf16>
    %99 = vector.shape_cast %98 : vector<1x32x16xbf16> to vector<32x16xbf16>
    %cst_51 = arith.constant dense<0.000000e+00> : vector<128x16xf32>
    %100 = tpu.matmul %32, %99, %cst_51 {dimension_numbers = #tpu.dot_dimension_numbers<[1], [0], [0], [1], [0, 0, 1, 1], [], []>} : vector<128x32xbf16>, vector<32x16xbf16>, vector<128x16xf32> -> vector<128x16xf32>
    %101 = vector.extract_strided_slice %17 {offsets = [2, 1, 0], sizes = [1, 1, 16], strides = [1, 1, 1]} : vector<3x2x16xf32> to vector<1x1x16xf32>
    %102 = vector.shape_cast %101 : vector<1x1x16xf32> to vector<1x16xf32>
    %103 = vector.broadcast %102 : vector<1x16xf32> to vector<128x16xf32>
    %104 = arith.addf %100, %103 : vector<128x16xf32>
    %cst_52 = arith.constant 2.500000e-01 : f32
    %105 = vector.broadcast %cst_52 : f32 to vector<128x16xf32>
    %106 = arith.mulf %90, %105 : vector<128x16xf32>
    %107 = vector.shape_cast %106 : vector<128x16xf32> to vector<16x8x16xf32>
    %108 = vector.shape_cast %97 : vector<128x16xf32> to vector<16x8x16xf32>
    %109 = vector.shape_cast %104 : vector<128x16xf32> to vector<16x8x16xf32>
    %110 = arith.truncf %107 : vector<16x8x16xf32> to vector<16x8x16xbf16>
    %111 = arith.truncf %108 : vector<16x8x16xf32> to vector<16x8x16xbf16>
    "tpu.trace_start"() <{level = 10 : i32, message = "nqd,nkd->nqk"}> : () -> ()
    %cst_53 = arith.constant dense<0.000000e+00> : vector<16x8x8xf32>
    %112 = tpu.matmul %110, %111, %cst_53 {dimension_numbers = #tpu.dot_dimension_numbers<[2], [2], [1], [1], [0, 0, 0, 1, 1, 1], [0], [0]>} : vector<16x8x16xbf16>, vector<16x8x16xbf16>, vector<16x8x8xf32> -> vector<16x8x8xf32>
    "tpu.trace_stop"() : () -> ()
    %113 = vector.broadcast %4 : vector<16x1x8xf32> to vector<16x8x8xf32>
    %114 = arith.addf %112, %113 : vector<16x8x8xf32>
    %cst_54 = arith.constant dense<0xFF800000> : vector<16x8xf32>
    %115 = vector.multi_reduction <maximumf>, %114, %cst_54 [2] : vector<16x8x8xf32> to vector<16x8xf32>
    %116 = vector.shape_cast %115 : vector<16x8xf32> to vector<16x8x1xf32>
    %117 = vector.broadcast %116 : vector<16x8x1xf32> to vector<16x8x8xf32>
    %118 = arith.subf %114, %117 : vector<16x8x8xf32>
    %119 = math.exp %118 : vector<16x8x8xf32>
    %cst_55 = arith.constant dense<0.000000e+00> : vector<16x8xf32>
    %120 = vector.multi_reduction <add>, %119, %cst_55 [2] : vector<16x8x8xf32> to vector<16x8xf32>
    %121 = vector.shape_cast %120 : vector<16x8xf32> to vector<16x8x1xf32>
    %122 = tpu.reciprocal %121 {approx = true} : vector<16x8x1xf32> -> vector<16x8x1xf32>
    %123 = vector.broadcast %122 : vector<16x8x1xf32> to vector<16x8x8xf32>
    %124 = arith.mulf %119, %123 : vector<16x8x8xf32>
    %125 = arith.truncf %124 : vector<16x8x8xf32> to vector<16x8x8xbf16>
    %126 = arith.truncf %109 : vector<16x8x16xf32> to vector<16x8x16xbf16>
    "tpu.trace_start"() <{level = 10 : i32, message = "nqk,nkd->nqd"}> : () -> ()
    %cst_56 = arith.constant dense<0.000000e+00> : vector<16x8x16xf32>
    %127 = tpu.matmul %125, %126, %cst_56 {dimension_numbers = #tpu.dot_dimension_numbers<[2], [1], [1], [2], [0, 0, 0, 1, 1, 2], [0], [0]>} : vector<16x8x8xbf16>, vector<16x8x16xbf16>, vector<16x8x16xf32> -> vector<16x8x16xf32>
    "tpu.trace_stop"() : () -> ()
    %128 = vector.shape_cast %127 : vector<16x8x16xf32> to vector<128x16xf32>
    %129 = arith.truncf %128 : vector<128x16xf32> to vector<128x16xbf16>
    %130 = vector.extract_strided_slice %15 {offsets = [1, 0, 0], sizes = [1, 16, 32], strides = [1, 1, 1]} : vector<2x16x32xbf16> to vector<1x16x32xbf16>
    %131 = vector.shape_cast %130 : vector<1x16x32xbf16> to vector<16x32xbf16>
    %cst_57 = arith.constant dense<0.000000e+00> : vector<128x32xf32>
    %132 = tpu.matmul %129, %131, %cst_57 {dimension_numbers = #tpu.dot_dimension_numbers<[1], [0], [0], [1], [0, 0, 1, 1], [], []>} : vector<128x16xbf16>, vector<16x32xbf16>, vector<128x32xf32> -> vector<128x32xf32>
    %133 = arith.addf %83, %132 : vector<128x32xf32>
    %134 = arith.addf %7, %133 : vector<128x32xf32>
    %cst_58 = arith.constant dense<0.000000e+00> : vector<128xf32>
    %135 = vector.multi_reduction <add>, %134, %cst_58 [1] : vector<128x32xf32> to vector<128xf32>
    %136 = vector.shape_cast %135 : vector<128xf32> to vector<128x1xf32>
    %cst_59 = arith.constant 3.200000e+01 : f32
    %137 = vector.broadcast %cst_59 : f32 to vector<128x1xf32>
    %138 = arith.divf %136, %137 : vector<128x1xf32>
    %139 = vector.broadcast %138 : vector<128x1xf32> to vector<128x32xf32>
    %140 = arith.subf %134, %139 : vector<128x32xf32>
    %141 = arith.mulf %140, %140 : vector<128x32xf32>
    %cst_60 = arith.constant dense<0.000000e+00> : vector<128xf32>
    %142 = vector.multi_reduction <add>, %141, %cst_60 [1] : vector<128x32xf32> to vector<128xf32>
    %143 = vector.shape_cast %142 : vector<128xf32> to vector<128x1xf32>
    %cst_61 = arith.constant 3.200000e+01 : f32
    %144 = vector.broadcast %cst_61 : f32 to vector<128x1xf32>
    %145 = arith.divf %143, %144 : vector<128x1xf32>
    %146 = vector.broadcast %138 : vector<128x1xf32> to vector<128x32xf32>
    %147 = arith.subf %134, %146 : vector<128x32xf32>
    %cst_62 = arith.constant 9.99999974E-6 : f32
    %148 = vector.broadcast %cst_62 : f32 to vector<128x1xf32>
    %149 = arith.addf %145, %148 : vector<128x1xf32>
    %150 = math.rsqrt %149 : vector<128x1xf32>
    %151 = vector.broadcast %150 : vector<128x1xf32> to vector<128x32xf32>
    %152 = arith.mulf %147, %151 : vector<128x32xf32>
    %153 = vector.broadcast %28 : vector<1x32xf32> to vector<128x32xf32>
    %154 = arith.mulf %152, %153 : vector<128x32xf32>
    %155 = vector.broadcast %29 : vector<1x32xf32> to vector<128x32xf32>
    %156 = arith.addf %154, %155 : vector<128x32xf32>
    %157 = arith.truncf %156 : vector<128x32xf32> to vector<128x32xbf16>
    %cst_63 = arith.constant dense<0.000000e+00> : vector<128x64xf32>
    %158 = tpu.matmul %157, %19, %cst_63 {dimension_numbers = #tpu.dot_dimension_numbers<[1], [0], [0], [1], [0, 0, 1, 1], [], []>} : vector<128x32xbf16>, vector<32x64xbf16>, vector<128x64xf32> -> vector<128x64xf32>
    %159 = vector.broadcast %21 : vector<1x64xf32> to vector<128x64xf32>
    %160 = arith.addf %158, %159 : vector<128x64xf32>
    %cst_64 = arith.constant 0.000000e+00 : f32
    %161 = vector.broadcast %cst_64 : f32 to vector<128x64xf32>
    %162 = arith.maximumf %160, %161 : vector<128x64xf32>
    %163 = arith.truncf %162 : vector<128x64xf32> to vector<128x64xbf16>
    %cst_65 = arith.constant dense<0.000000e+00> : vector<128x32xf32>
    %164 = tpu.matmul %163, %23, %cst_65 {dimension_numbers = #tpu.dot_dimension_numbers<[1], [0], [0], [1], [0, 0, 1, 1], [], []>} : vector<128x64xbf16>, vector<64x32xbf16>, vector<128x32xf32> -> vector<128x32xf32>
    %165 = vector.broadcast %27 : vector<1x32xf32> to vector<128x32xf32>
    %166 = arith.addf %164, %165 : vector<128x32xf32>
    %167 = arith.addf %156, %166 : vector<128x32xf32>
    %cst_66 = arith.constant dense<0.000000e+00> : vector<128xf32>
    %168 = vector.multi_reduction <add>, %167, %cst_66 [1] : vector<128x32xf32> to vector<128xf32>
    %169 = vector.shape_cast %168 : vector<128xf32> to vector<128x1xf32>
    %cst_67 = arith.constant 3.200000e+01 : f32
    %170 = vector.broadcast %cst_67 : f32 to vector<128x1xf32>
    %171 = arith.divf %169, %170 : vector<128x1xf32>
    %172 = vector.broadcast %171 : vector<128x1xf32> to vector<128x32xf32>
    %173 = arith.subf %167, %172 : vector<128x32xf32>
    %174 = arith.mulf %173, %173 : vector<128x32xf32>
    %cst_68 = arith.constant dense<0.000000e+00> : vector<128xf32>
    %175 = vector.multi_reduction <add>, %174, %cst_68 [1] : vector<128x32xf32> to vector<128xf32>
    %176 = vector.shape_cast %175 : vector<128xf32> to vector<128x1xf32>
    %cst_69 = arith.constant 3.200000e+01 : f32
    %177 = vector.broadcast %cst_69 : f32 to vector<128x1xf32>
    %178 = arith.divf %176, %177 : vector<128x1xf32>
    %179 = vector.broadcast %171 : vector<128x1xf32> to vector<128x32xf32>
    %180 = arith.subf %167, %179 : vector<128x32xf32>
    %cst_70 = arith.constant 9.99999974E-6 : f32
    %181 = vector.broadcast %cst_70 : f32 to vector<128x1xf32>
    %182 = arith.addf %178, %181 : vector<128x1xf32>
    %183 = math.rsqrt %182 : vector<128x1xf32>
    %184 = vector.broadcast %183 : vector<128x1xf32> to vector<128x32xf32>
    %185 = arith.mulf %180, %184 : vector<128x32xf32>
    %186 = vector.broadcast %30 : vector<1x32xf32> to vector<128x32xf32>
    %187 = arith.mulf %185, %186 : vector<128x32xf32>
    %188 = vector.broadcast %31 : vector<1x32xf32> to vector<128x32xf32>
    %189 = arith.addf %187, %188 : vector<128x32xf32>
    %190 = vector.broadcast %5 : vector<128x1xf32> to vector<128x32xf32>
    %191 = arith.mulf %189, %190 : vector<128x32xf32>
    %c1 = arith.constant 1 : index
    %c0_71 = arith.constant 0 : index
    %c0_72 = arith.constant 0 : index
    %c0_73 = arith.constant 0 : index
    %192 = vector.load %arg5[%c1, %c0_71, %c0_72, %c0_73] : memref<2x2x32x16xbf16, #tpu.memory_space<vmem>>, vector<1x2x32x16xbf16>
    %193 = vector.shape_cast %192 : vector<1x2x32x16xbf16> to vector<2x32x16xbf16>
    %c1_74 = arith.constant 1 : index
    %c0_75 = arith.constant 0 : index
    %c0_76 = arith.constant 0 : index
    %c0_77 = arith.constant 0 : index
    %194 = vector.load %arg6[%c1_74, %c0_75, %c0_76, %c0_77] : memref<2x2x32x16xbf16, #tpu.memory_space<vmem>>, vector<1x2x32x16xbf16>
    %195 = vector.shape_cast %194 : vector<1x2x32x16xbf16> to vector<2x32x16xbf16>
    %c1_78 = arith.constant 1 : index
    %c0_79 = arith.constant 0 : index
    %c0_80 = arith.constant 0 : index
    %c0_81 = arith.constant 0 : index
    %196 = vector.load %arg7[%c1_78, %c0_79, %c0_80, %c0_81] : memref<2x2x32x16xbf16, #tpu.memory_space<vmem>>, vector<1x2x32x16xbf16>
    %197 = vector.shape_cast %196 : vector<1x2x32x16xbf16> to vector<2x32x16xbf16>
    %c1_82 = arith.constant 1 : index
    %c0_83 = arith.constant 0 : index
    %c0_84 = arith.constant 0 : index
    %c0_85 = arith.constant 0 : index
    %198 = vector.load %arg9[%c1_82, %c0_83, %c0_84, %c0_85] : memref<2x2x16x32xbf16, #tpu.memory_space<vmem>>, vector<1x2x16x32xbf16>
    %199 = vector.shape_cast %198 : vector<1x2x16x32xbf16> to vector<2x16x32xbf16>
    %c1_86 = arith.constant 1 : index
    %c0_87 = arith.constant 0 : index
    %c0_88 = arith.constant 0 : index
    %c0_89 = arith.constant 0 : index
    %200 = vector.load %arg8[%c1_86, %c0_87, %c0_88, %c0_89] : memref<2x3x2x16xf32, #tpu.memory_space<vmem>>, vector<1x3x2x16xf32>
    %201 = vector.shape_cast %200 : vector<1x3x2x16xf32> to vector<3x2x16xf32>
    %c1_90 = arith.constant 1 : index
    %c0_91 = arith.constant 0 : index
    %c0_92 = arith.constant 0 : index
    %202 = vector.load %arg10[%c1_90, %c0_91, %c0_92] : memref<2x32x64xbf16, #tpu.memory_space<vmem>>, vector<1x32x64xbf16>
    %203 = vector.shape_cast %202 : vector<1x32x64xbf16> to vector<32x64xbf16>
    %c1_93 = arith.constant 1 : index
    %c0_94 = arith.constant 0 : index
    %c0_95 = arith.constant 0 : index
    %204 = vector.load %arg11[%c1_93, %c0_94, %c0_95] : memref<2x1x64xf32, #tpu.memory_space<vmem>>, vector<1x1x64xf32>
    %205 = vector.shape_cast %204 : vector<1x1x64xf32> to vector<1x64xf32>
    %c1_96 = arith.constant 1 : index
    %c0_97 = arith.constant 0 : index
    %c0_98 = arith.constant 0 : index
    %206 = vector.load %arg12[%c1_96, %c0_97, %c0_98] : memref<2x64x32xbf16, #tpu.memory_space<vmem>>, vector<1x64x32xbf16>
    %207 = vector.shape_cast %206 : vector<1x64x32xbf16> to vector<64x32xbf16>
    %c1_99 = arith.constant 1 : index
    %c0_100 = arith.constant 0 : index
    %c0_101 = arith.constant 0 : index
    %208 = vector.load %arg13[%c1_99, %c0_100, %c0_101] : memref<2x6x32xf32, #tpu.memory_space<vmem>>, vector<1x6x32xf32>
    %209 = vector.shape_cast %208 : vector<1x6x32xf32> to vector<6x32xf32>
    %210 = vector.extract_strided_slice %209 {offsets = [0, 0], sizes = [1, 32], strides = [1, 1]} : vector<6x32xf32> to vector<1x32xf32>
    %211 = vector.extract_strided_slice %209 {offsets = [1, 0], sizes = [1, 32], strides = [1, 1]} : vector<6x32xf32> to vector<1x32xf32>
    %212 = vector.extract_strided_slice %209 {offsets = [2, 0], sizes = [1, 32], strides = [1, 1]} : vector<6x32xf32> to vector<1x32xf32>
    %213 = vector.extract_strided_slice %209 {offsets = [3, 0], sizes = [1, 32], strides = [1, 1]} : vector<6x32xf32> to vector<1x32xf32>
    %214 = vector.extract_strided_slice %209 {offsets = [4, 0], sizes = [1, 32], strides = [1, 1]} : vector<6x32xf32> to vector<1x32xf32>
    %215 = vector.extract_strided_slice %209 {offsets = [5, 0], sizes = [1, 32], strides = [1, 1]} : vector<6x32xf32> to vector<1x32xf32>
    %216 = arith.truncf %191 : vector<128x32xf32> to vector<128x32xbf16>
    %217 = vector.extract_strided_slice %193 {offsets = [0, 0, 0], sizes = [1, 32, 16], strides = [1, 1, 1]} : vector<2x32x16xbf16> to vector<1x32x16xbf16>
    %218 = vector.shape_cast %217 : vector<1x32x16xbf16> to vector<32x16xbf16>
    %cst_102 = arith.constant dense<0.000000e+00> : vector<128x16xf32>
    %219 = tpu.matmul %216, %218, %cst_102 {dimension_numbers = #tpu.dot_dimension_numbers<[1], [0], [0], [1], [0, 0, 1, 1], [], []>} : vector<128x32xbf16>, vector<32x16xbf16>, vector<128x16xf32> -> vector<128x16xf32>
    %220 = vector.extract_strided_slice %201 {offsets = [0, 0, 0], sizes = [1, 1, 16], strides = [1, 1, 1]} : vector<3x2x16xf32> to vector<1x1x16xf32>
    %221 = vector.shape_cast %220 : vector<1x1x16xf32> to vector<1x16xf32>
    %222 = vector.broadcast %221 : vector<1x16xf32> to vector<128x16xf32>
    %223 = arith.addf %219, %222 : vector<128x16xf32>
    %224 = vector.extract_strided_slice %195 {offsets = [0, 0, 0], sizes = [1, 32, 16], strides = [1, 1, 1]} : vector<2x32x16xbf16> to vector<1x32x16xbf16>
    %225 = vector.shape_cast %224 : vector<1x32x16xbf16> to vector<32x16xbf16>
    %cst_103 = arith.constant dense<0.000000e+00> : vector<128x16xf32>
    %226 = tpu.matmul %216, %225, %cst_103 {dimension_numbers = #tpu.dot_dimension_numbers<[1], [0], [0], [1], [0, 0, 1, 1], [], []>} : vector<128x32xbf16>, vector<32x16xbf16>, vector<128x16xf32> -> vector<128x16xf32>
    %227 = vector.extract_strided_slice %201 {offsets = [1, 0, 0], sizes = [1, 1, 16], strides = [1, 1, 1]} : vector<3x2x16xf32> to vector<1x1x16xf32>
    %228 = vector.shape_cast %227 : vector<1x1x16xf32> to vector<1x16xf32>
    %229 = vector.broadcast %228 : vector<1x16xf32> to vector<128x16xf32>
    %230 = arith.addf %226, %229 : vector<128x16xf32>
    %231 = vector.extract_strided_slice %197 {offsets = [0, 0, 0], sizes = [1, 32, 16], strides = [1, 1, 1]} : vector<2x32x16xbf16> to vector<1x32x16xbf16>
    %232 = vector.shape_cast %231 : vector<1x32x16xbf16> to vector<32x16xbf16>
    %cst_104 = arith.constant dense<0.000000e+00> : vector<128x16xf32>
    %233 = tpu.matmul %216, %232, %cst_104 {dimension_numbers = #tpu.dot_dimension_numbers<[1], [0], [0], [1], [0, 0, 1, 1], [], []>} : vector<128x32xbf16>, vector<32x16xbf16>, vector<128x16xf32> -> vector<128x16xf32>
    %234 = vector.extract_strided_slice %201 {offsets = [2, 0, 0], sizes = [1, 1, 16], strides = [1, 1, 1]} : vector<3x2x16xf32> to vector<1x1x16xf32>
    %235 = vector.shape_cast %234 : vector<1x1x16xf32> to vector<1x16xf32>
    %236 = vector.broadcast %235 : vector<1x16xf32> to vector<128x16xf32>
    %237 = arith.addf %233, %236 : vector<128x16xf32>
    %cst_105 = arith.constant 2.500000e-01 : f32
    %238 = vector.broadcast %cst_105 : f32 to vector<128x16xf32>
    %239 = arith.mulf %223, %238 : vector<128x16xf32>
    %240 = vector.shape_cast %239 : vector<128x16xf32> to vector<16x8x16xf32>
    %241 = vector.shape_cast %230 : vector<128x16xf32> to vector<16x8x16xf32>
    %242 = vector.shape_cast %237 : vector<128x16xf32> to vector<16x8x16xf32>
    %243 = arith.truncf %240 : vector<16x8x16xf32> to vector<16x8x16xbf16>
    %244 = arith.truncf %241 : vector<16x8x16xf32> to vector<16x8x16xbf16>
    "tpu.trace_start"() <{level = 10 : i32, message = "nqd,nkd->nqk"}> : () -> ()
    %cst_106 = arith.constant dense<0.000000e+00> : vector<16x8x8xf32>
    %245 = tpu.matmul %243, %244, %cst_106 {dimension_numbers = #tpu.dot_dimension_numbers<[2], [2], [1], [1], [0, 0, 0, 1, 1, 1], [0], [0]>} : vector<16x8x16xbf16>, vector<16x8x16xbf16>, vector<16x8x8xf32> -> vector<16x8x8xf32>
    "tpu.trace_stop"() : () -> ()
    %246 = vector.broadcast %4 : vector<16x1x8xf32> to vector<16x8x8xf32>
    %247 = arith.addf %245, %246 : vector<16x8x8xf32>
    %cst_107 = arith.constant dense<0xFF800000> : vector<16x8xf32>
    %248 = vector.multi_reduction <maximumf>, %247, %cst_107 [2] : vector<16x8x8xf32> to vector<16x8xf32>
    %249 = vector.shape_cast %248 : vector<16x8xf32> to vector<16x8x1xf32>
    %250 = vector.broadcast %249 : vector<16x8x1xf32> to vector<16x8x8xf32>
    %251 = arith.subf %247, %250 : vector<16x8x8xf32>
    %252 = math.exp %251 : vector<16x8x8xf32>
    %cst_108 = arith.constant dense<0.000000e+00> : vector<16x8xf32>
    %253 = vector.multi_reduction <add>, %252, %cst_108 [2] : vector<16x8x8xf32> to vector<16x8xf32>
    %254 = vector.shape_cast %253 : vector<16x8xf32> to vector<16x8x1xf32>
    %255 = tpu.reciprocal %254 {approx = true} : vector<16x8x1xf32> -> vector<16x8x1xf32>
    %256 = vector.broadcast %255 : vector<16x8x1xf32> to vector<16x8x8xf32>
    %257 = arith.mulf %252, %256 : vector<16x8x8xf32>
    %258 = arith.truncf %257 : vector<16x8x8xf32> to vector<16x8x8xbf16>
    %259 = arith.truncf %242 : vector<16x8x16xf32> to vector<16x8x16xbf16>
    "tpu.trace_start"() <{level = 10 : i32, message = "nqk,nkd->nqd"}> : () -> ()
    %cst_109 = arith.constant dense<0.000000e+00> : vector<16x8x16xf32>
    %260 = tpu.matmul %258, %259, %cst_109 {dimension_numbers = #tpu.dot_dimension_numbers<[2], [1], [1], [2], [0, 0, 0, 1, 1, 2], [0], [0]>} : vector<16x8x8xbf16>, vector<16x8x16xbf16>, vector<16x8x16xf32> -> vector<16x8x16xf32>
    "tpu.trace_stop"() : () -> ()
    %261 = vector.shape_cast %260 : vector<16x8x16xf32> to vector<128x16xf32>
    %262 = arith.truncf %261 : vector<128x16xf32> to vector<128x16xbf16>
    %263 = vector.extract_strided_slice %199 {offsets = [0, 0, 0], sizes = [1, 16, 32], strides = [1, 1, 1]} : vector<2x16x32xbf16> to vector<1x16x32xbf16>
    %264 = vector.shape_cast %263 : vector<1x16x32xbf16> to vector<16x32xbf16>
    %cst_110 = arith.constant dense<0.000000e+00> : vector<128x32xf32>
    %265 = tpu.matmul %262, %264, %cst_110 {dimension_numbers = #tpu.dot_dimension_numbers<[1], [0], [0], [1], [0, 0, 1, 1], [], []>} : vector<128x16xbf16>, vector<16x32xbf16>, vector<128x32xf32> -> vector<128x32xf32>
    %266 = vector.broadcast %210 : vector<1x32xf32> to vector<128x32xf32>
    %267 = arith.addf %266, %265 : vector<128x32xf32>
    %268 = vector.extract_strided_slice %193 {offsets = [1, 0, 0], sizes = [1, 32, 16], strides = [1, 1, 1]} : vector<2x32x16xbf16> to vector<1x32x16xbf16>
    %269 = vector.shape_cast %268 : vector<1x32x16xbf16> to vector<32x16xbf16>
    %cst_111 = arith.constant dense<0.000000e+00> : vector<128x16xf32>
    %270 = tpu.matmul %216, %269, %cst_111 {dimension_numbers = #tpu.dot_dimension_numbers<[1], [0], [0], [1], [0, 0, 1, 1], [], []>} : vector<128x32xbf16>, vector<32x16xbf16>, vector<128x16xf32> -> vector<128x16xf32>
    %271 = vector.extract_strided_slice %201 {offsets = [0, 1, 0], sizes = [1, 1, 16], strides = [1, 1, 1]} : vector<3x2x16xf32> to vector<1x1x16xf32>
    %272 = vector.shape_cast %271 : vector<1x1x16xf32> to vector<1x16xf32>
    %273 = vector.broadcast %272 : vector<1x16xf32> to vector<128x16xf32>
    %274 = arith.addf %270, %273 : vector<128x16xf32>
    %275 = vector.extract_strided_slice %195 {offsets = [1, 0, 0], sizes = [1, 32, 16], strides = [1, 1, 1]} : vector<2x32x16xbf16> to vector<1x32x16xbf16>
    %276 = vector.shape_cast %275 : vector<1x32x16xbf16> to vector<32x16xbf16>
    %cst_112 = arith.constant dense<0.000000e+00> : vector<128x16xf32>
    %277 = tpu.matmul %216, %276, %cst_112 {dimension_numbers = #tpu.dot_dimension_numbers<[1], [0], [0], [1], [0, 0, 1, 1], [], []>} : vector<128x32xbf16>, vector<32x16xbf16>, vector<128x16xf32> -> vector<128x16xf32>
    %278 = vector.extract_strided_slice %201 {offsets = [1, 1, 0], sizes = [1, 1, 16], strides = [1, 1, 1]} : vector<3x2x16xf32> to vector<1x1x16xf32>
    %279 = vector.shape_cast %278 : vector<1x1x16xf32> to vector<1x16xf32>
    %280 = vector.broadcast %279 : vector<1x16xf32> to vector<128x16xf32>
    %281 = arith.addf %277, %280 : vector<128x16xf32>
    %282 = vector.extract_strided_slice %197 {offsets = [1, 0, 0], sizes = [1, 32, 16], strides = [1, 1, 1]} : vector<2x32x16xbf16> to vector<1x32x16xbf16>
    %283 = vector.shape_cast %282 : vector<1x32x16xbf16> to vector<32x16xbf16>
    %cst_113 = arith.constant dense<0.000000e+00> : vector<128x16xf32>
    %284 = tpu.matmul %216, %283, %cst_113 {dimension_numbers = #tpu.dot_dimension_numbers<[1], [0], [0], [1], [0, 0, 1, 1], [], []>} : vector<128x32xbf16>, vector<32x16xbf16>, vector<128x16xf32> -> vector<128x16xf32>
    %285 = vector.extract_strided_slice %201 {offsets = [2, 1, 0], sizes = [1, 1, 16], strides = [1, 1, 1]} : vector<3x2x16xf32> to vector<1x1x16xf32>
    %286 = vector.shape_cast %285 : vector<1x1x16xf32> to vector<1x16xf32>
    %287 = vector.broadcast %286 : vector<1x16xf32> to vector<128x16xf32>
    %288 = arith.addf %284, %287 : vector<128x16xf32>
    %cst_114 = arith.constant 2.500000e-01 : f32
    %289 = vector.broadcast %cst_114 : f32 to vector<128x16xf32>
    %290 = arith.mulf %274, %289 : vector<128x16xf32>
    %291 = vector.shape_cast %290 : vector<128x16xf32> to vector<16x8x16xf32>
    %292 = vector.shape_cast %281 : vector<128x16xf32> to vector<16x8x16xf32>
    %293 = vector.shape_cast %288 : vector<128x16xf32> to vector<16x8x16xf32>
    %294 = arith.truncf %291 : vector<16x8x16xf32> to vector<16x8x16xbf16>
    %295 = arith.truncf %292 : vector<16x8x16xf32> to vector<16x8x16xbf16>
    "tpu.trace_start"() <{level = 10 : i32, message = "nqd,nkd->nqk"}> : () -> ()
    %cst_115 = arith.constant dense<0.000000e+00> : vector<16x8x8xf32>
    %296 = tpu.matmul %294, %295, %cst_115 {dimension_numbers = #tpu.dot_dimension_numbers<[2], [2], [1], [1], [0, 0, 0, 1, 1, 1], [0], [0]>} : vector<16x8x16xbf16>, vector<16x8x16xbf16>, vector<16x8x8xf32> -> vector<16x8x8xf32>
    "tpu.trace_stop"() : () -> ()
    %297 = vector.broadcast %4 : vector<16x1x8xf32> to vector<16x8x8xf32>
    %298 = arith.addf %296, %297 : vector<16x8x8xf32>
    %cst_116 = arith.constant dense<0xFF800000> : vector<16x8xf32>
    %299 = vector.multi_reduction <maximumf>, %298, %cst_116 [2] : vector<16x8x8xf32> to vector<16x8xf32>
    %300 = vector.shape_cast %299 : vector<16x8xf32> to vector<16x8x1xf32>
    %301 = vector.broadcast %300 : vector<16x8x1xf32> to vector<16x8x8xf32>
    %302 = arith.subf %298, %301 : vector<16x8x8xf32>
    %303 = math.exp %302 : vector<16x8x8xf32>
    %cst_117 = arith.constant dense<0.000000e+00> : vector<16x8xf32>
    %304 = vector.multi_reduction <add>, %303, %cst_117 [2] : vector<16x8x8xf32> to vector<16x8xf32>
    %305 = vector.shape_cast %304 : vector<16x8xf32> to vector<16x8x1xf32>
    %306 = tpu.reciprocal %305 {approx = true} : vector<16x8x1xf32> -> vector<16x8x1xf32>
    %307 = vector.broadcast %306 : vector<16x8x1xf32> to vector<16x8x8xf32>
    %308 = arith.mulf %303, %307 : vector<16x8x8xf32>
    %309 = arith.truncf %308 : vector<16x8x8xf32> to vector<16x8x8xbf16>
    %310 = arith.truncf %293 : vector<16x8x16xf32> to vector<16x8x16xbf16>
    "tpu.trace_start"() <{level = 10 : i32, message = "nqk,nkd->nqd"}> : () -> ()
    %cst_118 = arith.constant dense<0.000000e+00> : vector<16x8x16xf32>
    %311 = tpu.matmul %309, %310, %cst_118 {dimension_numbers = #tpu.dot_dimension_numbers<[2], [1], [1], [2], [0, 0, 0, 1, 1, 2], [0], [0]>} : vector<16x8x8xbf16>, vector<16x8x16xbf16>, vector<16x8x16xf32> -> vector<16x8x16xf32>
    "tpu.trace_stop"() : () -> ()
    %312 = vector.shape_cast %311 : vector<16x8x16xf32> to vector<128x16xf32>
    %313 = arith.truncf %312 : vector<128x16xf32> to vector<128x16xbf16>
    %314 = vector.extract_strided_slice %199 {offsets = [1, 0, 0], sizes = [1, 16, 32], strides = [1, 1, 1]} : vector<2x16x32xbf16> to vector<1x16x32xbf16>
    %315 = vector.shape_cast %314 : vector<1x16x32xbf16> to vector<16x32xbf16>
    %cst_119 = arith.constant dense<0.000000e+00> : vector<128x32xf32>
    %316 = tpu.matmul %313, %315, %cst_119 {dimension_numbers = #tpu.dot_dimension_numbers<[1], [0], [0], [1], [0, 0, 1, 1], [], []>} : vector<128x16xbf16>, vector<16x32xbf16>, vector<128x32xf32> -> vector<128x32xf32>
    %317 = arith.addf %267, %316 : vector<128x32xf32>
    %318 = arith.addf %191, %317 : vector<128x32xf32>
    %cst_120 = arith.constant dense<0.000000e+00> : vector<128xf32>
    %319 = vector.multi_reduction <add>, %318, %cst_120 [1] : vector<128x32xf32> to vector<128xf32>
    %320 = vector.shape_cast %319 : vector<128xf32> to vector<128x1xf32>
    %cst_121 = arith.constant 3.200000e+01 : f32
    %321 = vector.broadcast %cst_121 : f32 to vector<128x1xf32>
    %322 = arith.divf %320, %321 : vector<128x1xf32>
    %323 = vector.broadcast %322 : vector<128x1xf32> to vector<128x32xf32>
    %324 = arith.subf %318, %323 : vector<128x32xf32>
    %325 = arith.mulf %324, %324 : vector<128x32xf32>
    %cst_122 = arith.constant dense<0.000000e+00> : vector<128xf32>
    %326 = vector.multi_reduction <add>, %325, %cst_122 [1] : vector<128x32xf32> to vector<128xf32>
    %327 = vector.shape_cast %326 : vector<128xf32> to vector<128x1xf32>
    %cst_123 = arith.constant 3.200000e+01 : f32
    %328 = vector.broadcast %cst_123 : f32 to vector<128x1xf32>
    %329 = arith.divf %327, %328 : vector<128x1xf32>
    %330 = vector.broadcast %322 : vector<128x1xf32> to vector<128x32xf32>
    %331 = arith.subf %318, %330 : vector<128x32xf32>
    %cst_124 = arith.constant 9.99999974E-6 : f32
    %332 = vector.broadcast %cst_124 : f32 to vector<128x1xf32>
    %333 = arith.addf %329, %332 : vector<128x1xf32>
    %334 = math.rsqrt %333 : vector<128x1xf32>
    %335 = vector.broadcast %334 : vector<128x1xf32> to vector<128x32xf32>
    %336 = arith.mulf %331, %335 : vector<128x32xf32>
    %337 = vector.broadcast %212 : vector<1x32xf32> to vector<128x32xf32>
    %338 = arith.mulf %336, %337 : vector<128x32xf32>
    %339 = vector.broadcast %213 : vector<1x32xf32> to vector<128x32xf32>
    %340 = arith.addf %338, %339 : vector<128x32xf32>
    %341 = arith.truncf %340 : vector<128x32xf32> to vector<128x32xbf16>
    %cst_125 = arith.constant dense<0.000000e+00> : vector<128x64xf32>
    %342 = tpu.matmul %341, %203, %cst_125 {dimension_numbers = #tpu.dot_dimension_numbers<[1], [0], [0], [1], [0, 0, 1, 1], [], []>} : vector<128x32xbf16>, vector<32x64xbf16>, vector<128x64xf32> -> vector<128x64xf32>
    %343 = vector.broadcast %205 : vector<1x64xf32> to vector<128x64xf32>
    %344 = arith.addf %342, %343 : vector<128x64xf32>
    %cst_126 = arith.constant 0.000000e+00 : f32
    %345 = vector.broadcast %cst_126 : f32 to vector<128x64xf32>
    %346 = arith.maximumf %344, %345 : vector<128x64xf32>
    %347 = arith.truncf %346 : vector<128x64xf32> to vector<128x64xbf16>
    %cst_127 = arith.constant dense<0.000000e+00> : vector<128x32xf32>
    %348 = tpu.matmul %347, %207, %cst_127 {dimension_numbers = #tpu.dot_dimension_numbers<[1], [0], [0], [1], [0, 0, 1, 1], [], []>} : vector<128x64xbf16>, vector<64x32xbf16>, vector<128x32xf32> -> vector<128x32xf32>
    %349 = vector.broadcast %211 : vector<1x32xf32> to vector<128x32xf32>
    %350 = arith.addf %348, %349 : vector<128x32xf32>
    %351 = arith.addf %340, %350 : vector<128x32xf32>
    %cst_128 = arith.constant dense<0.000000e+00> : vector<128xf32>
    %352 = vector.multi_reduction <add>, %351, %cst_128 [1] : vector<128x32xf32> to vector<128xf32>
    %353 = vector.shape_cast %352 : vector<128xf32> to vector<128x1xf32>
    %cst_129 = arith.constant 3.200000e+01 : f32
    %354 = vector.broadcast %cst_129 : f32 to vector<128x1xf32>
    %355 = arith.divf %353, %354 : vector<128x1xf32>
    %356 = vector.broadcast %355 : vector<128x1xf32> to vector<128x32xf32>
    %357 = arith.subf %351, %356 : vector<128x32xf32>
    %358 = arith.mulf %357, %357 : vector<128x32xf32>
    %cst_130 = arith.constant dense<0.000000e+00> : vector<128xf32>
    %359 = vector.multi_reduction <add>, %358, %cst_130 [1] : vector<128x32xf32> to vector<128xf32>
    %360 = vector.shape_cast %359 : vector<128xf32> to vector<128x1xf32>
    %cst_131 = arith.constant 3.200000e+01 : f32
    %361 = vector.broadcast %cst_131 : f32 to vector<128x1xf32>
    %362 = arith.divf %360, %361 : vector<128x1xf32>
    %363 = vector.broadcast %355 : vector<128x1xf32> to vector<128x32xf32>
    %364 = arith.subf %351, %363 : vector<128x32xf32>
    %cst_132 = arith.constant 9.99999974E-6 : f32
    %365 = vector.broadcast %cst_132 : f32 to vector<128x1xf32>
    %366 = arith.addf %362, %365 : vector<128x1xf32>
    %367 = math.rsqrt %366 : vector<128x1xf32>
    %368 = vector.broadcast %367 : vector<128x1xf32> to vector<128x32xf32>
    %369 = arith.mulf %364, %368 : vector<128x32xf32>
    %370 = vector.broadcast %214 : vector<1x32xf32> to vector<128x32xf32>
    %371 = arith.mulf %369, %370 : vector<128x32xf32>
    %372 = vector.broadcast %215 : vector<1x32xf32> to vector<128x32xf32>
    %373 = arith.addf %371, %372 : vector<128x32xf32>
    %374 = vector.broadcast %5 : vector<128x1xf32> to vector<128x32xf32>
    %375 = arith.mulf %373, %374 : vector<128x32xf32>
    %376 = vector.shape_cast %375 : vector<128x32xf32> to vector<16x8x32xf32>
    %377 = vector.shape_cast %0 : vector<16x1x8xf32> to vector<16x8xf32>
    %cst_133 = arith.constant dense<0.000000e+00> : vector<16xf32>
    %378 = vector.multi_reduction <add>, %377, %cst_133 [1] : vector<16x8xf32> to vector<16xf32>
    %379 = vector.shape_cast %378 : vector<16xf32> to vector<16x1xf32>
    %cst_134 = arith.constant 1.000000e-07 : f32
    %380 = vector.broadcast %cst_134 : f32 to vector<16x1xf32>
    %381 = arith.maximumf %379, %380 : vector<16x1xf32>
    %cst_135 = arith.constant dense<0.000000e+00> : vector<16x32xf32>
    %382 = vector.multi_reduction <add>, %376, %cst_135 [1] : vector<16x8x32xf32> to vector<16x32xf32>
    %383 = vector.broadcast %381 : vector<16x1xf32> to vector<16x32xf32>
    %384 = arith.divf %382, %383 : vector<16x32xf32>
    %385 = vector.shape_cast %384 : vector<16x32xf32> to vector<2x8x32xf32>
    %386 = vector.extract_strided_slice %385 {offsets = [0, 3, 0], sizes = [2, 1, 32], strides = [1, 1, 1]} : vector<2x8x32xf32> to vector<2x1x32xf32>
    %387 = vector.shape_cast %386 : vector<2x1x32xf32> to vector<2x32xf32>
    %c0_136 = arith.constant 0 : index
    %c0_137 = arith.constant 0 : index
    %388 = vector.load %arg24[%c0_136, %c0_137] : memref<2x32xf32, #tpu.memory_space<vmem>>, vector<2x32xf32>
    tpu.vector_store %arg24[%c0_136, %c0_137], %387 {strides = array<i32>} : memref<2x32xf32, #tpu.memory_space<vmem>>, vector<2x32xf32>,
    %c0_138 = arith.constant 0 : index
    %c0_139 = arith.constant 0 : index
    %c0_140 = arith.constant 0 : index
    %389 = vector.load %arg3[%c0_138, %c0_139, %c0_140] : memref<2x1x8xf32, #tpu.memory_space<vmem>>, vector<2x1x8xf32>
    %cst_141 = arith.constant 1.000000e+00 : f32
    %390 = vector.broadcast %cst_141 : f32 to vector<2x1x8xf32>
    %391 = arith.subf %389, %390 : vector<2x1x8xf32>
    %cst_142 = arith.constant 1.000000e+30 : f32
    %392 = vector.broadcast %cst_142 : f32 to vector<2x1x8xf32>
    %393 = arith.mulf %391, %392 : vector<2x1x8xf32>
    %c0_143 = arith.constant 0 : index
    %c0_144 = arith.constant 0 : index
    %394 = vector.load %arg4[%c0_143, %c0_144] : memref<16x1xf32, #tpu.memory_space<vmem>>, vector<16x1xf32>
    %395 = vector.broadcast %394 : vector<16x1xf32> to vector<16x32xf32>
    %396 = arith.mulf %384, %395 : vector<16x32xf32>
    %c0_145 = arith.constant 0 : index
    %c0_146 = arith.constant 0 : index
    %c0_147 = arith.constant 0 : index
    %c0_148 = arith.constant 0 : index
    %397 = vector.load %arg14[%c0_145, %c0_146, %c0_147, %c0_148] : memref<2x2x32x16xbf16, #tpu.memory_space<vmem>>, vector<1x2x32x16xbf16>
    %398 = vector.shape_cast %397 : vector<1x2x32x16xbf16> to vector<2x32x16xbf16>
    %c0_149 = arith.constant 0 : index
    %c0_150 = arith.constant 0 : index
    %c0_151 = arith.constant 0 : index
    %c0_152 = arith.constant 0 : index
    %399 = vector.load %arg15[%c0_149, %c0_150, %c0_151, %c0_152] : memref<2x2x32x16xbf16, #tpu.memory_space<vmem>>, vector<1x2x32x16xbf16>
    %400 = vector.shape_cast %399 : vector<1x2x32x16xbf16> to vector<2x32x16xbf16>
    %c0_153 = arith.constant 0 : index
    %c0_154 = arith.constant 0 : index
    %c0_155 = arith.constant 0 : index
    %c0_156 = arith.constant 0 : index
    %401 = vector.load %arg16[%c0_153, %c0_154, %c0_155, %c0_156] : memref<2x2x32x16xbf16, #tpu.memory_space<vmem>>, vector<1x2x32x16xbf16>
    %402 = vector.shape_cast %401 : vector<1x2x32x16xbf16> to vector<2x32x16xbf16>
    %c0_157 = arith.constant 0 : index
    %c0_158 = arith.constant 0 : index
    %c0_159 = arith.constant 0 : index
    %c0_160 = arith.constant 0 : index
    %403 = vector.load %arg18[%c0_157, %c0_158, %c0_159, %c0_160] : memref<2x2x16x32xbf16, #tpu.memory_space<vmem>>, vector<1x2x16x32xbf16>
    %404 = vector.shape_cast %403 : vector<1x2x16x32xbf16> to vector<2x16x32xbf16>
    %c0_161 = arith.constant 0 : index
    %c0_162 = arith.constant 0 : index
    %c0_163 = arith.constant 0 : index
    %c0_164 = arith.constant 0 : index
    %405 = vector.load %arg17[%c0_161, %c0_162, %c0_163, %c0_164] : memref<2x3x2x16xf32, #tpu.memory_space<vmem>>, vector<1x3x2x16xf32>
    %406 = vector.shape_cast %405 : vector<1x3x2x16xf32> to vector<3x2x16xf32>
    %c0_165 = arith.constant 0 : index
    %c0_166 = arith.constant 0 : index
    %c0_167 = arith.constant 0 : index
    %407 = vector.load %arg19[%c0_165, %c0_166, %c0_167] : memref<2x32x64xbf16, #tpu.memory_space<vmem>>, vector<1x32x64xbf16>
    %408 = vector.shape_cast %407 : vector<1x32x64xbf16> to vector<32x64xbf16>
    %c0_168 = arith.constant 0 : index
    %c0_169 = arith.constant 0 : index
    %c0_170 = arith.constant 0 : index
    %409 = vector.load %arg20[%c0_168, %c0_169, %c0_170] : memref<2x1x64xf32, #tpu.memory_space<vmem>>, vector<1x1x64xf32>
    %410 = vector.shape_cast %409 : vector<1x1x64xf32> to vector<1x64xf32>
    %c0_171 = arith.constant 0 : index
    %c0_172 = arith.constant 0 : index
    %c0_173 = arith.constant 0 : index
    %411 = vector.load %arg21[%c0_171, %c0_172, %c0_173] : memref<2x64x32xbf16, #tpu.memory_space<vmem>>, vector<1x64x32xbf16>
    %412 = vector.shape_cast %411 : vector<1x64x32xbf16> to vector<64x32xbf16>
    %c0_174 = arith.constant 0 : index
    %c0_175 = arith.constant 0 : index
    %c0_176 = arith.constant 0 : index
    %413 = vector.load %arg22[%c0_174, %c0_175, %c0_176] : memref<2x6x32xf32, #tpu.memory_space<vmem>>, vector<1x6x32xf32>
    %414 = vector.shape_cast %413 : vector<1x6x32xf32> to vector<6x32xf32>
    %415 = vector.extract_strided_slice %414 {offsets = [0, 0], sizes = [1, 32], strides = [1, 1]} : vector<6x32xf32> to vector<1x32xf32>
    %416 = vector.extract_strided_slice %414 {offsets = [1, 0], sizes = [1, 32], strides = [1, 1]} : vector<6x32xf32> to vector<1x32xf32>
    %417 = vector.extract_strided_slice %414 {offsets = [2, 0], sizes = [1, 32], strides = [1, 1]} : vector<6x32xf32> to vector<1x32xf32>
    %418 = vector.extract_strided_slice %414 {offsets = [3, 0], sizes = [1, 32], strides = [1, 1]} : vector<6x32xf32> to vector<1x32xf32>
    %419 = vector.extract_strided_slice %414 {offsets = [4, 0], sizes = [1, 32], strides = [1, 1]} : vector<6x32xf32> to vector<1x32xf32>
    %420 = vector.extract_strided_slice %414 {offsets = [5, 0], sizes = [1, 32], strides = [1, 1]} : vector<6x32xf32> to vector<1x32xf32>
    %421 = arith.truncf %396 : vector<16x32xf32> to vector<16x32xbf16>
    %422 = vector.extract_strided_slice %398 {offsets = [0, 0, 0], sizes = [1, 32, 16], strides = [1, 1, 1]} : vector<2x32x16xbf16> to vector<1x32x16xbf16>
    %423 = vector.shape_cast %422 : vector<1x32x16xbf16> to vector<32x16xbf16>
    %cst_177 = arith.constant dense<0.000000e+00> : vector<16x16xf32>
    %424 = tpu.matmul %421, %423, %cst_177 {dimension_numbers = #tpu.dot_dimension_numbers<[1], [0], [0], [1], [0, 0, 1, 1], [], []>} : vector<16x32xbf16>, vector<32x16xbf16>, vector<16x16xf32> -> vector<16x16xf32>
    %425 = vector.extract_strided_slice %406 {offsets = [0, 0, 0], sizes = [1, 1, 16], strides = [1, 1, 1]} : vector<3x2x16xf32> to vector<1x1x16xf32>
    %426 = vector.shape_cast %425 : vector<1x1x16xf32> to vector<1x16xf32>
    %427 = vector.broadcast %426 : vector<1x16xf32> to vector<16x16xf32>
    %428 = arith.addf %424, %427 : vector<16x16xf32>
    %429 = vector.extract_strided_slice %400 {offsets = [0, 0, 0], sizes = [1, 32, 16], strides = [1, 1, 1]} : vector<2x32x16xbf16> to vector<1x32x16xbf16>
    %430 = vector.shape_cast %429 : vector<1x32x16xbf16> to vector<32x16xbf16>
    %cst_178 = arith.constant dense<0.000000e+00> : vector<16x16xf32>
    %431 = tpu.matmul %421, %430, %cst_178 {dimension_numbers = #tpu.dot_dimension_numbers<[1], [0], [0], [1], [0, 0, 1, 1], [], []>} : vector<16x32xbf16>, vector<32x16xbf16>, vector<16x16xf32> -> vector<16x16xf32>
    %432 = vector.extract_strided_slice %406 {offsets = [1, 0, 0], sizes = [1, 1, 16], strides = [1, 1, 1]} : vector<3x2x16xf32> to vector<1x1x16xf32>
    %433 = vector.shape_cast %432 : vector<1x1x16xf32> to vector<1x16xf32>
    %434 = vector.broadcast %433 : vector<1x16xf32> to vector<16x16xf32>
    %435 = arith.addf %431, %434 : vector<16x16xf32>
    %436 = vector.extract_strided_slice %402 {offsets = [0, 0, 0], sizes = [1, 32, 16], strides = [1, 1, 1]} : vector<2x32x16xbf16> to vector<1x32x16xbf16>
    %437 = vector.shape_cast %436 : vector<1x32x16xbf16> to vector<32x16xbf16>
    %cst_179 = arith.constant dense<0.000000e+00> : vector<16x16xf32>
    %438 = tpu.matmul %421, %437, %cst_179 {dimension_numbers = #tpu.dot_dimension_numbers<[1], [0], [0], [1], [0, 0, 1, 1], [], []>} : vector<16x32xbf16>, vector<32x16xbf16>, vector<16x16xf32> -> vector<16x16xf32>
    %439 = vector.extract_strided_slice %406 {offsets = [2, 0, 0], sizes = [1, 1, 16], strides = [1, 1, 1]} : vector<3x2x16xf32> to vector<1x1x16xf32>
    %440 = vector.shape_cast %439 : vector<1x1x16xf32> to vector<1x16xf32>
    %441 = vector.broadcast %440 : vector<1x16xf32> to vector<16x16xf32>
    %442 = arith.addf %438, %441 : vector<16x16xf32>
    %cst_180 = arith.constant 2.500000e-01 : f32
    %443 = vector.broadcast %cst_180 : f32 to vector<16x16xf32>
    %444 = arith.mulf %428, %443 : vector<16x16xf32>
    %445 = vector.shape_cast %444 : vector<16x16xf32> to vector<2x8x16xf32>
    %446 = vector.shape_cast %435 : vector<16x16xf32> to vector<2x8x16xf32>
    %447 = vector.shape_cast %442 : vector<16x16xf32> to vector<2x8x16xf32>
    %448 = arith.truncf %445 : vector<2x8x16xf32> to vector<2x8x16xbf16>
    %449 = arith.truncf %446 : vector<2x8x16xf32> to vector<2x8x16xbf16>
    "tpu.trace_start"() <{level = 10 : i32, message = "nqd,nkd->nqk"}> : () -> ()
    %cst_181 = arith.constant dense<0.000000e+00> : vector<2x8x8xf32>
    %450 = tpu.matmul %448, %449, %cst_181 {dimension_numbers = #tpu.dot_dimension_numbers<[2], [2], [1], [1], [0, 0, 0, 1, 1, 1], [0], [0]>} : vector<2x8x16xbf16>, vector<2x8x16xbf16>, vector<2x8x8xf32> -> vector<2x8x8xf32>
    "tpu.trace_stop"() : () -> ()
    %451 = vector.broadcast %393 : vector<2x1x8xf32> to vector<2x8x8xf32>
    %452 = arith.addf %450, %451 : vector<2x8x8xf32>
    %cst_182 = arith.constant dense<0xFF800000> : vector<2x8xf32>
    %453 = vector.multi_reduction <maximumf>, %452, %cst_182 [2] : vector<2x8x8xf32> to vector<2x8xf32>
    %454 = vector.shape_cast %453 : vector<2x8xf32> to vector<2x8x1xf32>
    %455 = vector.broadcast %454 : vector<2x8x1xf32> to vector<2x8x8xf32>
    %456 = arith.subf %452, %455 : vector<2x8x8xf32>
    %457 = math.exp %456 : vector<2x8x8xf32>
    %cst_183 = arith.constant dense<0.000000e+00> : vector<2x8xf32>
    %458 = vector.multi_reduction <add>, %457, %cst_183 [2] : vector<2x8x8xf32> to vector<2x8xf32>
    %459 = vector.shape_cast %458 : vector<2x8xf32> to vector<2x8x1xf32>
    %460 = tpu.reciprocal %459 {approx = true} : vector<2x8x1xf32> -> vector<2x8x1xf32>
    %461 = vector.broadcast %460 : vector<2x8x1xf32> to vector<2x8x8xf32>
    %462 = arith.mulf %457, %461 : vector<2x8x8xf32>
    %463 = arith.truncf %462 : vector<2x8x8xf32> to vector<2x8x8xbf16>
    %464 = arith.truncf %447 : vector<2x8x16xf32> to vector<2x8x16xbf16>
    "tpu.trace_start"() <{level = 10 : i32, message = "nqk,nkd->nqd"}> : () -> ()
    %cst_184 = arith.constant dense<0.000000e+00> : vector<2x8x16xf32>
    %465 = tpu.matmul %463, %464, %cst_184 {dimension_numbers = #tpu.dot_dimension_numbers<[2], [1], [1], [2], [0, 0, 0, 1, 1, 2], [0], [0]>} : vector<2x8x8xbf16>, vector<2x8x16xbf16>, vector<2x8x16xf32> -> vector<2x8x16xf32>
    "tpu.trace_stop"() : () -> ()
    %466 = vector.shape_cast %465 : vector<2x8x16xf32> to vector<16x16xf32>
    %467 = arith.truncf %466 : vector<16x16xf32> to vector<16x16xbf16>
    %468 = vector.extract_strided_slice %404 {offsets = [0, 0, 0], sizes = [1, 16, 32], strides = [1, 1, 1]} : vector<2x16x32xbf16> to vector<1x16x32xbf16>
    %469 = vector.shape_cast %468 : vector<1x16x32xbf16> to vector<16x32xbf16>
    %cst_185 = arith.constant dense<0.000000e+00> : vector<16x32xf32>
    %470 = tpu.matmul %467, %469, %cst_185 {dimension_numbers = #tpu.dot_dimension_numbers<[1], [0], [0], [1], [0, 0, 1, 1], [], []>} : vector<16x16xbf16>, vector<16x32xbf16>, vector<16x32xf32> -> vector<16x32xf32>
    %471 = vector.broadcast %415 : vector<1x32xf32> to vector<16x32xf32>
    %472 = arith.addf %471, %470 : vector<16x32xf32>
    %473 = vector.extract_strided_slice %398 {offsets = [1, 0, 0], sizes = [1, 32, 16], strides = [1, 1, 1]} : vector<2x32x16xbf16> to vector<1x32x16xbf16>
    %474 = vector.shape_cast %473 : vector<1x32x16xbf16> to vector<32x16xbf16>
    %cst_186 = arith.constant dense<0.000000e+00> : vector<16x16xf32>
    %475 = tpu.matmul %421, %474, %cst_186 {dimension_numbers = #tpu.dot_dimension_numbers<[1], [0], [0], [1], [0, 0, 1, 1], [], []>} : vector<16x32xbf16>, vector<32x16xbf16>, vector<16x16xf32> -> vector<16x16xf32>
    %476 = vector.extract_strided_slice %406 {offsets = [0, 1, 0], sizes = [1, 1, 16], strides = [1, 1, 1]} : vector<3x2x16xf32> to vector<1x1x16xf32>
    %477 = vector.shape_cast %476 : vector<1x1x16xf32> to vector<1x16xf32>
    %478 = vector.broadcast %477 : vector<1x16xf32> to vector<16x16xf32>
    %479 = arith.addf %475, %478 : vector<16x16xf32>
    %480 = vector.extract_strided_slice %400 {offsets = [1, 0, 0], sizes = [1, 32, 16], strides = [1, 1, 1]} : vector<2x32x16xbf16> to vector<1x32x16xbf16>
    %481 = vector.shape_cast %480 : vector<1x32x16xbf16> to vector<32x16xbf16>
    %cst_187 = arith.constant dense<0.000000e+00> : vector<16x16xf32>
    %482 = tpu.matmul %421, %481, %cst_187 {dimension_numbers = #tpu.dot_dimension_numbers<[1], [0], [0], [1], [0, 0, 1, 1], [], []>} : vector<16x32xbf16>, vector<32x16xbf16>, vector<16x16xf32> -> vector<16x16xf32>
    %483 = vector.extract_strided_slice %406 {offsets = [1, 1, 0], sizes = [1, 1, 16], strides = [1, 1, 1]} : vector<3x2x16xf32> to vector<1x1x16xf32>
    %484 = vector.shape_cast %483 : vector<1x1x16xf32> to vector<1x16xf32>
    %485 = vector.broadcast %484 : vector<1x16xf32> to vector<16x16xf32>
    %486 = arith.addf %482, %485 : vector<16x16xf32>
    %487 = vector.extract_strided_slice %402 {offsets = [1, 0, 0], sizes = [1, 32, 16], strides = [1, 1, 1]} : vector<2x32x16xbf16> to vector<1x32x16xbf16>
    %488 = vector.shape_cast %487 : vector<1x32x16xbf16> to vector<32x16xbf16>
    %cst_188 = arith.constant dense<0.000000e+00> : vector<16x16xf32>
    %489 = tpu.matmul %421, %488, %cst_188 {dimension_numbers = #tpu.dot_dimension_numbers<[1], [0], [0], [1], [0, 0, 1, 1], [], []>} : vector<16x32xbf16>, vector<32x16xbf16>, vector<16x16xf32> -> vector<16x16xf32>
    %490 = vector.extract_strided_slice %406 {offsets = [2, 1, 0], sizes = [1, 1, 16], strides = [1, 1, 1]} : vector<3x2x16xf32> to vector<1x1x16xf32>
    %491 = vector.shape_cast %490 : vector<1x1x16xf32> to vector<1x16xf32>
    %492 = vector.broadcast %491 : vector<1x16xf32> to vector<16x16xf32>
    %493 = arith.addf %489, %492 : vector<16x16xf32>
    %cst_189 = arith.constant 2.500000e-01 : f32
    %494 = vector.broadcast %cst_189 : f32 to vector<16x16xf32>
    %495 = arith.mulf %479, %494 : vector<16x16xf32>
    %496 = vector.shape_cast %495 : vector<16x16xf32> to vector<2x8x16xf32>
    %497 = vector.shape_cast %486 : vector<16x16xf32> to vector<2x8x16xf32>
    %498 = vector.shape_cast %493 : vector<16x16xf32> to vector<2x8x16xf32>
    %499 = arith.truncf %496 : vector<2x8x16xf32> to vector<2x8x16xbf16>
    %500 = arith.truncf %497 : vector<2x8x16xf32> to vector<2x8x16xbf16>
    "tpu.trace_start"() <{level = 10 : i32, message = "nqd,nkd->nqk"}> : () -> ()
    %cst_190 = arith.constant dense<0.000000e+00> : vector<2x8x8xf32>
    %501 = tpu.matmul %499, %500, %cst_190 {dimension_numbers = #tpu.dot_dimension_numbers<[2], [2], [1], [1], [0, 0, 0, 1, 1, 1], [0], [0]>} : vector<2x8x16xbf16>, vector<2x8x16xbf16>, vector<2x8x8xf32> -> vector<2x8x8xf32>
    "tpu.trace_stop"() : () -> ()
    %502 = vector.broadcast %393 : vector<2x1x8xf32> to vector<2x8x8xf32>
    %503 = arith.addf %501, %502 : vector<2x8x8xf32>
    %cst_191 = arith.constant dense<0xFF800000> : vector<2x8xf32>
    %504 = vector.multi_reduction <maximumf>, %503, %cst_191 [2] : vector<2x8x8xf32> to vector<2x8xf32>
    %505 = vector.shape_cast %504 : vector<2x8xf32> to vector<2x8x1xf32>
    %506 = vector.broadcast %505 : vector<2x8x1xf32> to vector<2x8x8xf32>
    %507 = arith.subf %503, %506 : vector<2x8x8xf32>
    %508 = math.exp %507 : vector<2x8x8xf32>
    %cst_192 = arith.constant dense<0.000000e+00> : vector<2x8xf32>
    %509 = vector.multi_reduction <add>, %508, %cst_192 [2] : vector<2x8x8xf32> to vector<2x8xf32>
    %510 = vector.shape_cast %509 : vector<2x8xf32> to vector<2x8x1xf32>
    %511 = tpu.reciprocal %510 {approx = true} : vector<2x8x1xf32> -> vector<2x8x1xf32>
    %512 = vector.broadcast %511 : vector<2x8x1xf32> to vector<2x8x8xf32>
    %513 = arith.mulf %508, %512 : vector<2x8x8xf32>
    %514 = arith.truncf %513 : vector<2x8x8xf32> to vector<2x8x8xbf16>
    %515 = arith.truncf %498 : vector<2x8x16xf32> to vector<2x8x16xbf16>
    "tpu.trace_start"() <{level = 10 : i32, message = "nqk,nkd->nqd"}> : () -> ()
    %cst_193 = arith.constant dense<0.000000e+00> : vector<2x8x16xf32>
    %516 = tpu.matmul %514, %515, %cst_193 {dimension_numbers = #tpu.dot_dimension_numbers<[2], [1], [1], [2], [0, 0, 0, 1, 1, 2], [0], [0]>} : vector<2x8x8xbf16>, vector<2x8x16xbf16>, vector<2x8x16xf32> -> vector<2x8x16xf32>
    "tpu.trace_stop"() : () -> ()
    %517 = vector.shape_cast %516 : vector<2x8x16xf32> to vector<16x16xf32>
    %518 = arith.truncf %517 : vector<16x16xf32> to vector<16x16xbf16>
    %519 = vector.extract_strided_slice %404 {offsets = [1, 0, 0], sizes = [1, 16, 32], strides = [1, 1, 1]} : vector<2x16x32xbf16> to vector<1x16x32xbf16>
    %520 = vector.shape_cast %519 : vector<1x16x32xbf16> to vector<16x32xbf16>
    %cst_194 = arith.constant dense<0.000000e+00> : vector<16x32xf32>
    %521 = tpu.matmul %518, %520, %cst_194 {dimension_numbers = #tpu.dot_dimension_numbers<[1], [0], [0], [1], [0, 0, 1, 1], [], []>} : vector<16x16xbf16>, vector<16x32xbf16>, vector<16x32xf32> -> vector<16x32xf32>
    %522 = arith.addf %472, %521 : vector<16x32xf32>
    %523 = arith.addf %396, %522 : vector<16x32xf32>
    %cst_195 = arith.constant dense<0.000000e+00> : vector<16xf32>
    %524 = vector.multi_reduction <add>, %523, %cst_195 [1] : vector<16x32xf32> to vector<16xf32>
    %525 = vector.shape_cast %524 : vector<16xf32> to vector<16x1xf32>
    %cst_196 = arith.constant 3.200000e+01 : f32
    %526 = vector.broadcast %cst_196 : f32 to vector<16x1xf32>
    %527 = arith.divf %525, %526 : vector<16x1xf32>
    %528 = vector.broadcast %527 : vector<16x1xf32> to vector<16x32xf32>
    %529 = arith.subf %523, %528 : vector<16x32xf32>
    %530 = arith.mulf %529, %529 : vector<16x32xf32>
    %cst_197 = arith.constant dense<0.000000e+00> : vector<16xf32>
    %531 = vector.multi_reduction <add>, %530, %cst_197 [1] : vector<16x32xf32> to vector<16xf32>
    %532 = vector.shape_cast %531 : vector<16xf32> to vector<16x1xf32>
    %cst_198 = arith.constant 3.200000e+01 : f32
    %533 = vector.broadcast %cst_198 : f32 to vector<16x1xf32>
    %534 = arith.divf %532, %533 : vector<16x1xf32>
    %535 = vector.broadcast %527 : vector<16x1xf32> to vector<16x32xf32>
    %536 = arith.subf %523, %535 : vector<16x32xf32>
    %cst_199 = arith.constant 9.99999974E-6 : f32
    %537 = vector.broadcast %cst_199 : f32 to vector<16x1xf32>
    %538 = arith.addf %534, %537 : vector<16x1xf32>
    %539 = math.rsqrt %538 : vector<16x1xf32>
    %540 = vector.broadcast %539 : vector<16x1xf32> to vector<16x32xf32>
    %541 = arith.mulf %536, %540 : vector<16x32xf32>
    %542 = vector.broadcast %417 : vector<1x32xf32> to vector<16x32xf32>
    %543 = arith.mulf %541, %542 : vector<16x32xf32>
    %544 = vector.broadcast %418 : vector<1x32xf32> to vector<16x32xf32>
    %545 = arith.addf %543, %544 : vector<16x32xf32>
    %546 = arith.truncf %545 : vector<16x32xf32> to vector<16x32xbf16>
    %cst_200 = arith.constant dense<0.000000e+00> : vector<16x64xf32>
    %547 = tpu.matmul %546, %408, %cst_200 {dimension_numbers = #tpu.dot_dimension_numbers<[1], [0], [0], [1], [0, 0, 1, 1], [], []>} : vector<16x32xbf16>, vector<32x64xbf16>, vector<16x64xf32> -> vector<16x64xf32>
    %548 = vector.broadcast %410 : vector<1x64xf32> to vector<16x64xf32>
    %549 = arith.addf %547, %548 : vector<16x64xf32>
    %cst_201 = arith.constant 0.000000e+00 : f32
    %550 = vector.broadcast %cst_201 : f32 to vector<16x64xf32>
    %551 = arith.maximumf %549, %550 : vector<16x64xf32>
    %552 = arith.truncf %551 : vector<16x64xf32> to vector<16x64xbf16>
    %cst_202 = arith.constant dense<0.000000e+00> : vector<16x32xf32>
    %553 = tpu.matmul %552, %412, %cst_202 {dimension_numbers = #tpu.dot_dimension_numbers<[1], [0], [0], [1], [0, 0, 1, 1], [], []>} : vector<16x64xbf16>, vector<64x32xbf16>, vector<16x32xf32> -> vector<16x32xf32>
    %554 = vector.broadcast %416 : vector<1x32xf32> to vector<16x32xf32>
    %555 = arith.addf %553, %554 : vector<16x32xf32>
    %556 = arith.addf %545, %555 : vector<16x32xf32>
    %cst_203 = arith.constant dense<0.000000e+00> : vector<16xf32>
    %557 = vector.multi_reduction <add>, %556, %cst_203 [1] : vector<16x32xf32> to vector<16xf32>
    %558 = vector.shape_cast %557 : vector<16xf32> to vector<16x1xf32>
    %cst_204 = arith.constant 3.200000e+01 : f32
    %559 = vector.broadcast %cst_204 : f32 to vector<16x1xf32>
    %560 = arith.divf %558, %559 : vector<16x1xf32>
    %561 = vector.broadcast %560 : vector<16x1xf32> to vector<16x32xf32>
    %562 = arith.subf %556, %561 : vector<16x32xf32>
    %563 = arith.mulf %562, %562 : vector<16x32xf32>
    %cst_205 = arith.constant dense<0.000000e+00> : vector<16xf32>
    %564 = vector.multi_reduction <add>, %563, %cst_205 [1] : vector<16x32xf32> to vector<16xf32>
    %565 = vector.shape_cast %564 : vector<16xf32> to vector<16x1xf32>
    %cst_206 = arith.constant 3.200000e+01 : f32
    %566 = vector.broadcast %cst_206 : f32 to vector<16x1xf32>
    %567 = arith.divf %565, %566 : vector<16x1xf32>
    %568 = vector.broadcast %560 : vector<16x1xf32> to vector<16x32xf32>
    %569 = arith.subf %556, %568 : vector<16x32xf32>
    %cst_207 = arith.constant 9.99999974E-6 : f32
    %570 = vector.broadcast %cst_207 : f32 to vector<16x1xf32>
    %571 = arith.addf %567, %570 : vector<16x1xf32>
    %572 = math.rsqrt %571 : vector<16x1xf32>
    %573 = vector.broadcast %572 : vector<16x1xf32> to vector<16x32xf32>
    %574 = arith.mulf %569, %573 : vector<16x32xf32>
    %575 = vector.broadcast %419 : vector<1x32xf32> to vector<16x32xf32>
    %576 = arith.mulf %574, %575 : vector<16x32xf32>
    %577 = vector.broadcast %420 : vector<1x32xf32> to vector<16x32xf32>
    %578 = arith.addf %576, %577 : vector<16x32xf32>
    %579 = vector.broadcast %394 : vector<16x1xf32> to vector<16x32xf32>
    %580 = arith.mulf %578, %579 : vector<16x32xf32>
    %c1_208 = arith.constant 1 : index
    %c0_209 = arith.constant 0 : index
    %c0_210 = arith.constant 0 : index
    %c0_211 = arith.constant 0 : index
    %581 = vector.load %arg14[%c1_208, %c0_209, %c0_210, %c0_211] : memref<2x2x32x16xbf16, #tpu.memory_space<vmem>>, vector<1x2x32x16xbf16>
    %582 = vector.shape_cast %581 : vector<1x2x32x16xbf16> to vector<2x32x16xbf16>
    %c1_212 = arith.constant 1 : index
    %c0_213 = arith.constant 0 : index
    %c0_214 = arith.constant 0 : index
    %c0_215 = arith.constant 0 : index
    %583 = vector.load %arg15[%c1_212, %c0_213, %c0_214, %c0_215] : memref<2x2x32x16xbf16, #tpu.memory_space<vmem>>, vector<1x2x32x16xbf16>
    %584 = vector.shape_cast %583 : vector<1x2x32x16xbf16> to vector<2x32x16xbf16>
    %c1_216 = arith.constant 1 : index
    %c0_217 = arith.constant 0 : index
    %c0_218 = arith.constant 0 : index
    %c0_219 = arith.constant 0 : index
    %585 = vector.load %arg16[%c1_216, %c0_217, %c0_218, %c0_219] : memref<2x2x32x16xbf16, #tpu.memory_space<vmem>>, vector<1x2x32x16xbf16>
    %586 = vector.shape_cast %585 : vector<1x2x32x16xbf16> to vector<2x32x16xbf16>
    %c1_220 = arith.constant 1 : index
    %c0_221 = arith.constant 0 : index
    %c0_222 = arith.constant 0 : index
    %c0_223 = arith.constant 0 : index
    %587 = vector.load %arg18[%c1_220, %c0_221, %c0_222, %c0_223] : memref<2x2x16x32xbf16, #tpu.memory_space<vmem>>, vector<1x2x16x32xbf16>
    %588 = vector.shape_cast %587 : vector<1x2x16x32xbf16> to vector<2x16x32xbf16>
    %c1_224 = arith.constant 1 : index
    %c0_225 = arith.constant 0 : index
    %c0_226 = arith.constant 0 : index
    %c0_227 = arith.constant 0 : index
    %589 = vector.load %arg17[%c1_224, %c0_225, %c0_226, %c0_227] : memref<2x3x2x16xf32, #tpu.memory_space<vmem>>, vector<1x3x2x16xf32>
    %590 = vector.shape_cast %589 : vector<1x3x2x16xf32> to vector<3x2x16xf32>
    %c1_228 = arith.constant 1 : index
    %c0_229 = arith.constant 0 : index
    %c0_230 = arith.constant 0 : index
    %591 = vector.load %arg19[%c1_228, %c0_229, %c0_230] : memref<2x32x64xbf16, #tpu.memory_space<vmem>>, vector<1x32x64xbf16>
    %592 = vector.shape_cast %591 : vector<1x32x64xbf16> to vector<32x64xbf16>
    %c1_231 = arith.constant 1 : index
    %c0_232 = arith.constant 0 : index
    %c0_233 = arith.constant 0 : index
    %593 = vector.load %arg20[%c1_231, %c0_232, %c0_233] : memref<2x1x64xf32, #tpu.memory_space<vmem>>, vector<1x1x64xf32>
    %594 = vector.shape_cast %593 : vector<1x1x64xf32> to vector<1x64xf32>
    %c1_234 = arith.constant 1 : index
    %c0_235 = arith.constant 0 : index
    %c0_236 = arith.constant 0 : index
    %595 = vector.load %arg21[%c1_234, %c0_235, %c0_236] : memref<2x64x32xbf16, #tpu.memory_space<vmem>>, vector<1x64x32xbf16>
    %596 = vector.shape_cast %595 : vector<1x64x32xbf16> to vector<64x32xbf16>
    %c1_237 = arith.constant 1 : index
    %c0_238 = arith.constant 0 : index
    %c0_239 = arith.constant 0 : index
    %597 = vector.load %arg22[%c1_237, %c0_238, %c0_239] : memref<2x6x32xf32, #tpu.memory_space<vmem>>, vector<1x6x32xf32>
    %598 = vector.shape_cast %597 : vector<1x6x32xf32> to vector<6x32xf32>
    %599 = vector.extract_strided_slice %598 {offsets = [0, 0], sizes = [1, 32], strides = [1, 1]} : vector<6x32xf32> to vector<1x32xf32>
    %600 = vector.extract_strided_slice %598 {offsets = [1, 0], sizes = [1, 32], strides = [1, 1]} : vector<6x32xf32> to vector<1x32xf32>
    %601 = vector.extract_strided_slice %598 {offsets = [2, 0], sizes = [1, 32], strides = [1, 1]} : vector<6x32xf32> to vector<1x32xf32>
    %602 = vector.extract_strided_slice %598 {offsets = [3, 0], sizes = [1, 32], strides = [1, 1]} : vector<6x32xf32> to vector<1x32xf32>
    %603 = vector.extract_strided_slice %598 {offsets = [4, 0], sizes = [1, 32], strides = [1, 1]} : vector<6x32xf32> to vector<1x32xf32>
    %604 = vector.extract_strided_slice %598 {offsets = [5, 0], sizes = [1, 32], strides = [1, 1]} : vector<6x32xf32> to vector<1x32xf32>
    %605 = arith.truncf %580 : vector<16x32xf32> to vector<16x32xbf16>
    %606 = vector.extract_strided_slice %582 {offsets = [0, 0, 0], sizes = [1, 32, 16], strides = [1, 1, 1]} : vector<2x32x16xbf16> to vector<1x32x16xbf16>
    %607 = vector.shape_cast %606 : vector<1x32x16xbf16> to vector<32x16xbf16>
    %cst_240 = arith.constant dense<0.000000e+00> : vector<16x16xf32>
    %608 = tpu.matmul %605, %607, %cst_240 {dimension_numbers = #tpu.dot_dimension_numbers<[1], [0], [0], [1], [0, 0, 1, 1], [], []>} : vector<16x32xbf16>, vector<32x16xbf16>, vector<16x16xf32> -> vector<16x16xf32>
    %609 = vector.extract_strided_slice %590 {offsets = [0, 0, 0], sizes = [1, 1, 16], strides = [1, 1, 1]} : vector<3x2x16xf32> to vector<1x1x16xf32>
    %610 = vector.shape_cast %609 : vector<1x1x16xf32> to vector<1x16xf32>
    %611 = vector.broadcast %610 : vector<1x16xf32> to vector<16x16xf32>
    %612 = arith.addf %608, %611 : vector<16x16xf32>
    %613 = vector.extract_strided_slice %584 {offsets = [0, 0, 0], sizes = [1, 32, 16], strides = [1, 1, 1]} : vector<2x32x16xbf16> to vector<1x32x16xbf16>
    %614 = vector.shape_cast %613 : vector<1x32x16xbf16> to vector<32x16xbf16>
    %cst_241 = arith.constant dense<0.000000e+00> : vector<16x16xf32>
    %615 = tpu.matmul %605, %614, %cst_241 {dimension_numbers = #tpu.dot_dimension_numbers<[1], [0], [0], [1], [0, 0, 1, 1], [], []>} : vector<16x32xbf16>, vector<32x16xbf16>, vector<16x16xf32> -> vector<16x16xf32>
    %616 = vector.extract_strided_slice %590 {offsets = [1, 0, 0], sizes = [1, 1, 16], strides = [1, 1, 1]} : vector<3x2x16xf32> to vector<1x1x16xf32>
    %617 = vector.shape_cast %616 : vector<1x1x16xf32> to vector<1x16xf32>
    %618 = vector.broadcast %617 : vector<1x16xf32> to vector<16x16xf32>
    %619 = arith.addf %615, %618 : vector<16x16xf32>
    %620 = vector.extract_strided_slice %586 {offsets = [0, 0, 0], sizes = [1, 32, 16], strides = [1, 1, 1]} : vector<2x32x16xbf16> to vector<1x32x16xbf16>
    %621 = vector.shape_cast %620 : vector<1x32x16xbf16> to vector<32x16xbf16>
    %cst_242 = arith.constant dense<0.000000e+00> : vector<16x16xf32>
    %622 = tpu.matmul %605, %621, %cst_242 {dimension_numbers = #tpu.dot_dimension_numbers<[1], [0], [0], [1], [0, 0, 1, 1], [], []>} : vector<16x32xbf16>, vector<32x16xbf16>, vector<16x16xf32> -> vector<16x16xf32>
    %623 = vector.extract_strided_slice %590 {offsets = [2, 0, 0], sizes = [1, 1, 16], strides = [1, 1, 1]} : vector<3x2x16xf32> to vector<1x1x16xf32>
    %624 = vector.shape_cast %623 : vector<1x1x16xf32> to vector<1x16xf32>
    %625 = vector.broadcast %624 : vector<1x16xf32> to vector<16x16xf32>
    %626 = arith.addf %622, %625 : vector<16x16xf32>
    %cst_243 = arith.constant 2.500000e-01 : f32
    %627 = vector.broadcast %cst_243 : f32 to vector<16x16xf32>
    %628 = arith.mulf %612, %627 : vector<16x16xf32>
    %629 = vector.shape_cast %628 : vector<16x16xf32> to vector<2x8x16xf32>
    %630 = vector.shape_cast %619 : vector<16x16xf32> to vector<2x8x16xf32>
    %631 = vector.shape_cast %626 : vector<16x16xf32> to vector<2x8x16xf32>
    %632 = arith.truncf %629 : vector<2x8x16xf32> to vector<2x8x16xbf16>
    %633 = arith.truncf %630 : vector<2x8x16xf32> to vector<2x8x16xbf16>
    "tpu.trace_start"() <{level = 10 : i32, message = "nqd,nkd->nqk"}> : () -> ()
    %cst_244 = arith.constant dense<0.000000e+00> : vector<2x8x8xf32>
    %634 = tpu.matmul %632, %633, %cst_244 {dimension_numbers = #tpu.dot_dimension_numbers<[2], [2], [1], [1], [0, 0, 0, 1, 1, 1], [0], [0]>} : vector<2x8x16xbf16>, vector<2x8x16xbf16>, vector<2x8x8xf32> -> vector<2x8x8xf32>
    "tpu.trace_stop"() : () -> ()
    %635 = vector.broadcast %393 : vector<2x1x8xf32> to vector<2x8x8xf32>
    %636 = arith.addf %634, %635 : vector<2x8x8xf32>
    %cst_245 = arith.constant dense<0xFF800000> : vector<2x8xf32>
    %637 = vector.multi_reduction <maximumf>, %636, %cst_245 [2] : vector<2x8x8xf32> to vector<2x8xf32>
    %638 = vector.shape_cast %637 : vector<2x8xf32> to vector<2x8x1xf32>
    %639 = vector.broadcast %638 : vector<2x8x1xf32> to vector<2x8x8xf32>
    %640 = arith.subf %636, %639 : vector<2x8x8xf32>
    %641 = math.exp %640 : vector<2x8x8xf32>
    %cst_246 = arith.constant dense<0.000000e+00> : vector<2x8xf32>
    %642 = vector.multi_reduction <add>, %641, %cst_246 [2] : vector<2x8x8xf32> to vector<2x8xf32>
    %643 = vector.shape_cast %642 : vector<2x8xf32> to vector<2x8x1xf32>
    %644 = tpu.reciprocal %643 {approx = true} : vector<2x8x1xf32> -> vector<2x8x1xf32>
    %645 = vector.broadcast %644 : vector<2x8x1xf32> to vector<2x8x8xf32>
    %646 = arith.mulf %641, %645 : vector<2x8x8xf32>
    %647 = arith.truncf %646 : vector<2x8x8xf32> to vector<2x8x8xbf16>
    %648 = arith.truncf %631 : vector<2x8x16xf32> to vector<2x8x16xbf16>
    "tpu.trace_start"() <{level = 10 : i32, message = "nqk,nkd->nqd"}> : () -> ()
    %cst_247 = arith.constant dense<0.000000e+00> : vector<2x8x16xf32>
    %649 = tpu.matmul %647, %648, %cst_247 {dimension_numbers = #tpu.dot_dimension_numbers<[2], [1], [1], [2], [0, 0, 0, 1, 1, 2], [0], [0]>} : vector<2x8x8xbf16>, vector<2x8x16xbf16>, vector<2x8x16xf32> -> vector<2x8x16xf32>
    "tpu.trace_stop"() : () -> ()
    %650 = vector.shape_cast %649 : vector<2x8x16xf32> to vector<16x16xf32>
    %651 = arith.truncf %650 : vector<16x16xf32> to vector<16x16xbf16>
    %652 = vector.extract_strided_slice %588 {offsets = [0, 0, 0], sizes = [1, 16, 32], strides = [1, 1, 1]} : vector<2x16x32xbf16> to vector<1x16x32xbf16>
    %653 = vector.shape_cast %652 : vector<1x16x32xbf16> to vector<16x32xbf16>
    %cst_248 = arith.constant dense<0.000000e+00> : vector<16x32xf32>
    %654 = tpu.matmul %651, %653, %cst_248 {dimension_numbers = #tpu.dot_dimension_numbers<[1], [0], [0], [1], [0, 0, 1, 1], [], []>} : vector<16x16xbf16>, vector<16x32xbf16>, vector<16x32xf32> -> vector<16x32xf32>
    %655 = vector.broadcast %599 : vector<1x32xf32> to vector<16x32xf32>
    %656 = arith.addf %655, %654 : vector<16x32xf32>
    %657 = vector.extract_strided_slice %582 {offsets = [1, 0, 0], sizes = [1, 32, 16], strides = [1, 1, 1]} : vector<2x32x16xbf16> to vector<1x32x16xbf16>
    %658 = vector.shape_cast %657 : vector<1x32x16xbf16> to vector<32x16xbf16>
    %cst_249 = arith.constant dense<0.000000e+00> : vector<16x16xf32>
    %659 = tpu.matmul %605, %658, %cst_249 {dimension_numbers = #tpu.dot_dimension_numbers<[1], [0], [0], [1], [0, 0, 1, 1], [], []>} : vector<16x32xbf16>, vector<32x16xbf16>, vector<16x16xf32> -> vector<16x16xf32>
    %660 = vector.extract_strided_slice %590 {offsets = [0, 1, 0], sizes = [1, 1, 16], strides = [1, 1, 1]} : vector<3x2x16xf32> to vector<1x1x16xf32>
    %661 = vector.shape_cast %660 : vector<1x1x16xf32> to vector<1x16xf32>
    %662 = vector.broadcast %661 : vector<1x16xf32> to vector<16x16xf32>
    %663 = arith.addf %659, %662 : vector<16x16xf32>
    %664 = vector.extract_strided_slice %584 {offsets = [1, 0, 0], sizes = [1, 32, 16], strides = [1, 1, 1]} : vector<2x32x16xbf16> to vector<1x32x16xbf16>
    %665 = vector.shape_cast %664 : vector<1x32x16xbf16> to vector<32x16xbf16>
    %cst_250 = arith.constant dense<0.000000e+00> : vector<16x16xf32>
    %666 = tpu.matmul %605, %665, %cst_250 {dimension_numbers = #tpu.dot_dimension_numbers<[1], [0], [0], [1], [0, 0, 1, 1], [], []>} : vector<16x32xbf16>, vector<32x16xbf16>, vector<16x16xf32> -> vector<16x16xf32>
    %667 = vector.extract_strided_slice %590 {offsets = [1, 1, 0], sizes = [1, 1, 16], strides = [1, 1, 1]} : vector<3x2x16xf32> to vector<1x1x16xf32>
    %668 = vector.shape_cast %667 : vector<1x1x16xf32> to vector<1x16xf32>
    %669 = vector.broadcast %668 : vector<1x16xf32> to vector<16x16xf32>
    %670 = arith.addf %666, %669 : vector<16x16xf32>
    %671 = vector.extract_strided_slice %586 {offsets = [1, 0, 0], sizes = [1, 32, 16], strides = [1, 1, 1]} : vector<2x32x16xbf16> to vector<1x32x16xbf16>
    %672 = vector.shape_cast %671 : vector<1x32x16xbf16> to vector<32x16xbf16>
    %cst_251 = arith.constant dense<0.000000e+00> : vector<16x16xf32>
    %673 = tpu.matmul %605, %672, %cst_251 {dimension_numbers = #tpu.dot_dimension_numbers<[1], [0], [0], [1], [0, 0, 1, 1], [], []>} : vector<16x32xbf16>, vector<32x16xbf16>, vector<16x16xf32> -> vector<16x16xf32>
    %674 = vector.extract_strided_slice %590 {offsets = [2, 1, 0], sizes = [1, 1, 16], strides = [1, 1, 1]} : vector<3x2x16xf32> to vector<1x1x16xf32>
    %675 = vector.shape_cast %674 : vector<1x1x16xf32> to vector<1x16xf32>
    %676 = vector.broadcast %675 : vector<1x16xf32> to vector<16x16xf32>
    %677 = arith.addf %673, %676 : vector<16x16xf32>
    %cst_252 = arith.constant 2.500000e-01 : f32
    %678 = vector.broadcast %cst_252 : f32 to vector<16x16xf32>
    %679 = arith.mulf %663, %678 : vector<16x16xf32>
    %680 = vector.shape_cast %679 : vector<16x16xf32> to vector<2x8x16xf32>
    %681 = vector.shape_cast %670 : vector<16x16xf32> to vector<2x8x16xf32>
    %682 = vector.shape_cast %677 : vector<16x16xf32> to vector<2x8x16xf32>
    %683 = arith.truncf %680 : vector<2x8x16xf32> to vector<2x8x16xbf16>
    %684 = arith.truncf %681 : vector<2x8x16xf32> to vector<2x8x16xbf16>
    "tpu.trace_start"() <{level = 10 : i32, message = "nqd,nkd->nqk"}> : () -> ()
    %cst_253 = arith.constant dense<0.000000e+00> : vector<2x8x8xf32>
    %685 = tpu.matmul %683, %684, %cst_253 {dimension_numbers = #tpu.dot_dimension_numbers<[2], [2], [1], [1], [0, 0, 0, 1, 1, 1], [0], [0]>} : vector<2x8x16xbf16>, vector<2x8x16xbf16>, vector<2x8x8xf32> -> vector<2x8x8xf32>
    "tpu.trace_stop"() : () -> ()
    %686 = vector.broadcast %393 : vector<2x1x8xf32> to vector<2x8x8xf32>
    %687 = arith.addf %685, %686 : vector<2x8x8xf32>
    %cst_254 = arith.constant dense<0xFF800000> : vector<2x8xf32>
    %688 = vector.multi_reduction <maximumf>, %687, %cst_254 [2] : vector<2x8x8xf32> to vector<2x8xf32>
    %689 = vector.shape_cast %688 : vector<2x8xf32> to vector<2x8x1xf32>
    %690 = vector.broadcast %689 : vector<2x8x1xf32> to vector<2x8x8xf32>
    %691 = arith.subf %687, %690 : vector<2x8x8xf32>
    %692 = math.exp %691 : vector<2x8x8xf32>
    %cst_255 = arith.constant dense<0.000000e+00> : vector<2x8xf32>
    %693 = vector.multi_reduction <add>, %692, %cst_255 [2] : vector<2x8x8xf32> to vector<2x8xf32>
    %694 = vector.shape_cast %693 : vector<2x8xf32> to vector<2x8x1xf32>
    %695 = tpu.reciprocal %694 {approx = true} : vector<2x8x1xf32> -> vector<2x8x1xf32>
    %696 = vector.broadcast %695 : vector<2x8x1xf32> to vector<2x8x8xf32>
    %697 = arith.mulf %692, %696 : vector<2x8x8xf32>
    %698 = arith.truncf %697 : vector<2x8x8xf32> to vector<2x8x8xbf16>
    %699 = arith.truncf %682 : vector<2x8x16xf32> to vector<2x8x16xbf16>
    "tpu.trace_start"() <{level = 10 : i32, message = "nqk,nkd->nqd"}> : () -> ()
    %cst_256 = arith.constant dense<0.000000e+00> : vector<2x8x16xf32>
    %700 = tpu.matmul %698, %699, %cst_256 {dimension_numbers = #tpu.dot_dimension_numbers<[2], [1], [1], [2], [0, 0, 0, 1, 1, 2], [0], [0]>} : vector<2x8x8xbf16>, vector<2x8x16xbf16>, vector<2x8x16xf32> -> vector<2x8x16xf32>
    "tpu.trace_stop"() : () -> ()
    %701 = vector.shape_cast %700 : vector<2x8x16xf32> to vector<16x16xf32>
    %702 = arith.truncf %701 : vector<16x16xf32> to vector<16x16xbf16>
    %703 = vector.extract_strided_slice %588 {offsets = [1, 0, 0], sizes = [1, 16, 32], strides = [1, 1, 1]} : vector<2x16x32xbf16> to vector<1x16x32xbf16>
    %704 = vector.shape_cast %703 : vector<1x16x32xbf16> to vector<16x32xbf16>
    %cst_257 = arith.constant dense<0.000000e+00> : vector<16x32xf32>
    %705 = tpu.matmul %702, %704, %cst_257 {dimension_numbers = #tpu.dot_dimension_numbers<[1], [0], [0], [1], [0, 0, 1, 1], [], []>} : vector<16x16xbf16>, vector<16x32xbf16>, vector<16x32xf32> -> vector<16x32xf32>
    %706 = arith.addf %656, %705 : vector<16x32xf32>
    %707 = arith.addf %580, %706 : vector<16x32xf32>
    %cst_258 = arith.constant dense<0.000000e+00> : vector<16xf32>
    %708 = vector.multi_reduction <add>, %707, %cst_258 [1] : vector<16x32xf32> to vector<16xf32>
    %709 = vector.shape_cast %708 : vector<16xf32> to vector<16x1xf32>
    %cst_259 = arith.constant 3.200000e+01 : f32
    %710 = vector.broadcast %cst_259 : f32 to vector<16x1xf32>
    %711 = arith.divf %709, %710 : vector<16x1xf32>
    %712 = vector.broadcast %711 : vector<16x1xf32> to vector<16x32xf32>
    %713 = arith.subf %707, %712 : vector<16x32xf32>
    %714 = arith.mulf %713, %713 : vector<16x32xf32>
    %cst_260 = arith.constant dense<0.000000e+00> : vector<16xf32>
    %715 = vector.multi_reduction <add>, %714, %cst_260 [1] : vector<16x32xf32> to vector<16xf32>
    %716 = vector.shape_cast %715 : vector<16xf32> to vector<16x1xf32>
    %cst_261 = arith.constant 3.200000e+01 : f32
    %717 = vector.broadcast %cst_261 : f32 to vector<16x1xf32>
    %718 = arith.divf %716, %717 : vector<16x1xf32>
    %719 = vector.broadcast %711 : vector<16x1xf32> to vector<16x32xf32>
    %720 = arith.subf %707, %719 : vector<16x32xf32>
    %cst_262 = arith.constant 9.99999974E-6 : f32
    %721 = vector.broadcast %cst_262 : f32 to vector<16x1xf32>
    %722 = arith.addf %718, %721 : vector<16x1xf32>
    %723 = math.rsqrt %722 : vector<16x1xf32>
    %724 = vector.broadcast %723 : vector<16x1xf32> to vector<16x32xf32>
    %725 = arith.mulf %720, %724 : vector<16x32xf32>
    %726 = vector.broadcast %601 : vector<1x32xf32> to vector<16x32xf32>
    %727 = arith.mulf %725, %726 : vector<16x32xf32>
    %728 = vector.broadcast %602 : vector<1x32xf32> to vector<16x32xf32>
    %729 = arith.addf %727, %728 : vector<16x32xf32>
    %730 = arith.truncf %729 : vector<16x32xf32> to vector<16x32xbf16>
    %cst_263 = arith.constant dense<0.000000e+00> : vector<16x64xf32>
    %731 = tpu.matmul %730, %592, %cst_263 {dimension_numbers = #tpu.dot_dimension_numbers<[1], [0], [0], [1], [0, 0, 1, 1], [], []>} : vector<16x32xbf16>, vector<32x64xbf16>, vector<16x64xf32> -> vector<16x64xf32>
    %732 = vector.broadcast %594 : vector<1x64xf32> to vector<16x64xf32>
    %733 = arith.addf %731, %732 : vector<16x64xf32>
    %cst_264 = arith.constant 0.000000e+00 : f32
    %734 = vector.broadcast %cst_264 : f32 to vector<16x64xf32>
    %735 = arith.maximumf %733, %734 : vector<16x64xf32>
    %736 = arith.truncf %735 : vector<16x64xf32> to vector<16x64xbf16>
    %cst_265 = arith.constant dense<0.000000e+00> : vector<16x32xf32>
    %737 = tpu.matmul %736, %596, %cst_265 {dimension_numbers = #tpu.dot_dimension_numbers<[1], [0], [0], [1], [0, 0, 1, 1], [], []>} : vector<16x64xbf16>, vector<64x32xbf16>, vector<16x32xf32> -> vector<16x32xf32>
    %738 = vector.broadcast %600 : vector<1x32xf32> to vector<16x32xf32>
    %739 = arith.addf %737, %738 : vector<16x32xf32>
    %740 = arith.addf %729, %739 : vector<16x32xf32>
    %cst_266 = arith.constant dense<0.000000e+00> : vector<16xf32>
    %741 = vector.multi_reduction <add>, %740, %cst_266 [1] : vector<16x32xf32> to vector<16xf32>
    %742 = vector.shape_cast %741 : vector<16xf32> to vector<16x1xf32>
    %cst_267 = arith.constant 3.200000e+01 : f32
    %743 = vector.broadcast %cst_267 : f32 to vector<16x1xf32>
    %744 = arith.divf %742, %743 : vector<16x1xf32>
    %745 = vector.broadcast %744 : vector<16x1xf32> to vector<16x32xf32>
    %746 = arith.subf %740, %745 : vector<16x32xf32>
    %747 = arith.mulf %746, %746 : vector<16x32xf32>
    %cst_268 = arith.constant dense<0.000000e+00> : vector<16xf32>
    %748 = vector.multi_reduction <add>, %747, %cst_268 [1] : vector<16x32xf32> to vector<16xf32>
    %749 = vector.shape_cast %748 : vector<16xf32> to vector<16x1xf32>
    %cst_269 = arith.constant 3.200000e+01 : f32
    %750 = vector.broadcast %cst_269 : f32 to vector<16x1xf32>
    %751 = arith.divf %749, %750 : vector<16x1xf32>
    %752 = vector.broadcast %744 : vector<16x1xf32> to vector<16x32xf32>
    %753 = arith.subf %740, %752 : vector<16x32xf32>
    %cst_270 = arith.constant 9.99999974E-6 : f32
    %754 = vector.broadcast %cst_270 : f32 to vector<16x1xf32>
    %755 = arith.addf %751, %754 : vector<16x1xf32>
    %756 = math.rsqrt %755 : vector<16x1xf32>
    %757 = vector.broadcast %756 : vector<16x1xf32> to vector<16x32xf32>
    %758 = arith.mulf %753, %757 : vector<16x32xf32>
    %759 = vector.broadcast %603 : vector<1x32xf32> to vector<16x32xf32>
    %760 = arith.mulf %758, %759 : vector<16x32xf32>
    %761 = vector.broadcast %604 : vector<1x32xf32> to vector<16x32xf32>
    %762 = arith.addf %760, %761 : vector<16x32xf32>
    %763 = vector.broadcast %394 : vector<16x1xf32> to vector<16x32xf32>
    %764 = arith.mulf %762, %763 : vector<16x32xf32>
    %765 = vector.shape_cast %764 : vector<16x32xf32> to vector<2x8x32xf32>
    %c0_271 = arith.constant 0 : index
    %c0_272 = arith.constant 0 : index
    %c0_273 = arith.constant 0 : index
    %766 = vector.load %arg23[%c0_271, %c0_272, %c0_273] : memref<2x8x32xf32, #tpu.memory_space<vmem>>, vector<2x8x32xf32>
    tpu.vector_store %arg23[%c0_271, %c0_272, %c0_273], %765 {strides = array<i32>} : memref<2x8x32xf32, #tpu.memory_space<vmem>>, vector<2x8x32xf32>,
    return
  }
}

</mosaic_0001>

<llo_original>
// kernel: mem_net_forward.1
$region0: #{mem_net_forward.1}
  #allocation0 [shape = 'u32[]', space=smem, size = 0x4, offset = 0x4, fixed_abs, tag = 'smem constant byte address 0x4 - core index']
  #allocation1 [shape = 'u32[72,128]{1,0:T(1,128)}', space=vmem, size = 0x9000, scoped, tag = 'internal scratch']
  %s0 = inlined_call_operand.vmem [shape: f32[16,8,32], index: 0, kind: input, shape index: {}]
  %s1 = inlined_call_operand.vmem [shape: f32[16,1,8], index: 1, kind: input, shape index: {}]
  %s2 = inlined_call_operand.vmem [shape: f32[128,1], index: 2, kind: input, shape index: {}]
  %s3 = inlined_call_operand.vmem [shape: f32[2,1,8], index: 3, kind: input, shape index: {}]
  %s4 = inlined_call_operand.vmem [shape: f32[16,1], index: 4, kind: input, shape index: {}]
  %s5 = inlined_call_operand.vmem [shape: bf16[2,2,32,16], index: 5, kind: input, shape index: {}]
  %s6 = inlined_call_operand.vmem [shape: bf16[2,2,32,16], index: 6, kind: input, shape index: {}]
  %s7 = inlined_call_operand.vmem [shape: bf16[2,2,32,16], index: 7, kind: input, shape index: {}]
  %s8 = inlined_call_operand.vmem [shape: f32[2,3,2,16], index: 8, kind: input, shape index: {}]
  %s9 = inlined_call_operand.vmem [shape: bf16[2,2,16,32], index: 9, kind: input, shape index: {}]
  %s10 = inlined_call_operand.vmem [shape: bf16[2,32,64], index: 10, kind: input, shape index: {}]
  %s11 = inlined_call_operand.vmem [shape: f32[2,1,64], index: 11, kind: input, shape index: {}]
  %s12 = inlined_call_operand.vmem [shape: bf16[2,64,32], index: 12, kind: input, shape index: {}]
  %s13 = inlined_call_operand.vmem [shape: f32[2,6,32], index: 13, kind: input, shape index: {}]
  %s14 = inlined_call_operand.vmem [shape: bf16[2,2,32,16], index: 14, kind: input, shape index: {}]
  %s15 = inlined_call_operand.vmem [shape: bf16[2,2,32,16], index: 15, kind: input, shape index: {}]
  %s16 = inlined_call_operand.vmem [shape: bf16[2,2,32,16], index: 16, kind: input, shape index: {}]
  %s17 = inlined_call_operand.vmem [shape: f32[2,3,2,16], index: 17, kind: input, shape index: {}]
  %s18 = inlined_call_operand.vmem [shape: bf16[2,2,16,32], index: 18, kind: input, shape index: {}]
  %s19 = inlined_call_operand.vmem [shape: bf16[2,32,64], index: 19, kind: input, shape index: {}]
  %s20 = inlined_call_operand.vmem [shape: f32[2,1,64], index: 20, kind: input, shape index: {}]
  %s21 = inlined_call_operand.vmem [shape: bf16[2,64,32], index: 21, kind: input, shape index: {}]
  %s22 = inlined_call_operand.vmem [shape: f32[2,6,32], index: 22, kind: input, shape index: {}]
  %s23 = inlined_call_operand.vmem [shape: f32[2,8,32], index: 23, kind: output, shape index: {0}]
  %s24 = inlined_call_operand.vmem [shape: f32[2,32], index: 24, kind: output, shape index: {1}]
  %25 = xla_tuple %s23, %s24
  %s26 = sld [smem:[#allocation0]]
  $region110: #{mem_net_forward.1} parent=0
    _
  %s28 = ssub.s32 1, %s26
  %s29 = scalar_select 0, %s28, %s26
  // Predicated region
  $region2: #{mem_net_forward.1} parent=0 // pred_check
    _
  $region3: #{mem_net_forward.1} parent=0 // pred_check_branch
    %31 = sbr.rel (0) target = $region5
  $region4: #{mem_net_forward.1} parent=0 // pred_region
    _
  $region5: #{mem_net_forward.1} parent=0 // pred_fallthru
    _
  // Predicated region
  $region6: #{mem_net_forward.1} parent=0 // pred_check
    _
  $region7: #{mem_net_forward.1} parent=0 // pred_check_branch
    %33 = sbr.rel (0) target = $region9
  $region8: #{mem_net_forward.1} parent=0 // pred_region
    _
  $region9: #{mem_net_forward.1} parent=0 // pred_fallthru
    _
  // Predicated region
  $region10: #{mem_net_forward.1} parent=0 // pred_check
    _
  $region11: #{mem_net_forward.1} parent=0 // pred_check_branch
    %35 = sbr.rel (0) target = $region13
  $region12: #{mem_net_forward.1} parent=0 // pred_region
    _
  $region13: #{mem_net_forward.1} parent=0 // pred_fallthru
    _
  // Predicated region
  $region14: #{mem_net_forward.1} parent=0 // pred_check
    _
  $region15: #{mem_net_forward.1} parent=0 // pred_check_branch
    %37 = sbr.rel (0) target = $region17
  $region16: #{mem_net_forward.1} parent=0 // pred_region
    _
  $region17: #{mem_net_forward.1} parent=0 // pred_fallthru
    _
  // Predicated region
  $region18: #{mem_net_forward.1} parent=0 // pred_check
    _
  $region19: #{mem_net_forward.1} parent=0 // pred_check_branch
    %39 = sbr.rel (0) target = $region21
  $region20: #{mem_net_forward.1} parent=0 // pred_region
    _
  $region21: #{mem_net_forward.1} parent=0 // pred_fallthru
    _
  // Predicated region
  $region22: #{mem_net_forward.1} parent=0 // pred_check
    _
  $region23: #{mem_net_forward.1} parent=0 // pred_check_branch
    %41 = sbr.rel (0) target = $region25
  $region24: #{mem_net_forward.1} parent=0 // pred_region
    _
  $region25: #{mem_net_forward.1} parent=0 // pred_fallthru
    _
  // Predicated region
  $region26: #{mem_net_forward.1} parent=0 // pred_check
    _
  $region27: #{mem_net_forward.1} parent=0 // pred_check_branch
    %43 = sbr.rel (0) target = $region29
  $region28: #{mem_net_forward.1} parent=0 // pred_region
    _
  $region29: #{mem_net_forward.1} parent=0 // pred_fallthru
    _
  // Predicated region
  $region30: #{mem_net_forward.1} parent=0 // pred_check
    _
  $region31: #{mem_net_forward.1} parent=0 // pred_check_branch
    %45 = sbr.rel (0) target = $region33
  $region32: #{mem_net_forward.1} parent=0 // pred_region
    _
  $region33: #{mem_net_forward.1} parent=0 // pred_fallthru
    _
  // Predicated region
  $region34: #{mem_net_forward.1} parent=0 // pred_check
    _
  $region35: #{mem_net_forward.1} parent=0 // pred_check_branch
    %47 = sbr.rel (0) target = $region37
  $region36: #{mem_net_forward.1} parent=0 // pred_region
    _
  $region37: #{mem_net_forward.1} parent=0 // pred_fallthru
    _
  // Predicated region
  $region38: #{mem_net_forward.1} parent=0 // pred_check
    _
  $region39: #{mem_net_forward.1} parent=0 // pred_check_branch
    %49 = sbr.rel (0) target = $region41
  $region40: #{mem_net_forward.1} parent=0 // pred_region
    _
  $region41: #{mem_net_forward.1} parent=0 // pred_fallthru
    _
  // Predicated region
  $region42: #{mem_net_forward.1} parent=0 // pred_check
    _
  $region43: #{mem_net_forward.1} parent=0 // pred_check_branch
    %51 = sbr.rel (0) target = $region45
  $region44: #{mem_net_forward.1} parent=0 // pred_region
    _
  $region45: #{mem_net_forward.1} parent=0 // pred_fallthru
    _
  // Predicated region
  $region46: #{mem_net_forward.1} parent=0 // pred_check
    _
  $region47: #{mem_net_forward.1} parent=0 // pred_check_branch
    %53 = sbr.rel (0) target = $region49
  $region48: #{mem_net_forward.1} parent=0 // pred_region
    _
  $region49: #{mem_net_forward.1} parent=0 // pred_fallthru
    _
  // Predicated region
  $region50: #{mem_net_forward.1} parent=0 // pred_check
    _
  $region51: #{mem_net_forward.1} parent=0 // pred_check_branch
    %55 = sbr.rel (0) target = $region53
  $region52: #{mem_net_forward.1} parent=0 // pred_region
    _
  $region53: #{mem_net_forward.1} parent=0 // pred_fallthru
    _
  // Predicated region
  $region54: #{mem_net_forward.1} parent=0 // pred_check
    _
  $region55: #{mem_net_forward.1} parent=0 // pred_check_branch
    %57 = sbr.rel (0) target = $region57
  $region56: #{mem_net_forward.1} parent=0 // pred_region
    _
  $region57: #{mem_net_forward.1} parent=0 // pred_fallthru
    _
  // Predicated region
  $region58: #{mem_net_forward.1} parent=0 // pred_check
    _
  $region59: #{mem_net_forward.1} parent=0 // pred_check_branch
    %59 = sbr.rel (0) target = $region61
  $region60: #{mem_net_forward.1} parent=0 // pred_region
    _
  $region61: #{mem_net_forward.1} parent=0 // pred_fallthru
    _
  // Predicated region
  $region62: #{mem_net_forward.1} parent=0 // pred_check
    _
  $region63: #{mem_net_forward.1} parent=0 // pred_check_branch
    %61 = sbr.rel (0) target = $region65
  $region64: #{mem_net_forward.1} parent=0 // pred_region
    _
  $region65: #{mem_net_forward.1} parent=0 // pred_fallthru
    _
  // Predicated region
  $region66: #{mem_net_forward.1} parent=0 // pred_check
    _
  $region67: #{mem_net_forward.1} parent=0 // pred_check_branch
    %63 = sbr.rel (0) target = $region69
  $region68: #{mem_net_forward.1} parent=0 // pred_region
    _
  $region69: #{mem_net_forward.1} parent=0 // pred_fallthru
    _
  // Predicated region
  $region70: #{mem_net_forward.1} parent=0 // pred_check
    _
  $region71: #{mem_net_forward.1} parent=0 // pred_check_branch
    %65 = sbr.rel (0) target = $region73
  $region72: #{mem_net_forward.1} parent=0 // pred_region
    _
  $region73: #{mem_net_forward.1} parent=0 // pred_fallthru
    _
  // Predicated region
  $region74: #{mem_net_forward.1} parent=0 // pred_check
    _
  $region75: #{mem_net_forward.1} parent=0 // pred_check_branch
    %67 = sbr.rel (0) target = $region77
  $region76: #{mem_net_forward.1} parent=0 // pred_region
    _
  $region77: #{mem_net_forward.1} parent=0 // pred_fallthru
    _
  // Predicated region
  $region78: #{mem_net_forward.1} parent=0 // pred_check
    _
  $region79: #{mem_net_forward.1} parent=0 // pred_check_branch
    %69 = sbr.rel (0) target = $region81
  $region80: #{mem_net_forward.1} parent=0 // pred_region
    _
  $region81: #{mem_net_forward.1} parent=0 // pred_fallthru
    _
  // Predicated region
  $region82: #{mem_net_forward.1} parent=0 // pred_check
    _
  $region83: #{mem_net_forward.1} parent=0 // pred_check_branch
    %71 = sbr.rel (0) target = $region85
  $region84: #{mem_net_forward.1} parent=0 // pred_region
    _
  $region85: #{mem_net_forward.1} parent=0 // pred_fallthru
    _
  // Predicated region
  $region86: #{mem_net_forward.1} parent=0 // pred_check
    _
  $region87: #{mem_net_forward.1} parent=0 // pred_check_branch
    %73 = sbr.rel (0) target = $region89
  $region88: #{mem_net_forward.1} parent=0 // pred_region
    _
  $region89: #{mem_net_forward.1} parent=0 // pred_fallthru
    _
  // Predicated region
  $region90: #{mem_net_forward.1} parent=0 // pred_check
    _
  $region91: #{mem_net_forward.1} parent=0 // pred_check_branch
    %75 = sbr.rel (0) target = $region93
  $region92: #{mem_net_forward.1} parent=0 // pred_region
    _
  $region93: #{mem_net_forward.1} parent=0 // pred_fallthru
    _
  %v77 = vld [vmem:[%s1] sm:$0x1]
  %v78 = vld [vmem:[%s1 + $0x1] sm:$0x1]
  %v79 = vld [vmem:[%s1 + $0x2] sm:$0x1]
  %v80 = vld [vmem:[%s1 + $0x3] sm:$0x1]
  %v81 = vld [vmem:[%s1 + $0x4] sm:$0x1]
  %v82 = vld [vmem:[%s1 + $0x5] sm:$0x1]
  %v83 = vld [vmem:[%s1 + $0x6] sm:$0x1]
  %v84 = vld [vmem:[%s1 + $0x7] sm:$0x1]
  %v85 = vld [vmem:[%s1 + $0x8] sm:$0x1]
  %v86 = vld [vmem:[%s1 + $0x9] sm:$0x1]
  %v87 = vld [vmem:[%s1 + $0xa] sm:$0x1]
  %v88 = vld [vmem:[%s1 + $0xb] sm:$0x1]
  %v89 = vld [vmem:[%s1 + $0xc] sm:$0x1]
  %v90 = vld [vmem:[%s1 + $0xd] sm:$0x1]
  %v91 = vld [vmem:[%s1 + $0xe] sm:$0x1]
  %v92 = vld [vmem:[%s1 + $0xf] sm:$0x1]
  %v93 = vsub.f32 %v77, 1.0
  %v94 = vsub.f32 %v78, 1.0
  %v95 = vsub.f32 %v79, 1.0
  %v96 = vsub.f32 %v80, 1.0
  %v97 = vsub.f32 %v81, 1.0
  %v98 = vsub.f32 %v82, 1.0
  %v99 = vsub.f32 %v83, 1.0
  %v100 = vsub.f32 %v84, 1.0
  %v101 = vsub.f32 %v85, 1.0
  %v102 = vsub.f32 %v86, 1.0
  %v103 = vsub.f32 %v87, 1.0
  %v104 = vsub.f32 %v88, 1.0
  %v105 = vsub.f32 %v89, 1.0
  %v106 = vsub.f32 %v90, 1.0
  %v107 = vsub.f32 %v91, 1.0
  %v108 = vsub.f32 %v92, 1.0
  %v109 = vmul.f32 %v93, 1e+30
  %v110 = vmul.f32 %v94, 1e+30
  %v111 = vmul.f32 %v95, 1e+30
  %v112 = vmul.f32 %v96, 1e+30
  %v113 = vmul.f32 %v97, 1e+30
  %v114 = vmul.f32 %v98, 1e+30
  %v115 = vmul.f32 %v99, 1e+30
  %v116 = vmul.f32 %v100, 1e+30
  %v117 = vmul.f32 %v101, 1e+30
  %v118 = vmul.f32 %v102, 1e+30
  %v119 = vmul.f32 %v103, 1e+30
  %v120 = vmul.f32 %v104, 1e+30
  %v121 = vmul.f32 %v105, 1e+30
  %v122 = vmul.f32 %v106, 1e+30
  %v123 = vmul.f32 %v107, 1e+30
  %v124 = vmul.f32 %v108, 1e+30
  %v125 = vld [vmem:[%s2] sm:$0xff]
  %v126 = vld [vmem:[%s2 + $0x8] sm:$0xff]
  %v127 = vld [vmem:[%s2 + $0x10] sm:$0xff]
  %v128 = vld [vmem:[%s2 + $0x18] sm:$0xff]
  %v129 = vld [vmem:[%s2 + $0x20] sm:$0xff]
  %v130 = vld [vmem:[%s2 + $0x28] sm:$0xff]
  %v131 = vld [vmem:[%s2 + $0x30] sm:$0xff]
  %v132 = vld [vmem:[%s2 + $0x38] sm:$0xff]
  %v133 = vld [vmem:[%s2 + $0x40] sm:$0xff]
  %v134 = vld [vmem:[%s2 + $0x48] sm:$0xff]
  %v135 = vld [vmem:[%s2 + $0x50] sm:$0xff]
  %v136 = vld [vmem:[%s2 + $0x58] sm:$0xff]
  %v137 = vld [vmem:[%s2 + $0x60] sm:$0xff]
  %v138 = vld [vmem:[%s2 + $0x68] sm:$0xff]
  %v139 = vld [vmem:[%s2 + $0x70] sm:$0xff]
  %v140 = vld [vmem:[%s2 + $0x78] sm:$0xff]
  %v141 = vld [vmem:[%s0] sm:$0xff]
  %v142 = vld [vmem:[%s0 + $0x8] sm:$0xff]
  %v143 = vld [vmem:[%s0 + $0x10] sm:$0xff]
  %v144 = vld [vmem:[%s0 + $0x18] sm:$0xff]
  %v145 = vld [vmem:[%s0 + $0x20] sm:$0xff]
  %v146 = vld [vmem:[%s0 + $0x28] sm:$0xff]
  %v147 = vld [vmem:[%s0 + $0x30] sm:$0xff]
  %v148 = vld [vmem:[%s0 + $0x38] sm:$0xff]
  %v149 = vld [vmem:[%s0 + $0x40] sm:$0xff]
  %v150 = vld [vmem:[%s0 + $0x48] sm:$0xff]
  %v151 = vld [vmem:[%s0 + $0x50] sm:$0xff]
  %v152 = vld [vmem:[%s0 + $0x58] sm:$0xff]
  %v153 = vld [vmem:[%s0 + $0x60] sm:$0xff]
  %v154 = vld [vmem:[%s0 + $0x68] sm:$0xff]
  %v155 = vld [vmem:[%s0 + $0x70] sm:$0xff]
  %v156 = vld [vmem:[%s0 + $0x78] sm:$0xff]
  %v157 = vld [vmem:[%s5] sm:$0xf]
  %v158 = vld [vmem:[%s5 + $0x4] sm:$0xf]
  %v159 = vld [vmem:[%s5 + $0x8] sm:$0xf]
  %v160 = vld [vmem:[%s5 + $0xc] sm:$0xf]
  %v161 = vld [vmem:[%s5 + $0x10] sm:$0xf]
  %v162 = vld [vmem:[%s5 + $0x14] sm:$0xf]
  %v163 = vld [vmem:[%s5 + $0x18] sm:$0xf]
  %v164 = vld [vmem:[%s5 + $0x1c] sm:$0xf]
  %v165 = vld [vmem:[%s6] sm:$0xf]
  %v166 = vld [vmem:[%s6 + $0x4] sm:$0xf]
  %v167 = vld [vmem:[%s6 + $0x8] sm:$0xf]
  %v168 = vld [vmem:[%s6 + $0xc] sm:$0xf]
  %v169 = vld [vmem:[%s6 + $0x10] sm:$0xf]
  %v170 = vld [vmem:[%s6 + $0x14] sm:$0xf]
  %v171 = vld [vmem:[%s6 + $0x18] sm:$0xf]
  %v172 = vld [vmem:[%s6 + $0x1c] sm:$0xf]
  %v173 = vld [vmem:[%s7] sm:$0xf]
  %v174 = vld [vmem:[%s7 + $0x4] sm:$0xf]
  %v175 = vld [vmem:[%s7 + $0x8] sm:$0xf]
  %v176 = vld [vmem:[%s7 + $0xc] sm:$0xf]
  %v177 = vld [vmem:[%s7 + $0x10] sm:$0xf]
  %v178 = vld [vmem:[%s7 + $0x14] sm:$0xf]
  %v179 = vld [vmem:[%s7 + $0x18] sm:$0xf]
  %v180 = vld [vmem:[%s7 + $0x1c] sm:$0xf]
  %v181 = vld [vmem:[%s9] sm:$0xf]
  %v182 = vld [vmem:[%s9 + $0x4] sm:$0xf]
  %v183 = vld [vmem:[%s9 + $0x8] sm:$0xf]
  %v184 = vld [vmem:[%s9 + $0xc] sm:$0xf]
  %v185 = vld [vmem:[%s8] sm:$0x3]
  %v186 = vld [vmem:[%s8 + $0x2] sm:$0x3]
  %v187 = vld [vmem:[%s8 + $0x4] sm:$0x3]
  %v188 = vld [vmem:[%s10] sm:$0xf]
  %v189 = vld [vmem:[%s10 + $0x4] sm:$0xf]
  %v190 = vld [vmem:[%s10 + $0x8] sm:$0xf]
  %v191 = vld [vmem:[%s10 + $0xc] sm:$0xf]
  %v192 = vld [vmem:[%s11] sm:$0x1]
  %v193 = vld [vmem:[%s12] sm:$0xf]
  %v194 = vld [vmem:[%s12 + $0x4] sm:$0xf]
  %v195 = vld [vmem:[%s12 + $0x8] sm:$0xf]
  %v196 = vld [vmem:[%s12 + $0xc] sm:$0xf]
  %v197 = vld [vmem:[%s12 + $0x10] sm:$0xf]
  %v198 = vld [vmem:[%s12 + $0x14] sm:$0xf]
  %v199 = vld [vmem:[%s12 + $0x18] sm:$0xf]
  %v200 = vld [vmem:[%s12 + $0x1c] sm:$0xf]
  %v201 = vld [vmem:[%s13] sm:$0x3f]
  %v202 = vpack.c.bf16 %v142, %v141
  %v203 = vpack.c.bf16 %v144, %v143
  %v204 = vpack.c.bf16 %v146, %v145
  %v205 = vpack.c.bf16 %v148, %v147
  %v206 = vpack.c.bf16 %v150, %v149
  %v207 = vpack.c.bf16 %v152, %v151
  %v208 = vpack.c.bf16 %v154, %v153
  %v209 = vpack.c.bf16 %v156, %v155
  %v210 = vperm.slane %v185, 0
  %v215 = vunpack.c.l.b16 %v157
  %v216 = vunpack.c.l.b16 %v158
  %v217 = vunpack.c.l.b16 %v159
  %v218 = vunpack.c.l.b16 %v160
  %v219 = vpack.c.b16 %v216, %v215
  %v220 = vpack.c.b16 %v218, %v217
  %vm223 = vcmask 261120
  %v225 = vsel %vm223, %v202, 0
  %v228 = vsel %vm223, %v203, 0
  %v231 = vsel %vm223, %v204, 0
  %v234 = vsel %vm223, %v205, 0
  %v237 = vsel %vm223, %v206, 0
  %v240 = vsel %vm223, %v207, 0
  %v243 = vsel %vm223, %v208, 0
  %v246 = vsel %vm223, %v209, 0
  %248 = vmatpush.bf16.msra.mxu0 0
  %249 = vmatpush.bf16.msra.mxu0 0
  %250 = vmatpush.bf16.msra.mxu0 0
  %251 = vmatpush.bf16.msra.mxu0 0
  %252 = vmatpush.bf16.msra.mxu0 0
  %253 = vmatpush.bf16.msra.mxu0 0
  %254 = vmatpush.bf16.msra.mxu0 %v220
  %255 = vmatpush.bf16.msra.mxu0 %v219
  %256 = vmatmul.bf16.gmra.mxu0 %v225
  %v257 = vpop.f32.mrf.mxu0
  %v258 = vadd.f32 %v210, %v257
  %v259 = vpop.f32.mrf.mxu0
  %v260 = vadd.f32 %v210, %v259
  %261 = vmatmul.bf16.gmra.mxu0 %v228
  %v262 = vpop.f32.mrf.mxu0
  %v263 = vadd.f32 %v210, %v262
  %v264 = vpop.f32.mrf.mxu0
  %v265 = vadd.f32 %v210, %v264
  %266 = vmatmul.bf16.gmra.mxu0 %v231
  %v267 = vpop.f32.mrf.mxu0
  %v268 = vadd.f32 %v210, %v267
  %v269 = vpop.f32.mrf.mxu0
  %v270 = vadd.f32 %v210, %v269
  %271 = vmatmul.bf16.gmra.mxu0 %v234
  %v272 = vpop.f32.mrf.mxu0
  %v273 = vadd.f32 %v210, %v272
  %v274 = vpop.f32.mrf.mxu0
  %v275 = vadd.f32 %v210, %v274
  %276 = vmatmul.bf16.gmra.mxu0 %v237
  %v277 = vpop.f32.mrf.mxu0
  %v278 = vadd.f32 %v210, %v277
  %v279 = vpop.f32.mrf.mxu0
  %v280 = vadd.f32 %v210, %v279
  %281 = vmatmul.bf16.gmra.mxu0 %v240
  %v282 = vpop.f32.mrf.mxu0
  %v283 = vadd.f32 %v210, %v282
  %v284 = vpop.f32.mrf.mxu0
  %v285 = vadd.f32 %v210, %v284
  %286 = vmatmul.bf16.gmra.mxu0 %v243
  %v287 = vpop.f32.mrf.mxu0
  %v288 = vadd.f32 %v210, %v287
  %v289 = vpop.f32.mrf.mxu0
  %v290 = vadd.f32 %v210, %v289
  %291 = vmatmul.bf16.gmra.mxu0 %v246
  %v292 = vpop.f32.mrf.mxu0
  %v293 = vadd.f32 %v210, %v292
  %v294 = vpop.f32.mrf.mxu0
  %v295 = vadd.f32 %v210, %v294
  %296 = vdwg.mxu0
  %v297 = vperm.slane %v186, 0
  %v302 = vunpack.c.l.b16 %v165
  %v303 = vunpack.c.l.b16 %v166
  %v304 = vunpack.c.l.b16 %v167
  %v305 = vunpack.c.l.b16 %v168
  %v306 = vpack.c.b16 %v303, %v302
  %v307 = vpack.c.b16 %v305, %v304
  %310 = vmatpush.bf16.msra.mxu0 0
  %311 = vmatpush.bf16.msra.mxu0 0
  %312 = vmatpush.bf16.msra.mxu0 0
  %313 = vmatpush.bf16.msra.mxu0 0
  %314 = vmatpush.bf16.msra.mxu0 0
  %315 = vmatpush.bf16.msra.mxu0 0
  %316 = vmatpush.bf16.msra.mxu0 %v307
  %317 = vmatpush.bf16.msra.mxu0 %v306
  %318 = vmatmul.bf16.gmra.mxu0 %v225
  %v319 = vpop.f32.mrf.mxu0
  %v320 = vadd.f32 %v297, %v319
  %v321 = vpop.f32.mrf.mxu0
  %v322 = vadd.f32 %v297, %v321
  %323 = vmatmul.bf16.gmra.mxu0 %v228
  %v324 = vpop.f32.mrf.mxu0
  %v325 = vadd.f32 %v297, %v324
  %v326 = vpop.f32.mrf.mxu0
  %v327 = vadd.f32 %v297, %v326
  %328 = vmatmul.bf16.gmra.mxu0 %v231
  %v329 = vpop.f32.mrf.mxu0
  %v330 = vadd.f32 %v297, %v329
  %v331 = vpop.f32.mrf.mxu0
  %v332 = vadd.f32 %v297, %v331
  %333 = vmatmul.bf16.gmra.mxu0 %v234
  %v334 = vpop.f32.mrf.mxu0
  %v335 = vadd.f32 %v297, %v334
  %v336 = vpop.f32.mrf.mxu0
  %v337 = vadd.f32 %v297, %v336
  %338 = vmatmul.bf16.gmra.mxu0 %v237
  %v339 = vpop.f32.mrf.mxu0
  %v340 = vadd.f32 %v297, %v339
  %v341 = vpop.f32.mrf.mxu0
  %v342 = vadd.f32 %v297, %v341
  %343 = vmatmul.bf16.gmra.mxu0 %v240
  %v344 = vpop.f32.mrf.mxu0
  %v345 = vadd.f32 %v297, %v344
  %v346 = vpop.f32.mrf.mxu0
  %v347 = vadd.f32 %v297, %v346
  %348 = vmatmul.bf16.gmra.mxu0 %v243
  %v349 = vpop.f32.mrf.mxu0
  %v350 = vadd.f32 %v297, %v349
  %v351 = vpop.f32.mrf.mxu0
  %v352 = vadd.f32 %v297, %v351
  %353 = vmatmul.bf16.gmra.mxu0 %v246
  %v354 = vpop.f32.mrf.mxu0
  %v355 = vadd.f32 %v297, %v354
  %v356 = vpop.f32.mrf.mxu0
  %v357 = vadd.f32 %v297, %v356
  %358 = vdwg.mxu0
  %v359 = vperm.slane %v187, 0
  %v364 = vunpack.c.l.b16 %v173
  %v365 = vunpack.c.l.b16 %v174
  %v366 = vunpack.c.l.b16 %v175
  %v367 = vunpack.c.l.b16 %v176
  %v368 = vpack.c.b16 %v365, %v364
  %v369 = vpack.c.b16 %v367, %v366
  %372 = vmatpush.bf16.msra.mxu0 0
  %373 = vmatpush.bf16.msra.mxu0 0
  %374 = vmatpush.bf16.msra.mxu0 0
  %375 = vmatpush.bf16.msra.mxu0 0
  %376 = vmatpush.bf16.msra.mxu0 0
  %377 = vmatpush.bf16.msra.mxu0 0
  %378 = vmatpush.bf16.msra.mxu0 %v369
  %379 = vmatpush.bf16.msra.mxu0 %v368
  %380 = vmatmul.bf16.gmra.mxu0 %v225
  %v381 = vpop.f32.mrf.mxu0
  %v382 = vadd.f32 %v359, %v381
  %v383 = vpop.f32.mrf.mxu0
  %v384 = vadd.f32 %v359, %v383
  %385 = vmatmul.bf16.gmra.mxu0 %v228
  %v386 = vpop.f32.mrf.mxu0
  %v387 = vadd.f32 %v359, %v386
  %v388 = vpop.f32.mrf.mxu0
  %v389 = vadd.f32 %v359, %v388
  %390 = vmatmul.bf16.gmra.mxu0 %v231
  %v391 = vpop.f32.mrf.mxu0
  %v392 = vadd.f32 %v359, %v391
  %v393 = vpop.f32.mrf.mxu0
  %v394 = vadd.f32 %v359, %v393
  %395 = vmatmul.bf16.gmra.mxu0 %v234
  %v396 = vpop.f32.mrf.mxu0
  %v397 = vadd.f32 %v359, %v396
  %v398 = vpop.f32.mrf.mxu0
  %v399 = vadd.f32 %v359, %v398
  %400 = vmatmul.bf16.gmra.mxu0 %v237
  %v401 = vpop.f32.mrf.mxu0
  %v402 = vadd.f32 %v359, %v401
  %v403 = vpop.f32.mrf.mxu0
  %v404 = vadd.f32 %v359, %v403
  %405 = vmatmul.bf16.gmra.mxu0 %v240
  %v406 = vpop.f32.mrf.mxu0
  %v407 = vadd.f32 %v359, %v406
  %v408 = vpop.f32.mrf.mxu0
  %v409 = vadd.f32 %v359, %v408
  %410 = vmatmul.bf16.gmra.mxu0 %v243
  %v411 = vpop.f32.mrf.mxu0
  %v412 = vadd.f32 %v359, %v411
  %v413 = vpop.f32.mrf.mxu0
  %v414 = vadd.f32 %v359, %v413
  %415 = vmatmul.bf16.gmra.mxu0 %v246
  %v416 = vpop.f32.mrf.mxu0
  %v417 = vadd.f32 %v359, %v416
  %v418 = vpop.f32.mrf.mxu0
  %v419 = vadd.f32 %v359, %v418
  %420 = vdwg.mxu0
  %v421 = vmul.f32 %v258, 0.25
  %v422 = vmul.f32 %v260, 0.25
  %v423 = vmul.f32 %v263, 0.25
  %v424 = vmul.f32 %v265, 0.25
  %v425 = vmul.f32 %v268, 0.25
  %v426 = vmul.f32 %v270, 0.25
  %v427 = vmul.f32 %v273, 0.25
  %v428 = vmul.f32 %v275, 0.25
  %v429 = vmul.f32 %v278, 0.25
  %v430 = vmul.f32 %v280, 0.25
  %v431 = vmul.f32 %v283, 0.25
  %v432 = vmul.f32 %v285, 0.25
  %v433 = vmul.f32 %v288, 0.25
  %v434 = vmul.f32 %v290, 0.25
  %v435 = vmul.f32 %v293, 0.25
  %v436 = vmul.f32 %v295, 0.25
  %v437 = vpack.c.bf16 %v421, %v421
  %v438 = vpack.c.bf16 %v422, %v422
  %v439 = vpack.c.bf16 %v423, %v423
  %v440 = vpack.c.bf16 %v424, %v424
  %v441 = vpack.c.bf16 %v425, %v425
  %v442 = vpack.c.bf16 %v426, %v426
  %v443 = vpack.c.bf16 %v427, %v427
  %v444 = vpack.c.bf16 %v428, %v428
  %v445 = vpack.c.bf16 %v429, %v429
  %v446 = vpack.c.bf16 %v430, %v430
  %v447 = vpack.c.bf16 %v431, %v431
  %v448 = vpack.c.bf16 %v432, %v432
  %v449 = vpack.c.bf16 %v433, %v433
  %v450 = vpack.c.bf16 %v434, %v434
  %v451 = vpack.c.bf16 %v435, %v435
  %v452 = vpack.c.bf16 %v436, %v436
  %v453 = vpack.c.bf16 %v320, %v320
  %v454 = vpack.c.bf16 %v322, %v322
  %v455 = vpack.c.bf16 %v325, %v325
  %v456 = vpack.c.bf16 %v327, %v327
  %v457 = vpack.c.bf16 %v330, %v330
  %v458 = vpack.c.bf16 %v332, %v332
  %v459 = vpack.c.bf16 %v335, %v335
  %v460 = vpack.c.bf16 %v337, %v337
  %v461 = vpack.c.bf16 %v340, %v340
  %v462 = vpack.c.bf16 %v342, %v342
  %v463 = vpack.c.bf16 %v345, %v345
  %v464 = vpack.c.bf16 %v347, %v347
  %v465 = vpack.c.bf16 %v350, %v350
  %v466 = vpack.c.bf16 %v352, %v352
  %v467 = vpack.c.bf16 %v355, %v355
  %v468 = vpack.c.bf16 %v357, %v357
  %v485 = vperm.slane %v109, 0
  %v486 = vperm.slane %v110, 0
  %v487 = vperm.slane %v111, 0
  %v488 = vperm.slane %v112, 0
  %v489 = vperm.slane %v113, 0
  %v490 = vperm.slane %v114, 0
  %v491 = vperm.slane %v115, 0
  %v492 = vperm.slane %v116, 0
  %v493 = vperm.slane %v117, 0
  %v494 = vperm.slane %v118, 0
  %v495 = vperm.slane %v119, 0
  %v496 = vperm.slane %v120, 0
  %v497 = vperm.slane %v121, 0
  %v498 = vperm.slane %v122, 0
  %v499 = vperm.slane %v123, 0
  %v500 = vperm.slane %v124, 0
  %vm517 = vcmask 130048
  %v519 = vsel %vm517, %v437, 0
  %v522 = vsel %vm517, %v453, 0
  %524 = vmatpush.bf16.xpose.msra.mxu0 0
  %525 = vmatpush.bf16.xpose.msra.mxu0 0
  %526 = vmatpush.bf16.xpose.msra.mxu0 0
  %527 = vmatpush.bf16.xpose.msra.mxu0 0
  %528 = vmatpush.bf16.xpose.msra.mxu0 0
  %529 = vmatpush.bf16.xpose.msra.mxu0 0
  %530 = vmatpush.bf16.xpose.msra.mxu0 0
  %531 = vmatpush.bf16.xpose.msra.mxu0 %v522
  %532 = vmatmul.bf16.gmra.mxu0 %v519
  %v533 = vpop.f32.mrf.mxu0
  %v534 = vadd.f32 %v485, %v533
  %v535 = vpop.f32.mrf.mxu0
  %536 = vdwg.mxu0
  %v538 = vsel %vm517, %v438, 0
  %v541 = vsel %vm517, %v454, 0
  %543 = vmatpush.bf16.xpose.msra.mxu0 0
  %544 = vmatpush.bf16.xpose.msra.mxu0 0
  %545 = vmatpush.bf16.xpose.msra.mxu0 0
  %546 = vmatpush.bf16.xpose.msra.mxu0 0
  %547 = vmatpush.bf16.xpose.msra.mxu0 0
  %548 = vmatpush.bf16.xpose.msra.mxu0 0
  %549 = vmatpush.bf16.xpose.msra.mxu0 0
  %550 = vmatpush.bf16.xpose.msra.mxu0 %v541
  %551 = vmatmul.bf16.gmra.mxu0 %v538
  %v552 = vpop.f32.mrf.mxu0
  %v553 = vadd.f32 %v486, %v552
  %v554 = vpop.f32.mrf.mxu0
  %555 = vdwg.mxu0
  %v557 = vsel %vm517, %v439, 0
  %v560 = vsel %vm517, %v455, 0
  %562 = vmatpush.bf16.xpose.msra.mxu0 0
  %563 = vmatpush.bf16.xpose.msra.mxu0 0
  %564 = vmatpush.bf16.xpose.msra.mxu0 0
  %565 = vmatpush.bf16.xpose.msra.mxu0 0
  %566 = vmatpush.bf16.xpose.msra.mxu0 0
  %567 = vmatpush.bf16.xpose.msra.mxu0 0
  %568 = vmatpush.bf16.xpose.msra.mxu0 0
  %569 = vmatpush.bf16.xpose.msra.mxu0 %v560
  %570 = vmatmul.bf16.gmra.mxu0 %v557
  %v571 = vpop.f32.mrf.mxu0
  %v572 = vadd.f32 %v487, %v571
  %v573 = vpop.f32.mrf.mxu0
  %574 = vdwg.mxu0
  %v576 = vsel %vm517, %v440, 0
  %v579 = vsel %vm517, %v456, 0
  %581 = vmatpush.bf16.xpose.msra.mxu0 0
  %582 = vmatpush.bf16.xpose.msra.mxu0 0
  %583 = vmatpush.bf16.xpose.msra.mxu0 0
  %584 = vmatpush.bf16.xpose.msra.mxu0 0
  %585 = vmatpush.bf16.xpose.msra.mxu0 0
  %586 = vmatpush.bf16.xpose.msra.mxu0 0
  %587 = vmatpush.bf16.xpose.msra.mxu0 0
  %588 = vmatpush.bf16.xpose.msra.mxu0 %v579
  %589 = vmatmul.bf16.gmra.mxu0 %v576
  %v590 = vpop.f32.mrf.mxu0
  %v591 = vadd.f32 %v488, %v590
  %v592 = vpop.f32.mrf.mxu0
  %593 = vdwg.mxu0
  %v595 = vsel %vm517, %v441, 0
  %v598 = vsel %vm517, %v457, 0
  %600 = vmatpush.bf16.xpose.msra.mxu0 0
  %601 = vmatpush.bf16.xpose.msra.mxu0 0
  %602 = vmatpush.bf16.xpose.msra.mxu0 0
  %603 = vmatpush.bf16.xpose.msra.mxu0 0
  %604 = vmatpush.bf16.xpose.msra.mxu0 0
  %605 = vmatpush.bf16.xpose.msra.mxu0 0
  %606 = vmatpush.bf16.xpose.msra.mxu0 0
  %607 = vmatpush.bf16.xpose.msra.mxu0 %v598
  %608 = vmatmul.bf16.gmra.mxu0 %v595
  %v609 = vpop.f32.mrf.mxu0
  %v610 = vadd.f32 %v489, %v609
  %v611 = vpop.f32.mrf.mxu0
  %612 = vdwg.mxu0
  %v614 = vsel %vm517, %v442, 0
  %v617 = vsel %vm517, %v458, 0
  %619 = vmatpush.bf16.xpose.msra.mxu0 0
  %620 = vmatpush.bf16.xpose.msra.mxu0 0
  %621 = vmatpush.bf16.xpose.msra.mxu0 0
  %622 = vmatpush.bf16.xpose.msra.mxu0 0
  %623 = vmatpush.bf16.xpose.msra.mxu0 0
  %624 = vmatpush.bf16.xpose.msra.mxu0 0
  %625 = vmatpush.bf16.xpose.msra.mxu0 0
  %626 = vmatpush.bf16.xpose.msra.mxu0 %v617
  %627 = vmatmul.bf16.gmra.mxu0 %v614
  %v628 = vpop.f32.mrf.mxu0
  %v629 = vadd.f32 %v490, %v628
  %v630 = vpop.f32.mrf.mxu0
  %631 = vdwg.mxu0
  %v633 = vsel %vm517, %v443, 0
  %v636 = vsel %vm517, %v459, 0
  %638 = vmatpush.bf16.xpose.msra.mxu0 0
  %639 = vmatpush.bf16.xpose.msra.mxu0 0
  %640 = vmatpush.bf16.xpose.msra.mxu0 0
  %641 = vmatpush.bf16.xpose.msra.mxu0 0
  %642 = vmatpush.bf16.xpose.msra.mxu0 0
  %643 = vmatpush.bf16.xpose.msra.mxu0 0
  %644 = vmatpush.bf16.xpose.msra.mxu0 0
  %645 = vmatpush.bf16.xpose.msra.mxu0 %v636
  %646 = vmatmul.bf16.gmra.mxu0 %v633
  %v647 = vpop.f32.mrf.mxu0
  %v648 = vadd.f32 %v491, %v647
  %v649 = vpop.f32.mrf.mxu0
  %650 = vdwg.mxu0
  %v652 = vsel %vm517, %v444, 0
  %v655 = vsel %vm517, %v460, 0
  %657 = vmatpush.bf16.xpose.msra.mxu0 0
  %658 = vmatpush.bf16.xpose.msra.mxu0 0
  %659 = vmatpush.bf16.xpose.msra.mxu0 0
  %660 = vmatpush.bf16.xpose.msra.mxu0 0
  %661 = vmatpush.bf16.xpose.msra.mxu0 0
  %662 = vmatpush.bf16.xpose.msra.mxu0 0
  %663 = vmatpush.bf16.xpose.msra.mxu0 0
  %664 = vmatpush.bf16.xpose.msra.mxu0 %v655
  %665 = vmatmul.bf16.gmra.mxu0 %v652
  %v666 = vpop.f32.mrf.mxu0
  %v667 = vadd.f32 %v492, %v666
  %v668 = vpop.f32.mrf.mxu0
  %669 = vdwg.mxu0
  %v671 = vsel %vm517, %v445, 0
  %v674 = vsel %vm517, %v461, 0
  %676 = vmatpush.bf16.xpose.msra.mxu0 0
  %677 = vmatpush.bf16.xpose.msra.mxu0 0
  %678 = vmatpush.bf16.xpose.msra.mxu0 0
  %679 = vmatpush.bf16.xpose.msra.mxu0 0
  %680 = vmatpush.bf16.xpose.msra.mxu0 0
  %681 = vmatpush.bf16.xpose.msra.mxu0 0
  %682 = vmatpush.bf16.xpose.msra.mxu0 0
  %683 = vmatpush.bf16.xpose.msra.mxu0 %v674
  %684 = vmatmul.bf16.gmra.mxu0 %v671
  %v685 = vpop.f32.mrf.mxu0
  %v686 = vadd.f32 %v493, %v685
  %v687 = vpop.f32.mrf.mxu0
  %688 = vdwg.mxu0
  %v690 = vsel %vm517, %v446, 0
  %v693 = vsel %vm517, %v462, 0
  %695 = vmatpush.bf16.xpose.msra.mxu0 0
  %696 = vmatpush.bf16.xpose.msra.mxu0 0
  %697 = vmatpush.bf16.xpose.msra.mxu0 0
  %698 = vmatpush.bf16.xpose.msra.mxu0 0
  %699 = vmatpush.bf16.xpose.msra.mxu0 0
  %700 = vmatpush.bf16.xpose.msra.mxu0 0
  %701 = vmatpush.bf16.xpose.msra.mxu0 0
  %702 = vmatpush.bf16.xpose.msra.mxu0 %v693
  %703 = vmatmul.bf16.gmra.mxu0 %v690
  %v704 = vpop.f32.mrf.mxu0
  %v705 = vadd.f32 %v494, %v704
  %v706 = vpop.f32.mrf.mxu0
  %707 = vdwg.mxu0
  %v709 = vsel %vm517, %v447, 0
  %v712 = vsel %vm517, %v463, 0
  %714 = vmatpush.bf16.xpose.msra.mxu0 0
  %715 = vmatpush.bf16.xpose.msra.mxu0 0
  %716 = vmatpush.bf16.xpose.msra.mxu0 0
  %717 = vmatpush.bf16.xpose.msra.mxu0 0
  %718 = vmatpush.bf16.xpose.msra.mxu0 0
  %719 = vmatpush.bf16.xpose.msra.mxu0 0
  %720 = vmatpush.bf16.xpose.msra.mxu0 0
  %721 = vmatpush.bf16.xpose.msra.mxu0 %v712
  %722 = vmatmul.bf16.gmra.mxu0 %v709
  %v723 = vpop.f32.mrf.mxu0
  %v724 = vadd.f32 %v495, %v723
  %v725 = vpop.f32.mrf.mxu0
  %726 = vdwg.mxu0
  %v728 = vsel %vm517, %v448, 0
  %v731 = vsel %vm517, %v464, 0
  %733 = vmatpush.bf16.xpose.msra.mxu0 0
  %734 = vmatpush.bf16.xpose.msra.mxu0 0
  %735 = vmatpush.bf16.xpose.msra.mxu0 0
  %736 = vmatpush.bf16.xpose.msra.mxu0 0
  %737 = vmatpush.bf16.xpose.msra.mxu0 0
  %738 = vmatpush.bf16.xpose.msra.mxu0 0
  %739 = vmatpush.bf16.xpose.msra.mxu0 0
  %740 = vmatpush.bf16.xpose.msra.mxu0 %v731
  %741 = vmatmul.bf16.gmra.mxu0 %v728
  %v742 = vpop.f32.mrf.mxu0
  %v743 = vadd.f32 %v496, %v742
  %v744 = vpop.f32.mrf.mxu0
  %745 = vdwg.mxu0
  %v747 = vsel %vm517, %v449, 0
  %v750 = vsel %vm517, %v465, 0
  %752 = vmatpush.bf16.xpose.msra.mxu0 0
  %753 = vmatpush.bf16.xpose.msra.mxu0 0
  %754 = vmatpush.bf16.xpose.msra.mxu0 0
  %755 = vmatpush.bf16.xpose.msra.mxu0 0
  %756 = vmatpush.bf16.xpose.msra.mxu0 0
  %757 = vmatpush.bf16.xpose.msra.mxu0 0
  %758 = vmatpush.bf16.xpose.msra.mxu0 0
  %759 = vmatpush.bf16.xpose.msra.mxu0 %v750
  %760 = vmatmul.bf16.gmra.mxu0 %v747
  %v761 = vpop.f32.mrf.mxu0
  %v762 = vadd.f32 %v497, %v761
  %v763 = vpop.f32.mrf.mxu0
  %764 = vdwg.mxu0
  %v766 = vsel %vm517, %v450, 0
  %v769 = vsel %vm517, %v466, 0
  %771 = vmatpush.bf16.xpose.msra.mxu0 0
  %772 = vmatpush.bf16.xpose.msra.mxu0 0
  %773 = vmatpush.bf16.xpose.msra.mxu0 0
  %774 = vmatpush.bf16.xpose.msra.mxu0 0
  %775 = vmatpush.bf16.xpose.msra.mxu0 0
  %776 = vmatpush.bf16.xpose.msra.mxu0 0
  %777 = vmatpush.bf16.xpose.msra.mxu0 0
  %778 = vmatpush.bf16.xpose.msra.mxu0 %v769
  %779 = vmatmul.bf16.gmra.mxu0 %v766
  %v780 = vpop.f32.mrf.mxu0
  %v781 = vadd.f32 %v498, %v780
  %v782 = vpop.f32.mrf.mxu0
  %783 = vdwg.mxu0
  %v785 = vsel %vm517, %v451, 0
  %v788 = vsel %vm517, %v467, 0
  %790 = vmatpush.bf16.xpose.msra.mxu0 0
  %791 = vmatpush.bf16.xpose.msra.mxu0 0
  %792 = vmatpush.bf16.xpose.msra.mxu0 0
  %793 = vmatpush.bf16.xpose.msra.mxu0 0
  %794 = vmatpush.bf16.xpose.msra.mxu0 0
  %795 = vmatpush.bf16.xpose.msra.mxu0 0
  %796 = vmatpush.bf16.xpose.msra.mxu0 0
  %797 = vmatpush.bf16.xpose.msra.mxu0 %v788
  %798 = vmatmul.bf16.gmra.mxu0 %v785
  %v799 = vpop.f32.mrf.mxu0
  %v800 = vadd.f32 %v499, %v799
  %v801 = vpop.f32.mrf.mxu0
  %802 = vdwg.mxu0
  %v804 = vsel %vm517, %v452, 0
  %v807 = vsel %vm517, %v468, 0
  %809 = vmatpush.bf16.xpose.msra.mxu0 0
  %810 = vmatpush.bf16.xpose.msra.mxu0 0
  %811 = vmatpush.bf16.xpose.msra.mxu0 0
  %812 = vmatpush.bf16.xpose.msra.mxu0 0
  %813 = vmatpush.bf16.xpose.msra.mxu0 0
  %814 = vmatpush.bf16.xpose.msra.mxu0 0
  %815 = vmatpush.bf16.xpose.msra.mxu0 0
  %816 = vmatpush.bf16.xpose.msra.mxu0 %v807
  %817 = vmatmul.bf16.gmra.mxu0 %v804
  %v818 = vpop.f32.mrf.mxu0
  %v819 = vadd.f32 %v500, %v818
  %v820 = vpop.f32.mrf.mxu0
  %821 = vdwg.mxu0
  %vm822 = vcmask 64512
  %v823 = vsel %vm822, %v534, -inf
  %824 = vmax.xlane.f32.xlu0 %v823
  %v825 = vpop.xlane.xlu0 %824
  %v826 = vsel %vm822, %v553, -inf
  %827 = vmax.xlane.f32.xlu0 %v826
  %v828 = vpop.xlane.xlu0 %827
  %v829 = vsel %vm822, %v572, -inf
  %830 = vmax.xlane.f32.xlu0 %v829
  %v831 = vpop.xlane.xlu0 %830
  %v832 = vsel %vm822, %v591, -inf
  %833 = vmax.xlane.f32.xlu0 %v832
  %v834 = vpop.xlane.xlu0 %833
  %v835 = vsel %vm822, %v610, -inf
  %836 = vmax.xlane.f32.xlu0 %v835
  %v837 = vpop.xlane.xlu0 %836
  %v838 = vsel %vm822, %v629, -inf
  %839 = vmax.xlane.f32.xlu0 %v838
  %v840 = vpop.xlane.xlu0 %839
  %v841 = vsel %vm822, %v648, -inf
  %842 = vmax.xlane.f32.xlu0 %v841
  %v843 = vpop.xlane.xlu0 %842
  %v844 = vsel %vm822, %v667, -inf
  %845 = vmax.xlane.f32.xlu0 %v844
  %v846 = vpop.xlane.xlu0 %845
  %v847 = vsel %vm822, %v686, -inf
  %848 = vmax.xlane.f32.xlu0 %v847
  %v849 = vpop.xlane.xlu0 %848
  %v850 = vsel %vm822, %v705, -inf
  %851 = vmax.xlane.f32.xlu0 %v850
  %v852 = vpop.xlane.xlu0 %851
  %v853 = vsel %vm822, %v724, -inf
  %854 = vmax.xlane.f32.xlu0 %v853
  %v855 = vpop.xlane.xlu0 %854
  %v856 = vsel %vm822, %v743, -inf
  %857 = vmax.xlane.f32.xlu0 %v856
  %v858 = vpop.xlane.xlu0 %857
  %v859 = vsel %vm822, %v762, -inf
  %860 = vmax.xlane.f32.xlu0 %v859
  %v861 = vpop.xlane.xlu0 %860
  %v862 = vsel %vm822, %v781, -inf
  %863 = vmax.xlane.f32.xlu0 %v862
  %v864 = vpop.xlane.xlu0 %863
  %v865 = vsel %vm822, %v800, -inf
  %866 = vmax.xlane.f32.xlu0 %v865
  %v867 = vpop.xlane.xlu0 %866
  %v868 = vsel %vm822, %v819, -inf
  %869 = vmax.xlane.f32.xlu0 %v868
  %v870 = vpop.xlane.xlu0 %869
  %v871 = vsub.f32 %v534, %v825
  %v872 = vsub.f32 %v553, %v828
  %v873 = vsub.f32 %v572, %v831
  %v874 = vsub.f32 %v591, %v834
  %v875 = vsub.f32 %v610, %v837
  %v876 = vsub.f32 %v629, %v840
  %v877 = vsub.f32 %v648, %v843
  %v878 = vsub.f32 %v667, %v846
  %v879 = vsub.f32 %v686, %v849
  %v880 = vsub.f32 %v705, %v852
  %v881 = vsub.f32 %v724, %v855
  %v882 = vsub.f32 %v743, %v858
  %v883 = vsub.f32 %v762, %v861
  %v884 = vsub.f32 %v781, %v864
  %v885 = vsub.f32 %v800, %v867
  %v886 = vsub.f32 %v819, %v870
  %v887 = vmul.f32 %v871, 1.442695
  %v888 = vpow.pop %v887
  %v889 = vmul.f32 %v872, 1.442695
  %v890 = vpow.pop %v889
  %v891 = vmul.f32 %v873, 1.442695
  %v892 = vpow.pop %v891
  %v893 = vmul.f32 %v874, 1.442695
  %v894 = vpow.pop %v893
  %v895 = vmul.f32 %v875, 1.442695
  %v896 = vpow.pop %v895
  %v897 = vmul.f32 %v876, 1.442695
  %v898 = vpow.pop %v897
  %v899 = vmul.f32 %v877, 1.442695
  %v900 = vpow.pop %v899
  %v901 = vmul.f32 %v878, 1.442695
  %v902 = vpow.pop %v901
  %v903 = vmul.f32 %v879, 1.442695
  %v904 = vpow.pop %v903
  %v905 = vmul.f32 %v880, 1.442695
  %v906 = vpow.pop %v905
  %v907 = vmul.f32 %v881, 1.442695
  %v908 = vpow.pop %v907
  %v909 = vmul.f32 %v882, 1.442695
  %v910 = vpow.pop %v909
  %v911 = vmul.f32 %v883, 1.442695
  %v912 = vpow.pop %v911
  %v913 = vmul.f32 %v884, 1.442695
  %v914 = vpow.pop %v913
  %v915 = vmul.f32 %v885, 1.442695
  %v916 = vpow.pop %v915
  %v917 = vmul.f32 %v886, 1.442695
  %v918 = vpow.pop %v917
  %v919 = vsel %vm822, %v888, 0.0
  %920 = vadd.xlane.f32.xlu0 %v919
  %v921 = vpop.xlane.xlu0 %920
  %v922 = vsel %vm822, %v890, 0.0
  %923 = vadd.xlane.f32.xlu0 %v922
  %v924 = vpop.xlane.xlu0 %923
  %v925 = vsel %vm822, %v892, 0.0
  %926 = vadd.xlane.f32.xlu0 %v925
  %v927 = vpop.xlane.xlu0 %926
  %v928 = vsel %vm822, %v894, 0.0
  %929 = vadd.xlane.f32.xlu0 %v928
  %v930 = vpop.xlane.xlu0 %929
  %v931 = vsel %vm822, %v896, 0.0
  %932 = vadd.xlane.f32.xlu0 %v931
  %v933 = vpop.xlane.xlu0 %932
  %v934 = vsel %vm822, %v898, 0.0
  %935 = vadd.xlane.f32.xlu0 %v934
  %v936 = vpop.xlane.xlu0 %935
  %v937 = vsel %vm822, %v900, 0.0
  %938 = vadd.xlane.f32.xlu0 %v937
  %v939 = vpop.xlane.xlu0 %938
  %v940 = vsel %vm822, %v902, 0.0
  %941 = vadd.xlane.f32.xlu0 %v940
  %v942 = vpop.xlane.xlu0 %941
  %v943 = vsel %vm822, %v904, 0.0
  %944 = vadd.xlane.f32.xlu0 %v943
  %v945 = vpop.xlane.xlu0 %944
  %v946 = vsel %vm822, %v906, 0.0
  %947 = vadd.xlane.f32.xlu0 %v946
  %v948 = vpop.xlane.xlu0 %947
  %v949 = vsel %vm822, %v908, 0.0
  %950 = vadd.xlane.f32.xlu0 %v949
  %v951 = vpop.xlane.xlu0 %950
  %v952 = vsel %vm822, %v910, 0.0
  %953 = vadd.xlane.f32.xlu0 %v952
  %v954 = vpop.xlane.xlu0 %953
  %v955 = vsel %vm822, %v912, 0.0
  %956 = vadd.xlane.f32.xlu0 %v955
  %v957 = vpop.xlane.xlu0 %956
  %v958 = vsel %vm822, %v914, 0.0
  %959 = vadd.xlane.f32.xlu0 %v958
  %v960 = vpop.xlane.xlu0 %959
  %v961 = vsel %vm822, %v916, 0.0
  %962 = vadd.xlane.f32.xlu0 %v961
  %v963 = vpop.xlane.xlu0 %962
  %v964 = vsel %vm822, %v918, 0.0
  %965 = vadd.xlane.f32.xlu0 %v964
  %v966 = vpop.xlane.xlu0 %965
  %v967 = vrcp.pop %v921
  %v968 = vrcp.pop %v924
  %v969 = vrcp.pop %v927
  %v970 = vrcp.pop %v930
  %v971 = vrcp.pop %v933
  %v972 = vrcp.pop %v936
  %v973 = vrcp.pop %v939
  %v974 = vrcp.pop %v942
  %v975 = vrcp.pop %v945
  %v976 = vrcp.pop %v948
  %v977 = vrcp.pop %v951
  %v978 = vrcp.pop %v954
  %v979 = vrcp.pop %v957
  %v980 = vrcp.pop %v960
  %v981 = vrcp.pop %v963
  %v982 = vrcp.pop %v966
  %v983 = vmul.f32 %v888, %v967
  %v984 = vmul.f32 %v890, %v968
  %v985 = vmul.f32 %v892, %v969
  %v986 = vmul.f32 %v894, %v970
  %v987 = vmul.f32 %v896, %v971
  %v988 = vmul.f32 %v898, %v972
  %v989 = vmul.f32 %v900, %v973
  %v990 = vmul.f32 %v902, %v974
  %v991 = vmul.f32 %v904, %v975
  %v992 = vmul.f32 %v906, %v976
  %v993 = vmul.f32 %v908, %v977
  %v994 = vmul.f32 %v910, %v978
  %v995 = vmul.f32 %v912, %v979
  %v996 = vmul.f32 %v914, %v980
  %v997 = vmul.f32 %v916, %v981
  %v998 = vmul.f32 %v918, %v982
  %v999 = vpack.c.bf16 %v983, %v983
  %v1000 = vpack.c.bf16 %v984, %v984
  %v1001 = vpack.c.bf16 %v985, %v985
  %v1002 = vpack.c.bf16 %v986, %v986
  %v1003 = vpack.c.bf16 %v987, %v987
  %v1004 = vpack.c.bf16 %v988, %v988
  %v1005 = vpack.c.bf16 %v989, %v989
  %v1006 = vpack.c.bf16 %v990, %v990
  %v1007 = vpack.c.bf16 %v991, %v991
  %v1008 = vpack.c.bf16 %v992, %v992
  %v1009 = vpack.c.bf16 %v993, %v993
  %v1010 = vpack.c.bf16 %v994, %v994
  %v1011 = vpack.c.bf16 %v995, %v995
  %v1012 = vpack.c.bf16 %v996, %v996
  %v1013 = vpack.c.bf16 %v997, %v997
  %v1014 = vpack.c.bf16 %v998, %v998
  %v1015 = vpack.c.bf16 %v382, %v382
  %v1016 = vpack.c.bf16 %v384, %v384
  %v1017 = vpack.c.bf16 %v387, %v387
  %v1018 = vpack.c.bf16 %v389, %v389
  %v1019 = vpack.c.bf16 %v392, %v392
  %v1020 = vpack.c.bf16 %v394, %v394
  %v1021 = vpack.c.bf16 %v397, %v397
  %v1022 = vpack.c.bf16 %v399, %v399
  %v1023 = vpack.c.bf16 %v402, %v402
  %v1024 = vpack.c.bf16 %v404, %v404
  %v1025 = vpack.c.bf16 %v407, %v407
  %v1026 = vpack.c.bf16 %v409, %v409
  %v1027 = vpack.c.bf16 %v412, %v412
  %v1028 = vpack.c.bf16 %v414, %v414
  %v1029 = vpack.c.bf16 %v417, %v417
  %v1030 = vpack.c.bf16 %v419, %v419
  %v1032 = vsel %vm822, %v999, 0
  %vm1034 = vcmask 1043456
  %v1036 = vsel %vm1034, %v1015, 0
  %1038 = vmatpush.bf16.msra.mxu0 0
  %1039 = vmatpush.bf16.msra.mxu0 0
  %1040 = vmatpush.bf16.msra.mxu0 0
  %1041 = vmatpush.bf16.msra.mxu0 0
  %1042 = vmatpush.bf16.msra.mxu0 0
  %1043 = vmatpush.bf16.msra.mxu0 0
  %1044 = vmatpush.bf16.msra.mxu0 0
  %1045 = vmatpush.bf16.msra.mxu0 %v1036
  %1046 = vmatmul.bf16.gmra.mxu0 %v1032
  %v1047 = vpop.f32.mrf.mxu0
  %v1048 = vadd.f32 0.0, %v1047
  %v1049 = vpop.f32.mrf.mxu0
  %1050 = vdwg.mxu0
  %v1052 = vsel %vm822, %v1000, 0
  %v1055 = vsel %vm1034, %v1016, 0
  %1057 = vmatpush.bf16.msra.mxu0 0
  %1058 = vmatpush.bf16.msra.mxu0 0
  %1059 = vmatpush.bf16.msra.mxu0 0
  %1060 = vmatpush.bf16.msra.mxu0 0
  %1061 = vmatpush.bf16.msra.mxu0 0
  %1062 = vmatpush.bf16.msra.mxu0 0
  %1063 = vmatpush.bf16.msra.mxu0 0
  %1064 = vmatpush.bf16.msra.mxu0 %v1055
  %1065 = vmatmul.bf16.gmra.mxu0 %v1052
  %v1066 = vpop.f32.mrf.mxu0
  %v1067 = vadd.f32 0.0, %v1066
  %v1068 = vpop.f32.mrf.mxu0
  %1069 = vdwg.mxu0
  %v1071 = vsel %vm822, %v1001, 0
  %v1074 = vsel %vm1034, %v1017, 0
  %1076 = vmatpush.bf16.msra.mxu0 0
  %1077 = vmatpush.bf16.msra.mxu0 0
  %1078 = vmatpush.bf16.msra.mxu0 0
  %1079 = vmatpush.bf16.msra.mxu0 0
  %1080 = vmatpush.bf16.msra.mxu0 0
  %1081 = vmatpush.bf16.msra.mxu0 0
  %1082 = vmatpush.bf16.msra.mxu0 0
  %1083 = vmatpush.bf16.msra.mxu0 %v1074
  %1084 = vmatmul.bf16.gmra.mxu0 %v1071
  %v1085 = vpop.f32.mrf.mxu0
  %v1086 = vadd.f32 0.0, %v1085
  %v1087 = vpop.f32.mrf.mxu0
  %1088 = vdwg.mxu0
  %v1090 = vsel %vm822, %v1002, 0
  %v1093 = vsel %vm1034, %v1018, 0
  %1095 = vmatpush.bf16.msra.mxu0 0
  %1096 = vmatpush.bf16.msra.mxu0 0
  %1097 = vmatpush.bf16.msra.mxu0 0
  %1098 = vmatpush.bf16.msra.mxu0 0
  %1099 = vmatpush.bf16.msra.mxu0 0
  %1100 = vmatpush.bf16.msra.mxu0 0
  %1101 = vmatpush.bf16.msra.mxu0 0
  %1102 = vmatpush.bf16.msra.mxu0 %v1093
  %1103 = vmatmul.bf16.gmra.mxu0 %v1090
  %v1104 = vpop.f32.mrf.mxu0
  %v1105 = vadd.f32 0.0, %v1104
  %v1106 = vpop.f32.mrf.mxu0
  %1107 = vdwg.mxu0
  %v1109 = vsel %vm822, %v1003, 0
  %v1112 = vsel %vm1034, %v1019, 0
  %1114 = vmatpush.bf16.msra.mxu0 0
  %1115 = vmatpush.bf16.msra.mxu0 0
  %1116 = vmatpush.bf16.msra.mxu0 0
  %1117 = vmatpush.bf16.msra.mxu0 0
  %1118 = vmatpush.bf16.msra.mxu0 0
  %1119 = vmatpush.bf16.msra.mxu0 0
  %1120 = vmatpush.bf16.msra.mxu0 0
  %1121 = vmatpush.bf16.msra.mxu0 %v1112
  %1122 = vmatmul.bf16.gmra.mxu0 %v1109
  %v1123 = vpop.f32.mrf.mxu0
  %v1124 = vadd.f32 0.0, %v1123
  %v1125 = vpop.f32.mrf.mxu0
  %1126 = vdwg.mxu0
  %v1128 = vsel %vm822, %v1004, 0
  %v1131 = vsel %vm1034, %v1020, 0
  %1133 = vmatpush.bf16.msra.mxu0 0
  %1134 = vmatpush.bf16.msra.mxu0 0
  %1135 = vmatpush.bf16.msra.mxu0 0
  %1136 = vmatpush.bf16.msra.mxu0 0
  %1137 = vmatpush.bf16.msra.mxu0 0
  %1138 = vmatpush.bf16.msra.mxu0 0
  %1139 = vmatpush.bf16.msra.mxu0 0
  %1140 = vmatpush.bf16.msra.mxu0 %v1131
  %1141 = vmatmul.bf16.gmra.mxu0 %v1128
  %v1142 = vpop.f32.mrf.mxu0
  %v1143 = vadd.f32 0.0, %v1142
  %v1144 = vpop.f32.mrf.mxu0
  %1145 = vdwg.mxu0
  %v1147 = vsel %vm822, %v1005, 0
  %v1150 = vsel %vm1034, %v1021, 0
  %1152 = vmatpush.bf16.msra.mxu0 0
  %1153 = vmatpush.bf16.msra.mxu0 0
  %1154 = vmatpush.bf16.msra.mxu0 0
  %1155 = vmatpush.bf16.msra.mxu0 0
  %1156 = vmatpush.bf16.msra.mxu0 0
  %1157 = vmatpush.bf16.msra.mxu0 0
  %1158 = vmatpush.bf16.msra.mxu0 0
  %1159 = vmatpush.bf16.msra.mxu0 %v1150
  %1160 = vmatmul.bf16.gmra.mxu0 %v1147
  %v1161 = vpop.f32.mrf.mxu0
  %v1162 = vadd.f32 0.0, %v1161
  %v1163 = vpop.f32.mrf.mxu0
  %1164 = vdwg.mxu0
  %v1166 = vsel %vm822, %v1006, 0
  %v1169 = vsel %vm1034, %v1022, 0
  %1171 = vmatpush.bf16.msra.mxu0 0
  %1172 = vmatpush.bf16.msra.mxu0 0
  %1173 = vmatpush.bf16.msra.mxu0 0
  %1174 = vmatpush.bf16.msra.mxu0 0
  %1175 = vmatpush.bf16.msra.mxu0 0
  %1176 = vmatpush.bf16.msra.mxu0 0
  %1177 = vmatpush.bf16.msra.mxu0 0
  %1178 = vmatpush.bf16.msra.mxu0 %v1169
  %1179 = vmatmul.bf16.gmra.mxu0 %v1166
  %v1180 = vpop.f32.mrf.mxu0
  %v1181 = vadd.f32 0.0, %v1180
  %v1182 = vpop.f32.mrf.mxu0
  %1183 = vdwg.mxu0
  %v1185 = vsel %vm822, %v1007, 0
  %v1188 = vsel %vm1034, %v1023, 0
  %1190 = vmatpush.bf16.msra.mxu0 0
  %1191 = vmatpush.bf16.msra.mxu0 0
  %1192 = vmatpush.bf16.msra.mxu0 0
  %1193 = vmatpush.bf16.msra.mxu0 0
  %1194 = vmatpush.bf16.msra.mxu0 0
  %1195 = vmatpush.bf16.msra.mxu0 0
  %1196 = vmatpush.bf16.msra.mxu0 0
  %1197 = vmatpush.bf16.msra.mxu0 %v1188
  %1198 = vmatmul.bf16.gmra.mxu0 %v1185
  %v1199 = vpop.f32.mrf.mxu0
  %v1200 = vadd.f32 0.0, %v1199
  %v1201 = vpop.f32.mrf.mxu0
  %1202 = vdwg.mxu0
  %v1204 = vsel %vm822, %v1008, 0
  %v1207 = vsel %vm1034, %v1024, 0
  %1209 = vmatpush.bf16.msra.mxu0 0
  %1210 = vmatpush.bf16.msra.mxu0 0
  %1211 = vmatpush.bf16.msra.mxu0 0
  %1212 = vmatpush.bf16.msra.mxu0 0
  %1213 = vmatpush.bf16.msra.mxu0 0
  %1214 = vmatpush.bf16.msra.mxu0 0
  %1215 = vmatpush.bf16.msra.mxu0 0
  %1216 = vmatpush.bf16.msra.mxu0 %v1207
  %1217 = vmatmul.bf16.gmra.mxu0 %v1204
  %v1218 = vpop.f32.mrf.mxu0
  %v1219 = vadd.f32 0.0, %v1218
  %v1220 = vpop.f32.mrf.mxu0
  %1221 = vdwg.mxu0
  %v1223 = vsel %vm822, %v1009, 0
  %v1226 = vsel %vm1034, %v1025, 0
  %1228 = vmatpush.bf16.msra.mxu0 0
  %1229 = vmatpush.bf16.msra.mxu0 0
  %1230 = vmatpush.bf16.msra.mxu0 0
  %1231 = vmatpush.bf16.msra.mxu0 0
  %1232 = vmatpush.bf16.msra.mxu0 0
  %1233 = vmatpush.bf16.msra.mxu0 0
  %1234 = vmatpush.bf16.msra.mxu0 0
  %1235 = vmatpush.bf16.msra.mxu0 %v1226
  %1236 = vmatmul.bf16.gmra.mxu0 %v1223
  %v1237 = vpop.f32.mrf.mxu0
  %v1238 = vadd.f32 0.0, %v1237
  %v1239 = vpop.f32.mrf.mxu0
  %1240 = vdwg.mxu0
  %v1242 = vsel %vm822, %v1010, 0
  %v1245 = vsel %vm1034, %v1026, 0
  %1247 = vmatpush.bf16.msra.mxu0 0
  %1248 = vmatpush.bf16.msra.mxu0 0
  %1249 = vmatpush.bf16.msra.mxu0 0
  %1250 = vmatpush.bf16.msra.mxu0 0
  %1251 = vmatpush.bf16.msra.mxu0 0
  %1252 = vmatpush.bf16.msra.mxu0 0
  %1253 = vmatpush.bf16.msra.mxu0 0
  %1254 = vmatpush.bf16.msra.mxu0 %v1245
  %1255 = vmatmul.bf16.gmra.mxu0 %v1242
  %v1256 = vpop.f32.mrf.mxu0
  %v1257 = vadd.f32 0.0, %v1256
  %v1258 = vpop.f32.mrf.mxu0
  %1259 = vdwg.mxu0
  %v1261 = vsel %vm822, %v1011, 0
  %v1264 = vsel %vm1034, %v1027, 0
  %1266 = vmatpush.bf16.msra.mxu0 0
  %1267 = vmatpush.bf16.msra.mxu0 0
  %1268 = vmatpush.bf16.msra.mxu0 0
  %1269 = vmatpush.bf16.msra.mxu0 0
  %1270 = vmatpush.bf16.msra.mxu0 0
  %1271 = vmatpush.bf16.msra.mxu0 0
  %1272 = vmatpush.bf16.msra.mxu0 0
  %1273 = vmatpush.bf16.msra.mxu0 %v1264
  %1274 = vmatmul.bf16.gmra.mxu0 %v1261
  %v1275 = vpop.f32.mrf.mxu0
  %v1276 = vadd.f32 0.0, %v1275
  %v1277 = vpop.f32.mrf.mxu0
  %1278 = vdwg.mxu0
  %v1280 = vsel %vm822, %v1012, 0
  %v1283 = vsel %vm1034, %v1028, 0
  %1285 = vmatpush.bf16.msra.mxu0 0
  %1286 = vmatpush.bf16.msra.mxu0 0
  %1287 = vmatpush.bf16.msra.mxu0 0
  %1288 = vmatpush.bf16.msra.mxu0 0
  %1289 = vmatpush.bf16.msra.mxu0 0
  %1290 = vmatpush.bf16.msra.mxu0 0
  %1291 = vmatpush.bf16.msra.mxu0 0
  %1292 = vmatpush.bf16.msra.mxu0 %v1283
  %1293 = vmatmul.bf16.gmra.mxu0 %v1280
  %v1294 = vpop.f32.mrf.mxu0
  %v1295 = vadd.f32 0.0, %v1294
  %v1296 = vpop.f32.mrf.mxu0
  %1297 = vdwg.mxu0
  %v1299 = vsel %vm822, %v1013, 0
  %v1302 = vsel %vm1034, %v1029, 0
  %1304 = vmatpush.bf16.msra.mxu0 0
  %1305 = vmatpush.bf16.msra.mxu0 0
  %1306 = vmatpush.bf16.msra.mxu0 0
  %1307 = vmatpush.bf16.msra.mxu0 0
  %1308 = vmatpush.bf16.msra.mxu0 0
  %1309 = vmatpush.bf16.msra.mxu0 0
  %1310 = vmatpush.bf16.msra.mxu0 0
  %1311 = vmatpush.bf16.msra.mxu0 %v1302
  %1312 = vmatmul.bf16.gmra.mxu0 %v1299
  %v1313 = vpop.f32.mrf.mxu0
  %v1314 = vadd.f32 0.0, %v1313
  %v1315 = vpop.f32.mrf.mxu0
  %1316 = vdwg.mxu0
  %v1318 = vsel %vm822, %v1014, 0
  %v1321 = vsel %vm1034, %v1030, 0
  %1323 = vmatpush.bf16.msra.mxu0 0
  %1324 = vmatpush.bf16.msra.mxu0 0
  %1325 = vmatpush.bf16.msra.mxu0 0
  %1326 = vmatpush.bf16.msra.mxu0 0
  %1327 = vmatpush.bf16.msra.mxu0 0
  %1328 = vmatpush.bf16.msra.mxu0 0
  %1329 = vmatpush.bf16.msra.mxu0 0
  %1330 = vmatpush.bf16.msra.mxu0 %v1321
  %1331 = vmatmul.bf16.gmra.mxu0 %v1318
  %v1332 = vpop.f32.mrf.mxu0
  %v1333 = vadd.f32 0.0, %v1332
  %v1334 = vpop.f32.mrf.mxu0
  %1335 = vdwg.mxu0
  %v1336 = vpack.c.bf16 %v1067, %v1048
  %v1337 = vpack.c.bf16 %v1105, %v1086
  %v1338 = vpack.c.bf16 %v1143, %v1124
  %v1339 = vpack.c.bf16 %v1181, %v1162
  %v1340 = vpack.c.bf16 %v1219, %v1200
  %v1341 = vpack.c.bf16 %v1257, %v1238
  %v1342 = vpack.c.bf16 %v1295, %v1276
  %v1343 = vpack.c.bf16 %v1333, %v1314
  %v1346 = vunpack.c.l.b16 %v181
  %v1347 = vunpack.c.l.b16 %v182
  %v1348 = vpack.c.b16 %v1347, %v1346
  %v1351 = vsel %vm517, %v1336, 0
  %v1354 = vsel %vm517, %v1337, 0
  %v1357 = vsel %vm517, %v1338, 0
  %v1360 = vsel %vm517, %v1339, 0
  %v1363 = vsel %vm517, %v1340, 0
  %v1366 = vsel %vm517, %v1341, 0
  %v1369 = vsel %vm517, %v1342, 0
  %v1372 = vsel %vm517, %v1343, 0
  %1374 = vmatpush.bf16.msra.mxu0 0
  %1375 = vmatpush.bf16.msra.mxu0 0
  %1376 = vmatpush.bf16.msra.mxu0 0
  %1377 = vmatpush.bf16.msra.mxu0 0
  %1378 = vmatpush.bf16.msra.mxu0 0
  %1379 = vmatpush.bf16.msra.mxu0 0
  %1380 = vmatpush.bf16.msra.mxu0 0
  %1381 = vmatpush.bf16.msra.mxu0 %v1348
  %1382 = vmatmul.bf16.gmra.mxu0 %v1351
  %v1383 = vpop.f32.mrf.mxu0
  %v1384 = vadd.f32 0.0, %v1383
  %v1385 = vpop.f32.mrf.mxu0
  %v1386 = vadd.f32 0.0, %v1385
  %1387 = vmatmul.bf16.gmra.mxu0 %v1354
  %v1388 = vpop.f32.mrf.mxu0
  %v1389 = vadd.f32 0.0, %v1388
  %v1390 = vpop.f32.mrf.mxu0
  %v1391 = vadd.f32 0.0, %v1390
  %1392 = vmatmul.bf16.gmra.mxu0 %v1357
  %v1393 = vpop.f32.mrf.mxu0
  %v1394 = vadd.f32 0.0, %v1393
  %v1395 = vpop.f32.mrf.mxu0
  %v1396 = vadd.f32 0.0, %v1395
  %1397 = vmatmul.bf16.gmra.mxu0 %v1360
  %v1398 = vpop.f32.mrf.mxu0
  %v1399 = vadd.f32 0.0, %v1398
  %v1400 = vpop.f32.mrf.mxu0
  %v1401 = vadd.f32 0.0, %v1400
  %1402 = vmatmul.bf16.gmra.mxu0 %v1363
  %v1403 = vpop.f32.mrf.mxu0
  %v1404 = vadd.f32 0.0, %v1403
  %v1405 = vpop.f32.mrf.mxu0
  %v1406 = vadd.f32 0.0, %v1405
  %1407 = vmatmul.bf16.gmra.mxu0 %v1366
  %v1408 = vpop.f32.mrf.mxu0
  %v1409 = vadd.f32 0.0, %v1408
  %v1410 = vpop.f32.mrf.mxu0
  %v1411 = vadd.f32 0.0, %v1410
  %1412 = vmatmul.bf16.gmra.mxu0 %v1369
  %v1413 = vpop.f32.mrf.mxu0
  %v1414 = vadd.f32 0.0, %v1413
  %v1415 = vpop.f32.mrf.mxu0
  %v1416 = vadd.f32 0.0, %v1415
  %1417 = vmatmul.bf16.gmra.mxu0 %v1372
  %v1418 = vpop.f32.mrf.mxu0
  %v1419 = vadd.f32 0.0, %v1418
  %v1420 = vpop.f32.mrf.mxu0
  %v1421 = vadd.f32 0.0, %v1420
  %1422 = vdwg.mxu0
  %v1423 = vperm.slane %v201, 0
  %v1424 = vadd.f32 %v1423, %v1384
  %v1425 = vadd.f32 %v1423, %v1386
  %v1426 = vadd.f32 %v1423, %v1389
  %v1427 = vadd.f32 %v1423, %v1391
  %v1428 = vadd.f32 %v1423, %v1394
  %v1429 = vadd.f32 %v1423, %v1396
  %v1430 = vadd.f32 %v1423, %v1399
  %v1431 = vadd.f32 %v1423, %v1401
  %v1432 = vadd.f32 %v1423, %v1404
  %v1433 = vadd.f32 %v1423, %v1406
  %v1434 = vadd.f32 %v1423, %v1409
  %v1435 = vadd.f32 %v1423, %v1411
  %v1436 = vadd.f32 %v1423, %v1414
  %v1437 = vadd.f32 %v1423, %v1416
  %v1438 = vadd.f32 %v1423, %v1419
  %v1439 = vadd.f32 %v1423, %v1421
  %v1440 = vperm.slane %v185, 1
  %v1445 = vunpack.c.l.b16 %v161
  %v1446 = vunpack.c.l.b16 %v162
  %v1447 = vunpack.c.l.b16 %v163
  %v1448 = vunpack.c.l.b16 %v164
  %v1449 = vpack.c.b16 %v1446, %v1445
  %v1450 = vpack.c.b16 %v1448, %v1447
  %1453 = vmatpush.bf16.msra.mxu0 0
  %1454 = vmatpush.bf16.msra.mxu0 0
  %1455 = vmatpush.bf16.msra.mxu0 0
  %1456 = vmatpush.bf16.msra.mxu0 0
  %1457 = vmatpush.bf16.msra.mxu0 0
  %1458 = vmatpush.bf16.msra.mxu0 0
  %1459 = vmatpush.bf16.msra.mxu0 %v1450
  %1460 = vmatpush.bf16.msra.mxu0 %v1449
  %1461 = vmatmul.bf16.gmra.mxu0 %v225
  %v1462 = vpop.f32.mrf.mxu0
  %v1463 = vadd.f32 %v1440, %v1462
  %v1464 = vpop.f32.mrf.mxu0
  %v1465 = vadd.f32 %v1440, %v1464
  %1466 = vmatmul.bf16.gmra.mxu0 %v228
  %v1467 = vpop.f32.mrf.mxu0
  %v1468 = vadd.f32 %v1440, %v1467
  %v1469 = vpop.f32.mrf.mxu0
  %v1470 = vadd.f32 %v1440, %v1469
  %1471 = vmatmul.bf16.gmra.mxu0 %v231
  %v1472 = vpop.f32.mrf.mxu0
  %v1473 = vadd.f32 %v1440, %v1472
  %v1474 = vpop.f32.mrf.mxu0
  %v1475 = vadd.f32 %v1440, %v1474
  %1476 = vmatmul.bf16.gmra.mxu0 %v234
  %v1477 = vpop.f32.mrf.mxu0
  %v1478 = vadd.f32 %v1440, %v1477
  %v1479 = vpop.f32.mrf.mxu0
  %v1480 = vadd.f32 %v1440, %v1479
  %1481 = vmatmul.bf16.gmra.mxu0 %v237
  %v1482 = vpop.f32.mrf.mxu0
  %v1483 = vadd.f32 %v1440, %v1482
  %v1484 = vpop.f32.mrf.mxu0
  %v1485 = vadd.f32 %v1440, %v1484
  %1486 = vmatmul.bf16.gmra.mxu0 %v240
  %v1487 = vpop.f32.mrf.mxu0
  %v1488 = vadd.f32 %v1440, %v1487
  %v1489 = vpop.f32.mrf.mxu0
  %v1490 = vadd.f32 %v1440, %v1489
  %1491 = vmatmul.bf16.gmra.mxu0 %v243
  %v1492 = vpop.f32.mrf.mxu0
  %v1493 = vadd.f32 %v1440, %v1492
  %v1494 = vpop.f32.mrf.mxu0
  %v1495 = vadd.f32 %v1440, %v1494
  %1496 = vmatmul.bf16.gmra.mxu0 %v246
  %v1497 = vpop.f32.mrf.mxu0
  %v1498 = vadd.f32 %v1440, %v1497
  %v1499 = vpop.f32.mrf.mxu0
  %v1500 = vadd.f32 %v1440, %v1499
  %1501 = vdwg.mxu0
  %v1502 = vperm.slane %v186, 1
  %v1507 = vunpack.c.l.b16 %v169
  %v1508 = vunpack.c.l.b16 %v170
  %v1509 = vunpack.c.l.b16 %v171
  %v1510 = vunpack.c.l.b16 %v172
  %v1511 = vpack.c.b16 %v1508, %v1507
  %v1512 = vpack.c.b16 %v1510, %v1509
  %1515 = vmatpush.bf16.msra.mxu0 0
  %1516 = vmatpush.bf16.msra.mxu0 0
  %1517 = vmatpush.bf16.msra.mxu0 0
  %1518 = vmatpush.bf16.msra.mxu0 0
  %1519 = vmatpush.bf16.msra.mxu0 0
  %1520 = vmatpush.bf16.msra.mxu0 0
  %1521 = vmatpush.bf16.msra.mxu0 %v1512
  %1522 = vmatpush.bf16.msra.mxu0 %v1511
  %1523 = vmatmul.bf16.gmra.mxu0 %v225
  %v1524 = vpop.f32.mrf.mxu0
  %v1525 = vadd.f32 %v1502, %v1524
  %v1526 = vpop.f32.mrf.mxu0
  %v1527 = vadd.f32 %v1502, %v1526
  %1528 = vmatmul.bf16.gmra.mxu0 %v228
  %v1529 = vpop.f32.mrf.mxu0
  %v1530 = vadd.f32 %v1502, %v1529
  %v1531 = vpop.f32.mrf.mxu0
  %v1532 = vadd.f32 %v1502, %v1531
  %1533 = vmatmul.bf16.gmra.mxu0 %v231
  %v1534 = vpop.f32.mrf.mxu0
  %v1535 = vadd.f32 %v1502, %v1534
  %v1536 = vpop.f32.mrf.mxu0
  %v1537 = vadd.f32 %v1502, %v1536
  %1538 = vmatmul.bf16.gmra.mxu0 %v234
  %v1539 = vpop.f32.mrf.mxu0
  %v1540 = vadd.f32 %v1502, %v1539
  %v1541 = vpop.f32.mrf.mxu0
  %v1542 = vadd.f32 %v1502, %v1541
  %1543 = vmatmul.bf16.gmra.mxu0 %v237
  %v1544 = vpop.f32.mrf.mxu0
  %v1545 = vadd.f32 %v1502, %v1544
  %v1546 = vpop.f32.mrf.mxu0
  %v1547 = vadd.f32 %v1502, %v1546
  %1548 = vmatmul.bf16.gmra.mxu0 %v240
  %v1549 = vpop.f32.mrf.mxu0
  %v1550 = vadd.f32 %v1502, %v1549
  %v1551 = vpop.f32.mrf.mxu0
  %v1552 = vadd.f32 %v1502, %v1551
  %1553 = vmatmul.bf16.gmra.mxu0 %v243
  %v1554 = vpop.f32.mrf.mxu0
  %v1555 = vadd.f32 %v1502, %v1554
  %v1556 = vpop.f32.mrf.mxu0
  %v1557 = vadd.f32 %v1502, %v1556
  %1558 = vmatmul.bf16.gmra.mxu0 %v246
  %v1559 = vpop.f32.mrf.mxu0
  %v1560 = vadd.f32 %v1502, %v1559
  %v1561 = vpop.f32.mrf.mxu0
  %v1562 = vadd.f32 %v1502, %v1561
  %1563 = vdwg.mxu0
  %v1564 = vperm.slane %v187, 1
  %v1569 = vunpack.c.l.b16 %v177
  %v1570 = vunpack.c.l.b16 %v178
  %v1571 = vunpack.c.l.b16 %v179
  %v1572 = vunpack.c.l.b16 %v180
  %v1573 = vpack.c.b16 %v1570, %v1569
  %v1574 = vpack.c.b16 %v1572, %v1571
  %1577 = vmatpush.bf16.msra.mxu0 0
  %1578 = vmatpush.bf16.msra.mxu0 0
  %1579 = vmatpush.bf16.msra.mxu0 0
  %1580 = vmatpush.bf16.msra.mxu0 0
  %1581 = vmatpush.bf16.msra.mxu0 0
  %1582 = vmatpush.bf16.msra.mxu0 0
  %1583 = vmatpush.bf16.msra.mxu0 %v1574
  %1584 = vmatpush.bf16.msra.mxu0 %v1573
  %1585 = vmatmul.bf16.gmra.mxu0 %v225
  %v1586 = vpop.f32.mrf.mxu0
  %v1587 = vadd.f32 %v1564, %v1586
  %v1588 = vpop.f32.mrf.mxu0
  %v1589 = vadd.f32 %v1564, %v1588
  %1590 = vmatmul.bf16.gmra.mxu0 %v228
  %v1591 = vpop.f32.mrf.mxu0
  %v1592 = vadd.f32 %v1564, %v1591
  %v1593 = vpop.f32.mrf.mxu0
  %v1594 = vadd.f32 %v1564, %v1593
  %1595 = vmatmul.bf16.gmra.mxu0 %v231
  %v1596 = vpop.f32.mrf.mxu0
  %v1597 = vadd.f32 %v1564, %v1596
  %v1598 = vpop.f32.mrf.mxu0
  %v1599 = vadd.f32 %v1564, %v1598
  %1600 = vmatmul.bf16.gmra.mxu0 %v234
  %v1601 = vpop.f32.mrf.mxu0
  %v1602 = vadd.f32 %v1564, %v1601
  %v1603 = vpop.f32.mrf.mxu0
  %v1604 = vadd.f32 %v1564, %v1603
  %1605 = vmatmul.bf16.gmra.mxu0 %v237
  %v1606 = vpop.f32.mrf.mxu0
  %v1607 = vadd.f32 %v1564, %v1606
  %v1608 = vpop.f32.mrf.mxu0
  %v1609 = vadd.f32 %v1564, %v1608
  %1610 = vmatmul.bf16.gmra.mxu0 %v240
  %v1611 = vpop.f32.mrf.mxu0
  %v1612 = vadd.f32 %v1564, %v1611
  %v1613 = vpop.f32.mrf.mxu0
  %v1614 = vadd.f32 %v1564, %v1613
  %1615 = vmatmul.bf16.gmra.mxu0 %v243
  %v1616 = vpop.f32.mrf.mxu0
  %v1617 = vadd.f32 %v1564, %v1616
  %v1618 = vpop.f32.mrf.mxu0
  %v1619 = vadd.f32 %v1564, %v1618
  %1620 = vmatmul.bf16.gmra.mxu0 %v246
  %v1621 = vpop.f32.mrf.mxu0
  %v1622 = vadd.f32 %v1564, %v1621
  %v1623 = vpop.f32.mrf.mxu0
  %v1624 = vadd.f32 %v1564, %v1623
  %1625 = vdwg.mxu0
  %v1626 = vmul.f32 %v1463, 0.25
  %v1627 = vmul.f32 %v1465, 0.25
  %v1628 = vmul.f32 %v1468, 0.25
  %v1629 = vmul.f32 %v1470, 0.25
  %v1630 = vmul.f32 %v1473, 0.25
  %v1631 = vmul.f32 %v1475, 0.25
  %v1632 = vmul.f32 %v1478, 0.25
  %v1633 = vmul.f32 %v1480, 0.25
  %v1634 = vmul.f32 %v1483, 0.25
  %v1635 = vmul.f32 %v1485, 0.25
  %v1636 = vmul.f32 %v1488, 0.25
  %v1637 = vmul.f32 %v1490, 0.25
  %v1638 = vmul.f32 %v1493, 0.25
  %v1639 = vmul.f32 %v1495, 0.25
  %v1640 = vmul.f32 %v1498, 0.25
  %v1641 = vmul.f32 %v1500, 0.25
  %v1642 = vpack.c.bf16 %v1626, %v1626
  %v1643 = vpack.c.bf16 %v1627, %v1627
  %v1644 = vpack.c.bf16 %v1628, %v1628
  %v1645 = vpack.c.bf16 %v1629, %v1629
  %v1646 = vpack.c.bf16 %v1630, %v1630
  %v1647 = vpack.c.bf16 %v1631, %v1631
  %v1648 = vpack.c.bf16 %v1632, %v1632
  %v1649 = vpack.c.bf16 %v1633, %v1633
  %v1650 = vpack.c.bf16 %v1634, %v1634
  %v1651 = vpack.c.bf16 %v1635, %v1635
  %v1652 = vpack.c.bf16 %v1636, %v1636
  %v1653 = vpack.c.bf16 %v1637, %v1637
  %v1654 = vpack.c.bf16 %v1638, %v1638
  %v1655 = vpack.c.bf16 %v1639, %v1639
  %v1656 = vpack.c.bf16 %v1640, %v1640
  %v1657 = vpack.c.bf16 %v1641, %v1641
  %v1658 = vpack.c.bf16 %v1525, %v1525
  %v1659 = vpack.c.bf16 %v1527, %v1527
  %v1660 = vpack.c.bf16 %v1530, %v1530
  %v1661 = vpack.c.bf16 %v1532, %v1532
  %v1662 = vpack.c.bf16 %v1535, %v1535
  %v1663 = vpack.c.bf16 %v1537, %v1537
  %v1664 = vpack.c.bf16 %v1540, %v1540
  %v1665 = vpack.c.bf16 %v1542, %v1542
  %v1666 = vpack.c.bf16 %v1545, %v1545
  %v1667 = vpack.c.bf16 %v1547, %v1547
  %v1668 = vpack.c.bf16 %v1550, %v1550
  %v1669 = vpack.c.bf16 %v1552, %v1552
  %v1670 = vpack.c.bf16 %v1555, %v1555
  %v1671 = vpack.c.bf16 %v1557, %v1557
  %v1672 = vpack.c.bf16 %v1560, %v1560
  %v1673 = vpack.c.bf16 %v1562, %v1562
  %v1675 = vsel %vm517, %v1642, 0
  %v1678 = vsel %vm517, %v1658, 0
  %1680 = vmatpush.bf16.xpose.msra.mxu0 0
  %1681 = vmatpush.bf16.xpose.msra.mxu0 0
  %1682 = vmatpush.bf16.xpose.msra.mxu0 0
  %1683 = vmatpush.bf16.xpose.msra.mxu0 0
  %1684 = vmatpush.bf16.xpose.msra.mxu0 0
  %1685 = vmatpush.bf16.xpose.msra.mxu0 0
  %1686 = vmatpush.bf16.xpose.msra.mxu0 0
  %1687 = vmatpush.bf16.xpose.msra.mxu0 %v1678
  %1688 = vmatmul.bf16.gmra.mxu0 %v1675
  %v1689 = vpop.f32.mrf.mxu0
  %v1690 = vadd.f32 %v485, %v1689
  %v1691 = vpop.f32.mrf.mxu0
  %1692 = vdwg.mxu0
  %v1694 = vsel %vm517, %v1643, 0
  %v1697 = vsel %vm517, %v1659, 0
  %1699 = vmatpush.bf16.xpose.msra.mxu0 0
  %1700 = vmatpush.bf16.xpose.msra.mxu0 0
  %1701 = vmatpush.bf16.xpose.msra.mxu0 0
  %1702 = vmatpush.bf16.xpose.msra.mxu0 0
  %1703 = vmatpush.bf16.xpose.msra.mxu0 0
  %1704 = vmatpush.bf16.xpose.msra.mxu0 0
  %1705 = vmatpush.bf16.xpose.msra.mxu0 0
  %1706 = vmatpush.bf16.xpose.msra.mxu0 %v1697
  %1707 = vmatmul.bf16.gmra.mxu0 %v1694
  %v1708 = vpop.f32.mrf.mxu0
  %v1709 = vadd.f32 %v486, %v1708
  %v1710 = vpop.f32.mrf.mxu0
  %1711 = vdwg.mxu0
  %v1713 = vsel %vm517, %v1644, 0
  %v1716 = vsel %vm517, %v1660, 0
  %1718 = vmatpush.bf16.xpose.msra.mxu0 0
  %1719 = vmatpush.bf16.xpose.msra.mxu0 0
  %1720 = vmatpush.bf16.xpose.msra.mxu0 0
  %1721 = vmatpush.bf16.xpose.msra.mxu0 0
  %1722 = vmatpush.bf16.xpose.msra.mxu0 0
  %1723 = vmatpush.bf16.xpose.msra.mxu0 0
  %1724 = vmatpush.bf16.xpose.msra.mxu0 0
  %1725 = vmatpush.bf16.xpose.msra.mxu0 %v1716
  %1726 = vmatmul.bf16.gmra.mxu0 %v1713
  %v1727 = vpop.f32.mrf.mxu0
  %v1728 = vadd.f32 %v487, %v1727
  %v1729 = vpop.f32.mrf.mxu0
  %1730 = vdwg.mxu0
  %v1732 = vsel %vm517, %v1645, 0
  %v1735 = vsel %vm517, %v1661, 0
  %1737 = vmatpush.bf16.xpose.msra.mxu0 0
  %1738 = vmatpush.bf16.xpose.msra.mxu0 0
  %1739 = vmatpush.bf16.xpose.msra.mxu0 0
  %1740 = vmatpush.bf16.xpose.msra.mxu0 0
  %1741 = vmatpush.bf16.xpose.msra.mxu0 0
  %1742 = vmatpush.bf16.xpose.msra.mxu0 0
  %1743 = vmatpush.bf16.xpose.msra.mxu0 0
  %1744 = vmatpush.bf16.xpose.msra.mxu0 %v1735
  %1745 = vmatmul.bf16.gmra.mxu0 %v1732
  %v1746 = vpop.f32.mrf.mxu0
  %v1747 = vadd.f32 %v488, %v1746
  %v1748 = vpop.f32.mrf.mxu0
  %1749 = vdwg.mxu0
  %v1751 = vsel %vm517, %v1646, 0
  %v1754 = vsel %vm517, %v1662, 0
  %1756 = vmatpush.bf16.xpose.msra.mxu0 0
  %1757 = vmatpush.bf16.xpose.msra.mxu0 0
  %1758 = vmatpush.bf16.xpose.msra.mxu0 0
  %1759 = vmatpush.bf16.xpose.msra.mxu0 0
  %1760 = vmatpush.bf16.xpose.msra.mxu0 0
  %1761 = vmatpush.bf16.xpose.msra.mxu0 0
  %1762 = vmatpush.bf16.xpose.msra.mxu0 0
  %1763 = vmatpush.bf16.xpose.msra.mxu0 %v1754
  %1764 = vmatmul.bf16.gmra.mxu0 %v1751
  %v1765 = vpop.f32.mrf.mxu0
  %v1766 = vadd.f32 %v489, %v1765
  %v1767 = vpop.f32.mrf.mxu0
  %1768 = vdwg.mxu0
  %v1770 = vsel %vm517, %v1647, 0
  %v1773 = vsel %vm517, %v1663, 0
  %1775 = vmatpush.bf16.xpose.msra.mxu0 0
  %1776 = vmatpush.bf16.xpose.msra.mxu0 0
  %1777 = vmatpush.bf16.xpose.msra.mxu0 0
  %1778 = vmatpush.bf16.xpose.msra.mxu0 0
  %1779 = vmatpush.bf16.xpose.msra.mxu0 0
  %1780 = vmatpush.bf16.xpose.msra.mxu0 0
  %1781 = vmatpush.bf16.xpose.msra.mxu0 0
  %1782 = vmatpush.bf16.xpose.msra.mxu0 %v1773
  %1783 = vmatmul.bf16.gmra.mxu0 %v1770
  %v1784 = vpop.f32.mrf.mxu0
  %v1785 = vadd.f32 %v490, %v1784
  %v1786 = vpop.f32.mrf.mxu0
  %1787 = vdwg.mxu0
  %v1789 = vsel %vm517, %v1648, 0
  %v1792 = vsel %vm517, %v1664, 0
  %1794 = vmatpush.bf16.xpose.msra.mxu0 0
  %1795 = vmatpush.bf16.xpose.msra.mxu0 0
  %1796 = vmatpush.bf16.xpose.msra.mxu0 0
  %1797 = vmatpush.bf16.xpose.msra.mxu0 0
  %1798 = vmatpush.bf16.xpose.msra.mxu0 0
  %1799 = vmatpush.bf16.xpose.msra.mxu0 0
  %1800 = vmatpush.bf16.xpose.msra.mxu0 0
  %1801 = vmatpush.bf16.xpose.msra.mxu0 %v1792
  %1802 = vmatmul.bf16.gmra.mxu0 %v1789
  %v1803 = vpop.f32.mrf.mxu0
  %v1804 = vadd.f32 %v491, %v1803
  %v1805 = vpop.f32.mrf.mxu0
  %1806 = vdwg.mxu0
  %v1808 = vsel %vm517, %v1649, 0
  %v1811 = vsel %vm517, %v1665, 0
  %1813 = vmatpush.bf16.xpose.msra.mxu0 0
  %1814 = vmatpush.bf16.xpose.msra.mxu0 0
  %1815 = vmatpush.bf16.xpose.msra.mxu0 0
  %1816 = vmatpush.bf16.xpose.msra.mxu0 0
  %1817 = vmatpush.bf16.xpose.msra.mxu0 0
  %1818 = vmatpush.bf16.xpose.msra.mxu0 0
  %1819 = vmatpush.bf16.xpose.msra.mxu0 0
  %1820 = vmatpush.bf16.xpose.msra.mxu0 %v1811
  %1821 = vmatmul.bf16.gmra.mxu0 %v1808
  %v1822 = vpop.f32.mrf.mxu0
  %v1823 = vadd.f32 %v492, %v1822
  %v1824 = vpop.f32.mrf.mxu0
  %1825 = vdwg.mxu0
  %v1827 = vsel %vm517, %v1650, 0
  %v1830 = vsel %vm517, %v1666, 0
  %1832 = vmatpush.bf16.xpose.msra.mxu0 0
  %1833 = vmatpush.bf16.xpose.msra.mxu0 0
  %1834 = vmatpush.bf16.xpose.msra.mxu0 0
  %1835 = vmatpush.bf16.xpose.msra.mxu0 0
  %1836 = vmatpush.bf16.xpose.msra.mxu0 0
  %1837 = vmatpush.bf16.xpose.msra.mxu0 0
  %1838 = vmatpush.bf16.xpose.msra.mxu0 0
  %1839 = vmatpush.bf16.xpose.msra.mxu0 %v1830
  %1840 = vmatmul.bf16.gmra.mxu0 %v1827
  %v1841 = vpop.f32.mrf.mxu0
  %v1842 = vadd.f32 %v493, %v1841
  %v1843 = vpop.f32.mrf.mxu0
  %1844 = vdwg.mxu0
  %v1846 = vsel %vm517, %v1651, 0
  %v1849 = vsel %vm517, %v1667, 0
  %1851 = vmatpush.bf16.xpose.msra.mxu0 0
  %1852 = vmatpush.bf16.xpose.msra.mxu0 0
  %1853 = vmatpush.bf16.xpose.msra.mxu0 0
  %1854 = vmatpush.bf16.xpose.msra.mxu0 0
  %1855 = vmatpush.bf16.xpose.msra.mxu0 0
  %1856 = vmatpush.bf16.xpose.msra.mxu0 0
  %1857 = vmatpush.bf16.xpose.msra.mxu0 0
  %1858 = vmatpush.bf16.xpose.msra.mxu0 %v1849
  %1859 = vmatmul.bf16.gmra.mxu0 %v1846
  %v1860 = vpop.f32.mrf.mxu0
  %v1861 = vadd.f32 %v494, %v1860
  %v1862 = vpop.f32.mrf.mxu0
  %1863 = vdwg.mxu0
  %v1865 = vsel %vm517, %v1652, 0
  %v1868 = vsel %vm517, %v1668, 0
  %1870 = vmatpush.bf16.xpose.msra.mxu0 0
  %1871 = vmatpush.bf16.xpose.msra.mxu0 0
  %1872 = vmatpush.bf16.xpose.msra.mxu0 0
  %1873 = vmatpush.bf16.xpose.msra.mxu0 0
  %1874 = vmatpush.bf16.xpose.msra.mxu0 0
  %1875 = vmatpush.bf16.xpose.msra.mxu0 0
  %1876 = vmatpush.bf16.xpose.msra.mxu0 0
  %1877 = vmatpush.bf16.xpose.msra.mxu0 %v1868
  %1878 = vmatmul.bf16.gmra.mxu0 %v1865
  %v1879 = vpop.f32.mrf.mxu0
  %v1880 = vadd.f32 %v495, %v1879
  %v1881 = vpop.f32.mrf.mxu0
  %1882 = vdwg.mxu0
  %v1884 = vsel %vm517, %v1653, 0
  %v1887 = vsel %vm517, %v1669, 0
  %1889 = vmatpush.bf16.xpose.msra.mxu0 0
  %1890 = vmatpush.bf16.xpose.msra.mxu0 0
  %1891 = vmatpush.bf16.xpose.msra.mxu0 0
  %1892 = vmatpush.bf16.xpose.msra.mxu0 0
  %1893 = vmatpush.bf16.xpose.msra.mxu0 0
  %1894 = vmatpush.bf16.xpose.msra.mxu0 0
  %1895 = vmatpush.bf16.xpose.msra.mxu0 0
  %1896 = vmatpush.bf16.xpose.msra.mxu0 %v1887
  %1897 = vmatmul.bf16.gmra.mxu0 %v1884
  %v1898 = vpop.f32.mrf.mxu0
  %v1899 = vadd.f32 %v496, %v1898
  %v1900 = vpop.f32.mrf.mxu0
  %1901 = vdwg.mxu0
  %v1903 = vsel %vm517, %v1654, 0
  %v1906 = vsel %vm517, %v1670, 0
  %1908 = vmatpush.bf16.xpose.msra.mxu0 0
  %1909 = vmatpush.bf16.xpose.msra.mxu0 0
  %1910 = vmatpush.bf16.xpose.msra.mxu0 0
  %1911 = vmatpush.bf16.xpose.msra.mxu0 0
  %1912 = vmatpush.bf16.xpose.msra.mxu0 0
  %1913 = vmatpush.bf16.xpose.msra.mxu0 0
  %1914 = vmatpush.bf16.xpose.msra.mxu0 0
  %1915 = vmatpush.bf16.xpose.msra.mxu0 %v1906
  %1916 = vmatmul.bf16.gmra.mxu0 %v1903
  %v1917 = vpop.f32.mrf.mxu0
  %v1918 = vadd.f32 %v497, %v1917
  %v1919 = vpop.f32.mrf.mxu0
  %1920 = vdwg.mxu0
  %v1922 = vsel %vm517, %v1655, 0
  %v1925 = vsel %vm517, %v1671, 0
  %1927 = vmatpush.bf16.xpose.msra.mxu0 0
  %1928 = vmatpush.bf16.xpose.msra.mxu0 0
  %1929 = vmatpush.bf16.xpose.msra.mxu0 0
  %1930 = vmatpush.bf16.xpose.msra.mxu0 0
  %1931 = vmatpush.bf16.xpose.msra.mxu0 0
  %1932 = vmatpush.bf16.xpose.msra.mxu0 0
  %1933 = vmatpush.bf16.xpose.msra.mxu0 0
  %1934 = vmatpush.bf16.xpose.msra.mxu0 %v1925
  %1935 = vmatmul.bf16.gmra.mxu0 %v1922
  %v1936 = vpop.f32.mrf.mxu0
  %v1937 = vadd.f32 %v498, %v1936
  %v1938 = vpop.f32.mrf.mxu0
  %1939 = vdwg.mxu0
  %v1941 = vsel %vm517, %v1656, 0
  %v1944 = vsel %vm517, %v1672, 0
  %1946 = vmatpush.bf16.xpose.msra.mxu0 0
  %1947 = vmatpush.bf16.xpose.msra.mxu0 0
  %1948 = vmatpush.bf16.xpose.msra.mxu0 0
  %1949 = vmatpush.bf16.xpose.msra.mxu0 0
  %1950 = vmatpush.bf16.xpose.msra.mxu0 0
  %1951 = vmatpush.bf16.xpose.msra.mxu0 0
  %1952 = vmatpush.bf16.xpose.msra.mxu0 0
  %1953 = vmatpush.bf16.xpose.msra.mxu0 %v1944
  %1954 = vmatmul.bf16.gmra.mxu0 %v1941
  %v1955 = vpop.f32.mrf.mxu0
  %v1956 = vadd.f32 %v499, %v1955
  %v1957 = vpop.f32.mrf.mxu0
  %1958 = vdwg.mxu0
  %v1960 = vsel %vm517, %v1657, 0
  %v1963 = vsel %vm517, %v1673, 0
  %1965 = vmatpush.bf16.xpose.msra.mxu0 0
  %1966 = vmatpush.bf16.xpose.msra.mxu0 0
  %1967 = vmatpush.bf16.xpose.msra.mxu0 0
  %1968 = vmatpush.bf16.xpose.msra.mxu0 0
  %1969 = vmatpush.bf16.xpose.msra.mxu0 0
  %1970 = vmatpush.bf16.xpose.msra.mxu0 0
  %1971 = vmatpush.bf16.xpose.msra.mxu0 0
  %1972 = vmatpush.bf16.xpose.msra.mxu0 %v1963
  %1973 = vmatmul.bf16.gmra.mxu0 %v1960
  %v1974 = vpop.f32.mrf.mxu0
  %v1975 = vadd.f32 %v500, %v1974
  %v1976 = vpop.f32.mrf.mxu0
  %1977 = vdwg.mxu0
  %v1978 = vsel %vm822, %v1690, -inf
  %1979 = vmax.xlane.f32.xlu0 %v1978
  %v1980 = vpop.xlane.xlu0 %1979
  %v1981 = vsel %vm822, %v1709, -inf
  %1982 = vmax.xlane.f32.xlu0 %v1981
  %v1983 = vpop.xlane.xlu0 %1982
  %v1984 = vsel %vm822, %v1728, -inf
  %1985 = vmax.xlane.f32.xlu0 %v1984
  %v1986 = vpop.xlane.xlu0 %1985
  %v1987 = vsel %vm822, %v1747, -inf
  %1988 = vmax.xlane.f32.xlu0 %v1987
  %v1989 = vpop.xlane.xlu0 %1988
  %v1990 = vsel %vm822, %v1766, -inf
  %1991 = vmax.xlane.f32.xlu0 %v1990
  %v1992 = vpop.xlane.xlu0 %1991
  %v1993 = vsel %vm822, %v1785, -inf
  %1994 = vmax.xlane.f32.xlu0 %v1993
  %v1995 = vpop.xlane.xlu0 %1994
  %v1996 = vsel %vm822, %v1804, -inf
  %1997 = vmax.xlane.f32.xlu0 %v1996
  %v1998 = vpop.xlane.xlu0 %1997
  %v1999 = vsel %vm822, %v1823, -inf
  %2000 = vmax.xlane.f32.xlu0 %v1999
  %v2001 = vpop.xlane.xlu0 %2000
  %v2002 = vsel %vm822, %v1842, -inf
  %2003 = vmax.xlane.f32.xlu0 %v2002
  %v2004 = vpop.xlane.xlu0 %2003
  %v2005 = vsel %vm822, %v1861, -inf
  %2006 = vmax.xlane.f32.xlu0 %v2005
  %v2007 = vpop.xlane.xlu0 %2006
  %v2008 = vsel %vm822, %v1880, -inf
  %2009 = vmax.xlane.f32.xlu0 %v2008
  %v2010 = vpop.xlane.xlu0 %2009
  %v2011 = vsel %vm822, %v1899, -inf
  %2012 = vmax.xlane.f32.xlu0 %v2011
  %v2013 = vpop.xlane.xlu0 %2012
  %v2014 = vsel %vm822, %v1918, -inf
  %2015 = vmax.xlane.f32.xlu0 %v2014
  %v2016 = vpop.xlane.xlu0 %2015
  %v2017 = vsel %vm822, %v1937, -inf
  %2018 = vmax.xlane.f32.xlu0 %v2017
  %v2019 = vpop.xlane.xlu0 %2018
  %v2020 = vsel %vm822, %v1956, -inf
  %2021 = vmax.xlane.f32.xlu0 %v2020
  %v2022 = vpop.xlane.xlu0 %2021
  %v2023 = vsel %vm822, %v1975, -inf
  %2024 = vmax.xlane.f32.xlu0 %v2023
  %v2025 = vpop.xlane.xlu0 %2024
  %v2026 = vsub.f32 %v1690, %v1980
  %v2027 = vsub.f32 %v1709, %v1983
  %v2028 = vsub.f32 %v1728, %v1986
  %v2029 = vsub.f32 %v1747, %v1989
  %v2030 = vsub.f32 %v1766, %v1992
  %v2031 = vsub.f32 %v1785, %v1995
  %v2032 = vsub.f32 %v1804, %v1998
  %v2033 = vsub.f32 %v1823, %v2001
  %v2034 = vsub.f32 %v1842, %v2004
  %v2035 = vsub.f32 %v1861, %v2007
  %v2036 = vsub.f32 %v1880, %v2010
  %v2037 = vsub.f32 %v1899, %v2013
  %v2038 = vsub.f32 %v1918, %v2016
  %v2039 = vsub.f32 %v1937, %v2019
  %v2040 = vsub.f32 %v1956, %v2022
  %v2041 = vsub.f32 %v1975, %v2025
  %v2042 = vmul.f32 %v2026, 1.442695
  %v2043 = vpow.pop %v2042
  %v2044 = vmul.f32 %v2027, 1.442695
  %v2045 = vpow.pop %v2044
  %v2046 = vmul.f32 %v2028, 1.442695
  %v2047 = vpow.pop %v2046
  %v2048 = vmul.f32 %v2029, 1.442695
  %v2049 = vpow.pop %v2048
  %v2050 = vmul.f32 %v2030, 1.442695
  %v2051 = vpow.pop %v2050
  %v2052 = vmul.f32 %v2031, 1.442695
  %v2053 = vpow.pop %v2052
  %v2054 = vmul.f32 %v2032, 1.442695
  %v2055 = vpow.pop %v2054
  %v2056 = vmul.f32 %v2033, 1.442695
  %v2057 = vpow.pop %v2056
  %v2058 = vmul.f32 %v2034, 1.442695
  %v2059 = vpow.pop %v2058
  %v2060 = vmul.f32 %v2035, 1.442695
  %v2061 = vpow.pop %v2060
  %v2062 = vmul.f32 %v2036, 1.442695
  %v2063 = vpow.pop %v2062
  %v2064 = vmul.f32 %v2037, 1.442695
  %v2065 = vpow.pop %v2064
  %v2066 = vmul.f32 %v2038, 1.442695
  %v2067 = vpow.pop %v2066
  %v2068 = vmul.f32 %v2039, 1.442695
  %v2069 = vpow.pop %v2068
  %v2070 = vmul.f32 %v2040, 1.442695
  %v2071 = vpow.pop %v2070
  %v2072 = vmul.f32 %v2041, 1.442695
  %v2073 = vpow.pop %v2072
  %v2074 = vsel %vm822, %v2043, 0.0
  %2075 = vadd.xlane.f32.xlu0 %v2074
  %v2076 = vpop.xlane.xlu0 %2075
  %v2077 = vsel %vm822, %v2045, 0.0
  %2078 = vadd.xlane.f32.xlu0 %v2077
  %v2079 = vpop.xlane.xlu0 %2078
  %v2080 = vsel %vm822, %v2047, 0.0
  %2081 = vadd.xlane.f32.xlu0 %v2080
  %v2082 = vpop.xlane.xlu0 %2081
  %v2083 = vsel %vm822, %v2049, 0.0
  %2084 = vadd.xlane.f32.xlu0 %v2083
  %v2085 = vpop.xlane.xlu0 %2084
  %v2086 = vsel %vm822, %v2051, 0.0
  %2087 = vadd.xlane.f32.xlu0 %v2086
  %v2088 = vpop.xlane.xlu0 %2087
  %v2089 = vsel %vm822, %v2053, 0.0
  %2090 = vadd.xlane.f32.xlu0 %v2089
  %v2091 = vpop.xlane.xlu0 %2090
  %v2092 = vsel %vm822, %v2055, 0.0
  %2093 = vadd.xlane.f32.xlu0 %v2092
  %v2094 = vpop.xlane.xlu0 %2093
  %v2095 = vsel %vm822, %v2057, 0.0
  %2096 = vadd.xlane.f32.xlu0 %v2095
  %v2097 = vpop.xlane.xlu0 %2096
  %v2098 = vsel %vm822, %v2059, 0.0
  %2099 = vadd.xlane.f32.xlu0 %v2098
  %v2100 = vpop.xlane.xlu0 %2099
  %v2101 = vsel %vm822, %v2061, 0.0
  %2102 = vadd.xlane.f32.xlu0 %v2101
  %v2103 = vpop.xlane.xlu0 %2102
  %v2104 = vsel %vm822, %v2063, 0.0
  %2105 = vadd.xlane.f32.xlu0 %v2104
  %v2106 = vpop.xlane.xlu0 %2105
  %v2107 = vsel %vm822, %v2065, 0.0
  %2108 = vadd.xlane.f32.xlu0 %v2107
  %v2109 = vpop.xlane.xlu0 %2108
  %v2110 = vsel %vm822, %v2067, 0.0
  %2111 = vadd.xlane.f32.xlu0 %v2110
  %v2112 = vpop.xlane.xlu0 %2111
  %v2113 = vsel %vm822, %v2069, 0.0
  %2114 = vadd.xlane.f32.xlu0 %v2113
  %v2115 = vpop.xlane.xlu0 %2114
  %v2116 = vsel %vm822, %v2071, 0.0
  %2117 = vadd.xlane.f32.xlu0 %v2116
  %v2118 = vpop.xlane.xlu0 %2117
  %v2119 = vsel %vm822, %v2073, 0.0
  %2120 = vadd.xlane.f32.xlu0 %v2119
  %v2121 = vpop.xlane.xlu0 %2120
  %v2122 = vrcp.pop %v2076
  %v2123 = vrcp.pop %v2079
  %v2124 = vrcp.pop %v2082
  %v2125 = vrcp.pop %v2085
  %v2126 = vrcp.pop %v2088
  %v2127 = vrcp.pop %v2091
  %v2128 = vrcp.pop %v2094
  %v2129 = vrcp.pop %v2097
  %v2130 = vrcp.pop %v2100
  %v2131 = vrcp.pop %v2103
  %v2132 = vrcp.pop %v2106
  %v2133 = vrcp.pop %v2109
  %v2134 = vrcp.pop %v2112
  %v2135 = vrcp.pop %v2115
  %v2136 = vrcp.pop %v2118
  %v2137 = vrcp.pop %v2121
  %v2138 = vmul.f32 %v2043, %v2122
  %v2139 = vmul.f32 %v2045, %v2123
  %v2140 = vmul.f32 %v2047, %v2124
  %v2141 = vmul.f32 %v2049, %v2125
  %v2142 = vmul.f32 %v2051, %v2126
  %v2143 = vmul.f32 %v2053, %v2127
  %v2144 = vmul.f32 %v2055, %v2128
  %v2145 = vmul.f32 %v2057, %v2129
  %v2146 = vmul.f32 %v2059, %v2130
  %v2147 = vmul.f32 %v2061, %v2131
  %v2148 = vmul.f32 %v2063, %v2132
  %v2149 = vmul.f32 %v2065, %v2133
  %v2150 = vmul.f32 %v2067, %v2134
  %v2151 = vmul.f32 %v2069, %v2135
  %v2152 = vmul.f32 %v2071, %v2136
  %v2153 = vmul.f32 %v2073, %v2137
  %v2154 = vpack.c.bf16 %v2138, %v2138
  %v2155 = vpack.c.bf16 %v2139, %v2139
  %v2156 = vpack.c.bf16 %v2140, %v2140
  %v2157 = vpack.c.bf16 %v2141, %v2141
  %v2158 = vpack.c.bf16 %v2142, %v2142
  %v2159 = vpack.c.bf16 %v2143, %v2143
  %v2160 = vpack.c.bf16 %v2144, %v2144
  %v2161 = vpack.c.bf16 %v2145, %v2145
  %v2162 = vpack.c.bf16 %v2146, %v2146
  %v2163 = vpack.c.bf16 %v2147, %v2147
  %v2164 = vpack.c.bf16 %v2148, %v2148
  %v2165 = vpack.c.bf16 %v2149, %v2149
  %v2166 = vpack.c.bf16 %v2150, %v2150
  %v2167 = vpack.c.bf16 %v2151, %v2151
  %v2168 = vpack.c.bf16 %v2152, %v2152
  %v2169 = vpack.c.bf16 %v2153, %v2153
  %v2170 = vpack.c.bf16 %v1587, %v1587
  %v2171 = vpack.c.bf16 %v1589, %v1589
  %v2172 = vpack.c.bf16 %v1592, %v1592
  %v2173 = vpack.c.bf16 %v1594, %v1594
  %v2174 = vpack.c.bf16 %v1597, %v1597
  %v2175 = vpack.c.bf16 %v1599, %v1599
  %v2176 = vpack.c.bf16 %v1602, %v1602
  %v2177 = vpack.c.bf16 %v1604, %v1604
  %v2178 = vpack.c.bf16 %v1607, %v1607
  %v2179 = vpack.c.bf16 %v1609, %v1609
  %v2180 = vpack.c.bf16 %v1612, %v1612
  %v2181 = vpack.c.bf16 %v1614, %v1614
  %v2182 = vpack.c.bf16 %v1617, %v1617
  %v2183 = vpack.c.bf16 %v1619, %v1619
  %v2184 = vpack.c.bf16 %v1622, %v1622
  %v2185 = vpack.c.bf16 %v1624, %v1624
  %v2187 = vsel %vm822, %v2154, 0
  %v2190 = vsel %vm1034, %v2170, 0
  %2192 = vmatpush.bf16.msra.mxu0 0
  %2193 = vmatpush.bf16.msra.mxu0 0
  %2194 = vmatpush.bf16.msra.mxu0 0
  %2195 = vmatpush.bf16.msra.mxu0 0
  %2196 = vmatpush.bf16.msra.mxu0 0
  %2197 = vmatpush.bf16.msra.mxu0 0
  %2198 = vmatpush.bf16.msra.mxu0 0
  %2199 = vmatpush.bf16.msra.mxu0 %v2190
  %2200 = vmatmul.bf16.gmra.mxu0 %v2187
  %v2201 = vpop.f32.mrf.mxu0
  %v2202 = vadd.f32 0.0, %v2201
  %v2203 = vpop.f32.mrf.mxu0
  %2204 = vdwg.mxu0
  %v2206 = vsel %vm822, %v2155, 0
  %v2209 = vsel %vm1034, %v2171, 0
  %2211 = vmatpush.bf16.msra.mxu0 0
  %2212 = vmatpush.bf16.msra.mxu0 0
  %2213 = vmatpush.bf16.msra.mxu0 0
  %2214 = vmatpush.bf16.msra.mxu0 0
  %2215 = vmatpush.bf16.msra.mxu0 0
  %2216 = vmatpush.bf16.msra.mxu0 0
  %2217 = vmatpush.bf16.msra.mxu0 0
  %2218 = vmatpush.bf16.msra.mxu0 %v2209
  %2219 = vmatmul.bf16.gmra.mxu0 %v2206
  %v2220 = vpop.f32.mrf.mxu0
  %v2221 = vadd.f32 0.0, %v2220
  %v2222 = vpop.f32.mrf.mxu0
  %2223 = vdwg.mxu0
  %v2225 = vsel %vm822, %v2156, 0
  %v2228 = vsel %vm1034, %v2172, 0
  %2230 = vmatpush.bf16.msra.mxu0 0
  %2231 = vmatpush.bf16.msra.mxu0 0
  %2232 = vmatpush.bf16.msra.mxu0 0
  %2233 = vmatpush.bf16.msra.mxu0 0
  %2234 = vmatpush.bf16.msra.mxu0 0
  %2235 = vmatpush.bf16.msra.mxu0 0
  %2236 = vmatpush.bf16.msra.mxu0 0
  %2237 = vmatpush.bf16.msra.mxu0 %v2228
  %2238 = vmatmul.bf16.gmra.mxu0 %v2225
  %v2239 = vpop.f32.mrf.mxu0
  %v2240 = vadd.f32 0.0, %v2239
  %v2241 = vpop.f32.mrf.mxu0
  %2242 = vdwg.mxu0
  %v2244 = vsel %vm822, %v2157, 0
  %v2247 = vsel %vm1034, %v2173, 0
  %2249 = vmatpush.bf16.msra.mxu0 0
  %2250 = vmatpush.bf16.msra.mxu0 0
  %2251 = vmatpush.bf16.msra.mxu0 0
  %2252 = vmatpush.bf16.msra.mxu0 0
  %2253 = vmatpush.bf16.msra.mxu0 0
  %2254 = vmatpush.bf16.msra.mxu0 0
  %2255 = vmatpush.bf16.msra.mxu0 0
  %2256 = vmatpush.bf16.msra.mxu0 %v2247
  %2257 = vmatmul.bf16.gmra.mxu0 %v2244
  %v2258 = vpop.f32.mrf.mxu0
  %v2259 = vadd.f32 0.0, %v2258
  %v2260 = vpop.f32.mrf.mxu0
  %2261 = vdwg.mxu0
  %v2263 = vsel %vm822, %v2158, 0
  %v2266 = vsel %vm1034, %v2174, 0
  %2268 = vmatpush.bf16.msra.mxu0 0
  %2269 = vmatpush.bf16.msra.mxu0 0
  %2270 = vmatpush.bf16.msra.mxu0 0
  %2271 = vmatpush.bf16.msra.mxu0 0
  %2272 = vmatpush.bf16.msra.mxu0 0
  %2273 = vmatpush.bf16.msra.mxu0 0
  %2274 = vmatpush.bf16.msra.mxu0 0
  %2275 = vmatpush.bf16.msra.mxu0 %v2266
  %2276 = vmatmul.bf16.gmra.mxu0 %v2263
  %v2277 = vpop.f32.mrf.mxu0
  %v2278 = vadd.f32 0.0, %v2277
  %v2279 = vpop.f32.mrf.mxu0
  %2280 = vdwg.mxu0
  %v2282 = vsel %vm822, %v2159, 0
  %v2285 = vsel %vm1034, %v2175, 0
  %2287 = vmatpush.bf16.msra.mxu0 0
  %2288 = vmatpush.bf16.msra.mxu0 0
  %2289 = vmatpush.bf16.msra.mxu0 0
  %2290 = vmatpush.bf16.msra.mxu0 0
  %2291 = vmatpush.bf16.msra.mxu0 0
  %2292 = vmatpush.bf16.msra.mxu0 0
  %2293 = vmatpush.bf16.msra.mxu0 0
  %2294 = vmatpush.bf16.msra.mxu0 %v2285
  %2295 = vmatmul.bf16.gmra.mxu0 %v2282
  %v2296 = vpop.f32.mrf.mxu0
  %v2297 = vadd.f32 0.0, %v2296
  %v2298 = vpop.f32.mrf.mxu0
  %2299 = vdwg.mxu0
  %v2301 = vsel %vm822, %v2160, 0
  %v2304 = vsel %vm1034, %v2176, 0
  %2306 = vmatpush.bf16.msra.mxu0 0
  %2307 = vmatpush.bf16.msra.mxu0 0
  %2308 = vmatpush.bf16.msra.mxu0 0
  %2309 = vmatpush.bf16.msra.mxu0 0
  %2310 = vmatpush.bf16.msra.mxu0 0
  %2311 = vmatpush.bf16.msra.mxu0 0
  %2312 = vmatpush.bf16.msra.mxu0 0
  %2313 = vmatpush.bf16.msra.mxu0 %v2304
  %2314 = vmatmul.bf16.gmra.mxu0 %v2301
  %v2315 = vpop.f32.mrf.mxu0
  %v2316 = vadd.f32 0.0, %v2315
  %v2317 = vpop.f32.mrf.mxu0
  %2318 = vdwg.mxu0
  %v2320 = vsel %vm822, %v2161, 0
  %v2323 = vsel %vm1034, %v2177, 0
  %2325 = vmatpush.bf16.msra.mxu0 0
  %2326 = vmatpush.bf16.msra.mxu0 0
  %2327 = vmatpush.bf16.msra.mxu0 0
  %2328 = vmatpush.bf16.msra.mxu0 0
  %2329 = vmatpush.bf16.msra.mxu0 0
  %2330 = vmatpush.bf16.msra.mxu0 0
  %2331 = vmatpush.bf16.msra.mxu0 0
  %2332 = vmatpush.bf16.msra.mxu0 %v2323
  %2333 = vmatmul.bf16.gmra.mxu0 %v2320
  %v2334 = vpop.f32.mrf.mxu0
  %v2335 = vadd.f32 0.0, %v2334
  %v2336 = vpop.f32.mrf.mxu0
  %2337 = vdwg.mxu0
  %v2339 = vsel %vm822, %v2162, 0
  %v2342 = vsel %vm1034, %v2178, 0
  %2344 = vmatpush.bf16.msra.mxu0 0
  %2345 = vmatpush.bf16.msra.mxu0 0
  %2346 = vmatpush.bf16.msra.mxu0 0
  %2347 = vmatpush.bf16.msra.mxu0 0
  %2348 = vmatpush.bf16.msra.mxu0 0
  %2349 = vmatpush.bf16.msra.mxu0 0
  %2350 = vmatpush.bf16.msra.mxu0 0
  %2351 = vmatpush.bf16.msra.mxu0 %v2342
  %2352 = vmatmul.bf16.gmra.mxu0 %v2339
  %v2353 = vpop.f32.mrf.mxu0
  %v2354 = vadd.f32 0.0, %v2353
  %v2355 = vpop.f32.mrf.mxu0
  %2356 = vdwg.mxu0
  %v2358 = vsel %vm822, %v2163, 0
  %v2361 = vsel %vm1034, %v2179, 0
  %2363 = vmatpush.bf16.msra.mxu0 0
  %2364 = vmatpush.bf16.msra.mxu0 0
  %2365 = vmatpush.bf16.msra.mxu0 0
  %2366 = vmatpush.bf16.msra.mxu0 0
  %2367 = vmatpush.bf16.msra.mxu0 0
  %2368 = vmatpush.bf16.msra.mxu0 0
  %2369 = vmatpush.bf16.msra.mxu0 0
  %2370 = vmatpush.bf16.msra.mxu0 %v2361
  %2371 = vmatmul.bf16.gmra.mxu0 %v2358
  %v2372 = vpop.f32.mrf.mxu0
  %v2373 = vadd.f32 0.0, %v2372
  %v2374 = vpop.f32.mrf.mxu0
  %2375 = vdwg.mxu0
  %v2377 = vsel %vm822, %v2164, 0
  %v2380 = vsel %vm1034, %v2180, 0
  %2382 = vmatpush.bf16.msra.mxu0 0
  %2383 = vmatpush.bf16.msra.mxu0 0
  %2384 = vmatpush.bf16.msra.mxu0 0
  %2385 = vmatpush.bf16.msra.mxu0 0
  %2386 = vmatpush.bf16.msra.mxu0 0
  %2387 = vmatpush.bf16.msra.mxu0 0
  %2388 = vmatpush.bf16.msra.mxu0 0
  %2389 = vmatpush.bf16.msra.mxu0 %v2380
  %2390 = vmatmul.bf16.gmra.mxu0 %v2377
  %v2391 = vpop.f32.mrf.mxu0
  %v2392 = vadd.f32 0.0, %v2391
  %v2393 = vpop.f32.mrf.mxu0
  %2394 = vdwg.mxu0
  %v2396 = vsel %vm822, %v2165, 0
  %v2399 = vsel %vm1034, %v2181, 0
  %2401 = vmatpush.bf16.msra.mxu0 0
  %2402 = vmatpush.bf16.msra.mxu0 0
  %2403 = vmatpush.bf16.msra.mxu0 0
  %2404 = vmatpush.bf16.msra.mxu0 0
  %2405 = vmatpush.bf16.msra.mxu0 0
  %2406 = vmatpush.bf16.msra.mxu0 0
  %2407 = vmatpush.bf16.msra.mxu0 0
  %2408 = vmatpush.bf16.msra.mxu0 %v2399
  %2409 = vmatmul.bf16.gmra.mxu0 %v2396
  %v2410 = vpop.f32.mrf.mxu0
  %v2411 = vadd.f32 0.0, %v2410
  %v2412 = vpop.f32.mrf.mxu0
  %2413 = vdwg.mxu0
  %v2415 = vsel %vm822, %v2166, 0
  %v2418 = vsel %vm1034, %v2182, 0
  %2420 = vmatpush.bf16.msra.mxu0 0
  %2421 = vmatpush.bf16.msra.mxu0 0
  %2422 = vmatpush.bf16.msra.mxu0 0
  %2423 = vmatpush.bf16.msra.mxu0 0
  %2424 = vmatpush.bf16.msra.mxu0 0
  %2425 = vmatpush.bf16.msra.mxu0 0
  %2426 = vmatpush.bf16.msra.mxu0 0
  %2427 = vmatpush.bf16.msra.mxu0 %v2418
  %2428 = vmatmul.bf16.gmra.mxu0 %v2415
  %v2429 = vpop.f32.mrf.mxu0
  %v2430 = vadd.f32 0.0, %v2429
  %v2431 = vpop.f32.mrf.mxu0
  %2432 = vdwg.mxu0
  %v2434 = vsel %vm822, %v2167, 0
  %v2437 = vsel %vm1034, %v2183, 0
  %2439 = vmatpush.bf16.msra.mxu0 0
  %2440 = vmatpush.bf16.msra.mxu0 0
  %2441 = vmatpush.bf16.msra.mxu0 0
  %2442 = vmatpush.bf16.msra.mxu0 0
  %2443 = vmatpush.bf16.msra.mxu0 0
  %2444 = vmatpush.bf16.msra.mxu0 0
  %2445 = vmatpush.bf16.msra.mxu0 0
  %2446 = vmatpush.bf16.msra.mxu0 %v2437
  %2447 = vmatmul.bf16.gmra.mxu0 %v2434
  %v2448 = vpop.f32.mrf.mxu0
  %v2449 = vadd.f32 0.0, %v2448
  %v2450 = vpop.f32.mrf.mxu0
  %2451 = vdwg.mxu0
  %v2453 = vsel %vm822, %v2168, 0
  %v2456 = vsel %vm1034, %v2184, 0
  %2458 = vmatpush.bf16.msra.mxu0 0
  %2459 = vmatpush.bf16.msra.mxu0 0
  %2460 = vmatpush.bf16.msra.mxu0 0
  %2461 = vmatpush.bf16.msra.mxu0 0
  %2462 = vmatpush.bf16.msra.mxu0 0
  %2463 = vmatpush.bf16.msra.mxu0 0
  %2464 = vmatpush.bf16.msra.mxu0 0
  %2465 = vmatpush.bf16.msra.mxu0 %v2456
  %2466 = vmatmul.bf16.gmra.mxu0 %v2453
  %v2467 = vpop.f32.mrf.mxu0
  %v2468 = vadd.f32 0.0, %v2467
  %v2469 = vpop.f32.mrf.mxu0
  %2470 = vdwg.mxu0
  %v2472 = vsel %vm822, %v2169, 0
  %v2475 = vsel %vm1034, %v2185, 0
  %2477 = vmatpush.bf16.msra.mxu0 0
  %2478 = vmatpush.bf16.msra.mxu0 0
  %2479 = vmatpush.bf16.msra.mxu0 0
  %2480 = vmatpush.bf16.msra.mxu0 0
  %2481 = vmatpush.bf16.msra.mxu0 0
  %2482 = vmatpush.bf16.msra.mxu0 0
  %2483 = vmatpush.bf16.msra.mxu0 0
  %2484 = vmatpush.bf16.msra.mxu0 %v2475
  %2485 = vmatmul.bf16.gmra.mxu0 %v2472
  %v2486 = vpop.f32.mrf.mxu0
  %v2487 = vadd.f32 0.0, %v2486
  %v2488 = vpop.f32.mrf.mxu0
  %2489 = vdwg.mxu0
  %v2490 = vpack.c.bf16 %v2221, %v2202
  %v2491 = vpack.c.bf16 %v2259, %v2240
  %v2492 = vpack.c.bf16 %v2297, %v2278
  %v2493 = vpack.c.bf16 %v2335, %v2316
  %v2494 = vpack.c.bf16 %v2373, %v2354
  %v2495 = vpack.c.bf16 %v2411, %v2392
  %v2496 = vpack.c.bf16 %v2449, %v2430
  %v2497 = vpack.c.bf16 %v2487, %v2468
  %v2500 = vunpack.c.l.b16 %v183
  %v2501 = vunpack.c.l.b16 %v184
  %v2502 = vpack.c.b16 %v2501, %v2500
  %v2505 = vsel %vm517, %v2490, 0
  %v2508 = vsel %vm517, %v2491, 0
  %v2511 = vsel %vm517, %v2492, 0
  %v2514 = vsel %vm517, %v2493, 0
  %v2517 = vsel %vm517, %v2494, 0
  %v2520 = vsel %vm517, %v2495, 0
  %v2523 = vsel %vm517, %v2496, 0
  %v2526 = vsel %vm517, %v2497, 0
  %2528 = vmatpush.bf16.msra.mxu0 0
  %2529 = vmatpush.bf16.msra.mxu0 0
  %2530 = vmatpush.bf16.msra.mxu0 0
  %2531 = vmatpush.bf16.msra.mxu0 0
  %2532 = vmatpush.bf16.msra.mxu0 0
  %2533 = vmatpush.bf16.msra.mxu0 0
  %2534 = vmatpush.bf16.msra.mxu0 0
  %2535 = vmatpush.bf16.msra.mxu0 %v2502
  %2536 = vmatmul.bf16.gmra.mxu0 %v2505
  %v2537 = vpop.f32.mrf.mxu0
  %v2538 = vadd.f32 0.0, %v2537
  %v2539 = vpop.f32.mrf.mxu0
  %v2540 = vadd.f32 0.0, %v2539
  %2541 = vmatmul.bf16.gmra.mxu0 %v2508
  %v2542 = vpop.f32.mrf.mxu0
  %v2543 = vadd.f32 0.0, %v2542
  %v2544 = vpop.f32.mrf.mxu0
  %v2545 = vadd.f32 0.0, %v2544
  %2546 = vmatmul.bf16.gmra.mxu0 %v2511
  %v2547 = vpop.f32.mrf.mxu0
  %v2548 = vadd.f32 0.0, %v2547
  %v2549 = vpop.f32.mrf.mxu0
  %v2550 = vadd.f32 0.0, %v2549
  %2551 = vmatmul.bf16.gmra.mxu0 %v2514
  %v2552 = vpop.f32.mrf.mxu0
  %v2553 = vadd.f32 0.0, %v2552
  %v2554 = vpop.f32.mrf.mxu0
  %v2555 = vadd.f32 0.0, %v2554
  %2556 = vmatmul.bf16.gmra.mxu0 %v2517
  %v2557 = vpop.f32.mrf.mxu0
  %v2558 = vadd.f32 0.0, %v2557
  %v2559 = vpop.f32.mrf.mxu0
  %v2560 = vadd.f32 0.0, %v2559
  %2561 = vmatmul.bf16.gmra.mxu0 %v2520
  %v2562 = vpop.f32.mrf.mxu0
  %v2563 = vadd.f32 0.0, %v2562
  %v2564 = vpop.f32.mrf.mxu0
  %v2565 = vadd.f32 0.0, %v2564
  %2566 = vmatmul.bf16.gmra.mxu0 %v2523
  %v2567 = vpop.f32.mrf.mxu0
  %v2568 = vadd.f32 0.0, %v2567
  %v2569 = vpop.f32.mrf.mxu0
  %v2570 = vadd.f32 0.0, %v2569
  %2571 = vmatmul.bf16.gmra.mxu0 %v2526
  %v2572 = vpop.f32.mrf.mxu0
  %v2573 = vadd.f32 0.0, %v2572
  %v2574 = vpop.f32.mrf.mxu0
  %v2575 = vadd.f32 0.0, %v2574
  %2576 = vdwg.mxu0
  %v2577 = vadd.f32 %v1424, %v2538
  %v2578 = vadd.f32 %v1425, %v2540
  %v2579 = vadd.f32 %v1426, %v2543
  %v2580 = vadd.f32 %v1427, %v2545
  %v2581 = vadd.f32 %v1428, %v2548
  %v2582 = vadd.f32 %v1429, %v2550
  %v2583 = vadd.f32 %v1430, %v2553
  %v2584 = vadd.f32 %v1431, %v2555
  %v2585 = vadd.f32 %v1432, %v2558
  %v2586 = vadd.f32 %v1433, %v2560
  %v2587 = vadd.f32 %v1434, %v2563
  %v2588 = vadd.f32 %v1435, %v2565
  %v2589 = vadd.f32 %v1436, %v2568
  %v2590 = vadd.f32 %v1437, %v2570
  %v2591 = vadd.f32 %v1438, %v2573
  %v2592 = vadd.f32 %v1439, %v2575
  %v2593 = vadd.f32 %v141, %v2577
  %v2594 = vadd.f32 %v142, %v2578
  %v2595 = vadd.f32 %v143, %v2579
  %v2596 = vadd.f32 %v144, %v2580
  %v2597 = vadd.f32 %v145, %v2581
  %v2598 = vadd.f32 %v146, %v2582
  %v2599 = vadd.f32 %v147, %v2583
  %v2600 = vadd.f32 %v148, %v2584
  %v2601 = vadd.f32 %v149, %v2585
  %v2602 = vadd.f32 %v150, %v2586
  %v2603 = vadd.f32 %v151, %v2587
  %v2604 = vadd.f32 %v152, %v2588
  %v2605 = vadd.f32 %v153, %v2589
  %v2606 = vadd.f32 %v154, %v2590
  %v2607 = vadd.f32 %v155, %v2591
  %v2608 = vadd.f32 %v156, %v2592
  %v2609 = vsel %vm223, %v2593, 0.0
  %2610 = vadd.xlane.f32.xlu0 %v2609
  %v2611 = vpop.xlane.xlu0 %2610
  %v2612 = vsel %vm223, %v2594, 0.0
  %2613 = vadd.xlane.f32.xlu0 %v2612
  %v2614 = vpop.xlane.xlu0 %2613
  %v2615 = vsel %vm223, %v2595, 0.0
  %2616 = vadd.xlane.f32.xlu0 %v2615
  %v2617 = vpop.xlane.xlu0 %2616
  %v2618 = vsel %vm223, %v2596, 0.0
  %2619 = vadd.xlane.f32.xlu0 %v2618
  %v2620 = vpop.xlane.xlu0 %2619
  %v2621 = vsel %vm223, %v2597, 0.0
  %2622 = vadd.xlane.f32.xlu0 %v2621
  %v2623 = vpop.xlane.xlu0 %2622
  %v2624 = vsel %vm223, %v2598, 0.0
  %2625 = vadd.xlane.f32.xlu0 %v2624
  %v2626 = vpop.xlane.xlu0 %2625
  %v2627 = vsel %vm223, %v2599, 0.0
  %2628 = vadd.xlane.f32.xlu0 %v2627
  %v2629 = vpop.xlane.xlu0 %2628
  %v2630 = vsel %vm223, %v2600, 0.0
  %2631 = vadd.xlane.f32.xlu0 %v2630
  %v2632 = vpop.xlane.xlu0 %2631
  %v2633 = vsel %vm223, %v2601, 0.0
  %2634 = vadd.xlane.f32.xlu0 %v2633
  %v2635 = vpop.xlane.xlu0 %2634
  %v2636 = vsel %vm223, %v2602, 0.0
  %2637 = vadd.xlane.f32.xlu0 %v2636
  %v2638 = vpop.xlane.xlu0 %2637
  %v2639 = vsel %vm223, %v2603, 0.0
  %2640 = vadd.xlane.f32.xlu0 %v2639
  %v2641 = vpop.xlane.xlu0 %2640
  %v2642 = vsel %vm223, %v2604, 0.0
  %2643 = vadd.xlane.f32.xlu0 %v2642
  %v2644 = vpop.xlane.xlu0 %2643
  %v2645 = vsel %vm223, %v2605, 0.0
  %2646 = vadd.xlane.f32.xlu0 %v2645
  %v2647 = vpop.xlane.xlu0 %2646
  %v2648 = vsel %vm223, %v2606, 0.0
  %2649 = vadd.xlane.f32.xlu0 %v2648
  %v2650 = vpop.xlane.xlu0 %2649
  %v2651 = vsel %vm223, %v2607, 0.0
  %2652 = vadd.xlane.f32.xlu0 %v2651
  %v2653 = vpop.xlane.xlu0 %2652
  %v2654 = vsel %vm223, %v2608, 0.0
  %2655 = vadd.xlane.f32.xlu0 %v2654
  %v2656 = vpop.xlane.xlu0 %2655
  %v2657 = vrcp.pop 32.0
  %v2658 = vmul.f32 32.0, %v2657
  %v2659 = vsub.f32 1.0, %v2658
  %v2660 = vmul.f32 %v2657, %v2659
  %v2661 = vadd.f32 %v2657, %v2660
  %vm2662 = vweird.f32 %v2657
  %v2663 = vsel %vm2662, %v2657, %v2661
  %v2664 = vmul.f32 %v2611, %v2663
  %v2665 = vmul.f32 %v2614, %v2663
  %v2666 = vmul.f32 %v2617, %v2663
  %v2667 = vmul.f32 %v2620, %v2663
  %v2668 = vmul.f32 %v2623, %v2663
  %v2669 = vmul.f32 %v2626, %v2663
  %v2670 = vmul.f32 %v2629, %v2663
  %v2671 = vmul.f32 %v2632, %v2663
  %v2672 = vmul.f32 %v2635, %v2663
  %v2673 = vmul.f32 %v2638, %v2663
  %v2674 = vmul.f32 %v2641, %v2663
  %v2675 = vmul.f32 %v2644, %v2663
  %v2676 = vmul.f32 %v2647, %v2663
  %v2677 = vmul.f32 %v2650, %v2663
  %v2678 = vmul.f32 %v2653, %v2663
  %v2679 = vmul.f32 %v2656, %v2663
  %v2680 = vsub.f32 %v2593, %v2664
  %v2681 = vsub.f32 %v2594, %v2665
  %v2682 = vsub.f32 %v2595, %v2666
  %v2683 = vsub.f32 %v2596, %v2667
  %v2684 = vsub.f32 %v2597, %v2668
  %v2685 = vsub.f32 %v2598, %v2669
  %v2686 = vsub.f32 %v2599, %v2670
  %v2687 = vsub.f32 %v2600, %v2671
  %v2688 = vsub.f32 %v2601, %v2672
  %v2689 = vsub.f32 %v2602, %v2673
  %v2690 = vsub.f32 %v2603, %v2674
  %v2691 = vsub.f32 %v2604, %v2675
  %v2692 = vsub.f32 %v2605, %v2676
  %v2693 = vsub.f32 %v2606, %v2677
  %v2694 = vsub.f32 %v2607, %v2678
  %v2695 = vsub.f32 %v2608, %v2679
  %v2696 = vmul.f32 %v2680, %v2680
  %v2697 = vmul.f32 %v2681, %v2681
  %v2698 = vmul.f32 %v2682, %v2682
  %v2699 = vmul.f32 %v2683, %v2683
  %v2700 = vmul.f32 %v2684, %v2684
  %v2701 = vmul.f32 %v2685, %v2685
  %v2702 = vmul.f32 %v2686, %v2686
  %v2703 = vmul.f32 %v2687, %v2687
  %v2704 = vmul.f32 %v2688, %v2688
  %v2705 = vmul.f32 %v2689, %v2689
  %v2706 = vmul.f32 %v2690, %v2690
  %v2707 = vmul.f32 %v2691, %v2691
  %v2708 = vmul.f32 %v2692, %v2692
  %v2709 = vmul.f32 %v2693, %v2693
  %v2710 = vmul.f32 %v2694, %v2694
  %v2711 = vmul.f32 %v2695, %v2695
  %v2712 = vsel %vm223, %v2696, 0.0
  %2713 = vadd.xlane.f32.xlu0 %v2712
  %v2714 = vpop.xlane.xlu0 %2713
  %v2715 = vsel %vm223, %v2697, 0.0
  %2716 = vadd.xlane.f32.xlu0 %v2715
  %v2717 = vpop.xlane.xlu0 %2716
  %v2718 = vsel %vm223, %v2698, 0.0
  %2719 = vadd.xlane.f32.xlu0 %v2718
  %v2720 = vpop.xlane.xlu0 %2719
  %v2721 = vsel %vm223, %v2699, 0.0
  %2722 = vadd.xlane.f32.xlu0 %v2721
  %v2723 = vpop.xlane.xlu0 %2722
  %v2724 = vsel %vm223, %v2700, 0.0
  %2725 = vadd.xlane.f32.xlu0 %v2724
  %v2726 = vpop.xlane.xlu0 %2725
  %v2727 = vsel %vm223, %v2701, 0.0
  %2728 = vadd.xlane.f32.xlu0 %v2727
  %v2729 = vpop.xlane.xlu0 %2728
  %v2730 = vsel %vm223, %v2702, 0.0
  %2731 = vadd.xlane.f32.xlu0 %v2730
  %v2732 = vpop.xlane.xlu0 %2731
  %v2733 = vsel %vm223, %v2703, 0.0
  %2734 = vadd.xlane.f32.xlu0 %v2733
  %v2735 = vpop.xlane.xlu0 %2734
  %v2736 = vsel %vm223, %v2704, 0.0
  %2737 = vadd.xlane.f32.xlu0 %v2736
  %v2738 = vpop.xlane.xlu0 %2737
  %v2739 = vsel %vm223, %v2705, 0.0
  %2740 = vadd.xlane.f32.xlu0 %v2739
  %v2741 = vpop.xlane.xlu0 %2740
  %v2742 = vsel %vm223, %v2706, 0.0
  %2743 = vadd.xlane.f32.xlu0 %v2742
  %v2744 = vpop.xlane.xlu0 %2743
  %v2745 = vsel %vm223, %v2707, 0.0
  %2746 = vadd.xlane.f32.xlu0 %v2745
  %v2747 = vpop.xlane.xlu0 %2746
  %v2748 = vsel %vm223, %v2708, 0.0
  %2749 = vadd.xlane.f32.xlu0 %v2748
  %v2750 = vpop.xlane.xlu0 %2749
  %v2751 = vsel %vm223, %v2709, 0.0
  %2752 = vadd.xlane.f32.xlu0 %v2751
  %v2753 = vpop.xlane.xlu0 %2752
  %v2754 = vsel %vm223, %v2710, 0.0
  %2755 = vadd.xlane.f32.xlu0 %v2754
  %v2756 = vpop.xlane.xlu0 %2755
  %v2757 = vsel %vm223, %v2711, 0.0
  %2758 = vadd.xlane.f32.xlu0 %v2757
  %v2759 = vpop.xlane.xlu0 %2758
  %v2760 = vmul.f32 %v2714, %v2663
  %v2761 = vmul.f32 %v2717, %v2663
  %v2762 = vmul.f32 %v2720, %v2663
  %v2763 = vmul.f32 %v2723, %v2663
  %v2764 = vmul.f32 %v2726, %v2663
  %v2765 = vmul.f32 %v2729, %v2663
  %v2766 = vmul.f32 %v2732, %v2663
  %v2767 = vmul.f32 %v2735, %v2663
  %v2768 = vmul.f32 %v2738, %v2663
  %v2769 = vmul.f32 %v2741, %v2663
  %v2770 = vmul.f32 %v2744, %v2663
  %v2771 = vmul.f32 %v2747, %v2663
  %v2772 = vmul.f32 %v2750, %v2663
  %v2773 = vmul.f32 %v2753, %v2663
  %v2774 = vmul.f32 %v2756, %v2663
  %v2775 = vmul.f32 %v2759, %v2663
  %v2776 = vadd.f32 %v2760, 1e-05
  %v2777 = vadd.f32 %v2761, 1e-05
  %v2778 = vadd.f32 %v2762, 1e-05
  %v2779 = vadd.f32 %v2763, 1e-05
  %v2780 = vadd.f32 %v2764, 1e-05
  %v2781 = vadd.f32 %v2765, 1e-05
  %v2782 = vadd.f32 %v2766, 1e-05
  %v2783 = vadd.f32 %v2767, 1e-05
  %v2784 = vadd.f32 %v2768, 1e-05
  %v2785 = vadd.f32 %v2769, 1e-05
  %v2786 = vadd.f32 %v2770, 1e-05
  %v2787 = vadd.f32 %v2771, 1e-05
  %v2788 = vadd.f32 %v2772, 1e-05
  %v2789 = vadd.f32 %v2773, 1e-05
  %v2790 = vadd.f32 %v2774, 1e-05
  %v2791 = vadd.f32 %v2775, 1e-05
  %v2792 = vrsqrt.pop %v2776
  %v2793 = vmul.f32 %v2792, %v2776
  %v2794 = vmul.f32 %v2793, %v2792
  %v2795 = vmul.f32 0.5, %v2794
  %v2796 = vsub.f32 1.5, %v2795
  %v2797 = vmul.f32 %v2792, %v2796
  %vm2798 = vweird.f32 %v2776
  %vm2799 = vweird.f32 %v2792
  %vm2800 = vmor %vm2798, %vm2799
  %v2801 = vsel %vm2800, %v2792, %v2797
  %v2802 = vrsqrt.pop %v2777
  %v2803 = vmul.f32 %v2802, %v2777
  %v2804 = vmul.f32 %v2803, %v2802
  %v2805 = vmul.f32 0.5, %v2804
  %v2806 = vsub.f32 1.5, %v2805
  %v2807 = vmul.f32 %v2802, %v2806
  %vm2808 = vweird.f32 %v2777
  %vm2809 = vweird.f32 %v2802
  %vm2810 = vmor %vm2808, %vm2809
  %v2811 = vsel %vm2810, %v2802, %v2807
  %v2812 = vrsqrt.pop %v2778
  %v2813 = vmul.f32 %v2812, %v2778
  %v2814 = vmul.f32 %v2813, %v2812
  %v2815 = vmul.f32 0.5, %v2814
  %v2816 = vsub.f32 1.5, %v2815
  %v2817 = vmul.f32 %v2812, %v2816
  %vm2818 = vweird.f32 %v2778
  %vm2819 = vweird.f32 %v2812
  %vm2820 = vmor %vm2818, %vm2819
  %v2821 = vsel %vm2820, %v2812, %v2817
  %v2822 = vrsqrt.pop %v2779
  %v2823 = vmul.f32 %v2822, %v2779
  %v2824 = vmul.f32 %v2823, %v2822
  %v2825 = vmul.f32 0.5, %v2824
  %v2826 = vsub.f32 1.5, %v2825
  %v2827 = vmul.f32 %v2822, %v2826
  %vm2828 = vweird.f32 %v2779
  %vm2829 = vweird.f32 %v2822
  %vm2830 = vmor %vm2828, %vm2829
  %v2831 = vsel %vm2830, %v2822, %v2827
  %v2832 = vrsqrt.pop %v2780
  %v2833 = vmul.f32 %v2832, %v2780
  %v2834 = vmul.f32 %v2833, %v2832
  %v2835 = vmul.f32 0.5, %v2834
  %v2836 = vsub.f32 1.5, %v2835
  %v2837 = vmul.f32 %v2832, %v2836
  %vm2838 = vweird.f32 %v2780
  %vm2839 = vweird.f32 %v2832
  %vm2840 = vmor %vm2838, %vm2839
  %v2841 = vsel %vm2840, %v2832, %v2837
  %v2842 = vrsqrt.pop %v2781
  %v2843 = vmul.f32 %v2842, %v2781
  %v2844 = vmul.f32 %v2843, %v2842
  %v2845 = vmul.f32 0.5, %v2844
  %v2846 = vsub.f32 1.5, %v2845
  %v2847 = vmul.f32 %v2842, %v2846
  %vm2848 = vweird.f32 %v2781
  %vm2849 = vweird.f32 %v2842
  %vm2850 = vmor %vm2848, %vm2849
  %v2851 = vsel %vm2850, %v2842, %v2847
  %v2852 = vrsqrt.pop %v2782
  %v2853 = vmul.f32 %v2852, %v2782
  %v2854 = vmul.f32 %v2853, %v2852
  %v2855 = vmul.f32 0.5, %v2854
  %v2856 = vsub.f32 1.5, %v2855
  %v2857 = vmul.f32 %v2852, %v2856
  %vm2858 = vweird.f32 %v2782
  %vm2859 = vweird.f32 %v2852
  %vm2860 = vmor %vm2858, %vm2859
  %v2861 = vsel %vm2860, %v2852, %v2857
  %v2862 = vrsqrt.pop %v2783
  %v2863 = vmul.f32 %v2862, %v2783
  %v2864 = vmul.f32 %v2863, %v2862
  %v2865 = vmul.f32 0.5, %v2864
  %v2866 = vsub.f32 1.5, %v2865
  %v2867 = vmul.f32 %v2862, %v2866
  %vm2868 = vweird.f32 %v2783
  %vm2869 = vweird.f32 %v2862
  %vm2870 = vmor %vm2868, %vm2869
  %v2871 = vsel %vm2870, %v2862, %v2867
  %v2872 = vrsqrt.pop %v2784
  %v2873 = vmul.f32 %v2872, %v2784
  %v2874 = vmul.f32 %v2873, %v2872
  %v2875 = vmul.f32 0.5, %v2874
  %v2876 = vsub.f32 1.5, %v2875
  %v2877 = vmul.f32 %v2872, %v2876
  %vm2878 = vweird.f32 %v2784
  %vm2879 = vweird.f32 %v2872
  %vm2880 = vmor %vm2878, %vm2879
  %v2881 = vsel %vm2880, %v2872, %v2877
  %v2882 = vrsqrt.pop %v2785
  %v2883 = vmul.f32 %v2882, %v2785
  %v2884 = vmul.f32 %v2883, %v2882
  %v2885 = vmul.f32 0.5, %v2884
  %v2886 = vsub.f32 1.5, %v2885
  %v2887 = vmul.f32 %v2882, %v2886
  %vm2888 = vweird.f32 %v2785
  %vm2889 = vweird.f32 %v2882
  %vm2890 = vmor %vm2888, %vm2889
  %v2891 = vsel %vm2890, %v2882, %v2887
  %v2892 = vrsqrt.pop %v2786
  %v2893 = vmul.f32 %v2892, %v2786
  %v2894 = vmul.f32 %v2893, %v2892
  %v2895 = vmul.f32 0.5, %v2894
  %v2896 = vsub.f32 1.5, %v2895
  %v2897 = vmul.f32 %v2892, %v2896
  %vm2898 = vweird.f32 %v2786
  %vm2899 = vweird.f32 %v2892
  %vm2900 = vmor %vm2898, %vm2899
  %v2901 = vsel %vm2900, %v2892, %v2897
  %v2902 = vrsqrt.pop %v2787
  %v2903 = vmul.f32 %v2902, %v2787
  %v2904 = vmul.f32 %v2903, %v2902
  %v2905 = vmul.f32 0.5, %v2904
  %v2906 = vsub.f32 1.5, %v2905
  %v2907 = vmul.f32 %v2902, %v2906
  %vm2908 = vweird.f32 %v2787
  %vm2909 = vweird.f32 %v2902
  %vm2910 = vmor %vm2908, %vm2909
  %v2911 = vsel %vm2910, %v2902, %v2907
  %v2912 = vrsqrt.pop %v2788
  %v2913 = vmul.f32 %v2912, %v2788
  %v2914 = vmul.f32 %v2913, %v2912
  %v2915 = vmul.f32 0.5, %v2914
  %v2916 = vsub.f32 1.5, %v2915
  %v2917 = vmul.f32 %v2912, %v2916
  %vm2918 = vweird.f32 %v2788
  %vm2919 = vweird.f32 %v2912
  %vm2920 = vmor %vm2918, %vm2919
  %v2921 = vsel %vm2920, %v2912, %v2917
  %v2922 = vrsqrt.pop %v2789
  %v2923 = vmul.f32 %v2922, %v2789
  %v2924 = vmul.f32 %v2923, %v2922
  %v2925 = vmul.f32 0.5, %v2924
  %v2926 = vsub.f32 1.5, %v2925
  %v2927 = vmul.f32 %v2922, %v2926
  %vm2928 = vweird.f32 %v2789
  %vm2929 = vweird.f32 %v2922
  %vm2930 = vmor %vm2928, %vm2929
  %v2931 = vsel %vm2930, %v2922, %v2927
  %v2932 = vrsqrt.pop %v2790
  %v2933 = vmul.f32 %v2932, %v2790
  %v2934 = vmul.f32 %v2933, %v2932
  %v2935 = vmul.f32 0.5, %v2934
  %v2936 = vsub.f32 1.5, %v2935
  %v2937 = vmul.f32 %v2932, %v2936
  %vm2938 = vweird.f32 %v2790
  %vm2939 = vweird.f32 %v2932
  %vm2940 = vmor %vm2938, %vm2939
  %v2941 = vsel %vm2940, %v2932, %v2937
  %v2942 = vrsqrt.pop %v2791
  %v2943 = vmul.f32 %v2942, %v2791
  %v2944 = vmul.f32 %v2943, %v2942
  %v2945 = vmul.f32 0.5, %v2944
  %v2946 = vsub.f32 1.5, %v2945
  %v2947 = vmul.f32 %v2942, %v2946
  %vm2948 = vweird.f32 %v2791
  %vm2949 = vweird.f32 %v2942
  %vm2950 = vmor %vm2948, %vm2949
  %v2951 = vsel %vm2950, %v2942, %v2947
  %v2952 = vmul.f32 %v2680, %v2801
  %v2953 = vmul.f32 %v2681, %v2811
  %v2954 = vmul.f32 %v2682, %v2821
  %v2955 = vmul.f32 %v2683, %v2831
  %v2956 = vmul.f32 %v2684, %v2841
  %v2957 = vmul.f32 %v2685, %v2851
  %v2958 = vmul.f32 %v2686, %v2861
  %v2959 = vmul.f32 %v2687, %v2871
  %v2960 = vmul.f32 %v2688, %v2881
  %v2961 = vmul.f32 %v2689, %v2891
  %v2962 = vmul.f32 %v2690, %v2901
  %v2963 = vmul.f32 %v2691, %v2911
  %v2964 = vmul.f32 %v2692, %v2921
  %v2965 = vmul.f32 %v2693, %v2931
  %v2966 = vmul.f32 %v2694, %v2941
  %v2967 = vmul.f32 %v2695, %v2951
  %v2968 = vperm.slane %v201, 2
  %v2969 = vmul.f32 %v2952, %v2968
  %v2970 = vmul.f32 %v2953, %v2968
  %v2971 = vmul.f32 %v2954, %v2968
  %v2972 = vmul.f32 %v2955, %v2968
  %v2973 = vmul.f32 %v2956, %v2968
  %v2974 = vmul.f32 %v2957, %v2968
  %v2975 = vmul.f32 %v2958, %v2968
  %v2976 = vmul.f32 %v2959, %v2968
  %v2977 = vmul.f32 %v2960, %v2968
  %v2978 = vmul.f32 %v2961, %v2968
  %v2979 = vmul.f32 %v2962, %v2968
  %v2980 = vmul.f32 %v2963, %v2968
  %v2981 = vmul.f32 %v2964, %v2968
  %v2982 = vmul.f32 %v2965, %v2968
  %v2983 = vmul.f32 %v2966, %v2968
  %v2984 = vmul.f32 %v2967, %v2968
  %v2985 = vperm.slane %v201, 3
  %v2986 = vadd.f32 %v2969, %v2985
  %v2987 = vadd.f32 %v2970, %v2985
  %v2988 = vadd.f32 %v2971, %v2985
  %v2989 = vadd.f32 %v2972, %v2985
  %v2990 = vadd.f32 %v2973, %v2985
  %v2991 = vadd.f32 %v2974, %v2985
  %v2992 = vadd.f32 %v2975, %v2985
  %v2993 = vadd.f32 %v2976, %v2985
  %v2994 = vadd.f32 %v2977, %v2985
  %v2995 = vadd.f32 %v2978, %v2985
  %v2996 = vadd.f32 %v2979, %v2985
  %v2997 = vadd.f32 %v2980, %v2985
  %v2998 = vadd.f32 %v2981, %v2985
  %v2999 = vadd.f32 %v2982, %v2985
  %v3000 = vadd.f32 %v2983, %v2985
  %v3001 = vadd.f32 %v2984, %v2985
  %v3002 = vpack.c.bf16 %v2987, %v2986
  %v3003 = vpack.c.bf16 %v2989, %v2988
  %v3004 = vpack.c.bf16 %v2991, %v2990
  %v3005 = vpack.c.bf16 %v2993, %v2992
  %v3006 = vpack.c.bf16 %v2995, %v2994
  %v3007 = vpack.c.bf16 %v2997, %v2996
  %v3008 = vpack.c.bf16 %v2999, %v2998
  %v3009 = vpack.c.bf16 %v3001, %v3000
  %v3011 = vperm.slane %v192, 0
  %v3017 = vunpack.c.l.b16 %v188
  %v3018 = vunpack.c.l.b16 %v189
  %v3019 = vunpack.c.l.b16 %v190
  %v3020 = vunpack.c.l.b16 %v191
  %v3021 = vpack.c.b16 %v3018, %v3017
  %v3022 = vpack.c.b16 %v3020, %v3019
  %v3026 = vsel %vm223, %v3002, 0
  %v3029 = vsel %vm223, %v3003, 0
  %v3032 = vsel %vm223, %v3004, 0
  %v3035 = vsel %vm223, %v3005, 0
  %v3038 = vsel %vm223, %v3006, 0
  %v3041 = vsel %vm223, %v3007, 0
  %v3044 = vsel %vm223, %v3008, 0
  %v3047 = vsel %vm223, %v3009, 0
  %3049 = vmatpush.bf16.msra.mxu0 0
  %3050 = vmatpush.bf16.msra.mxu0 0
  %3051 = vmatpush.bf16.msra.mxu0 0
  %3052 = vmatpush.bf16.msra.mxu0 0
  %3053 = vmatpush.bf16.msra.mxu0 0
  %3054 = vmatpush.bf16.msra.mxu0 0
  %3055 = vmatpush.bf16.msra.mxu0 %v3022
  %3056 = vmatpush.bf16.msra.mxu0 %v3021
  %3057 = vmatmul.bf16.gmra.mxu0 %v3026
  %v3058 = vpop.f32.mrf.mxu0
  %v3059 = vadd.f32 %v3011, %v3058
  %v3060 = vpop.f32.mrf.mxu0
  %v3061 = vadd.f32 %v3011, %v3060
  %3062 = vmatmul.bf16.gmra.mxu0 %v3029
  %v3063 = vpop.f32.mrf.mxu0
  %v3064 = vadd.f32 %v3011, %v3063
  %v3065 = vpop.f32.mrf.mxu0
  %v3066 = vadd.f32 %v3011, %v3065
  %3067 = vmatmul.bf16.gmra.mxu0 %v3032
  %v3068 = vpop.f32.mrf.mxu0
  %v3069 = vadd.f32 %v3011, %v3068
  %v3070 = vpop.f32.mrf.mxu0
  %v3071 = vadd.f32 %v3011, %v3070
  %3072 = vmatmul.bf16.gmra.mxu0 %v3035
  %v3073 = vpop.f32.mrf.mxu0
  %v3074 = vadd.f32 %v3011, %v3073
  %v3075 = vpop.f32.mrf.mxu0
  %v3076 = vadd.f32 %v3011, %v3075
  %3077 = vmatmul.bf16.gmra.mxu0 %v3038
  %v3078 = vpop.f32.mrf.mxu0
  %v3079 = vadd.f32 %v3011, %v3078
  %v3080 = vpop.f32.mrf.mxu0
  %v3081 = vadd.f32 %v3011, %v3080
  %3082 = vmatmul.bf16.gmra.mxu0 %v3041
  %v3083 = vpop.f32.mrf.mxu0
  %v3084 = vadd.f32 %v3011, %v3083
  %v3085 = vpop.f32.mrf.mxu0
  %v3086 = vadd.f32 %v3011, %v3085
  %3087 = vmatmul.bf16.gmra.mxu0 %v3044
  %v3088 = vpop.f32.mrf.mxu0
  %v3089 = vadd.f32 %v3011, %v3088
  %v3090 = vpop.f32.mrf.mxu0
  %v3091 = vadd.f32 %v3011, %v3090
  %3092 = vmatmul.bf16.gmra.mxu0 %v3047
  %v3093 = vpop.f32.mrf.mxu0
  %v3094 = vadd.f32 %v3011, %v3093
  %v3095 = vpop.f32.mrf.mxu0
  %v3096 = vadd.f32 %v3011, %v3095
  %3097 = vdwg.mxu0
  %v3098 = vmax.f32 %v3059, 0.0
  %v3099 = vmax.f32 %v3061, 0.0
  %v3100 = vmax.f32 %v3064, 0.0
  %v3101 = vmax.f32 %v3066, 0.0
  %v3102 = vmax.f32 %v3069, 0.0
  %v3103 = vmax.f32 %v3071, 0.0
  %v3104 = vmax.f32 %v3074, 0.0
  %v3105 = vmax.f32 %v3076, 0.0
  %v3106 = vmax.f32 %v3079, 0.0
  %v3107 = vmax.f32 %v3081, 0.0
  %v3108 = vmax.f32 %v3084, 0.0
  %v3109 = vmax.f32 %v3086, 0.0
  %v3110 = vmax.f32 %v3089, 0.0
  %v3111 = vmax.f32 %v3091, 0.0
  %v3112 = vmax.f32 %v3094, 0.0
  %v3113 = vmax.f32 %v3096, 0.0
  %v3114 = vpack.c.bf16 %v3099, %v3098
  %v3115 = vpack.c.bf16 %v3101, %v3100
  %v3116 = vpack.c.bf16 %v3103, %v3102
  %v3117 = vpack.c.bf16 %v3105, %v3104
  %v3118 = vpack.c.bf16 %v3107, %v3106
  %v3119 = vpack.c.bf16 %v3109, %v3108
  %v3120 = vpack.c.bf16 %v3111, %v3110
  %v3121 = vpack.c.bf16 %v3113, %v3112
  %v3122 = vperm.slane %v201, 1
  %v3131 = vunpack.c.l.b16 %v193
  %v3132 = vunpack.c.l.b16 %v194
  %v3133 = vunpack.c.l.b16 %v195
  %v3134 = vunpack.c.l.b16 %v196
  %v3135 = vunpack.c.l.b16 %v197
  %v3136 = vunpack.c.l.b16 %v198
  %v3137 = vunpack.c.l.b16 %v199
  %v3138 = vunpack.c.l.b16 %v200
  %v3139 = vpack.c.b16 %v3132, %v3131
  %v3140 = vpack.c.b16 %v3134, %v3133
  %v3141 = vpack.c.b16 %v3136, %v3135
  %v3142 = vpack.c.b16 %v3138, %v3137
  %vm3147 = vcmask 523264
  %v3149 = vsel %vm3147, %v3114, 0
  %v3152 = vsel %vm3147, %v3115, 0
  %v3155 = vsel %vm3147, %v3116, 0
  %v3158 = vsel %vm3147, %v3117, 0
  %v3161 = vsel %vm3147, %v3118, 0
  %v3164 = vsel %vm3147, %v3119, 0
  %v3167 = vsel %vm3147, %v3120, 0
  %v3170 = vsel %vm3147, %v3121, 0
  %3172 = vmatpush.bf16.msra.mxu0 0
  %3173 = vmatpush.bf16.msra.mxu0 0
  %3174 = vmatpush.bf16.msra.mxu0 0
  %3175 = vmatpush.bf16.msra.mxu0 0
  %3176 = vmatpush.bf16.msra.mxu0 %v3142
  %3177 = vmatpush.bf16.msra.mxu0 %v3141
  %3178 = vmatpush.bf16.msra.mxu0 %v3140
  %3179 = vmatpush.bf16.msra.mxu0 %v3139
  %3180 = vmatmul.bf16.gmra.mxu0 %v3149
  %v3181 = vpop.f32.mrf.mxu0
  %v3182 = vadd.f32 %v3122, %v3181
  %v3183 = vpop.f32.mrf.mxu0
  %v3184 = vadd.f32 %v3122, %v3183
  %3185 = vmatmul.bf16.gmra.mxu0 %v3152
  %v3186 = vpop.f32.mrf.mxu0
  %v3187 = vadd.f32 %v3122, %v3186
  %v3188 = vpop.f32.mrf.mxu0
  %v3189 = vadd.f32 %v3122, %v3188
  %3190 = vmatmul.bf16.gmra.mxu0 %v3155
  %v3191 = vpop.f32.mrf.mxu0
  %v3192 = vadd.f32 %v3122, %v3191
  %v3193 = vpop.f32.mrf.mxu0
  %v3194 = vadd.f32 %v3122, %v3193
  %3195 = vmatmul.bf16.gmra.mxu0 %v3158
  %v3196 = vpop.f32.mrf.mxu0
  %v3197 = vadd.f32 %v3122, %v3196
  %v3198 = vpop.f32.mrf.mxu0
  %v3199 = vadd.f32 %v3122, %v3198
  %3200 = vmatmul.bf16.gmra.mxu0 %v3161
  %v3201 = vpop.f32.mrf.mxu0
  %v3202 = vadd.f32 %v3122, %v3201
  %v3203 = vpop.f32.mrf.mxu0
  %v3204 = vadd.f32 %v3122, %v3203
  %3205 = vmatmul.bf16.gmra.mxu0 %v3164
  %v3206 = vpop.f32.mrf.mxu0
  %v3207 = vadd.f32 %v3122, %v3206
  %v3208 = vpop.f32.mrf.mxu0
  %v3209 = vadd.f32 %v3122, %v3208
  %3210 = vmatmul.bf16.gmra.mxu0 %v3167
  %v3211 = vpop.f32.mrf.mxu0
  %v3212 = vadd.f32 %v3122, %v3211
  %v3213 = vpop.f32.mrf.mxu0
  %v3214 = vadd.f32 %v3122, %v3213
  %3215 = vmatmul.bf16.gmra.mxu0 %v3170
  %v3216 = vpop.f32.mrf.mxu0
  %v3217 = vadd.f32 %v3122, %v3216
  %v3218 = vpop.f32.mrf.mxu0
  %v3219 = vadd.f32 %v3122, %v3218
  %3220 = vdwg.mxu0
  %v3221 = vadd.f32 %v2986, %v3182
  %v3222 = vadd.f32 %v2987, %v3184
  %v3223 = vadd.f32 %v2988, %v3187
  %v3224 = vadd.f32 %v2989, %v3189
  %v3225 = vadd.f32 %v2990, %v3192
  %v3226 = vadd.f32 %v2991, %v3194
  %v3227 = vadd.f32 %v2992, %v3197
  %v3228 = vadd.f32 %v2993, %v3199
  %v3229 = vadd.f32 %v2994, %v3202
  %v3230 = vadd.f32 %v2995, %v3204
  %v3231 = vadd.f32 %v2996, %v3207
  %v3232 = vadd.f32 %v2997, %v3209
  %v3233 = vadd.f32 %v2998, %v3212
  %v3234 = vadd.f32 %v2999, %v3214
  %v3235 = vadd.f32 %v3000, %v3217
  %v3236 = vadd.f32 %v3001, %v3219
  %v3237 = vsel %vm223, %v3221, 0.0
  %3238 = vadd.xlane.f32.xlu0 %v3237
  %v3239 = vpop.xlane.xlu0 %3238
  %v3240 = vsel %vm223, %v3222, 0.0
  %3241 = vadd.xlane.f32.xlu0 %v3240
  %v3242 = vpop.xlane.xlu0 %3241
  %v3243 = vsel %vm223, %v3223, 0.0
  %3244 = vadd.xlane.f32.xlu0 %v3243
  %v3245 = vpop.xlane.xlu0 %3244
  %v3246 = vsel %vm223, %v3224, 0.0
  %3247 = vadd.xlane.f32.xlu0 %v3246
  %v3248 = vpop.xlane.xlu0 %3247
  %v3249 = vsel %vm223, %v3225, 0.0
  %3250 = vadd.xlane.f32.xlu0 %v3249
  %v3251 = vpop.xlane.xlu0 %3250
  %v3252 = vsel %vm223, %v3226, 0.0
  %3253 = vadd.xlane.f32.xlu0 %v3252
  %v3254 = vpop.xlane.xlu0 %3253
  %v3255 = vsel %vm223, %v3227, 0.0
  %3256 = vadd.xlane.f32.xlu0 %v3255
  %v3257 = vpop.xlane.xlu0 %3256
  %v3258 = vsel %vm223, %v3228, 0.0
  %3259 = vadd.xlane.f32.xlu0 %v3258
  %v3260 = vpop.xlane.xlu0 %3259
  %v3261 = vsel %vm223, %v3229, 0.0
  %3262 = vadd.xlane.f32.xlu0 %v3261
  %v3263 = vpop.xlane.xlu0 %3262
  %v3264 = vsel %vm223, %v3230, 0.0
  %3265 = vadd.xlane.f32.xlu0 %v3264
  %v3266 = vpop.xlane.xlu0 %3265
  %v3267 = vsel %vm223, %v3231, 0.0
  %3268 = vadd.xlane.f32.xlu0 %v3267
  %v3269 = vpop.xlane.xlu0 %3268
  %v3270 = vsel %vm223, %v3232, 0.0
  %3271 = vadd.xlane.f32.xlu0 %v3270
  %v3272 = vpop.xlane.xlu0 %3271
  %v3273 = vsel %vm223, %v3233, 0.0
  %3274 = vadd.xlane.f32.xlu0 %v3273
  %v3275 = vpop.xlane.xlu0 %3274
  %v3276 = vsel %vm223, %v3234, 0.0
  %3277 = vadd.xlane.f32.xlu0 %v3276
  %v3278 = vpop.xlane.xlu0 %3277
  %v3279 = vsel %vm223, %v3235, 0.0
  %3280 = vadd.xlane.f32.xlu0 %v3279
  %v3281 = vpop.xlane.xlu0 %3280
  %v3282 = vsel %vm223, %v3236, 0.0
  %3283 = vadd.xlane.f32.xlu0 %v3282
  %v3284 = vpop.xlane.xlu0 %3283
  %v3285 = vmul.f32 %v3239, %v2663
  %v3286 = vmul.f32 %v3242, %v2663
  %v3287 = vmul.f32 %v3245, %v2663
  %v3288 = vmul.f32 %v3248, %v2663
  %v3289 = vmul.f32 %v3251, %v2663
  %v3290 = vmul.f32 %v3254, %v2663
  %v3291 = vmul.f32 %v3257, %v2663
  %v3292 = vmul.f32 %v3260, %v2663
  %v3293 = vmul.f32 %v3263, %v2663
  %v3294 = vmul.f32 %v3266, %v2663
  %v3295 = vmul.f32 %v3269, %v2663
  %v3296 = vmul.f32 %v3272, %v2663
  %v3297 = vmul.f32 %v3275, %v2663
  %v3298 = vmul.f32 %v3278, %v2663
  %v3299 = vmul.f32 %v3281, %v2663
  %v3300 = vmul.f32 %v3284, %v2663
  %v3301 = vsub.f32 %v3221, %v3285
  %v3302 = vsub.f32 %v3222, %v3286
  %v3303 = vsub.f32 %v3223, %v3287
  %v3304 = vsub.f32 %v3224, %v3288
  %v3305 = vsub.f32 %v3225, %v3289
  %v3306 = vsub.f32 %v3226, %v3290
  %v3307 = vsub.f32 %v3227, %v3291
  %v3308 = vsub.f32 %v3228, %v3292
  %v3309 = vsub.f32 %v3229, %v3293
  %v3310 = vsub.f32 %v3230, %v3294
  %v3311 = vsub.f32 %v3231, %v3295
  %v3312 = vsub.f32 %v3232, %v3296
  %v3313 = vsub.f32 %v3233, %v3297
  %v3314 = vsub.f32 %v3234, %v3298
  %v3315 = vsub.f32 %v3235, %v3299
  %v3316 = vsub.f32 %v3236, %v3300
  %v3317 = vmul.f32 %v3301, %v3301
  %v3318 = vmul.f32 %v3302, %v3302
  %v3319 = vmul.f32 %v3303, %v3303
  %v3320 = vmul.f32 %v3304, %v3304
  %v3321 = vmul.f32 %v3305, %v3305
  %v3322 = vmul.f32 %v3306, %v3306
  %v3323 = vmul.f32 %v3307, %v3307
  %v3324 = vmul.f32 %v3308, %v3308
  %v3325 = vmul.f32 %v3309, %v3309
  %v3326 = vmul.f32 %v3310, %v3310
  %v3327 = vmul.f32 %v3311, %v3311
  %v3328 = vmul.f32 %v3312, %v3312
  %v3329 = vmul.f32 %v3313, %v3313
  %v3330 = vmul.f32 %v3314, %v3314
  %v3331 = vmul.f32 %v3315, %v3315
  %v3332 = vmul.f32 %v3316, %v3316
  %v3333 = vsel %vm223, %v3317, 0.0
  %3334 = vadd.xlane.f32.xlu0 %v3333
  %v3335 = vpop.xlane.xlu0 %3334
  %v3336 = vsel %vm223, %v3318, 0.0
  %3337 = vadd.xlane.f32.xlu0 %v3336
  %v3338 = vpop.xlane.xlu0 %3337
  %v3339 = vsel %vm223, %v3319, 0.0
  %3340 = vadd.xlane.f32.xlu0 %v3339
  %v3341 = vpop.xlane.xlu0 %3340
  %v3342 = vsel %vm223, %v3320, 0.0
  %3343 = vadd.xlane.f32.xlu0 %v3342
  %v3344 = vpop.xlane.xlu0 %3343
  %v3345 = vsel %vm223, %v3321, 0.0
  %3346 = vadd.xlane.f32.xlu0 %v3345
  %v3347 = vpop.xlane.xlu0 %3346
  %v3348 = vsel %vm223, %v3322, 0.0
  %3349 = vadd.xlane.f32.xlu0 %v3348
  %v3350 = vpop.xlane.xlu0 %3349
  %v3351 = vsel %vm223, %v3323, 0.0
  %3352 = vadd.xlane.f32.xlu0 %v3351
  %v3353 = vpop.xlane.xlu0 %3352
  %v3354 = vsel %vm223, %v3324, 0.0
  %3355 = vadd.xlane.f32.xlu0 %v3354
  %v3356 = vpop.xlane.xlu0 %3355
  %v3357 = vsel %vm223, %v3325, 0.0
  %3358 = vadd.xlane.f32.xlu0 %v3357
  %v3359 = vpop.xlane.xlu0 %3358
  %v3360 = vsel %vm223, %v3326, 0.0
  %3361 = vadd.xlane.f32.xlu0 %v3360
  %v3362 = vpop.xlane.xlu0 %3361
  %v3363 = vsel %vm223, %v3327, 0.0
  %3364 = vadd.xlane.f32.xlu0 %v3363
  %v3365 = vpop.xlane.xlu0 %3364
  %v3366 = vsel %vm223, %v3328, 0.0
  %3367 = vadd.xlane.f32.xlu0 %v3366
  %v3368 = vpop.xlane.xlu0 %3367
  %v3369 = vsel %vm223, %v3329, 0.0
  %3370 = vadd.xlane.f32.xlu0 %v3369
  %v3371 = vpop.xlane.xlu0 %3370
  %v3372 = vsel %vm223, %v3330, 0.0
  %3373 = vadd.xlane.f32.xlu0 %v3372
  %v3374 = vpop.xlane.xlu0 %3373
  %v3375 = vsel %vm223, %v3331, 0.0
  %3376 = vadd.xlane.f32.xlu0 %v3375
  %v3377 = vpop.xlane.xlu0 %3376
  %v3378 = vsel %vm223, %v3332, 0.0
  %3379 = vadd.xlane.f32.xlu0 %v3378
  %v3380 = vpop.xlane.xlu0 %3379
  %v3381 = vmul.f32 %v3335, %v2663
  %v3382 = vmul.f32 %v3338, %v2663
  %v3383 = vmul.f32 %v3341, %v2663
  %v3384 = vmul.f32 %v3344, %v2663
  %v3385 = vmul.f32 %v3347, %v2663
  %v3386 = vmul.f32 %v3350, %v2663
  %v3387 = vmul.f32 %v3353, %v2663
  %v3388 = vmul.f32 %v3356, %v2663
  %v3389 = vmul.f32 %v3359, %v2663
  %v3390 = vmul.f32 %v3362, %v2663
  %v3391 = vmul.f32 %v3365, %v2663
  %v3392 = vmul.f32 %v3368, %v2663
  %v3393 = vmul.f32 %v3371, %v2663
  %v3394 = vmul.f32 %v3374, %v2663
  %v3395 = vmul.f32 %v3377, %v2663
  %v3396 = vmul.f32 %v3380, %v2663
  %v3397 = vadd.f32 %v3381, 1e-05
  %v3398 = vadd.f32 %v3382, 1e-05
  %v3399 = vadd.f32 %v3383, 1e-05
  %v3400 = vadd.f32 %v3384, 1e-05
  %v3401 = vadd.f32 %v3385, 1e-05
  %v3402 = vadd.f32 %v3386, 1e-05
  %v3403 = vadd.f32 %v3387, 1e-05
  %v3404 = vadd.f32 %v3388, 1e-05
  %v3405 = vadd.f32 %v3389, 1e-05
  %v3406 = vadd.f32 %v3390, 1e-05
  %v3407 = vadd.f32 %v3391, 1e-05
  %v3408 = vadd.f32 %v3392, 1e-05
  %v3409 = vadd.f32 %v3393, 1e-05
  %v3410 = vadd.f32 %v3394, 1e-05
  %v3411 = vadd.f32 %v3395, 1e-05
  %v3412 = vadd.f32 %v3396, 1e-05
  %v3413 = vrsqrt.pop %v3397
  %v3414 = vmul.f32 %v3413, %v3397
  %v3415 = vmul.f32 %v3414, %v3413
  %v3416 = vmul.f32 0.5, %v3415
  %v3417 = vsub.f32 1.5, %v3416
  %v3418 = vmul.f32 %v3413, %v3417
  %vm3419 = vweird.f32 %v3397
  %vm3420 = vweird.f32 %v3413
  %vm3421 = vmor %vm3419, %vm3420
  %v3422 = vsel %vm3421, %v3413, %v3418
  %v3423 = vrsqrt.pop %v3398
  %v3424 = vmul.f32 %v3423, %v3398
  %v3425 = vmul.f32 %v3424, %v3423
  %v3426 = vmul.f32 0.5, %v3425
  %v3427 = vsub.f32 1.5, %v3426
  %v3428 = vmul.f32 %v3423, %v3427
  %vm3429 = vweird.f32 %v3398
  %vm3430 = vweird.f32 %v3423
  %vm3431 = vmor %vm3429, %vm3430
  %v3432 = vsel %vm3431, %v3423, %v3428
  %v3433 = vrsqrt.pop %v3399
  %v3434 = vmul.f32 %v3433, %v3399
  %v3435 = vmul.f32 %v3434, %v3433
  %v3436 = vmul.f32 0.5, %v3435
  %v3437 = vsub.f32 1.5, %v3436
  %v3438 = vmul.f32 %v3433, %v3437
  %vm3439 = vweird.f32 %v3399
  %vm3440 = vweird.f32 %v3433
  %vm3441 = vmor %vm3439, %vm3440
  %v3442 = vsel %vm3441, %v3433, %v3438
  %v3443 = vrsqrt.pop %v3400
  %v3444 = vmul.f32 %v3443, %v3400
  %v3445 = vmul.f32 %v3444, %v3443
  %v3446 = vmul.f32 0.5, %v3445
  %v3447 = vsub.f32 1.5, %v3446
  %v3448 = vmul.f32 %v3443, %v3447
  %vm3449 = vweird.f32 %v3400
  %vm3450 = vweird.f32 %v3443
  %vm3451 = vmor %vm3449, %vm3450
  %v3452 = vsel %vm3451, %v3443, %v3448
  %v3453 = vrsqrt.pop %v3401
  %v3454 = vmul.f32 %v3453, %v3401
  %v3455 = vmul.f32 %v3454, %v3453
  %v3456 = vmul.f32 0.5, %v3455
  %v3457 = vsub.f32 1.5, %v3456
  %v3458 = vmul.f32 %v3453, %v3457
  %vm3459 = vweird.f32 %v3401
  %vm3460 = vweird.f32 %v3453
  %vm3461 = vmor %vm3459, %vm3460
  %v3462 = vsel %vm3461, %v3453, %v3458
  %v3463 = vrsqrt.pop %v3402
  %v3464 = vmul.f32 %v3463, %v3402
  %v3465 = vmul.f32 %v3464, %v3463
  %v3466 = vmul.f32 0.5, %v3465
  %v3467 = vsub.f32 1.5, %v3466
  %v3468 = vmul.f32 %v3463, %v3467
  %vm3469 = vweird.f32 %v3402
  %vm3470 = vweird.f32 %v3463
  %vm3471 = vmor %vm3469, %vm3470
  %v3472 = vsel %vm3471, %v3463, %v3468
  %v3473 = vrsqrt.pop %v3403
  %v3474 = vmul.f32 %v3473, %v3403
  %v3475 = vmul.f32 %v3474, %v3473
  %v3476 = vmul.f32 0.5, %v3475
  %v3477 = vsub.f32 1.5, %v3476
  %v3478 = vmul.f32 %v3473, %v3477
  %vm3479 = vweird.f32 %v3403
  %vm3480 = vweird.f32 %v3473
  %vm3481 = vmor %vm3479, %vm3480
  %v3482 = vsel %vm3481, %v3473, %v3478
  %v3483 = vrsqrt.pop %v3404
  %v3484 = vmul.f32 %v3483, %v3404
  %v3485 = vmul.f32 %v3484, %v3483
  %v3486 = vmul.f32 0.5, %v3485
  %v3487 = vsub.f32 1.5, %v3486
  %v3488 = vmul.f32 %v3483, %v3487
  %vm3489 = vweird.f32 %v3404
  %vm3490 = vweird.f32 %v3483
  %vm3491 = vmor %vm3489, %vm3490
  %v3492 = vsel %vm3491, %v3483, %v3488
  %v3493 = vrsqrt.pop %v3405
  %v3494 = vmul.f32 %v3493, %v3405
  %v3495 = vmul.f32 %v3494, %v3493
  %v3496 = vmul.f32 0.5, %v3495
  %v3497 = vsub.f32 1.5, %v3496
  %v3498 = vmul.f32 %v3493, %v3497
  %vm3499 = vweird.f32 %v3405
  %vm3500 = vweird.f32 %v3493
  %vm3501 = vmor %vm3499, %vm3500
  %v3502 = vsel %vm3501, %v3493, %v3498
  %v3503 = vrsqrt.pop %v3406
  %v3504 = vmul.f32 %v3503, %v3406
  %v3505 = vmul.f32 %v3504, %v3503
  %v3506 = vmul.f32 0.5, %v3505
  %v3507 = vsub.f32 1.5, %v3506
  %v3508 = vmul.f32 %v3503, %v3507
  %vm3509 = vweird.f32 %v3406
  %vm3510 = vweird.f32 %v3503
  %vm3511 = vmor %vm3509, %vm3510
  %v3512 = vsel %vm3511, %v3503, %v3508
  %v3513 = vrsqrt.pop %v3407
  %v3514 = vmul.f32 %v3513, %v3407
  %v3515 = vmul.f32 %v3514, %v3513
  %v3516 = vmul.f32 0.5, %v3515
  %v3517 = vsub.f32 1.5, %v3516
  %v3518 = vmul.f32 %v3513, %v3517
  %vm3519 = vweird.f32 %v3407
  %vm3520 = vweird.f32 %v3513
  %vm3521 = vmor %vm3519, %vm3520
  %v3522 = vsel %vm3521, %v3513, %v3518
  %v3523 = vrsqrt.pop %v3408
  %v3524 = vmul.f32 %v3523, %v3408
  %v3525 = vmul.f32 %v3524, %v3523
  %v3526 = vmul.f32 0.5, %v3525
  %v3527 = vsub.f32 1.5, %v3526
  %v3528 = vmul.f32 %v3523, %v3527
  %vm3529 = vweird.f32 %v3408
  %vm3530 = vweird.f32 %v3523
  %vm3531 = vmor %vm3529, %vm3530
  %v3532 = vsel %vm3531, %v3523, %v3528
  %v3533 = vrsqrt.pop %v3409
  %v3534 = vmul.f32 %v3533, %v3409
  %v3535 = vmul.f32 %v3534, %v3533
  %v3536 = vmul.f32 0.5, %v3535
  %v3537 = vsub.f32 1.5, %v3536
  %v3538 = vmul.f32 %v3533, %v3537
  %vm3539 = vweird.f32 %v3409
  %vm3540 = vweird.f32 %v3533
  %vm3541 = vmor %vm3539, %vm3540
  %v3542 = vsel %vm3541, %v3533, %v3538
  %v3543 = vrsqrt.pop %v3410
  %v3544 = vmul.f32 %v3543, %v3410
  %v3545 = vmul.f32 %v3544, %v3543
  %v3546 = vmul.f32 0.5, %v3545
  %v3547 = vsub.f32 1.5, %v3546
  %v3548 = vmul.f32 %v3543, %v3547
  %vm3549 = vweird.f32 %v3410
  %vm3550 = vweird.f32 %v3543
  %vm3551 = vmor %vm3549, %vm3550
  %v3552 = vsel %vm3551, %v3543, %v3548
  %v3553 = vrsqrt.pop %v3411
  %v3554 = vmul.f32 %v3553, %v3411
  %v3555 = vmul.f32 %v3554, %v3553
  %v3556 = vmul.f32 0.5, %v3555
  %v3557 = vsub.f32 1.5, %v3556
  %v3558 = vmul.f32 %v3553, %v3557
  %vm3559 = vweird.f32 %v3411
  %vm3560 = vweird.f32 %v3553
  %vm3561 = vmor %vm3559, %vm3560
  %v3562 = vsel %vm3561, %v3553, %v3558
  %v3563 = vrsqrt.pop %v3412
  %v3564 = vmul.f32 %v3563, %v3412
  %v3565 = vmul.f32 %v3564, %v3563
  %v3566 = vmul.f32 0.5, %v3565
  %v3567 = vsub.f32 1.5, %v3566
  %v3568 = vmul.f32 %v3563, %v3567
  %vm3569 = vweird.f32 %v3412
  %vm3570 = vweird.f32 %v3563
  %vm3571 = vmor %vm3569, %vm3570
  %v3572 = vsel %vm3571, %v3563, %v3568
  %v3573 = vmul.f32 %v3301, %v3422
  %v3574 = vmul.f32 %v3302, %v3432
  %v3575 = vmul.f32 %v3303, %v3442
  %v3576 = vmul.f32 %v3304, %v3452
  %v3577 = vmul.f32 %v3305, %v3462
  %v3578 = vmul.f32 %v3306, %v3472
  %v3579 = vmul.f32 %v3307, %v3482
  %v3580 = vmul.f32 %v3308, %v3492
  %v3581 = vmul.f32 %v3309, %v3502
  %v3582 = vmul.f32 %v3310, %v3512
  %v3583 = vmul.f32 %v3311, %v3522
  %v3584 = vmul.f32 %v3312, %v3532
  %v3585 = vmul.f32 %v3313, %v3542
  %v3586 = vmul.f32 %v3314, %v3552
  %v3587 = vmul.f32 %v3315, %v3562
  %v3588 = vmul.f32 %v3316, %v3572
  %v3589 = vperm.slane %v201, 4
  %v3590 = vmul.f32 %v3573, %v3589
  %v3591 = vmul.f32 %v3574, %v3589
  %v3592 = vmul.f32 %v3575, %v3589
  %v3593 = vmul.f32 %v3576, %v3589
  %v3594 = vmul.f32 %v3577, %v3589
  %v3595 = vmul.f32 %v3578, %v3589
  %v3596 = vmul.f32 %v3579, %v3589
  %v3597 = vmul.f32 %v3580, %v3589
  %v3598 = vmul.f32 %v3581, %v3589
  %v3599 = vmul.f32 %v3582, %v3589
  %v3600 = vmul.f32 %v3583, %v3589
  %v3601 = vmul.f32 %v3584, %v3589
  %v3602 = vmul.f32 %v3585, %v3589
  %v3603 = vmul.f32 %v3586, %v3589
  %v3604 = vmul.f32 %v3587, %v3589
  %v3605 = vmul.f32 %v3588, %v3589
  %v3606 = vperm.slane %v201, 5
  %v3607 = vadd.f32 %v3590, %v3606
  %v3608 = vadd.f32 %v3591, %v3606
  %v3609 = vadd.f32 %v3592, %v3606
  %v3610 = vadd.f32 %v3593, %v3606
  %v3611 = vadd.f32 %v3594, %v3606
  %v3612 = vadd.f32 %v3595, %v3606
  %v3613 = vadd.f32 %v3596, %v3606
  %v3614 = vadd.f32 %v3597, %v3606
  %v3615 = vadd.f32 %v3598, %v3606
  %v3616 = vadd.f32 %v3599, %v3606
  %v3617 = vadd.f32 %v3600, %v3606
  %v3618 = vadd.f32 %v3601, %v3606
  %v3619 = vadd.f32 %v3602, %v3606
  %v3620 = vadd.f32 %v3603, %v3606
  %v3621 = vadd.f32 %v3604, %v3606
  %v3622 = vadd.f32 %v3605, %v3606
  %3624 = vset.pattern.permute.xlu0 0
  %3625 = vperm.xlu0 %3624, %v125
  %v3626 = vpop.permute.xlu0 %3625
  %3629 = vset.pattern.permute.xlu0 0
  %3630 = vperm.xlu0 %3629, %v126
  %v3631 = vpop.permute.xlu0 %3630
  %3634 = vset.pattern.permute.xlu0 0
  %3635 = vperm.xlu0 %3634, %v127
  %v3636 = vpop.permute.xlu0 %3635
  %3639 = vset.pattern.permute.xlu0 0
  %3640 = vperm.xlu0 %3639, %v128
  %v3641 = vpop.permute.xlu0 %3640
  %3644 = vset.pattern.permute.xlu0 0
  %3645 = vperm.xlu0 %3644, %v129
  %v3646 = vpop.permute.xlu0 %3645
  %3649 = vset.pattern.permute.xlu0 0
  %3650 = vperm.xlu0 %3649, %v130
  %v3651 = vpop.permute.xlu0 %3650
  %3654 = vset.pattern.permute.xlu0 0
  %3655 = vperm.xlu0 %3654, %v131
  %v3656 = vpop.permute.xlu0 %3655
  %3659 = vset.pattern.permute.xlu0 0
  %3660 = vperm.xlu0 %3659, %v132
  %v3661 = vpop.permute.xlu0 %3660
  %3664 = vset.pattern.permute.xlu0 0
  %3665 = vperm.xlu0 %3664, %v133
  %v3666 = vpop.permute.xlu0 %3665
  %3669 = vset.pattern.permute.xlu0 0
  %3670 = vperm.xlu0 %3669, %v134
  %v3671 = vpop.permute.xlu0 %3670
  %3674 = vset.pattern.permute.xlu0 0
  %3675 = vperm.xlu0 %3674, %v135
  %v3676 = vpop.permute.xlu0 %3675
  %3679 = vset.pattern.permute.xlu0 0
  %3680 = vperm.xlu0 %3679, %v136
  %v3681 = vpop.permute.xlu0 %3680
  %3684 = vset.pattern.permute.xlu0 0
  %3685 = vperm.xlu0 %3684, %v137
  %v3686 = vpop.permute.xlu0 %3685
  %3689 = vset.pattern.permute.xlu0 0
  %3690 = vperm.xlu0 %3689, %v138
  %v3691 = vpop.permute.xlu0 %3690
  %3694 = vset.pattern.permute.xlu0 0
  %3695 = vperm.xlu0 %3694, %v139
  %v3696 = vpop.permute.xlu0 %3695
  %3699 = vset.pattern.permute.xlu0 0
  %3700 = vperm.xlu0 %3699, %v140
  %v3701 = vpop.permute.xlu0 %3700
  %v3703 = vmul.f32 %v3607, %v3626
  %v3704 = vmul.f32 %v3608, %v3631
  %v3705 = vmul.f32 %v3609, %v3636
  %v3706 = vmul.f32 %v3610, %v3641
  %v3707 = vmul.f32 %v3611, %v3646
  %v3708 = vmul.f32 %v3612, %v3651
  %v3709 = vmul.f32 %v3613, %v3656
  %v3710 = vmul.f32 %v3614, %v3661
  %v3711 = vmul.f32 %v3615, %v3666
  %v3712 = vmul.f32 %v3616, %v3671
  %v3713 = vmul.f32 %v3617, %v3676
  %v3714 = vmul.f32 %v3618, %v3681
  %v3715 = vmul.f32 %v3619, %v3686
  %v3716 = vmul.f32 %v3620, %v3691
  %v3717 = vmul.f32 %v3621, %v3696
  %v3718 = vmul.f32 %v3622, %v3701
  %s3719 = scalar_lea.vmem %s5, 32
  %v3720 = vld [vmem:[%s3719] sm:$0xf]
  %v3721 = vld [vmem:[%s3719 + $0x4] sm:$0xf]
  %v3722 = vld [vmem:[%s3719 + $0x8] sm:$0xf]
  %v3723 = vld [vmem:[%s3719 + $0xc] sm:$0xf]
  %v3724 = vld [vmem:[%s3719 + $0x10] sm:$0xf]
  %v3725 = vld [vmem:[%s3719 + $0x14] sm:$0xf]
  %v3726 = vld [vmem:[%s3719 + $0x18] sm:$0xf]
  %v3727 = vld [vmem:[%s3719 + $0x1c] sm:$0xf]
  %s3728 = scalar_lea.vmem %s6, 32
  %v3729 = vld [vmem:[%s3728] sm:$0xf]
  %v3730 = vld [vmem:[%s3728 + $0x4] sm:$0xf]
  %v3731 = vld [vmem:[%s3728 + $0x8] sm:$0xf]
  %v3732 = vld [vmem:[%s3728 + $0xc] sm:$0xf]
  %v3733 = vld [vmem:[%s3728 + $0x10] sm:$0xf]
  %v3734 = vld [vmem:[%s3728 + $0x14] sm:$0xf]
  %v3735 = vld [vmem:[%s3728 + $0x18] sm:$0xf]
  %v3736 = vld [vmem:[%s3728 + $0x1c] sm:$0xf]
  %s3737 = scalar_lea.vmem %s7, 32
  %v3738 = vld [vmem:[%s3737] sm:$0xf]
  %v3739 = vld [vmem:[%s3737 + $0x4] sm:$0xf]
  %v3740 = vld [vmem:[%s3737 + $0x8] sm:$0xf]
  %v3741 = vld [vmem:[%s3737 + $0xc] sm:$0xf]
  %v3742 = vld [vmem:[%s3737 + $0x10] sm:$0xf]
  %v3743 = vld [vmem:[%s3737 + $0x14] sm:$0xf]
  %v3744 = vld [vmem:[%s3737 + $0x18] sm:$0xf]
  %v3745 = vld [vmem:[%s3737 + $0x1c] sm:$0xf]
  %s3746 = scalar_lea.vmem %s9, 16
  %v3747 = vld [vmem:[%s3746] sm:$0xf]
  %v3748 = vld [vmem:[%s3746 + $0x4] sm:$0xf]
  %v3749 = vld [vmem:[%s3746 + $0x8] sm:$0xf]
  %v3750 = vld [vmem:[%s3746 + $0xc] sm:$0xf]
  %s3751 = scalar_lea.vmem %s8, 6
  %v3752 = vld [vmem:[%s3751] sm:$0x3]
  %v3753 = vld [vmem:[%s3751 + $0x2] sm:$0x3]
  %v3754 = vld [vmem:[%s3751 + $0x4] sm:$0x3]
  %s3755 = scalar_lea.vmem %s10, 16
  %v3756 = vld [vmem:[%s3755] sm:$0xf]
  %v3757 = vld [vmem:[%s3755 + $0x4] sm:$0xf]
  %v3758 = vld [vmem:[%s3755 + $0x8] sm:$0xf]
  %v3759 = vld [vmem:[%s3755 + $0xc] sm:$0xf]
  %s3760 = scalar_lea.vmem %s11, 1
  %v3761 = vld [vmem:[%s3760] sm:$0x1]
  %s3762 = scalar_lea.vmem %s12, 32
  %v3763 = vld [vmem:[%s3762] sm:$0xf]
  %v3764 = vld [vmem:[%s3762 + $0x4] sm:$0xf]
  %v3765 = vld [vmem:[%s3762 + $0x8] sm:$0xf]
  %v3766 = vld [vmem:[%s3762 + $0xc] sm:$0xf]
  %v3767 = vld [vmem:[%s3762 + $0x10] sm:$0xf]
  %v3768 = vld [vmem:[%s3762 + $0x14] sm:$0xf]
  %v3769 = vld [vmem:[%s3762 + $0x18] sm:$0xf]
  %v3770 = vld [vmem:[%s3762 + $0x1c] sm:$0xf]
  %s3771 = scalar_lea.vmem %s13, 8
  %v3772 = vld [vmem:[%s3771] sm:$0x3f]
  %v3773 = vpack.c.bf16 %v3704, %v3703
  %v3774 = vpack.c.bf16 %v3706, %v3705
  %v3775 = vpack.c.bf16 %v3708, %v3707
  %v3776 = vpack.c.bf16 %v3710, %v3709
  %v3777 = vpack.c.bf16 %v3712, %v3711
  %v3778 = vpack.c.bf16 %v3714, %v3713
  %v3779 = vpack.c.bf16 %v3716, %v3715
  %v3780 = vpack.c.bf16 %v3718, %v3717
  %v3781 = vperm.slane %v3752, 0
  %v3786 = vunpack.c.l.b16 %v3720
  %v3787 = vunpack.c.l.b16 %v3721
  %v3788 = vunpack.c.l.b16 %v3722
  %v3789 = vunpack.c.l.b16 %v3723
  %v3790 = vpack.c.b16 %v3787, %v3786
  %v3791 = vpack.c.b16 %v3789, %v3788
  %v3795 = vsel %vm223, %v3773, 0
  %v3798 = vsel %vm223, %v3774, 0
  %v3801 = vsel %vm223, %v3775, 0
  %v3804 = vsel %vm223, %v3776, 0
  %v3807 = vsel %vm223, %v3777, 0
  %v3810 = vsel %vm223, %v3778, 0
  %v3813 = vsel %vm223, %v3779, 0
  %v3816 = vsel %vm223, %v3780, 0
  %3818 = vmatpush.bf16.msra.mxu0 0
  %3819 = vmatpush.bf16.msra.mxu0 0
  %3820 = vmatpush.bf16.msra.mxu0 0
  %3821 = vmatpush.bf16.msra.mxu0 0
  %3822 = vmatpush.bf16.msra.mxu0 0
  %3823 = vmatpush.bf16.msra.mxu0 0
  %3824 = vmatpush.bf16.msra.mxu0 %v3791
  %3825 = vmatpush.bf16.msra.mxu0 %v3790
  %3826 = vmatmul.bf16.gmra.mxu0 %v3795
  %v3827 = vpop.f32.mrf.mxu0
  %v3828 = vadd.f32 %v3781, %v3827
  %v3829 = vpop.f32.mrf.mxu0
  %v3830 = vadd.f32 %v3781, %v3829
  %3831 = vmatmul.bf16.gmra.mxu0 %v3798
  %v3832 = vpop.f32.mrf.mxu0
  %v3833 = vadd.f32 %v3781, %v3832
  %v3834 = vpop.f32.mrf.mxu0
  %v3835 = vadd.f32 %v3781, %v3834
  %3836 = vmatmul.bf16.gmra.mxu0 %v3801
  %v3837 = vpop.f32.mrf.mxu0
  %v3838 = vadd.f32 %v3781, %v3837
  %v3839 = vpop.f32.mrf.mxu0
  %v3840 = vadd.f32 %v3781, %v3839
  %3841 = vmatmul.bf16.gmra.mxu0 %v3804
  %v3842 = vpop.f32.mrf.mxu0
  %v3843 = vadd.f32 %v3781, %v3842
  %v3844 = vpop.f32.mrf.mxu0
  %v3845 = vadd.f32 %v3781, %v3844
  %3846 = vmatmul.bf16.gmra.mxu0 %v3807
  %v3847 = vpop.f32.mrf.mxu0
  %v3848 = vadd.f32 %v3781, %v3847
  %v3849 = vpop.f32.mrf.mxu0
  %v3850 = vadd.f32 %v3781, %v3849
  %3851 = vmatmul.bf16.gmra.mxu0 %v3810
  %v3852 = vpop.f32.mrf.mxu0
  %v3853 = vadd.f32 %v3781, %v3852
  %v3854 = vpop.f32.mrf.mxu0
  %v3855 = vadd.f32 %v3781, %v3854
  %3856 = vmatmul.bf16.gmra.mxu0 %v3813
  %v3857 = vpop.f32.mrf.mxu0
  %v3858 = vadd.f32 %v3781, %v3857
  %v3859 = vpop.f32.mrf.mxu0
  %v3860 = vadd.f32 %v3781, %v3859
  %3861 = vmatmul.bf16.gmra.mxu0 %v3816
  %v3862 = vpop.f32.mrf.mxu0
  %v3863 = vadd.f32 %v3781, %v3862
  %v3864 = vpop.f32.mrf.mxu0
  %v3865 = vadd.f32 %v3781, %v3864
  %3866 = vdwg.mxu0
  %v3867 = vperm.slane %v3753, 0
  %v3872 = vunpack.c.l.b16 %v3729
  %v3873 = vunpack.c.l.b16 %v3730
  %v3874 = vunpack.c.l.b16 %v3731
  %v3875 = vunpack.c.l.b16 %v3732
  %v3876 = vpack.c.b16 %v3873, %v3872
  %v3877 = vpack.c.b16 %v3875, %v3874
  %3880 = vmatpush.bf16.msra.mxu0 0
  %3881 = vmatpush.bf16.msra.mxu0 0
  %3882 = vmatpush.bf16.msra.mxu0 0
  %3883 = vmatpush.bf16.msra.mxu0 0
  %3884 = vmatpush.bf16.msra.mxu0 0
  %3885 = vmatpush.bf16.msra.mxu0 0
  %3886 = vmatpush.bf16.msra.mxu0 %v3877
  %3887 = vmatpush.bf16.msra.mxu0 %v3876
  %3888 = vmatmul.bf16.gmra.mxu0 %v3795
  %v3889 = vpop.f32.mrf.mxu0
  %v3890 = vadd.f32 %v3867, %v3889
  %v3891 = vpop.f32.mrf.mxu0
  %v3892 = vadd.f32 %v3867, %v3891
  %3893 = vmatmul.bf16.gmra.mxu0 %v3798
  %v3894 = vpop.f32.mrf.mxu0
  %v3895 = vadd.f32 %v3867, %v3894
  %v3896 = vpop.f32.mrf.mxu0
  %v3897 = vadd.f32 %v3867, %v3896
  %3898 = vmatmul.bf16.gmra.mxu0 %v3801
  %v3899 = vpop.f32.mrf.mxu0
  %v3900 = vadd.f32 %v3867, %v3899
  %v3901 = vpop.f32.mrf.mxu0
  %v3902 = vadd.f32 %v3867, %v3901
  %3903 = vmatmul.bf16.gmra.mxu0 %v3804
  %v3904 = vpop.f32.mrf.mxu0
  %v3905 = vadd.f32 %v3867, %v3904
  %v3906 = vpop.f32.mrf.mxu0
  %v3907 = vadd.f32 %v3867, %v3906
  %3908 = vmatmul.bf16.gmra.mxu0 %v3807
  %v3909 = vpop.f32.mrf.mxu0
  %v3910 = vadd.f32 %v3867, %v3909
  %v3911 = vpop.f32.mrf.mxu0
  %v3912 = vadd.f32 %v3867, %v3911
  %3913 = vmatmul.bf16.gmra.mxu0 %v3810
  %v3914 = vpop.f32.mrf.mxu0
  %v3915 = vadd.f32 %v3867, %v3914
  %v3916 = vpop.f32.mrf.mxu0
  %v3917 = vadd.f32 %v3867, %v3916
  %3918 = vmatmul.bf16.gmra.mxu0 %v3813
  %v3919 = vpop.f32.mrf.mxu0
  %v3920 = vadd.f32 %v3867, %v3919
  %v3921 = vpop.f32.mrf.mxu0
  %v3922 = vadd.f32 %v3867, %v3921
  %3923 = vmatmul.bf16.gmra.mxu0 %v3816
  %v3924 = vpop.f32.mrf.mxu0
  %v3925 = vadd.f32 %v3867, %v3924
  %v3926 = vpop.f32.mrf.mxu0
  %v3927 = vadd.f32 %v3867, %v3926
  %3928 = vdwg.mxu0
  %v3929 = vperm.slane %v3754, 0
  %v3934 = vunpack.c.l.b16 %v3738
  %v3935 = vunpack.c.l.b16 %v3739
  %v3936 = vunpack.c.l.b16 %v3740
  %v3937 = vunpack.c.l.b16 %v3741
  %v3938 = vpack.c.b16 %v3935, %v3934
  %v3939 = vpack.c.b16 %v3937, %v3936
  %3942 = vmatpush.bf16.msra.mxu0 0
  %3943 = vmatpush.bf16.msra.mxu0 0
  %3944 = vmatpush.bf16.msra.mxu0 0
  %3945 = vmatpush.bf16.msra.mxu0 0
  %3946 = vmatpush.bf16.msra.mxu0 0
  %3947 = vmatpush.bf16.msra.mxu0 0
  %3948 = vmatpush.bf16.msra.mxu0 %v3939
  %3949 = vmatpush.bf16.msra.mxu0 %v3938
  %3950 = vmatmul.bf16.gmra.mxu0 %v3795
  %v3951 = vpop.f32.mrf.mxu0
  %v3952 = vadd.f32 %v3929, %v3951
  %v3953 = vpop.f32.mrf.mxu0
  %v3954 = vadd.f32 %v3929, %v3953
  %3955 = vmatmul.bf16.gmra.mxu0 %v3798
  %v3956 = vpop.f32.mrf.mxu0
  %v3957 = vadd.f32 %v3929, %v3956
  %v3958 = vpop.f32.mrf.mxu0
  %v3959 = vadd.f32 %v3929, %v3958
  %3960 = vmatmul.bf16.gmra.mxu0 %v3801
  %v3961 = vpop.f32.mrf.mxu0
  %v3962 = vadd.f32 %v3929, %v3961
  %v3963 = vpop.f32.mrf.mxu0
  %v3964 = vadd.f32 %v3929, %v3963
  %3965 = vmatmul.bf16.gmra.mxu0 %v3804
  %v3966 = vpop.f32.mrf.mxu0
  %v3967 = vadd.f32 %v3929, %v3966
  %v3968 = vpop.f32.mrf.mxu0
  %v3969 = vadd.f32 %v3929, %v3968
  %3970 = vmatmul.bf16.gmra.mxu0 %v3807
  %v3971 = vpop.f32.mrf.mxu0
  %v3972 = vadd.f32 %v3929, %v3971
  %v3973 = vpop.f32.mrf.mxu0
  %v3974 = vadd.f32 %v3929, %v3973
  %3975 = vmatmul.bf16.gmra.mxu0 %v3810
  %v3976 = vpop.f32.mrf.mxu0
  %v3977 = vadd.f32 %v3929, %v3976
  %v3978 = vpop.f32.mrf.mxu0
  %v3979 = vadd.f32 %v3929, %v3978
  %3980 = vmatmul.bf16.gmra.mxu0 %v3813
  %v3981 = vpop.f32.mrf.mxu0
  %v3982 = vadd.f32 %v3929, %v3981
  %v3983 = vpop.f32.mrf.mxu0
  %v3984 = vadd.f32 %v3929, %v3983
  %3985 = vmatmul.bf16.gmra.mxu0 %v3816
  %v3986 = vpop.f32.mrf.mxu0
  %v3987 = vadd.f32 %v3929, %v3986
  %v3988 = vpop.f32.mrf.mxu0
  %v3989 = vadd.f32 %v3929, %v3988
  %3990 = vdwg.mxu0
  %v3991 = vmul.f32 %v3828, 0.25
  %v3992 = vmul.f32 %v3830, 0.25
  %v3993 = vmul.f32 %v3833, 0.25
  %v3994 = vmul.f32 %v3835, 0.25
  %v3995 = vmul.f32 %v3838, 0.25
  %v3996 = vmul.f32 %v3840, 0.25
  %v3997 = vmul.f32 %v3843, 0.25
  %v3998 = vmul.f32 %v3845, 0.25
  %v3999 = vmul.f32 %v3848, 0.25
  %v4000 = vmul.f32 %v3850, 0.25
  %v4001 = vmul.f32 %v3853, 0.25
  %v4002 = vmul.f32 %v3855, 0.25
  %v4003 = vmul.f32 %v3858, 0.25
  %v4004 = vmul.f32 %v3860, 0.25
  %v4005 = vmul.f32 %v3863, 0.25
  %v4006 = vmul.f32 %v3865, 0.25
  %v4007 = vpack.c.bf16 %v3991, %v3991
  %v4008 = vpack.c.bf16 %v3992, %v3992
  %v4009 = vpack.c.bf16 %v3993, %v3993
  %v4010 = vpack.c.bf16 %v3994, %v3994
  %v4011 = vpack.c.bf16 %v3995, %v3995
  %v4012 = vpack.c.bf16 %v3996, %v3996
  %v4013 = vpack.c.bf16 %v3997, %v3997
  %v4014 = vpack.c.bf16 %v3998, %v3998
  %v4015 = vpack.c.bf16 %v3999, %v3999
  %v4016 = vpack.c.bf16 %v4000, %v4000
  %v4017 = vpack.c.bf16 %v4001, %v4001
  %v4018 = vpack.c.bf16 %v4002, %v4002
  %v4019 = vpack.c.bf16 %v4003, %v4003
  %v4020 = vpack.c.bf16 %v4004, %v4004
  %v4021 = vpack.c.bf16 %v4005, %v4005
  %v4022 = vpack.c.bf16 %v4006, %v4006
  %v4023 = vpack.c.bf16 %v3890, %v3890
  %v4024 = vpack.c.bf16 %v3892, %v3892
  %v4025 = vpack.c.bf16 %v3895, %v3895
  %v4026 = vpack.c.bf16 %v3897, %v3897
  %v4027 = vpack.c.bf16 %v3900, %v3900
  %v4028 = vpack.c.bf16 %v3902, %v3902
  %v4029 = vpack.c.bf16 %v3905, %v3905
  %v4030 = vpack.c.bf16 %v3907, %v3907
  %v4031 = vpack.c.bf16 %v3910, %v3910
  %v4032 = vpack.c.bf16 %v3912, %v3912
  %v4033 = vpack.c.bf16 %v3915, %v3915
  %v4034 = vpack.c.bf16 %v3917, %v3917
  %v4035 = vpack.c.bf16 %v3920, %v3920
  %v4036 = vpack.c.bf16 %v3922, %v3922
  %v4037 = vpack.c.bf16 %v3925, %v3925
  %v4038 = vpack.c.bf16 %v3927, %v3927
  %v4040 = vsel %vm517, %v4007, 0
  %v4043 = vsel %vm517, %v4023, 0
  %4045 = vmatpush.bf16.xpose.msra.mxu0 0
  %4046 = vmatpush.bf16.xpose.msra.mxu0 0
  %4047 = vmatpush.bf16.xpose.msra.mxu0 0
  %4048 = vmatpush.bf16.xpose.msra.mxu0 0
  %4049 = vmatpush.bf16.xpose.msra.mxu0 0
  %4050 = vmatpush.bf16.xpose.msra.mxu0 0
  %4051 = vmatpush.bf16.xpose.msra.mxu0 0
  %4052 = vmatpush.bf16.xpose.msra.mxu0 %v4043
  %4053 = vmatmul.bf16.gmra.mxu0 %v4040
  %v4054 = vpop.f32.mrf.mxu0
  %v4055 = vadd.f32 %v485, %v4054
  %v4056 = vpop.f32.mrf.mxu0
  %4057 = vdwg.mxu0
  %v4059 = vsel %vm517, %v4008, 0
  %v4062 = vsel %vm517, %v4024, 0
  %4064 = vmatpush.bf16.xpose.msra.mxu0 0
  %4065 = vmatpush.bf16.xpose.msra.mxu0 0
  %4066 = vmatpush.bf16.xpose.msra.mxu0 0
  %4067 = vmatpush.bf16.xpose.msra.mxu0 0
  %4068 = vmatpush.bf16.xpose.msra.mxu0 0
  %4069 = vmatpush.bf16.xpose.msra.mxu0 0
  %4070 = vmatpush.bf16.xpose.msra.mxu0 0
  %4071 = vmatpush.bf16.xpose.msra.mxu0 %v4062
  %4072 = vmatmul.bf16.gmra.mxu0 %v4059
  %v4073 = vpop.f32.mrf.mxu0
  %v4074 = vadd.f32 %v486, %v4073
  %v4075 = vpop.f32.mrf.mxu0
  %4076 = vdwg.mxu0
  %v4078 = vsel %vm517, %v4009, 0
  %v4081 = vsel %vm517, %v4025, 0
  %4083 = vmatpush.bf16.xpose.msra.mxu0 0
  %4084 = vmatpush.bf16.xpose.msra.mxu0 0
  %4085 = vmatpush.bf16.xpose.msra.mxu0 0
  %4086 = vmatpush.bf16.xpose.msra.mxu0 0
  %4087 = vmatpush.bf16.xpose.msra.mxu0 0
  %4088 = vmatpush.bf16.xpose.msra.mxu0 0
  %4089 = vmatpush.bf16.xpose.msra.mxu0 0
  %4090 = vmatpush.bf16.xpose.msra.mxu0 %v4081
  %4091 = vmatmul.bf16.gmra.mxu0 %v4078
  %v4092 = vpop.f32.mrf.mxu0
  %v4093 = vadd.f32 %v487, %v4092
  %v4094 = vpop.f32.mrf.mxu0
  %4095 = vdwg.mxu0
  %v4097 = vsel %vm517, %v4010, 0
  %v4100 = vsel %vm517, %v4026, 0
  %4102 = vmatpush.bf16.xpose.msra.mxu0 0
  %4103 = vmatpush.bf16.xpose.msra.mxu0 0
  %4104 = vmatpush.bf16.xpose.msra.mxu0 0
  %4105 = vmatpush.bf16.xpose.msra.mxu0 0
  %4106 = vmatpush.bf16.xpose.msra.mxu0 0
  %4107 = vmatpush.bf16.xpose.msra.mxu0 0
  %4108 = vmatpush.bf16.xpose.msra.mxu0 0
  %4109 = vmatpush.bf16.xpose.msra.mxu0 %v4100
  %4110 = vmatmul.bf16.gmra.mxu0 %v4097
  %v4111 = vpop.f32.mrf.mxu0
  %v4112 = vadd.f32 %v488, %v4111
  %v4113 = vpop.f32.mrf.mxu0
  %4114 = vdwg.mxu0
  %v4116 = vsel %vm517, %v4011, 0
  %v4119 = vsel %vm517, %v4027, 0
  %4121 = vmatpush.bf16.xpose.msra.mxu0 0
  %4122 = vmatpush.bf16.xpose.msra.mxu0 0
  %4123 = vmatpush.bf16.xpose.msra.mxu0 0
  %4124 = vmatpush.bf16.xpose.msra.mxu0 0
  %4125 = vmatpush.bf16.xpose.msra.mxu0 0
  %4126 = vmatpush.bf16.xpose.msra.mxu0 0
  %4127 = vmatpush.bf16.xpose.msra.mxu0 0
  %4128 = vmatpush.bf16.xpose.msra.mxu0 %v4119
  %4129 = vmatmul.bf16.gmra.mxu0 %v4116
  %v4130 = vpop.f32.mrf.mxu0
  %v4131 = vadd.f32 %v489, %v4130
  %v4132 = vpop.f32.mrf.mxu0
  %4133 = vdwg.mxu0
  %v4135 = vsel %vm517, %v4012, 0
  %v4138 = vsel %vm517, %v4028, 0
  %4140 = vmatpush.bf16.xpose.msra.mxu0 0
  %4141 = vmatpush.bf16.xpose.msra.mxu0 0
  %4142 = vmatpush.bf16.xpose.msra.mxu0 0
  %4143 = vmatpush.bf16.xpose.msra.mxu0 0
  %4144 = vmatpush.bf16.xpose.msra.mxu0 0
  %4145 = vmatpush.bf16.xpose.msra.mxu0 0
  %4146 = vmatpush.bf16.xpose.msra.mxu0 0
  %4147 = vmatpush.bf16.xpose.msra.mxu0 %v4138
  %4148 = vmatmul.bf16.gmra.mxu0 %v4135
  %v4149 = vpop.f32.mrf.mxu0
  %v4150 = vadd.f32 %v490, %v4149
  %v4151 = vpop.f32.mrf.mxu0
  %4152 = vdwg.mxu0
  %v4154 = vsel %vm517, %v4013, 0
  %v4157 = vsel %vm517, %v4029, 0
  %4159 = vmatpush.bf16.xpose.msra.mxu0 0
  %4160 = vmatpush.bf16.xpose.msra.mxu0 0
  %4161 = vmatpush.bf16.xpose.msra.mxu0 0
  %4162 = vmatpush.bf16.xpose.msra.mxu0 0
  %4163 = vmatpush.bf16.xpose.msra.mxu0 0
  %4164 = vmatpush.bf16.xpose.msra.mxu0 0
  %4165 = vmatpush.bf16.xpose.msra.mxu0 0
  %4166 = vmatpush.bf16.xpose.msra.mxu0 %v4157
  %4167 = vmatmul.bf16.gmra.mxu0 %v4154
  %v4168 = vpop.f32.mrf.mxu0
  %v4169 = vadd.f32 %v491, %v4168
  %v4170 = vpop.f32.mrf.mxu0
  %4171 = vdwg.mxu0
  %v4173 = vsel %vm517, %v4014, 0
  %v4176 = vsel %vm517, %v4030, 0
  %4178 = vmatpush.bf16.xpose.msra.mxu0 0
  %4179 = vmatpush.bf16.xpose.msra.mxu0 0
  %4180 = vmatpush.bf16.xpose.msra.mxu0 0
  %4181 = vmatpush.bf16.xpose.msra.mxu0 0
  %4182 = vmatpush.bf16.xpose.msra.mxu0 0
  %4183 = vmatpush.bf16.xpose.msra.mxu0 0
  %4184 = vmatpush.bf16.xpose.msra.mxu0 0
  %4185 = vmatpush.bf16.xpose.msra.mxu0 %v4176
  %4186 = vmatmul.bf16.gmra.mxu0 %v4173
  %v4187 = vpop.f32.mrf.mxu0
  %v4188 = vadd.f32 %v492, %v4187
  %v4189 = vpop.f32.mrf.mxu0
  %4190 = vdwg.mxu0
  %v4192 = vsel %vm517, %v4015, 0
  %v4195 = vsel %vm517, %v4031, 0
  %4197 = vmatpush.bf16.xpose.msra.mxu0 0
  %4198 = vmatpush.bf16.xpose.msra.mxu0 0
  %4199 = vmatpush.bf16.xpose.msra.mxu0 0
  %4200 = vmatpush.bf16.xpose.msra.mxu0 0
  %4201 = vmatpush.bf16.xpose.msra.mxu0 0
  %4202 = vmatpush.bf16.xpose.msra.mxu0 0
  %4203 = vmatpush.bf16.xpose.msra.mxu0 0
  %4204 = vmatpush.bf16.xpose.msra.mxu0 %v4195
  %4205 = vmatmul.bf16.gmra.mxu0 %v4192
  %v4206 = vpop.f32.mrf.mxu0
  %v4207 = vadd.f32 %v493, %v4206
  %v4208 = vpop.f32.mrf.mxu0
  %4209 = vdwg.mxu0
  %v4211 = vsel %vm517, %v4016, 0
  %v4214 = vsel %vm517, %v4032, 0
  %4216 = vmatpush.bf16.xpose.msra.mxu0 0
  %4217 = vmatpush.bf16.xpose.msra.mxu0 0
  %4218 = vmatpush.bf16.xpose.msra.mxu0 0
  %4219 = vmatpush.bf16.xpose.msra.mxu0 0
  %4220 = vmatpush.bf16.xpose.msra.mxu0 0
  %4221 = vmatpush.bf16.xpose.msra.mxu0 0
  %4222 = vmatpush.bf16.xpose.msra.mxu0 0
  %4223 = vmatpush.bf16.xpose.msra.mxu0 %v4214
  %4224 = vmatmul.bf16.gmra.mxu0 %v4211
  %v4225 = vpop.f32.mrf.mxu0
  %v4226 = vadd.f32 %v494, %v4225
  %v4227 = vpop.f32.mrf.mxu0
  %4228 = vdwg.mxu0
  %v4230 = vsel %vm517, %v4017, 0
  %v4233 = vsel %vm517, %v4033, 0
  %4235 = vmatpush.bf16.xpose.msra.mxu0 0
  %4236 = vmatpush.bf16.xpose.msra.mxu0 0
  %4237 = vmatpush.bf16.xpose.msra.mxu0 0
  %4238 = vmatpush.bf16.xpose.msra.mxu0 0
  %4239 = vmatpush.bf16.xpose.msra.mxu0 0
  %4240 = vmatpush.bf16.xpose.msra.mxu0 0
  %4241 = vmatpush.bf16.xpose.msra.mxu0 0
  %4242 = vmatpush.bf16.xpose.msra.mxu0 %v4233
  %4243 = vmatmul.bf16.gmra.mxu0 %v4230
  %v4244 = vpop.f32.mrf.mxu0
  %v4245 = vadd.f32 %v495, %v4244
  %v4246 = vpop.f32.mrf.mxu0
  %4247 = vdwg.mxu0
  %v4249 = vsel %vm517, %v4018, 0
  %v4252 = vsel %vm517, %v4034, 0
  %4254 = vmatpush.bf16.xpose.msra.mxu0 0
  %4255 = vmatpush.bf16.xpose.msra.mxu0 0
  %4256 = vmatpush.bf16.xpose.msra.mxu0 0
  %4257 = vmatpush.bf16.xpose.msra.mxu0 0
  %4258 = vmatpush.bf16.xpose.msra.mxu0 0
  %4259 = vmatpush.bf16.xpose.msra.mxu0 0
  %4260 = vmatpush.bf16.xpose.msra.mxu0 0
  %4261 = vmatpush.bf16.xpose.msra.mxu0 %v4252
  %4262 = vmatmul.bf16.gmra.mxu0 %v4249
  %v4263 = vpop.f32.mrf.mxu0
  %v4264 = vadd.f32 %v496, %v4263
  %v4265 = vpop.f32.mrf.mxu0
  %4266 = vdwg.mxu0
  %v4268 = vsel %vm517, %v4019, 0
  %v4271 = vsel %vm517, %v4035, 0
  %4273 = vmatpush.bf16.xpose.msra.mxu0 0
  %4274 = vmatpush.bf16.xpose.msra.mxu0 0
  %4275 = vmatpush.bf16.xpose.msra.mxu0 0
  %4276 = vmatpush.bf16.xpose.msra.mxu0 0
  %4277 = vmatpush.bf16.xpose.msra.mxu0 0
  %4278 = vmatpush.bf16.xpose.msra.mxu0 0
  %4279 = vmatpush.bf16.xpose.msra.mxu0 0
  %4280 = vmatpush.bf16.xpose.msra.mxu0 %v4271
  %4281 = vmatmul.bf16.gmra.mxu0 %v4268
  %v4282 = vpop.f32.mrf.mxu0
  %v4283 = vadd.f32 %v497, %v4282
  %v4284 = vpop.f32.mrf.mxu0
  %4285 = vdwg.mxu0
  %v4287 = vsel %vm517, %v4020, 0
  %v4290 = vsel %vm517, %v4036, 0
  %4292 = vmatpush.bf16.xpose.msra.mxu0 0
  %4293 = vmatpush.bf16.xpose.msra.mxu0 0
  %4294 = vmatpush.bf16.xpose.msra.mxu0 0
  %4295 = vmatpush.bf16.xpose.msra.mxu0 0
  %4296 = vmatpush.bf16.xpose.msra.mxu0 0
  %4297 = vmatpush.bf16.xpose.msra.mxu0 0
  %4298 = vmatpush.bf16.xpose.msra.mxu0 0
  %4299 = vmatpush.bf16.xpose.msra.mxu0 %v4290
  %4300 = vmatmul.bf16.gmra.mxu0 %v4287
  %v4301 = vpop.f32.mrf.mxu0
  %v4302 = vadd.f32 %v498, %v4301
  %v4303 = vpop.f32.mrf.mxu0
  %4304 = vdwg.mxu0
  %v4306 = vsel %vm517, %v4021, 0
  %v4309 = vsel %vm517, %v4037, 0
  %4311 = vmatpush.bf16.xpose.msra.mxu0 0
  %4312 = vmatpush.bf16.xpose.msra.mxu0 0
  %4313 = vmatpush.bf16.xpose.msra.mxu0 0
  %4314 = vmatpush.bf16.xpose.msra.mxu0 0
  %4315 = vmatpush.bf16.xpose.msra.mxu0 0
  %4316 = vmatpush.bf16.xpose.msra.mxu0 0
  %4317 = vmatpush.bf16.xpose.msra.mxu0 0
  %4318 = vmatpush.bf16.xpose.msra.mxu0 %v4309
  %4319 = vmatmul.bf16.gmra.mxu0 %v4306
  %v4320 = vpop.f32.mrf.mxu0
  %v4321 = vadd.f32 %v499, %v4320
  %v4322 = vpop.f32.mrf.mxu0
  %4323 = vdwg.mxu0
  %v4325 = vsel %vm517, %v4022, 0
  %v4328 = vsel %vm517, %v4038, 0
  %4330 = vmatpush.bf16.xpose.msra.mxu0 0
  %4331 = vmatpush.bf16.xpose.msra.mxu0 0
  %4332 = vmatpush.bf16.xpose.msra.mxu0 0
  %4333 = vmatpush.bf16.xpose.msra.mxu0 0
  %4334 = vmatpush.bf16.xpose.msra.mxu0 0
  %4335 = vmatpush.bf16.xpose.msra.mxu0 0
  %4336 = vmatpush.bf16.xpose.msra.mxu0 0
  %4337 = vmatpush.bf16.xpose.msra.mxu0 %v4328
  %4338 = vmatmul.bf16.gmra.mxu0 %v4325
  %v4339 = vpop.f32.mrf.mxu0
  %v4340 = vadd.f32 %v500, %v4339
  %v4341 = vpop.f32.mrf.mxu0
  %4342 = vdwg.mxu0
  %v4343 = vsel %vm822, %v4055, -inf
  %4344 = vmax.xlane.f32.xlu0 %v4343
  %v4345 = vpop.xlane.xlu0 %4344
  %v4346 = vsel %vm822, %v4074, -inf
  %4347 = vmax.xlane.f32.xlu0 %v4346
  %v4348 = vpop.xlane.xlu0 %4347
  %v4349 = vsel %vm822, %v4093, -inf
  %4350 = vmax.xlane.f32.xlu0 %v4349
  %v4351 = vpop.xlane.xlu0 %4350
  %v4352 = vsel %vm822, %v4112, -inf
  %4353 = vmax.xlane.f32.xlu0 %v4352
  %v4354 = vpop.xlane.xlu0 %4353
  %v4355 = vsel %vm822, %v4131, -inf
  %4356 = vmax.xlane.f32.xlu0 %v4355
  %v4357 = vpop.xlane.xlu0 %4356
  %v4358 = vsel %vm822, %v4150, -inf
  %4359 = vmax.xlane.f32.xlu0 %v4358
  %v4360 = vpop.xlane.xlu0 %4359
  %v4361 = vsel %vm822, %v4169, -inf
  %4362 = vmax.xlane.f32.xlu0 %v4361
  %v4363 = vpop.xlane.xlu0 %4362
  %v4364 = vsel %vm822, %v4188, -inf
  %4365 = vmax.xlane.f32.xlu0 %v4364
  %v4366 = vpop.xlane.xlu0 %4365
  %v4367 = vsel %vm822, %v4207, -inf
  %4368 = vmax.xlane.f32.xlu0 %v4367
  %v4369 = vpop.xlane.xlu0 %4368
  %v4370 = vsel %vm822, %v4226, -inf
  %4371 = vmax.xlane.f32.xlu0 %v4370
  %v4372 = vpop.xlane.xlu0 %4371
  %v4373 = vsel %vm822, %v4245, -inf
  %4374 = vmax.xlane.f32.xlu0 %v4373
  %v4375 = vpop.xlane.xlu0 %4374
  %v4376 = vsel %vm822, %v4264, -inf
  %4377 = vmax.xlane.f32.xlu0 %v4376
  %v4378 = vpop.xlane.xlu0 %4377
  %v4379 = vsel %vm822, %v4283, -inf
  %4380 = vmax.xlane.f32.xlu0 %v4379
  %v4381 = vpop.xlane.xlu0 %4380
  %v4382 = vsel %vm822, %v4302, -inf
  %4383 = vmax.xlane.f32.xlu0 %v4382
  %v4384 = vpop.xlane.xlu0 %4383
  %v4385 = vsel %vm822, %v4321, -inf
  %4386 = vmax.xlane.f32.xlu0 %v4385
  %v4387 = vpop.xlane.xlu0 %4386
  %v4388 = vsel %vm822, %v4340, -inf
  %4389 = vmax.xlane.f32.xlu0 %v4388
  %v4390 = vpop.xlane.xlu0 %4389
  %v4391 = vsub.f32 %v4055, %v4345
  %v4392 = vsub.f32 %v4074, %v4348
  %v4393 = vsub.f32 %v4093, %v4351
  %v4394 = vsub.f32 %v4112, %v4354
  %v4395 = vsub.f32 %v4131, %v4357
  %v4396 = vsub.f32 %v4150, %v4360
  %v4397 = vsub.f32 %v4169, %v4363
  %v4398 = vsub.f32 %v4188, %v4366
  %v4399 = vsub.f32 %v4207, %v4369
  %v4400 = vsub.f32 %v4226, %v4372
  %v4401 = vsub.f32 %v4245, %v4375
  %v4402 = vsub.f32 %v4264, %v4378
  %v4403 = vsub.f32 %v4283, %v4381
  %v4404 = vsub.f32 %v4302, %v4384
  %v4405 = vsub.f32 %v4321, %v4387
  %v4406 = vsub.f32 %v4340, %v4390
  %v4407 = vmul.f32 %v4391, 1.442695
  %v4408 = vpow.pop %v4407
  %v4409 = vmul.f32 %v4392, 1.442695
  %v4410 = vpow.pop %v4409
  %v4411 = vmul.f32 %v4393, 1.442695
  %v4412 = vpow.pop %v4411
  %v4413 = vmul.f32 %v4394, 1.442695
  %v4414 = vpow.pop %v4413
  %v4415 = vmul.f32 %v4395, 1.442695
  %v4416 = vpow.pop %v4415
  %v4417 = vmul.f32 %v4396, 1.442695
  %v4418 = vpow.pop %v4417
  %v4419 = vmul.f32 %v4397, 1.442695
  %v4420 = vpow.pop %v4419
  %v4421 = vmul.f32 %v4398, 1.442695
  %v4422 = vpow.pop %v4421
  %v4423 = vmul.f32 %v4399, 1.442695
  %v4424 = vpow.pop %v4423
  %v4425 = vmul.f32 %v4400, 1.442695
  %v4426 = vpow.pop %v4425
  %v4427 = vmul.f32 %v4401, 1.442695
  %v4428 = vpow.pop %v4427
  %v4429 = vmul.f32 %v4402, 1.442695
  %v4430 = vpow.pop %v4429
  %v4431 = vmul.f32 %v4403, 1.442695
  %v4432 = vpow.pop %v4431
  %v4433 = vmul.f32 %v4404, 1.442695
  %v4434 = vpow.pop %v4433
  %v4435 = vmul.f32 %v4405, 1.442695
  %v4436 = vpow.pop %v4435
  %v4437 = vmul.f32 %v4406, 1.442695
  %v4438 = vpow.pop %v4437
  %v4439 = vsel %vm822, %v4408, 0.0
  %4440 = vadd.xlane.f32.xlu0 %v4439
  %v4441 = vpop.xlane.xlu0 %4440
  %v4442 = vsel %vm822, %v4410, 0.0
  %4443 = vadd.xlane.f32.xlu0 %v4442
  %v4444 = vpop.xlane.xlu0 %4443
  %v4445 = vsel %vm822, %v4412, 0.0
  %4446 = vadd.xlane.f32.xlu0 %v4445
  %v4447 = vpop.xlane.xlu0 %4446
  %v4448 = vsel %vm822, %v4414, 0.0
  %4449 = vadd.xlane.f32.xlu0 %v4448
  %v4450 = vpop.xlane.xlu0 %4449
  %v4451 = vsel %vm822, %v4416, 0.0
  %4452 = vadd.xlane.f32.xlu0 %v4451
  %v4453 = vpop.xlane.xlu0 %4452
  %v4454 = vsel %vm822, %v4418, 0.0
  %4455 = vadd.xlane.f32.xlu0 %v4454
  %v4456 = vpop.xlane.xlu0 %4455
  %v4457 = vsel %vm822, %v4420, 0.0
  %4458 = vadd.xlane.f32.xlu0 %v4457
  %v4459 = vpop.xlane.xlu0 %4458
  %v4460 = vsel %vm822, %v4422, 0.0
  %4461 = vadd.xlane.f32.xlu0 %v4460
  %v4462 = vpop.xlane.xlu0 %4461
  %v4463 = vsel %vm822, %v4424, 0.0
  %4464 = vadd.xlane.f32.xlu0 %v4463
  %v4465 = vpop.xlane.xlu0 %4464
  %v4466 = vsel %vm822, %v4426, 0.0
  %4467 = vadd.xlane.f32.xlu0 %v4466
  %v4468 = vpop.xlane.xlu0 %4467
  %v4469 = vsel %vm822, %v4428, 0.0
  %4470 = vadd.xlane.f32.xlu0 %v4469
  %v4471 = vpop.xlane.xlu0 %4470
  %v4472 = vsel %vm822, %v4430, 0.0
  %4473 = vadd.xlane.f32.xlu0 %v4472
  %v4474 = vpop.xlane.xlu0 %4473
  %v4475 = vsel %vm822, %v4432, 0.0
  %4476 = vadd.xlane.f32.xlu0 %v4475
  %v4477 = vpop.xlane.xlu0 %4476
  %v4478 = vsel %vm822, %v4434, 0.0
  %4479 = vadd.xlane.f32.xlu0 %v4478
  %v4480 = vpop.xlane.xlu0 %4479
  %v4481 = vsel %vm822, %v4436, 0.0
  %4482 = vadd.xlane.f32.xlu0 %v4481
  %v4483 = vpop.xlane.xlu0 %4482
  %v4484 = vsel %vm822, %v4438, 0.0
  %4485 = vadd.xlane.f32.xlu0 %v4484
  %v4486 = vpop.xlane.xlu0 %4485
  %v4487 = vrcp.pop %v4441
  %v4488 = vrcp.pop %v4444
  %v4489 = vrcp.pop %v4447
  %v4490 = vrcp.pop %v4450
  %v4491 = vrcp.pop %v4453
  %v4492 = vrcp.pop %v4456
  %v4493 = vrcp.pop %v4459
  %v4494 = vrcp.pop %v4462
  %v4495 = vrcp.pop %v4465
  %v4496 = vrcp.pop %v4468
  %v4497 = vrcp.pop %v4471
  %v4498 = vrcp.pop %v4474
  %v4499 = vrcp.pop %v4477
  %v4500 = vrcp.pop %v4480
  %v4501 = vrcp.pop %v4483
  %v4502 = vrcp.pop %v4486
  %v4503 = vmul.f32 %v4408, %v4487
  %v4504 = vmul.f32 %v4410, %v4488
  %v4505 = vmul.f32 %v4412, %v4489
  %v4506 = vmul.f32 %v4414, %v4490
  %v4507 = vmul.f32 %v4416, %v4491
  %v4508 = vmul.f32 %v4418, %v4492
  %v4509 = vmul.f32 %v4420, %v4493
  %v4510 = vmul.f32 %v4422, %v4494
  %v4511 = vmul.f32 %v4424, %v4495
  %v4512 = vmul.f32 %v4426, %v4496
  %v4513 = vmul.f32 %v4428, %v4497
  %v4514 = vmul.f32 %v4430, %v4498
  %v4515 = vmul.f32 %v4432, %v4499
  %v4516 = vmul.f32 %v4434, %v4500
  %v4517 = vmul.f32 %v4436, %v4501
  %v4518 = vmul.f32 %v4438, %v4502
  %v4519 = vpack.c.bf16 %v4503, %v4503
  %v4520 = vpack.c.bf16 %v4504, %v4504
  %v4521 = vpack.c.bf16 %v4505, %v4505
  %v4522 = vpack.c.bf16 %v4506, %v4506
  %v4523 = vpack.c.bf16 %v4507, %v4507
  %v4524 = vpack.c.bf16 %v4508, %v4508
  %v4525 = vpack.c.bf16 %v4509, %v4509
  %v4526 = vpack.c.bf16 %v4510, %v4510
  %v4527 = vpack.c.bf16 %v4511, %v4511
  %v4528 = vpack.c.bf16 %v4512, %v4512
  %v4529 = vpack.c.bf16 %v4513, %v4513
  %v4530 = vpack.c.bf16 %v4514, %v4514
  %v4531 = vpack.c.bf16 %v4515, %v4515
  %v4532 = vpack.c.bf16 %v4516, %v4516
  %v4533 = vpack.c.bf16 %v4517, %v4517
  %v4534 = vpack.c.bf16 %v4518, %v4518
  %v4535 = vpack.c.bf16 %v3952, %v3952
  %v4536 = vpack.c.bf16 %v3954, %v3954
  %v4537 = vpack.c.bf16 %v3957, %v3957
  %v4538 = vpack.c.bf16 %v3959, %v3959
  %v4539 = vpack.c.bf16 %v3962, %v3962
  %v4540 = vpack.c.bf16 %v3964, %v3964
  %v4541 = vpack.c.bf16 %v3967, %v3967
  %v4542 = vpack.c.bf16 %v3969, %v3969
  %v4543 = vpack.c.bf16 %v3972, %v3972
  %v4544 = vpack.c.bf16 %v3974, %v3974
  %v4545 = vpack.c.bf16 %v3977, %v3977
  %v4546 = vpack.c.bf16 %v3979, %v3979
  %v4547 = vpack.c.bf16 %v3982, %v3982
  %v4548 = vpack.c.bf16 %v3984, %v3984
  %v4549 = vpack.c.bf16 %v3987, %v3987
  %v4550 = vpack.c.bf16 %v3989, %v3989
  %v4552 = vsel %vm822, %v4519, 0
  %v4555 = vsel %vm1034, %v4535, 0
  %4557 = vmatpush.bf16.msra.mxu0 0
  %4558 = vmatpush.bf16.msra.mxu0 0
  %4559 = vmatpush.bf16.msra.mxu0 0
  %4560 = vmatpush.bf16.msra.mxu0 0
  %4561 = vmatpush.bf16.msra.mxu0 0
  %4562 = vmatpush.bf16.msra.mxu0 0
  %4563 = vmatpush.bf16.msra.mxu0 0
  %4564 = vmatpush.bf16.msra.mxu0 %v4555
  %4565 = vmatmul.bf16.gmra.mxu0 %v4552
  %v4566 = vpop.f32.mrf.mxu0
  %v4567 = vadd.f32 0.0, %v4566
  %v4568 = vpop.f32.mrf.mxu0
  %4569 = vdwg.mxu0
  %v4571 = vsel %vm822, %v4520, 0
  %v4574 = vsel %vm1034, %v4536, 0
  %4576 = vmatpush.bf16.msra.mxu0 0
  %4577 = vmatpush.bf16.msra.mxu0 0
  %4578 = vmatpush.bf16.msra.mxu0 0
  %4579 = vmatpush.bf16.msra.mxu0 0
  %4580 = vmatpush.bf16.msra.mxu0 0
  %4581 = vmatpush.bf16.msra.mxu0 0
  %4582 = vmatpush.bf16.msra.mxu0 0
  %4583 = vmatpush.bf16.msra.mxu0 %v4574
  %4584 = vmatmul.bf16.gmra.mxu0 %v4571
  %v4585 = vpop.f32.mrf.mxu0
  %v4586 = vadd.f32 0.0, %v4585
  %v4587 = vpop.f32.mrf.mxu0
  %4588 = vdwg.mxu0
  %v4590 = vsel %vm822, %v4521, 0
  %v4593 = vsel %vm1034, %v4537, 0
  %4595 = vmatpush.bf16.msra.mxu0 0
  %4596 = vmatpush.bf16.msra.mxu0 0
  %4597 = vmatpush.bf16.msra.mxu0 0
  %4598 = vmatpush.bf16.msra.mxu0 0
  %4599 = vmatpush.bf16.msra.mxu0 0
  %4600 = vmatpush.bf16.msra.mxu0 0
  %4601 = vmatpush.bf16.msra.mxu0 0
  %4602 = vmatpush.bf16.msra.mxu0 %v4593
  %4603 = vmatmul.bf16.gmra.mxu0 %v4590
  %v4604 = vpop.f32.mrf.mxu0
  %v4605 = vadd.f32 0.0, %v4604
  %v4606 = vpop.f32.mrf.mxu0
  %4607 = vdwg.mxu0
  %v4609 = vsel %vm822, %v4522, 0
  %v4612 = vsel %vm1034, %v4538, 0
  %4614 = vmatpush.bf16.msra.mxu0 0
  %4615 = vmatpush.bf16.msra.mxu0 0
  %4616 = vmatpush.bf16.msra.mxu0 0
  %4617 = vmatpush.bf16.msra.mxu0 0
  %4618 = vmatpush.bf16.msra.mxu0 0
  %4619 = vmatpush.bf16.msra.mxu0 0
  %4620 = vmatpush.bf16.msra.mxu0 0
  %4621 = vmatpush.bf16.msra.mxu0 %v4612
  %4622 = vmatmul.bf16.gmra.mxu0 %v4609
  %v4623 = vpop.f32.mrf.mxu0
  %v4624 = vadd.f32 0.0, %v4623
  %v4625 = vpop.f32.mrf.mxu0
  %4626 = vdwg.mxu0
  %v4628 = vsel %vm822, %v4523, 0
  %v4631 = vsel %vm1034, %v4539, 0
  %4633 = vmatpush.bf16.msra.mxu0 0
  %4634 = vmatpush.bf16.msra.mxu0 0
  %4635 = vmatpush.bf16.msra.mxu0 0
  %4636 = vmatpush.bf16.msra.mxu0 0
  %4637 = vmatpush.bf16.msra.mxu0 0
  %4638 = vmatpush.bf16.msra.mxu0 0
  %4639 = vmatpush.bf16.msra.mxu0 0
  %4640 = vmatpush.bf16.msra.mxu0 %v4631
  %4641 = vmatmul.bf16.gmra.mxu0 %v4628
  %v4642 = vpop.f32.mrf.mxu0
  %v4643 = vadd.f32 0.0, %v4642
  %v4644 = vpop.f32.mrf.mxu0
  %4645 = vdwg.mxu0
  %v4647 = vsel %vm822, %v4524, 0
  %v4650 = vsel %vm1034, %v4540, 0
  %4652 = vmatpush.bf16.msra.mxu0 0
  %4653 = vmatpush.bf16.msra.mxu0 0
  %4654 = vmatpush.bf16.msra.mxu0 0
  %4655 = vmatpush.bf16.msra.mxu0 0
  %4656 = vmatpush.bf16.msra.mxu0 0
  %4657 = vmatpush.bf16.msra.mxu0 0
  %4658 = vmatpush.bf16.msra.mxu0 0
  %4659 = vmatpush.bf16.msra.mxu0 %v4650
  %4660 = vmatmul.bf16.gmra.mxu0 %v4647
  %v4661 = vpop.f32.mrf.mxu0
  %v4662 = vadd.f32 0.0, %v4661
  %v4663 = vpop.f32.mrf.mxu0
  %4664 = vdwg.mxu0
  %v4666 = vsel %vm822, %v4525, 0
  %v4669 = vsel %vm1034, %v4541, 0
  %4671 = vmatpush.bf16.msra.mxu0 0
  %4672 = vmatpush.bf16.msra.mxu0 0
  %4673 = vmatpush.bf16.msra.mxu0 0
  %4674 = vmatpush.bf16.msra.mxu0 0
  %4675 = vmatpush.bf16.msra.mxu0 0
  %4676 = vmatpush.bf16.msra.mxu0 0
  %4677 = vmatpush.bf16.msra.mxu0 0
  %4678 = vmatpush.bf16.msra.mxu0 %v4669
  %4679 = vmatmul.bf16.gmra.mxu0 %v4666
  %v4680 = vpop.f32.mrf.mxu0
  %v4681 = vadd.f32 0.0, %v4680
  %v4682 = vpop.f32.mrf.mxu0
  %4683 = vdwg.mxu0
  %v4685 = vsel %vm822, %v4526, 0
  %v4688 = vsel %vm1034, %v4542, 0
  %4690 = vmatpush.bf16.msra.mxu0 0
  %4691 = vmatpush.bf16.msra.mxu0 0
  %4692 = vmatpush.bf16.msra.mxu0 0
  %4693 = vmatpush.bf16.msra.mxu0 0
  %4694 = vmatpush.bf16.msra.mxu0 0
  %4695 = vmatpush.bf16.msra.mxu0 0
  %4696 = vmatpush.bf16.msra.mxu0 0
  %4697 = vmatpush.bf16.msra.mxu0 %v4688
  %4698 = vmatmul.bf16.gmra.mxu0 %v4685
  %v4699 = vpop.f32.mrf.mxu0
  %v4700 = vadd.f32 0.0, %v4699
  %v4701 = vpop.f32.mrf.mxu0
  %4702 = vdwg.mxu0
  %v4704 = vsel %vm822, %v4527, 0
  %v4707 = vsel %vm1034, %v4543, 0
  %4709 = vmatpush.bf16.msra.mxu0 0
  %4710 = vmatpush.bf16.msra.mxu0 0
  %4711 = vmatpush.bf16.msra.mxu0 0
  %4712 = vmatpush.bf16.msra.mxu0 0
  %4713 = vmatpush.bf16.msra.mxu0 0
  %4714 = vmatpush.bf16.msra.mxu0 0
  %4715 = vmatpush.bf16.msra.mxu0 0
  %4716 = vmatpush.bf16.msra.mxu0 %v4707
  %4717 = vmatmul.bf16.gmra.mxu0 %v4704
  %v4718 = vpop.f32.mrf.mxu0
  %v4719 = vadd.f32 0.0, %v4718
  %v4720 = vpop.f32.mrf.mxu0
  %4721 = vdwg.mxu0
  %v4723 = vsel %vm822, %v4528, 0
  %v4726 = vsel %vm1034, %v4544, 0
  %4728 = vmatpush.bf16.msra.mxu0 0
  %4729 = vmatpush.bf16.msra.mxu0 0
  %4730 = vmatpush.bf16.msra.mxu0 0
  %4731 = vmatpush.bf16.msra.mxu0 0
  %4732 = vmatpush.bf16.msra.mxu0 0
  %4733 = vmatpush.bf16.msra.mxu0 0
  %4734 = vmatpush.bf16.msra.mxu0 0
  %4735 = vmatpush.bf16.msra.mxu0 %v4726
  %4736 = vmatmul.bf16.gmra.mxu0 %v4723
  %v4737 = vpop.f32.mrf.mxu0
  %v4738 = vadd.f32 0.0, %v4737
  %v4739 = vpop.f32.mrf.mxu0
  %4740 = vdwg.mxu0
  %v4742 = vsel %vm822, %v4529, 0
  %v4745 = vsel %vm1034, %v4545, 0
  %4747 = vmatpush.bf16.msra.mxu0 0
  %4748 = vmatpush.bf16.msra.mxu0 0
  %4749 = vmatpush.bf16.msra.mxu0 0
  %4750 = vmatpush.bf16.msra.mxu0 0
  %4751 = vmatpush.bf16.msra.mxu0 0
  %4752 = vmatpush.bf16.msra.mxu0 0
  %4753 = vmatpush.bf16.msra.mxu0 0
  %4754 = vmatpush.bf16.msra.mxu0 %v4745
  %4755 = vmatmul.bf16.gmra.mxu0 %v4742
  %v4756 = vpop.f32.mrf.mxu0
  %v4757 = vadd.f32 0.0, %v4756
  %v4758 = vpop.f32.mrf.mxu0
  %4759 = vdwg.mxu0
  %v4761 = vsel %vm822, %v4530, 0
  %v4764 = vsel %vm1034, %v4546, 0
  %4766 = vmatpush.bf16.msra.mxu0 0
  %4767 = vmatpush.bf16.msra.mxu0 0
  %4768 = vmatpush.bf16.msra.mxu0 0
  %4769 = vmatpush.bf16.msra.mxu0 0
  %4770 = vmatpush.bf16.msra.mxu0 0
  %4771 = vmatpush.bf16.msra.mxu0 0
  %4772 = vmatpush.bf16.msra.mxu0 0
  %4773 = vmatpush.bf16.msra.mxu0 %v4764
  %4774 = vmatmul.bf16.gmra.mxu0 %v4761
  %v4775 = vpop.f32.mrf.mxu0
  %v4776 = vadd.f32 0.0, %v4775
  %v4777 = vpop.f32.mrf.mxu0
  %4778 = vdwg.mxu0
  %v4780 = vsel %vm822, %v4531, 0
  %v4783 = vsel %vm1034, %v4547, 0
  %4785 = vmatpush.bf16.msra.mxu0 0
  %4786 = vmatpush.bf16.msra.mxu0 0
  %4787 = vmatpush.bf16.msra.mxu0 0
  %4788 = vmatpush.bf16.msra.mxu0 0
  %4789 = vmatpush.bf16.msra.mxu0 0
  %4790 = vmatpush.bf16.msra.mxu0 0
  %4791 = vmatpush.bf16.msra.mxu0 0
  %4792 = vmatpush.bf16.msra.mxu0 %v4783
  %4793 = vmatmul.bf16.gmra.mxu0 %v4780
  %v4794 = vpop.f32.mrf.mxu0
  %v4795 = vadd.f32 0.0, %v4794
  %v4796 = vpop.f32.mrf.mxu0
  %4797 = vdwg.mxu0
  %v4799 = vsel %vm822, %v4532, 0
  %v4802 = vsel %vm1034, %v4548, 0
  %4804 = vmatpush.bf16.msra.mxu0 0
  %4805 = vmatpush.bf16.msra.mxu0 0
  %4806 = vmatpush.bf16.msra.mxu0 0
  %4807 = vmatpush.bf16.msra.mxu0 0
  %4808 = vmatpush.bf16.msra.mxu0 0
  %4809 = vmatpush.bf16.msra.mxu0 0
  %4810 = vmatpush.bf16.msra.mxu0 0
  %4811 = vmatpush.bf16.msra.mxu0 %v4802
  %4812 = vmatmul.bf16.gmra.mxu0 %v4799
  %v4813 = vpop.f32.mrf.mxu0
  %v4814 = vadd.f32 0.0, %v4813
  %v4815 = vpop.f32.mrf.mxu0
  %4816 = vdwg.mxu0
  %v4818 = vsel %vm822, %v4533, 0
  %v4821 = vsel %vm1034, %v4549, 0
  %4823 = vmatpush.bf16.msra.mxu0 0
  %4824 = vmatpush.bf16.msra.mxu0 0
  %4825 = vmatpush.bf16.msra.mxu0 0
  %4826 = vmatpush.bf16.msra.mxu0 0
  %4827 = vmatpush.bf16.msra.mxu0 0
  %4828 = vmatpush.bf16.msra.mxu0 0
  %4829 = vmatpush.bf16.msra.mxu0 0
  %4830 = vmatpush.bf16.msra.mxu0 %v4821
  %4831 = vmatmul.bf16.gmra.mxu0 %v4818
  %v4832 = vpop.f32.mrf.mxu0
  %v4833 = vadd.f32 0.0, %v4832
  %v4834 = vpop.f32.mrf.mxu0
  %4835 = vdwg.mxu0
  %v4837 = vsel %vm822, %v4534, 0
  %v4840 = vsel %vm1034, %v4550, 0
  %4842 = vmatpush.bf16.msra.mxu0 0
  %4843 = vmatpush.bf16.msra.mxu0 0
  %4844 = vmatpush.bf16.msra.mxu0 0
  %4845 = vmatpush.bf16.msra.mxu0 0
  %4846 = vmatpush.bf16.msra.mxu0 0
  %4847 = vmatpush.bf16.msra.mxu0 0
  %4848 = vmatpush.bf16.msra.mxu0 0
  %4849 = vmatpush.bf16.msra.mxu0 %v4840
  %4850 = vmatmul.bf16.gmra.mxu0 %v4837
  %v4851 = vpop.f32.mrf.mxu0
  %v4852 = vadd.f32 0.0, %v4851
  %v4853 = vpop.f32.mrf.mxu0
  %4854 = vdwg.mxu0
  %v4855 = vpack.c.bf16 %v4586, %v4567
  %v4856 = vpack.c.bf16 %v4624, %v4605
  %v4857 = vpack.c.bf16 %v4662, %v4643
  %v4858 = vpack.c.bf16 %v4700, %v4681
  %v4859 = vpack.c.bf16 %v4738, %v4719
  %v4860 = vpack.c.bf16 %v4776, %v4757
  %v4861 = vpack.c.bf16 %v4814, %v4795
  %v4862 = vpack.c.bf16 %v4852, %v4833
  %v4865 = vunpack.c.l.b16 %v3747
  %v4866 = vunpack.c.l.b16 %v3748
  %v4867 = vpack.c.b16 %v4866, %v4865
  %v4870 = vsel %vm517, %v4855, 0
  %v4873 = vsel %vm517, %v4856, 0
  %v4876 = vsel %vm517, %v4857, 0
  %v4879 = vsel %vm517, %v4858, 0
  %v4882 = vsel %vm517, %v4859, 0
  %v4885 = vsel %vm517, %v4860, 0
  %v4888 = vsel %vm517, %v4861, 0
  %v4891 = vsel %vm517, %v4862, 0
  %4893 = vmatpush.bf16.msra.mxu0 0
  %4894 = vmatpush.bf16.msra.mxu0 0
  %4895 = vmatpush.bf16.msra.mxu0 0
  %4896 = vmatpush.bf16.msra.mxu0 0
  %4897 = vmatpush.bf16.msra.mxu0 0
  %4898 = vmatpush.bf16.msra.mxu0 0
  %4899 = vmatpush.bf16.msra.mxu0 0
  %4900 = vmatpush.bf16.msra.mxu0 %v4867
  %4901 = vmatmul.bf16.gmra.mxu0 %v4870
  %v4902 = vpop.f32.mrf.mxu0
  %v4903 = vadd.f32 0.0, %v4902
  %v4904 = vpop.f32.mrf.mxu0
  %v4905 = vadd.f32 0.0, %v4904
  %4906 = vmatmul.bf16.gmra.mxu0 %v4873
  %v4907 = vpop.f32.mrf.mxu0
  %v4908 = vadd.f32 0.0, %v4907
  %v4909 = vpop.f32.mrf.mxu0
  %v4910 = vadd.f32 0.0, %v4909
  %4911 = vmatmul.bf16.gmra.mxu0 %v4876
  %v4912 = vpop.f32.mrf.mxu0
  %v4913 = vadd.f32 0.0, %v4912
  %v4914 = vpop.f32.mrf.mxu0
  %v4915 = vadd.f32 0.0, %v4914
  %4916 = vmatmul.bf16.gmra.mxu0 %v4879
  %v4917 = vpop.f32.mrf.mxu0
  %v4918 = vadd.f32 0.0, %v4917
  %v4919 = vpop.f32.mrf.mxu0
  %v4920 = vadd.f32 0.0, %v4919
  %4921 = vmatmul.bf16.gmra.mxu0 %v4882
  %v4922 = vpop.f32.mrf.mxu0
  %v4923 = vadd.f32 0.0, %v4922
  %v4924 = vpop.f32.mrf.mxu0
  %v4925 = vadd.f32 0.0, %v4924
  %4926 = vmatmul.bf16.gmra.mxu0 %v4885
  %v4927 = vpop.f32.mrf.mxu0
  %v4928 = vadd.f32 0.0, %v4927
  %v4929 = vpop.f32.mrf.mxu0
  %v4930 = vadd.f32 0.0, %v4929
  %4931 = vmatmul.bf16.gmra.mxu0 %v4888
  %v4932 = vpop.f32.mrf.mxu0
  %v4933 = vadd.f32 0.0, %v4932
  %v4934 = vpop.f32.mrf.mxu0
  %v4935 = vadd.f32 0.0, %v4934
  %4936 = vmatmul.bf16.gmra.mxu0 %v4891
  %v4937 = vpop.f32.mrf.mxu0
  %v4938 = vadd.f32 0.0, %v4937
  %v4939 = vpop.f32.mrf.mxu0
  %v4940 = vadd.f32 0.0, %v4939
  %4941 = vdwg.mxu0
  %v4942 = vperm.slane %v3772, 0
  %v4943 = vadd.f32 %v4942, %v4903
  %v4944 = vadd.f32 %v4942, %v4905
  %v4945 = vadd.f32 %v4942, %v4908
  %v4946 = vadd.f32 %v4942, %v4910
  %v4947 = vadd.f32 %v4942, %v4913
  %v4948 = vadd.f32 %v4942, %v4915
  %v4949 = vadd.f32 %v4942, %v4918
  %v4950 = vadd.f32 %v4942, %v4920
  %v4951 = vadd.f32 %v4942, %v4923
  %v4952 = vadd.f32 %v4942, %v4925
  %v4953 = vadd.f32 %v4942, %v4928
  %v4954 = vadd.f32 %v4942, %v4930
  %v4955 = vadd.f32 %v4942, %v4933
  %v4956 = vadd.f32 %v4942, %v4935
  %v4957 = vadd.f32 %v4942, %v4938
  %v4958 = vadd.f32 %v4942, %v4940
  %v4959 = vperm.slane %v3752, 1
  %v4964 = vunpack.c.l.b16 %v3724
  %v4965 = vunpack.c.l.b16 %v3725
  %v4966 = vunpack.c.l.b16 %v3726
  %v4967 = vunpack.c.l.b16 %v3727
  %v4968 = vpack.c.b16 %v4965, %v4964
  %v4969 = vpack.c.b16 %v4967, %v4966
  %4972 = vmatpush.bf16.msra.mxu0 0
  %4973 = vmatpush.bf16.msra.mxu0 0
  %4974 = vmatpush.bf16.msra.mxu0 0
  %4975 = vmatpush.bf16.msra.mxu0 0
  %4976 = vmatpush.bf16.msra.mxu0 0
  %4977 = vmatpush.bf16.msra.mxu0 0
  %4978 = vmatpush.bf16.msra.mxu0 %v4969
  %4979 = vmatpush.bf16.msra.mxu0 %v4968
  %4980 = vmatmul.bf16.gmra.mxu0 %v3795
  %v4981 = vpop.f32.mrf.mxu0
  %v4982 = vadd.f32 %v4959, %v4981
  %v4983 = vpop.f32.mrf.mxu0
  %v4984 = vadd.f32 %v4959, %v4983
  %4985 = vmatmul.bf16.gmra.mxu0 %v3798
  %v4986 = vpop.f32.mrf.mxu0
  %v4987 = vadd.f32 %v4959, %v4986
  %v4988 = vpop.f32.mrf.mxu0
  %v4989 = vadd.f32 %v4959, %v4988
  %4990 = vmatmul.bf16.gmra.mxu0 %v3801
  %v4991 = vpop.f32.mrf.mxu0
  %v4992 = vadd.f32 %v4959, %v4991
  %v4993 = vpop.f32.mrf.mxu0
  %v4994 = vadd.f32 %v4959, %v4993
  %4995 = vmatmul.bf16.gmra.mxu0 %v3804
  %v4996 = vpop.f32.mrf.mxu0
  %v4997 = vadd.f32 %v4959, %v4996
  %v4998 = vpop.f32.mrf.mxu0
  %v4999 = vadd.f32 %v4959, %v4998
  %5000 = vmatmul.bf16.gmra.mxu0 %v3807
  %v5001 = vpop.f32.mrf.mxu0
  %v5002 = vadd.f32 %v4959, %v5001
  %v5003 = vpop.f32.mrf.mxu0
  %v5004 = vadd.f32 %v4959, %v5003
  %5005 = vmatmul.bf16.gmra.mxu0 %v3810
  %v5006 = vpop.f32.mrf.mxu0
  %v5007 = vadd.f32 %v4959, %v5006
  %v5008 = vpop.f32.mrf.mxu0
  %v5009 = vadd.f32 %v4959, %v5008
  %5010 = vmatmul.bf16.gmra.mxu0 %v3813
  %v5011 = vpop.f32.mrf.mxu0
  %v5012 = vadd.f32 %v4959, %v5011
  %v5013 = vpop.f32.mrf.mxu0
  %v5014 = vadd.f32 %v4959, %v5013
  %5015 = vmatmul.bf16.gmra.mxu0 %v3816
  %v5016 = vpop.f32.mrf.mxu0
  %v5017 = vadd.f32 %v4959, %v5016
  %v5018 = vpop.f32.mrf.mxu0
  %v5019 = vadd.f32 %v4959, %v5018
  %5020 = vdwg.mxu0
  %v5021 = vperm.slane %v3753, 1
  %v5026 = vunpack.c.l.b16 %v3733
  %v5027 = vunpack.c.l.b16 %v3734
  %v5028 = vunpack.c.l.b16 %v3735
  %v5029 = vunpack.c.l.b16 %v3736
  %v5030 = vpack.c.b16 %v5027, %v5026
  %v5031 = vpack.c.b16 %v5029, %v5028
  %5034 = vmatpush.bf16.msra.mxu0 0
  %5035 = vmatpush.bf16.msra.mxu0 0
  %5036 = vmatpush.bf16.msra.mxu0 0
  %5037 = vmatpush.bf16.msra.mxu0 0
  %5038 = vmatpush.bf16.msra.mxu0 0
  %5039 = vmatpush.bf16.msra.mxu0 0
  %5040 = vmatpush.bf16.msra.mxu0 %v5031
  %5041 = vmatpush.bf16.msra.mxu0 %v5030
  %5042 = vmatmul.bf16.gmra.mxu0 %v3795
  %v5043 = vpop.f32.mrf.mxu0
  %v5044 = vadd.f32 %v5021, %v5043
  %v5045 = vpop.f32.mrf.mxu0
  %v5046 = vadd.f32 %v5021, %v5045
  %5047 = vmatmul.bf16.gmra.mxu0 %v3798
  %v5048 = vpop.f32.mrf.mxu0
  %v5049 = vadd.f32 %v5021, %v5048
  %v5050 = vpop.f32.mrf.mxu0
  %v5051 = vadd.f32 %v5021, %v5050
  %5052 = vmatmul.bf16.gmra.mxu0 %v3801
  %v5053 = vpop.f32.mrf.mxu0
  %v5054 = vadd.f32 %v5021, %v5053
  %v5055 = vpop.f32.mrf.mxu0
  %v5056 = vadd.f32 %v5021, %v5055
  %5057 = vmatmul.bf16.gmra.mxu0 %v3804
  %v5058 = vpop.f32.mrf.mxu0
  %v5059 = vadd.f32 %v5021, %v5058
  %v5060 = vpop.f32.mrf.mxu0
  %v5061 = vadd.f32 %v5021, %v5060
  %5062 = vmatmul.bf16.gmra.mxu0 %v3807
  %v5063 = vpop.f32.mrf.mxu0
  %v5064 = vadd.f32 %v5021, %v5063
  %v5065 = vpop.f32.mrf.mxu0
  %v5066 = vadd.f32 %v5021, %v5065
  %5067 = vmatmul.bf16.gmra.mxu0 %v3810
  %v5068 = vpop.f32.mrf.mxu0
  %v5069 = vadd.f32 %v5021, %v5068
  %v5070 = vpop.f32.mrf.mxu0
  %v5071 = vadd.f32 %v5021, %v5070
  %5072 = vmatmul.bf16.gmra.mxu0 %v3813
  %v5073 = vpop.f32.mrf.mxu0
  %v5074 = vadd.f32 %v5021, %v5073
  %v5075 = vpop.f32.mrf.mxu0
  %v5076 = vadd.f32 %v5021, %v5075
  %5077 = vmatmul.bf16.gmra.mxu0 %v3816
  %v5078 = vpop.f32.mrf.mxu0
  %v5079 = vadd.f32 %v5021, %v5078
  %v5080 = vpop.f32.mrf.mxu0
  %v5081 = vadd.f32 %v5021, %v5080
  %5082 = vdwg.mxu0
  %v5083 = vperm.slane %v3754, 1
  %v5088 = vunpack.c.l.b16 %v3742
  %v5089 = vunpack.c.l.b16 %v3743
  %v5090 = vunpack.c.l.b16 %v3744
  %v5091 = vunpack.c.l.b16 %v3745
  %v5092 = vpack.c.b16 %v5089, %v5088
  %v5093 = vpack.c.b16 %v5091, %v5090
  %5096 = vmatpush.bf16.msra.mxu0 0
  %5097 = vmatpush.bf16.msra.mxu0 0
  %5098 = vmatpush.bf16.msra.mxu0 0
  %5099 = vmatpush.bf16.msra.mxu0 0
  %5100 = vmatpush.bf16.msra.mxu0 0
  %5101 = vmatpush.bf16.msra.mxu0 0
  %5102 = vmatpush.bf16.msra.mxu0 %v5093
  %5103 = vmatpush.bf16.msra.mxu0 %v5092
  %5104 = vmatmul.bf16.gmra.mxu0 %v3795
  %v5105 = vpop.f32.mrf.mxu0
  %v5106 = vadd.f32 %v5083, %v5105
  %v5107 = vpop.f32.mrf.mxu0
  %v5108 = vadd.f32 %v5083, %v5107
  %5109 = vmatmul.bf16.gmra.mxu0 %v3798
  %v5110 = vpop.f32.mrf.mxu0
  %v5111 = vadd.f32 %v5083, %v5110
  %v5112 = vpop.f32.mrf.mxu0
  %v5113 = vadd.f32 %v5083, %v5112
  %5114 = vmatmul.bf16.gmra.mxu0 %v3801
  %v5115 = vpop.f32.mrf.mxu0
  %v5116 = vadd.f32 %v5083, %v5115
  %v5117 = vpop.f32.mrf.mxu0
  %v5118 = vadd.f32 %v5083, %v5117
  %5119 = vmatmul.bf16.gmra.mxu0 %v3804
  %v5120 = vpop.f32.mrf.mxu0
  %v5121 = vadd.f32 %v5083, %v5120
  %v5122 = vpop.f32.mrf.mxu0
  %v5123 = vadd.f32 %v5083, %v5122
  %5124 = vmatmul.bf16.gmra.mxu0 %v3807
  %v5125 = vpop.f32.mrf.mxu0
  %v5126 = vadd.f32 %v5083, %v5125
  %v5127 = vpop.f32.mrf.mxu0
  %v5128 = vadd.f32 %v5083, %v5127
  %5129 = vmatmul.bf16.gmra.mxu0 %v3810
  %v5130 = vpop.f32.mrf.mxu0
  %v5131 = vadd.f32 %v5083, %v5130
  %v5132 = vpop.f32.mrf.mxu0
  %v5133 = vadd.f32 %v5083, %v5132
  %5134 = vmatmul.bf16.gmra.mxu0 %v3813
  %v5135 = vpop.f32.mrf.mxu0
  %v5136 = vadd.f32 %v5083, %v5135
  %v5137 = vpop.f32.mrf.mxu0
  %v5138 = vadd.f32 %v5083, %v5137
  %5139 = vmatmul.bf16.gmra.mxu0 %v3816
  %v5140 = vpop.f32.mrf.mxu0
  %v5141 = vadd.f32 %v5083, %v5140
  %v5142 = vpop.f32.mrf.mxu0
  %v5143 = vadd.f32 %v5083, %v5142
  %5144 = vdwg.mxu0
  %v5145 = vmul.f32 %v4982, 0.25
  %v5146 = vmul.f32 %v4984, 0.25
  %v5147 = vmul.f32 %v4987, 0.25
  %v5148 = vmul.f32 %v4989, 0.25
  %v5149 = vmul.f32 %v4992, 0.25
  %v5150 = vmul.f32 %v4994, 0.25
  %v5151 = vmul.f32 %v4997, 0.25
  %v5152 = vmul.f32 %v4999, 0.25
  %v5153 = vmul.f32 %v5002, 0.25
  %v5154 = vmul.f32 %v5004, 0.25
  %v5155 = vmul.f32 %v5007, 0.25
  %v5156 = vmul.f32 %v5009, 0.25
  %v5157 = vmul.f32 %v5012, 0.25
  %v5158 = vmul.f32 %v5014, 0.25
  %v5159 = vmul.f32 %v5017, 0.25
  %v5160 = vmul.f32 %v5019, 0.25
  %v5161 = vpack.c.bf16 %v5145, %v5145
  %v5162 = vpack.c.bf16 %v5146, %v5146
  %v5163 = vpack.c.bf16 %v5147, %v5147
  %v5164 = vpack.c.bf16 %v5148, %v5148
  %v5165 = vpack.c.bf16 %v5149, %v5149
  %v5166 = vpack.c.bf16 %v5150, %v5150
  %v5167 = vpack.c.bf16 %v5151, %v5151
  %v5168 = vpack.c.bf16 %v5152, %v5152
  %v5169 = vpack.c.bf16 %v5153, %v5153
  %v5170 = vpack.c.bf16 %v5154, %v5154
  %v5171 = vpack.c.bf16 %v5155, %v5155
  %v5172 = vpack.c.bf16 %v5156, %v5156
  %v5173 = vpack.c.bf16 %v5157, %v5157
  %v5174 = vpack.c.bf16 %v5158, %v5158
  %v5175 = vpack.c.bf16 %v5159, %v5159
  %v5176 = vpack.c.bf16 %v5160, %v5160
  %v5177 = vpack.c.bf16 %v5044, %v5044
  %v5178 = vpack.c.bf16 %v5046, %v5046
  %v5179 = vpack.c.bf16 %v5049, %v5049
  %v5180 = vpack.c.bf16 %v5051, %v5051
  %v5181 = vpack.c.bf16 %v5054, %v5054
  %v5182 = vpack.c.bf16 %v5056, %v5056
  %v5183 = vpack.c.bf16 %v5059, %v5059
  %v5184 = vpack.c.bf16 %v5061, %v5061
  %v5185 = vpack.c.bf16 %v5064, %v5064
  %v5186 = vpack.c.bf16 %v5066, %v5066
  %v5187 = vpack.c.bf16 %v5069, %v5069
  %v5188 = vpack.c.bf16 %v5071, %v5071
  %v5189 = vpack.c.bf16 %v5074, %v5074
  %v5190 = vpack.c.bf16 %v5076, %v5076
  %v5191 = vpack.c.bf16 %v5079, %v5079
  %v5192 = vpack.c.bf16 %v5081, %v5081
  %v5194 = vsel %vm517, %v5161, 0
  %v5197 = vsel %vm517, %v5177, 0
  %5199 = vmatpush.bf16.xpose.msra.mxu0 0
  %5200 = vmatpush.bf16.xpose.msra.mxu0 0
  %5201 = vmatpush.bf16.xpose.msra.mxu0 0
  %5202 = vmatpush.bf16.xpose.msra.mxu0 0
  %5203 = vmatpush.bf16.xpose.msra.mxu0 0
  %5204 = vmatpush.bf16.xpose.msra.mxu0 0
  %5205 = vmatpush.bf16.xpose.msra.mxu0 0
  %5206 = vmatpush.bf16.xpose.msra.mxu0 %v5197
  %5207 = vmatmul.bf16.gmra.mxu0 %v5194
  %v5208 = vpop.f32.mrf.mxu0
  %v5209 = vadd.f32 %v485, %v5208
  %v5210 = vpop.f32.mrf.mxu0
  %5211 = vdwg.mxu0
  %v5213 = vsel %vm517, %v5162, 0
  %v5216 = vsel %vm517, %v5178, 0
  %5218 = vmatpush.bf16.xpose.msra.mxu0 0
  %5219 = vmatpush.bf16.xpose.msra.mxu0 0
  %5220 = vmatpush.bf16.xpose.msra.mxu0 0
  %5221 = vmatpush.bf16.xpose.msra.mxu0 0
  %5222 = vmatpush.bf16.xpose.msra.mxu0 0
  %5223 = vmatpush.bf16.xpose.msra.mxu0 0
  %5224 = vmatpush.bf16.xpose.msra.mxu0 0
  %5225 = vmatpush.bf16.xpose.msra.mxu0 %v5216
  %5226 = vmatmul.bf16.gmra.mxu0 %v5213
  %v5227 = vpop.f32.mrf.mxu0
  %v5228 = vadd.f32 %v486, %v5227
  %v5229 = vpop.f32.mrf.mxu0
  %5230 = vdwg.mxu0
  %v5232 = vsel %vm517, %v5163, 0
  %v5235 = vsel %vm517, %v5179, 0
  %5237 = vmatpush.bf16.xpose.msra.mxu0 0
  %5238 = vmatpush.bf16.xpose.msra.mxu0 0
  %5239 = vmatpush.bf16.xpose.msra.mxu0 0
  %5240 = vmatpush.bf16.xpose.msra.mxu0 0
  %5241 = vmatpush.bf16.xpose.msra.mxu0 0
  %5242 = vmatpush.bf16.xpose.msra.mxu0 0
  %5243 = vmatpush.bf16.xpose.msra.mxu0 0
  %5244 = vmatpush.bf16.xpose.msra.mxu0 %v5235
  %5245 = vmatmul.bf16.gmra.mxu0 %v5232
  %v5246 = vpop.f32.mrf.mxu0
  %v5247 = vadd.f32 %v487, %v5246
  %v5248 = vpop.f32.mrf.mxu0
  %5249 = vdwg.mxu0
  %v5251 = vsel %vm517, %v5164, 0
  %v5254 = vsel %vm517, %v5180, 0
  %5256 = vmatpush.bf16.xpose.msra.mxu0 0
  %5257 = vmatpush.bf16.xpose.msra.mxu0 0
  %5258 = vmatpush.bf16.xpose.msra.mxu0 0
  %5259 = vmatpush.bf16.xpose.msra.mxu0 0
  %5260 = vmatpush.bf16.xpose.msra.mxu0 0
  %5261 = vmatpush.bf16.xpose.msra.mxu0 0
  %5262 = vmatpush.bf16.xpose.msra.mxu0 0
  %5263 = vmatpush.bf16.xpose.msra.mxu0 %v5254
  %5264 = vmatmul.bf16.gmra.mxu0 %v5251
  %v5265 = vpop.f32.mrf.mxu0
  %v5266 = vadd.f32 %v488, %v5265
  %v5267 = vpop.f32.mrf.mxu0
  %5268 = vdwg.mxu0
  %v5270 = vsel %vm517, %v5165, 0
  %v5273 = vsel %vm517, %v5181, 0
  %5275 = vmatpush.bf16.xpose.msra.mxu0 0
  %5276 = vmatpush.bf16.xpose.msra.mxu0 0
  %5277 = vmatpush.bf16.xpose.msra.mxu0 0
  %5278 = vmatpush.bf16.xpose.msra.mxu0 0
  %5279 = vmatpush.bf16.xpose.msra.mxu0 0
  %5280 = vmatpush.bf16.xpose.msra.mxu0 0
  %5281 = vmatpush.bf16.xpose.msra.mxu0 0
  %5282 = vmatpush.bf16.xpose.msra.mxu0 %v5273
  %5283 = vmatmul.bf16.gmra.mxu0 %v5270
  %v5284 = vpop.f32.mrf.mxu0
  %v5285 = vadd.f32 %v489, %v5284
  %v5286 = vpop.f32.mrf.mxu0
  %5287 = vdwg.mxu0
  %v5289 = vsel %vm517, %v5166, 0
  %v5292 = vsel %vm517, %v5182, 0
  %5294 = vmatpush.bf16.xpose.msra.mxu0 0
  %5295 = vmatpush.bf16.xpose.msra.mxu0 0
  %5296 = vmatpush.bf16.xpose.msra.mxu0 0
  %5297 = vmatpush.bf16.xpose.msra.mxu0 0
  %5298 = vmatpush.bf16.xpose.msra.mxu0 0
  %5299 = vmatpush.bf16.xpose.msra.mxu0 0
  %5300 = vmatpush.bf16.xpose.msra.mxu0 0
  %5301 = vmatpush.bf16.xpose.msra.mxu0 %v5292
  %5302 = vmatmul.bf16.gmra.mxu0 %v5289
  %v5303 = vpop.f32.mrf.mxu0
  %v5304 = vadd.f32 %v490, %v5303
  %v5305 = vpop.f32.mrf.mxu0
  %5306 = vdwg.mxu0
  %v5308 = vsel %vm517, %v5167, 0
  %v5311 = vsel %vm517, %v5183, 0
  %5313 = vmatpush.bf16.xpose.msra.mxu0 0
  %5314 = vmatpush.bf16.xpose.msra.mxu0 0
  %5315 = vmatpush.bf16.xpose.msra.mxu0 0
  %5316 = vmatpush.bf16.xpose.msra.mxu0 0
  %5317 = vmatpush.bf16.xpose.msra.mxu0 0
  %5318 = vmatpush.bf16.xpose.msra.mxu0 0
  %5319 = vmatpush.bf16.xpose.msra.mxu0 0
  %5320 = vmatpush.bf16.xpose.msra.mxu0 %v5311
  %5321 = vmatmul.bf16.gmra.mxu0 %v5308
  %v5322 = vpop.f32.mrf.mxu0
  %v5323 = vadd.f32 %v491, %v5322
  %v5324 = vpop.f32.mrf.mxu0
  %5325 = vdwg.mxu0
  %v5327 = vsel %vm517, %v5168, 0
  %v5330 = vsel %vm517, %v5184, 0
  %5332 = vmatpush.bf16.xpose.msra.mxu0 0
  %5333 = vmatpush.bf16.xpose.msra.mxu0 0
  %5334 = vmatpush.bf16.xpose.msra.mxu0 0
  %5335 = vmatpush.bf16.xpose.msra.mxu0 0
  %5336 = vmatpush.bf16.xpose.msra.mxu0 0
  %5337 = vmatpush.bf16.xpose.msra.mxu0 0
  %5338 = vmatpush.bf16.xpose.msra.mxu0 0
  %5339 = vmatpush.bf16.xpose.msra.mxu0 %v5330
  %5340 = vmatmul.bf16.gmra.mxu0 %v5327
  %v5341 = vpop.f32.mrf.mxu0
  %v5342 = vadd.f32 %v492, %v5341
  %v5343 = vpop.f32.mrf.mxu0
  %5344 = vdwg.mxu0
  %v5346 = vsel %vm517, %v5169, 0
  %v5349 = vsel %vm517, %v5185, 0
  %5351 = vmatpush.bf16.xpose.msra.mxu0 0
  %5352 = vmatpush.bf16.xpose.msra.mxu0 0
  %5353 = vmatpush.bf16.xpose.msra.mxu0 0
  %5354 = vmatpush.bf16.xpose.msra.mxu0 0
  %5355 = vmatpush.bf16.xpose.msra.mxu0 0
  %5356 = vmatpush.bf16.xpose.msra.mxu0 0
  %5357 = vmatpush.bf16.xpose.msra.mxu0 0
  %5358 = vmatpush.bf16.xpose.msra.mxu0 %v5349
  %5359 = vmatmul.bf16.gmra.mxu0 %v5346
  %v5360 = vpop.f32.mrf.mxu0
  %v5361 = vadd.f32 %v493, %v5360
  %v5362 = vpop.f32.mrf.mxu0
  %5363 = vdwg.mxu0
  %v5365 = vsel %vm517, %v5170, 0
  %v5368 = vsel %vm517, %v5186, 0
  %5370 = vmatpush.bf16.xpose.msra.mxu0 0
  %5371 = vmatpush.bf16.xpose.msra.mxu0 0
  %5372 = vmatpush.bf16.xpose.msra.mxu0 0
  %5373 = vmatpush.bf16.xpose.msra.mxu0 0
  %5374 = vmatpush.bf16.xpose.msra.mxu0 0
  %5375 = vmatpush.bf16.xpose.msra.mxu0 0
  %5376 = vmatpush.bf16.xpose.msra.mxu0 0
  %5377 = vmatpush.bf16.xpose.msra.mxu0 %v5368
  %5378 = vmatmul.bf16.gmra.mxu0 %v5365
  %v5379 = vpop.f32.mrf.mxu0
  %v5380 = vadd.f32 %v494, %v5379
  %v5381 = vpop.f32.mrf.mxu0
  %5382 = vdwg.mxu0
  %v5384 = vsel %vm517, %v5171, 0
  %v5387 = vsel %vm517, %v5187, 0
  %5389 = vmatpush.bf16.xpose.msra.mxu0 0
  %5390 = vmatpush.bf16.xpose.msra.mxu0 0
  %5391 = vmatpush.bf16.xpose.msra.mxu0 0
  %5392 = vmatpush.bf16.xpose.msra.mxu0 0
  %5393 = vmatpush.bf16.xpose.msra.mxu0 0
  %5394 = vmatpush.bf16.xpose.msra.mxu0 0
  %5395 = vmatpush.bf16.xpose.msra.mxu0 0
  %5396 = vmatpush.bf16.xpose.msra.mxu0 %v5387
  %5397 = vmatmul.bf16.gmra.mxu0 %v5384
  %v5398 = vpop.f32.mrf.mxu0
  %v5399 = vadd.f32 %v495, %v5398
  %v5400 = vpop.f32.mrf.mxu0
  %5401 = vdwg.mxu0
  %v5403 = vsel %vm517, %v5172, 0
  %v5406 = vsel %vm517, %v5188, 0
  %5408 = vmatpush.bf16.xpose.msra.mxu0 0
  %5409 = vmatpush.bf16.xpose.msra.mxu0 0
  %5410 = vmatpush.bf16.xpose.msra.mxu0 0
  %5411 = vmatpush.bf16.xpose.msra.mxu0 0
  %5412 = vmatpush.bf16.xpose.msra.mxu0 0
  %5413 = vmatpush.bf16.xpose.msra.mxu0 0
  %5414 = vmatpush.bf16.xpose.msra.mxu0 0
  %5415 = vmatpush.bf16.xpose.msra.mxu0 %v5406
  %5416 = vmatmul.bf16.gmra.mxu0 %v5403
  %v5417 = vpop.f32.mrf.mxu0
  %v5418 = vadd.f32 %v496, %v5417
  %v5419 = vpop.f32.mrf.mxu0
  %5420 = vdwg.mxu0
  %v5422 = vsel %vm517, %v5173, 0
  %v5425 = vsel %vm517, %v5189, 0
  %5427 = vmatpush.bf16.xpose.msra.mxu0 0
  %5428 = vmatpush.bf16.xpose.msra.mxu0 0
  %5429 = vmatpush.bf16.xpose.msra.mxu0 0
  %5430 = vmatpush.bf16.xpose.msra.mxu0 0
  %5431 = vmatpush.bf16.xpose.msra.mxu0 0
  %5432 = vmatpush.bf16.xpose.msra.mxu0 0
  %5433 = vmatpush.bf16.xpose.msra.mxu0 0
  %5434 = vmatpush.bf16.xpose.msra.mxu0 %v5425
  %5435 = vmatmul.bf16.gmra.mxu0 %v5422
  %v5436 = vpop.f32.mrf.mxu0
  %v5437 = vadd.f32 %v497, %v5436
  %v5438 = vpop.f32.mrf.mxu0
  %5439 = vdwg.mxu0
  %v5441 = vsel %vm517, %v5174, 0
  %v5444 = vsel %vm517, %v5190, 0
  %5446 = vmatpush.bf16.xpose.msra.mxu0 0
  %5447 = vmatpush.bf16.xpose.msra.mxu0 0
  %5448 = vmatpush.bf16.xpose.msra.mxu0 0
  %5449 = vmatpush.bf16.xpose.msra.mxu0 0
  %5450 = vmatpush.bf16.xpose.msra.mxu0 0
  %5451 = vmatpush.bf16.xpose.msra.mxu0 0
  %5452 = vmatpush.bf16.xpose.msra.mxu0 0
  %5453 = vmatpush.bf16.xpose.msra.mxu0 %v5444
  %5454 = vmatmul.bf16.gmra.mxu0 %v5441
  %v5455 = vpop.f32.mrf.mxu0
  %v5456 = vadd.f32 %v498, %v5455
  %v5457 = vpop.f32.mrf.mxu0
  %5458 = vdwg.mxu0
  %v5460 = vsel %vm517, %v5175, 0
  %v5463 = vsel %vm517, %v5191, 0
  %5465 = vmatpush.bf16.xpose.msra.mxu0 0
  %5466 = vmatpush.bf16.xpose.msra.mxu0 0
  %5467 = vmatpush.bf16.xpose.msra.mxu0 0
  %5468 = vmatpush.bf16.xpose.msra.mxu0 0
  %5469 = vmatpush.bf16.xpose.msra.mxu0 0
  %5470 = vmatpush.bf16.xpose.msra.mxu0 0
  %5471 = vmatpush.bf16.xpose.msra.mxu0 0
  %5472 = vmatpush.bf16.xpose.msra.mxu0 %v5463
  %5473 = vmatmul.bf16.gmra.mxu0 %v5460
  %v5474 = vpop.f32.mrf.mxu0
  %v5475 = vadd.f32 %v499, %v5474
  %v5476 = vpop.f32.mrf.mxu0
  %5477 = vdwg.mxu0
  %v5479 = vsel %vm517, %v5176, 0
  %v5482 = vsel %vm517, %v5192, 0
  %5484 = vmatpush.bf16.xpose.msra.mxu0 0
  %5485 = vmatpush.bf16.xpose.msra.mxu0 0
  %5486 = vmatpush.bf16.xpose.msra.mxu0 0
  %5487 = vmatpush.bf16.xpose.msra.mxu0 0
  %5488 = vmatpush.bf16.xpose.msra.mxu0 0
  %5489 = vmatpush.bf16.xpose.msra.mxu0 0
  %5490 = vmatpush.bf16.xpose.msra.mxu0 0
  %5491 = vmatpush.bf16.xpose.msra.mxu0 %v5482
  %5492 = vmatmul.bf16.gmra.mxu0 %v5479
  %v5493 = vpop.f32.mrf.mxu0
  %v5494 = vadd.f32 %v500, %v5493
  %v5495 = vpop.f32.mrf.mxu0
  %5496 = vdwg.mxu0
  %v5497 = vsel %vm822, %v5209, -inf
  %5498 = vmax.xlane.f32.xlu0 %v5497
  %v5499 = vpop.xlane.xlu0 %5498
  %v5500 = vsel %vm822, %v5228, -inf
  %5501 = vmax.xlane.f32.xlu0 %v5500
  %v5502 = vpop.xlane.xlu0 %5501
  %v5503 = vsel %vm822, %v5247, -inf
  %5504 = vmax.xlane.f32.xlu0 %v5503
  %v5505 = vpop.xlane.xlu0 %5504
  %v5506 = vsel %vm822, %v5266, -inf
  %5507 = vmax.xlane.f32.xlu0 %v5506
  %v5508 = vpop.xlane.xlu0 %5507
  %v5509 = vsel %vm822, %v5285, -inf
  %5510 = vmax.xlane.f32.xlu0 %v5509
  %v5511 = vpop.xlane.xlu0 %5510
  %v5512 = vsel %vm822, %v5304, -inf
  %5513 = vmax.xlane.f32.xlu0 %v5512
  %v5514 = vpop.xlane.xlu0 %5513
  %v5515 = vsel %vm822, %v5323, -inf
  %5516 = vmax.xlane.f32.xlu0 %v5515
  %v5517 = vpop.xlane.xlu0 %5516
  %v5518 = vsel %vm822, %v5342, -inf
  %5519 = vmax.xlane.f32.xlu0 %v5518
  %v5520 = vpop.xlane.xlu0 %5519
  %v5521 = vsel %vm822, %v5361, -inf
  %5522 = vmax.xlane.f32.xlu0 %v5521
  %v5523 = vpop.xlane.xlu0 %5522
  %v5524 = vsel %vm822, %v5380, -inf
  %5525 = vmax.xlane.f32.xlu0 %v5524
  %v5526 = vpop.xlane.xlu0 %5525
  %v5527 = vsel %vm822, %v5399, -inf
  %5528 = vmax.xlane.f32.xlu0 %v5527
  %v5529 = vpop.xlane.xlu0 %5528
  %v5530 = vsel %vm822, %v5418, -inf
  %5531 = vmax.xlane.f32.xlu0 %v5530
  %v5532 = vpop.xlane.xlu0 %5531
  %v5533 = vsel %vm822, %v5437, -inf
  %5534 = vmax.xlane.f32.xlu0 %v5533
  %v5535 = vpop.xlane.xlu0 %5534
  %v5536 = vsel %vm822, %v5456, -inf
  %5537 = vmax.xlane.f32.xlu0 %v5536
  %v5538 = vpop.xlane.xlu0 %5537
  %v5539 = vsel %vm822, %v5475, -inf
  %5540 = vmax.xlane.f32.xlu0 %v5539
  %v5541 = vpop.xlane.xlu0 %5540
  %v5542 = vsel %vm822, %v5494, -inf
  %5543 = vmax.xlane.f32.xlu0 %v5542
  %v5544 = vpop.xlane.xlu0 %5543
  %v5545 = vsub.f32 %v5209, %v5499
  %v5546 = vsub.f32 %v5228, %v5502
  %v5547 = vsub.f32 %v5247, %v5505
  %v5548 = vsub.f32 %v5266, %v5508
  %v5549 = vsub.f32 %v5285, %v5511
  %v5550 = vsub.f32 %v5304, %v5514
  %v5551 = vsub.f32 %v5323, %v5517
  %v5552 = vsub.f32 %v5342, %v5520
  %v5553 = vsub.f32 %v5361, %v5523
  %v5554 = vsub.f32 %v5380, %v5526
  %v5555 = vsub.f32 %v5399, %v5529
  %v5556 = vsub.f32 %v5418, %v5532
  %v5557 = vsub.f32 %v5437, %v5535
  %v5558 = vsub.f32 %v5456, %v5538
  %v5559 = vsub.f32 %v5475, %v5541
  %v5560 = vsub.f32 %v5494, %v5544
  %v5561 = vmul.f32 %v5545, 1.442695
  %v5562 = vpow.pop %v5561
  %v5563 = vmul.f32 %v5546, 1.442695
  %v5564 = vpow.pop %v5563
  %v5565 = vmul.f32 %v5547, 1.442695
  %v5566 = vpow.pop %v5565
  %v5567 = vmul.f32 %v5548, 1.442695
  %v5568 = vpow.pop %v5567
  %v5569 = vmul.f32 %v5549, 1.442695
  %v5570 = vpow.pop %v5569
  %v5571 = vmul.f32 %v5550, 1.442695
  %v5572 = vpow.pop %v5571
  %v5573 = vmul.f32 %v5551, 1.442695
  %v5574 = vpow.pop %v5573
  %v5575 = vmul.f32 %v5552, 1.442695
  %v5576 = vpow.pop %v5575
  %v5577 = vmul.f32 %v5553, 1.442695
  %v5578 = vpow.pop %v5577
  %v5579 = vmul.f32 %v5554, 1.442695
  %v5580 = vpow.pop %v5579
  %v5581 = vmul.f32 %v5555, 1.442695
  %v5582 = vpow.pop %v5581
  %v5583 = vmul.f32 %v5556, 1.442695
  %v5584 = vpow.pop %v5583
  %v5585 = vmul.f32 %v5557, 1.442695
  %v5586 = vpow.pop %v5585
  %v5587 = vmul.f32 %v5558, 1.442695
  %v5588 = vpow.pop %v5587
  %v5589 = vmul.f32 %v5559, 1.442695
  %v5590 = vpow.pop %v5589
  %v5591 = vmul.f32 %v5560, 1.442695
  %v5592 = vpow.pop %v5591
  %v5593 = vsel %vm822, %v5562, 0.0
  %5594 = vadd.xlane.f32.xlu0 %v5593
  %v5595 = vpop.xlane.xlu0 %5594
  %v5596 = vsel %vm822, %v5564, 0.0
  %5597 = vadd.xlane.f32.xlu0 %v5596
  %v5598 = vpop.xlane.xlu0 %5597
  %v5599 = vsel %vm822, %v5566, 0.0
  %5600 = vadd.xlane.f32.xlu0 %v5599
  %v5601 = vpop.xlane.xlu0 %5600
  %v5602 = vsel %vm822, %v5568, 0.0
  %5603 = vadd.xlane.f32.xlu0 %v5602
  %v5604 = vpop.xlane.xlu0 %5603
  %v5605 = vsel %vm822, %v5570, 0.0
  %5606 = vadd.xlane.f32.xlu0 %v5605
  %v5607 = vpop.xlane.xlu0 %5606
  %v5608 = vsel %vm822, %v5572, 0.0
  %5609 = vadd.xlane.f32.xlu0 %v5608
  %v5610 = vpop.xlane.xlu0 %5609
  %v5611 = vsel %vm822, %v5574, 0.0
  %5612 = vadd.xlane.f32.xlu0 %v5611
  %v5613 = vpop.xlane.xlu0 %5612
  %v5614 = vsel %vm822, %v5576, 0.0
  %5615 = vadd.xlane.f32.xlu0 %v5614
  %v5616 = vpop.xlane.xlu0 %5615
  %v5617 = vsel %vm822, %v5578, 0.0
  %5618 = vadd.xlane.f32.xlu0 %v5617
  %v5619 = vpop.xlane.xlu0 %5618
  %v5620 = vsel %vm822, %v5580, 0.0
  %5621 = vadd.xlane.f32.xlu0 %v5620
  %v5622 = vpop.xlane.xlu0 %5621
  %v5623 = vsel %vm822, %v5582, 0.0
  %5624 = vadd.xlane.f32.xlu0 %v5623
  %v5625 = vpop.xlane.xlu0 %5624
  %v5626 = vsel %vm822, %v5584, 0.0
  %5627 = vadd.xlane.f32.xlu0 %v5626
  %v5628 = vpop.xlane.xlu0 %5627
  %v5629 = vsel %vm822, %v5586, 0.0
  %5630 = vadd.xlane.f32.xlu0 %v5629
  %v5631 = vpop.xlane.xlu0 %5630
  %v5632 = vsel %vm822, %v5588, 0.0
  %5633 = vadd.xlane.f32.xlu0 %v5632
  %v5634 = vpop.xlane.xlu0 %5633
  %v5635 = vsel %vm822, %v5590, 0.0
  %5636 = vadd.xlane.f32.xlu0 %v5635
  %v5637 = vpop.xlane.xlu0 %5636
  %v5638 = vsel %vm822, %v5592, 0.0
  %5639 = vadd.xlane.f32.xlu0 %v5638
  %v5640 = vpop.xlane.xlu0 %5639
  %v5641 = vrcp.pop %v5595
  %v5642 = vrcp.pop %v5598
  %v5643 = vrcp.pop %v5601
  %v5644 = vrcp.pop %v5604
  %v5645 = vrcp.pop %v5607
  %v5646 = vrcp.pop %v5610
  %v5647 = vrcp.pop %v5613
  %v5648 = vrcp.pop %v5616
  %v5649 = vrcp.pop %v5619
  %v5650 = vrcp.pop %v5622
  %v5651 = vrcp.pop %v5625
  %v5652 = vrcp.pop %v5628
  %v5653 = vrcp.pop %v5631
  %v5654 = vrcp.pop %v5634
  %v5655 = vrcp.pop %v5637
  %v5656 = vrcp.pop %v5640
  %v5657 = vmul.f32 %v5562, %v5641
  %v5658 = vmul.f32 %v5564, %v5642
  %v5659 = vmul.f32 %v5566, %v5643
  %v5660 = vmul.f32 %v5568, %v5644
  %v5661 = vmul.f32 %v5570, %v5645
  %v5662 = vmul.f32 %v5572, %v5646
  %v5663 = vmul.f32 %v5574, %v5647
  %v5664 = vmul.f32 %v5576, %v5648
  %v5665 = vmul.f32 %v5578, %v5649
  %v5666 = vmul.f32 %v5580, %v5650
  %v5667 = vmul.f32 %v5582, %v5651
  %v5668 = vmul.f32 %v5584, %v5652
  %v5669 = vmul.f32 %v5586, %v5653
  %v5670 = vmul.f32 %v5588, %v5654
  %v5671 = vmul.f32 %v5590, %v5655
  %v5672 = vmul.f32 %v5592, %v5656
  %v5673 = vpack.c.bf16 %v5657, %v5657
  %v5674 = vpack.c.bf16 %v5658, %v5658
  %v5675 = vpack.c.bf16 %v5659, %v5659
  %v5676 = vpack.c.bf16 %v5660, %v5660
  %v5677 = vpack.c.bf16 %v5661, %v5661
  %v5678 = vpack.c.bf16 %v5662, %v5662
  %v5679 = vpack.c.bf16 %v5663, %v5663
  %v5680 = vpack.c.bf16 %v5664, %v5664
  %v5681 = vpack.c.bf16 %v5665, %v5665
  %v5682 = vpack.c.bf16 %v5666, %v5666
  %v5683 = vpack.c.bf16 %v5667, %v5667
  %v5684 = vpack.c.bf16 %v5668, %v5668
  %v5685 = vpack.c.bf16 %v5669, %v5669
  %v5686 = vpack.c.bf16 %v5670, %v5670
  %v5687 = vpack.c.bf16 %v5671, %v5671
  %v5688 = vpack.c.bf16 %v5672, %v5672
  %v5689 = vpack.c.bf16 %v5106, %v5106
  %v5690 = vpack.c.bf16 %v5108, %v5108
  %v5691 = vpack.c.bf16 %v5111, %v5111
  %v5692 = vpack.c.bf16 %v5113, %v5113
  %v5693 = vpack.c.bf16 %v5116, %v5116
  %v5694 = vpack.c.bf16 %v5118, %v5118
  %v5695 = vpack.c.bf16 %v5121, %v5121
  %v5696 = vpack.c.bf16 %v5123, %v5123
  %v5697 = vpack.c.bf16 %v5126, %v5126
  %v5698 = vpack.c.bf16 %v5128, %v5128
  %v5699 = vpack.c.bf16 %v5131, %v5131
  %v5700 = vpack.c.bf16 %v5133, %v5133
  %v5701 = vpack.c.bf16 %v5136, %v5136
  %v5702 = vpack.c.bf16 %v5138, %v5138
  %v5703 = vpack.c.bf16 %v5141, %v5141
  %v5704 = vpack.c.bf16 %v5143, %v5143
  %v5706 = vsel %vm822, %v5673, 0
  %v5709 = vsel %vm1034, %v5689, 0
  %5711 = vmatpush.bf16.msra.mxu0 0
  %5712 = vmatpush.bf16.msra.mxu0 0
  %5713 = vmatpush.bf16.msra.mxu0 0
  %5714 = vmatpush.bf16.msra.mxu0 0
  %5715 = vmatpush.bf16.msra.mxu0 0
  %5716 = vmatpush.bf16.msra.mxu0 0
  %5717 = vmatpush.bf16.msra.mxu0 0
  %5718 = vmatpush.bf16.msra.mxu0 %v5709
  %5719 = vmatmul.bf16.gmra.mxu0 %v5706
  %v5720 = vpop.f32.mrf.mxu0
  %v5721 = vadd.f32 0.0, %v5720
  %v5722 = vpop.f32.mrf.mxu0
  %5723 = vdwg.mxu0
  %v5725 = vsel %vm822, %v5674, 0
  %v5728 = vsel %vm1034, %v5690, 0
  %5730 = vmatpush.bf16.msra.mxu0 0
  %5731 = vmatpush.bf16.msra.mxu0 0
  %5732 = vmatpush.bf16.msra.mxu0 0
  %5733 = vmatpush.bf16.msra.mxu0 0
  %5734 = vmatpush.bf16.msra.mxu0 0
  %5735 = vmatpush.bf16.msra.mxu0 0
  %5736 = vmatpush.bf16.msra.mxu0 0
  %5737 = vmatpush.bf16.msra.mxu0 %v5728
  %5738 = vmatmul.bf16.gmra.mxu0 %v5725
  %v5739 = vpop.f32.mrf.mxu0
  %v5740 = vadd.f32 0.0, %v5739
  %v5741 = vpop.f32.mrf.mxu0
  %5742 = vdwg.mxu0
  %v5744 = vsel %vm822, %v5675, 0
  %v5747 = vsel %vm1034, %v5691, 0
  %5749 = vmatpush.bf16.msra.mxu0 0
  %5750 = vmatpush.bf16.msra.mxu0 0
  %5751 = vmatpush.bf16.msra.mxu0 0
  %5752 = vmatpush.bf16.msra.mxu0 0
  %5753 = vmatpush.bf16.msra.mxu0 0
  %5754 = vmatpush.bf16.msra.mxu0 0
  %5755 = vmatpush.bf16.msra.mxu0 0
  %5756 = vmatpush.bf16.msra.mxu0 %v5747
  %5757 = vmatmul.bf16.gmra.mxu0 %v5744
  %v5758 = vpop.f32.mrf.mxu0
  %v5759 = vadd.f32 0.0, %v5758
  %v5760 = vpop.f32.mrf.mxu0
  %5761 = vdwg.mxu0
  %v5763 = vsel %vm822, %v5676, 0
  %v5766 = vsel %vm1034, %v5692, 0
  %5768 = vmatpush.bf16.msra.mxu0 0
  %5769 = vmatpush.bf16.msra.mxu0 0
  %5770 = vmatpush.bf16.msra.mxu0 0
  %5771 = vmatpush.bf16.msra.mxu0 0
  %5772 = vmatpush.bf16.msra.mxu0 0
  %5773 = vmatpush.bf16.msra.mxu0 0
  %5774 = vmatpush.bf16.msra.mxu0 0
  %5775 = vmatpush.bf16.msra.mxu0 %v5766
  %5776 = vmatmul.bf16.gmra.mxu0 %v5763
  %v5777 = vpop.f32.mrf.mxu0
  %v5778 = vadd.f32 0.0, %v5777
  %v5779 = vpop.f32.mrf.mxu0
  %5780 = vdwg.mxu0
  %v5782 = vsel %vm822, %v5677, 0
  %v5785 = vsel %vm1034, %v5693, 0
  %5787 = vmatpush.bf16.msra.mxu0 0
  %5788 = vmatpush.bf16.msra.mxu0 0
  %5789 = vmatpush.bf16.msra.mxu0 0
  %5790 = vmatpush.bf16.msra.mxu0 0
  %5791 = vmatpush.bf16.msra.mxu0 0
  %5792 = vmatpush.bf16.msra.mxu0 0
  %5793 = vmatpush.bf16.msra.mxu0 0
  %5794 = vmatpush.bf16.msra.mxu0 %v5785
  %5795 = vmatmul.bf16.gmra.mxu0 %v5782
  %v5796 = vpop.f32.mrf.mxu0
  %v5797 = vadd.f32 0.0, %v5796
  %v5798 = vpop.f32.mrf.mxu0
  %5799 = vdwg.mxu0
  %v5801 = vsel %vm822, %v5678, 0
  %v5804 = vsel %vm1034, %v5694, 0
  %5806 = vmatpush.bf16.msra.mxu0 0
  %5807 = vmatpush.bf16.msra.mxu0 0
  %5808 = vmatpush.bf16.msra.mxu0 0
  %5809 = vmatpush.bf16.msra.mxu0 0
  %5810 = vmatpush.bf16.msra.mxu0 0
  %5811 = vmatpush.bf16.msra.mxu0 0
  %5812 = vmatpush.bf16.msra.mxu0 0
  %5813 = vmatpush.bf16.msra.mxu0 %v5804
  %5814 = vmatmul.bf16.gmra.mxu0 %v5801
  %v5815 = vpop.f32.mrf.mxu0
  %v5816 = vadd.f32 0.0, %v5815
  %v5817 = vpop.f32.mrf.mxu0
  %5818 = vdwg.mxu0
  %v5820 = vsel %vm822, %v5679, 0
  %v5823 = vsel %vm1034, %v5695, 0
  %5825 = vmatpush.bf16.msra.mxu0 0
  %5826 = vmatpush.bf16.msra.mxu0 0
  %5827 = vmatpush.bf16.msra.mxu0 0
  %5828 = vmatpush.bf16.msra.mxu0 0
  %5829 = vmatpush.bf16.msra.mxu0 0
  %5830 = vmatpush.bf16.msra.mxu0 0
  %5831 = vmatpush.bf16.msra.mxu0 0
  %5832 = vmatpush.bf16.msra.mxu0 %v5823
  %5833 = vmatmul.bf16.gmra.mxu0 %v5820
  %v5834 = vpop.f32.mrf.mxu0
  %v5835 = vadd.f32 0.0, %v5834
  %v5836 = vpop.f32.mrf.mxu0
  %5837 = vdwg.mxu0
  %v5839 = vsel %vm822, %v5680, 0
  %v5842 = vsel %vm1034, %v5696, 0
  %5844 = vmatpush.bf16.msra.mxu0 0
  %5845 = vmatpush.bf16.msra.mxu0 0
  %5846 = vmatpush.bf16.msra.mxu0 0
  %5847 = vmatpush.bf16.msra.mxu0 0
  %5848 = vmatpush.bf16.msra.mxu0 0
  %5849 = vmatpush.bf16.msra.mxu0 0
  %5850 = vmatpush.bf16.msra.mxu0 0
  %5851 = vmatpush.bf16.msra.mxu0 %v5842
  %5852 = vmatmul.bf16.gmra.mxu0 %v5839
  %v5853 = vpop.f32.mrf.mxu0
  %v5854 = vadd.f32 0.0, %v5853
  %v5855 = vpop.f32.mrf.mxu0
  %5856 = vdwg.mxu0
  %v5858 = vsel %vm822, %v5681, 0
  %v5861 = vsel %vm1034, %v5697, 0
  %5863 = vmatpush.bf16.msra.mxu0 0
  %5864 = vmatpush.bf16.msra.mxu0 0
  %5865 = vmatpush.bf16.msra.mxu0 0
  %5866 = vmatpush.bf16.msra.mxu0 0
  %5867 = vmatpush.bf16.msra.mxu0 0
  %5868 = vmatpush.bf16.msra.mxu0 0
  %5869 = vmatpush.bf16.msra.mxu0 0
  %5870 = vmatpush.bf16.msra.mxu0 %v5861
  %5871 = vmatmul.bf16.gmra.mxu0 %v5858
  %v5872 = vpop.f32.mrf.mxu0
  %v5873 = vadd.f32 0.0, %v5872
  %v5874 = vpop.f32.mrf.mxu0
  %5875 = vdwg.mxu0
  %v5877 = vsel %vm822, %v5682, 0
  %v5880 = vsel %vm1034, %v5698, 0
  %5882 = vmatpush.bf16.msra.mxu0 0
  %5883 = vmatpush.bf16.msra.mxu0 0
  %5884 = vmatpush.bf16.msra.mxu0 0
  %5885 = vmatpush.bf16.msra.mxu0 0
  %5886 = vmatpush.bf16.msra.mxu0 0
  %5887 = vmatpush.bf16.msra.mxu0 0
  %5888 = vmatpush.bf16.msra.mxu0 0
  %5889 = vmatpush.bf16.msra.mxu0 %v5880
  %5890 = vmatmul.bf16.gmra.mxu0 %v5877
  %v5891 = vpop.f32.mrf.mxu0
  %v5892 = vadd.f32 0.0, %v5891
  %v5893 = vpop.f32.mrf.mxu0
  %5894 = vdwg.mxu0
  %v5896 = vsel %vm822, %v5683, 0
  %v5899 = vsel %vm1034, %v5699, 0
  %5901 = vmatpush.bf16.msra.mxu0 0
  %5902 = vmatpush.bf16.msra.mxu0 0
  %5903 = vmatpush.bf16.msra.mxu0 0
  %5904 = vmatpush.bf16.msra.mxu0 0
  %5905 = vmatpush.bf16.msra.mxu0 0
  %5906 = vmatpush.bf16.msra.mxu0 0
  %5907 = vmatpush.bf16.msra.mxu0 0
  %5908 = vmatpush.bf16.msra.mxu0 %v5899
  %5909 = vmatmul.bf16.gmra.mxu0 %v5896
  %v5910 = vpop.f32.mrf.mxu0
  %v5911 = vadd.f32 0.0, %v5910
  %v5912 = vpop.f32.mrf.mxu0
  %5913 = vdwg.mxu0
  %v5915 = vsel %vm822, %v5684, 0
  %v5918 = vsel %vm1034, %v5700, 0
  %5920 = vmatpush.bf16.msra.mxu0 0
  %5921 = vmatpush.bf16.msra.mxu0 0
  %5922 = vmatpush.bf16.msra.mxu0 0
  %5923 = vmatpush.bf16.msra.mxu0 0
  %5924 = vmatpush.bf16.msra.mxu0 0
  %5925 = vmatpush.bf16.msra.mxu0 0
  %5926 = vmatpush.bf16.msra.mxu0 0
  %5927 = vmatpush.bf16.msra.mxu0 %v5918
  %5928 = vmatmul.bf16.gmra.mxu0 %v5915
  %v5929 = vpop.f32.mrf.mxu0
  %v5930 = vadd.f32 0.0, %v5929
  %v5931 = vpop.f32.mrf.mxu0
  %5932 = vdwg.mxu0
  %v5934 = vsel %vm822, %v5685, 0
  %v5937 = vsel %vm1034, %v5701, 0
  %5939 = vmatpush.bf16.msra.mxu0 0
  %5940 = vmatpush.bf16.msra.mxu0 0
  %5941 = vmatpush.bf16.msra.mxu0 0
  %5942 = vmatpush.bf16.msra.mxu0 0
  %5943 = vmatpush.bf16.msra.mxu0 0
  %5944 = vmatpush.bf16.msra.mxu0 0
  %5945 = vmatpush.bf16.msra.mxu0 0
  %5946 = vmatpush.bf16.msra.mxu0 %v5937
  %5947 = vmatmul.bf16.gmra.mxu0 %v5934
  %v5948 = vpop.f32.mrf.mxu0
  %v5949 = vadd.f32 0.0, %v5948
  %v5950 = vpop.f32.mrf.mxu0
  %5951 = vdwg.mxu0
  %v5953 = vsel %vm822, %v5686, 0
  %v5956 = vsel %vm1034, %v5702, 0
  %5958 = vmatpush.bf16.msra.mxu0 0
  %5959 = vmatpush.bf16.msra.mxu0 0
  %5960 = vmatpush.bf16.msra.mxu0 0
  %5961 = vmatpush.bf16.msra.mxu0 0
  %5962 = vmatpush.bf16.msra.mxu0 0
  %5963 = vmatpush.bf16.msra.mxu0 0
  %5964 = vmatpush.bf16.msra.mxu0 0
  %5965 = vmatpush.bf16.msra.mxu0 %v5956
  %5966 = vmatmul.bf16.gmra.mxu0 %v5953
  %v5967 = vpop.f32.mrf.mxu0
  %v5968 = vadd.f32 0.0, %v5967
  %v5969 = vpop.f32.mrf.mxu0
  %5970 = vdwg.mxu0
  %v5972 = vsel %vm822, %v5687, 0
  %v5975 = vsel %vm1034, %v5703, 0
  %5977 = vmatpush.bf16.msra.mxu0 0
  %5978 = vmatpush.bf16.msra.mxu0 0
  %5979 = vmatpush.bf16.msra.mxu0 0
  %5980 = vmatpush.bf16.msra.mxu0 0
  %5981 = vmatpush.bf16.msra.mxu0 0
  %5982 = vmatpush.bf16.msra.mxu0 0
  %5983 = vmatpush.bf16.msra.mxu0 0
  %5984 = vmatpush.bf16.msra.mxu0 %v5975
  %5985 = vmatmul.bf16.gmra.mxu0 %v5972
  %v5986 = vpop.f32.mrf.mxu0
  %v5987 = vadd.f32 0.0, %v5986
  %v5988 = vpop.f32.mrf.mxu0
  %5989 = vdwg.mxu0
  %v5991 = vsel %vm822, %v5688, 0
  %v5994 = vsel %vm1034, %v5704, 0
  %5996 = vmatpush.bf16.msra.mxu0 0
  %5997 = vmatpush.bf16.msra.mxu0 0
  %5998 = vmatpush.bf16.msra.mxu0 0
  %5999 = vmatpush.bf16.msra.mxu0 0
  %6000 = vmatpush.bf16.msra.mxu0 0
  %6001 = vmatpush.bf16.msra.mxu0 0
  %6002 = vmatpush.bf16.msra.mxu0 0
  %6003 = vmatpush.bf16.msra.mxu0 %v5994
  %6004 = vmatmul.bf16.gmra.mxu0 %v5991
  %v6005 = vpop.f32.mrf.mxu0
  %v6006 = vadd.f32 0.0, %v6005
  %v6007 = vpop.f32.mrf.mxu0
  %6008 = vdwg.mxu0
  %v6009 = vpack.c.bf16 %v5740, %v5721
  %v6010 = vpack.c.bf16 %v5778, %v5759
  %v6011 = vpack.c.bf16 %v5816, %v5797
  %v6012 = vpack.c.bf16 %v5854, %v5835
  %v6013 = vpack.c.bf16 %v5892, %v5873
  %v6014 = vpack.c.bf16 %v5930, %v5911
  %v6015 = vpack.c.bf16 %v5968, %v5949
  %v6016 = vpack.c.bf16 %v6006, %v5987
  %v6019 = vunpack.c.l.b16 %v3749
  %v6020 = vunpack.c.l.b16 %v3750
  %v6021 = vpack.c.b16 %v6020, %v6019
  %v6024 = vsel %vm517, %v6009, 0
  %v6027 = vsel %vm517, %v6010, 0
  %v6030 = vsel %vm517, %v6011, 0
  %v6033 = vsel %vm517, %v6012, 0
  %v6036 = vsel %vm517, %v6013, 0
  %v6039 = vsel %vm517, %v6014, 0
  %v6042 = vsel %vm517, %v6015, 0
  %v6045 = vsel %vm517, %v6016, 0
  %6047 = vmatpush.bf16.msra.mxu0 0
  %6048 = vmatpush.bf16.msra.mxu0 0
  %6049 = vmatpush.bf16.msra.mxu0 0
  %6050 = vmatpush.bf16.msra.mxu0 0
  %6051 = vmatpush.bf16.msra.mxu0 0
  %6052 = vmatpush.bf16.msra.mxu0 0
  %6053 = vmatpush.bf16.msra.mxu0 0
  %6054 = vmatpush.bf16.msra.mxu0 %v6021
  %6055 = vmatmul.bf16.gmra.mxu0 %v6024
  %v6056 = vpop.f32.mrf.mxu0
  %v6057 = vadd.f32 0.0, %v6056
  %v6058 = vpop.f32.mrf.mxu0
  %v6059 = vadd.f32 0.0, %v6058
  %6060 = vmatmul.bf16.gmra.mxu0 %v6027
  %v6061 = vpop.f32.mrf.mxu0
  %v6062 = vadd.f32 0.0, %v6061
  %v6063 = vpop.f32.mrf.mxu0
  %v6064 = vadd.f32 0.0, %v6063
  %6065 = vmatmul.bf16.gmra.mxu0 %v6030
  %v6066 = vpop.f32.mrf.mxu0
  %v6067 = vadd.f32 0.0, %v6066
  %v6068 = vpop.f32.mrf.mxu0
  %v6069 = vadd.f32 0.0, %v6068
  %6070 = vmatmul.bf16.gmra.mxu0 %v6033
  %v6071 = vpop.f32.mrf.mxu0
  %v6072 = vadd.f32 0.0, %v6071
  %v6073 = vpop.f32.mrf.mxu0
  %v6074 = vadd.f32 0.0, %v6073
  %6075 = vmatmul.bf16.gmra.mxu0 %v6036
  %v6076 = vpop.f32.mrf.mxu0
  %v6077 = vadd.f32 0.0, %v6076
  %v6078 = vpop.f32.mrf.mxu0
  %v6079 = vadd.f32 0.0, %v6078
  %6080 = vmatmul.bf16.gmra.mxu0 %v6039
  %v6081 = vpop.f32.mrf.mxu0
  %v6082 = vadd.f32 0.0, %v6081
  %v6083 = vpop.f32.mrf.mxu0
  %v6084 = vadd.f32 0.0, %v6083
  %6085 = vmatmul.bf16.gmra.mxu0 %v6042
  %v6086 = vpop.f32.mrf.mxu0
  %v6087 = vadd.f32 0.0, %v6086
  %v6088 = vpop.f32.mrf.mxu0
  %v6089 = vadd.f32 0.0, %v6088
  %6090 = vmatmul.bf16.gmra.mxu0 %v6045
  %v6091 = vpop.f32.mrf.mxu0
  %v6092 = vadd.f32 0.0, %v6091
  %v6093 = vpop.f32.mrf.mxu0
  %v6094 = vadd.f32 0.0, %v6093
  %6095 = vdwg.mxu0
  %v6096 = vadd.f32 %v4943, %v6057
  %v6097 = vadd.f32 %v4944, %v6059
  %v6098 = vadd.f32 %v4945, %v6062
  %v6099 = vadd.f32 %v4946, %v6064
  %v6100 = vadd.f32 %v4947, %v6067
  %v6101 = vadd.f32 %v4948, %v6069
  %v6102 = vadd.f32 %v4949, %v6072
  %v6103 = vadd.f32 %v4950, %v6074
  %v6104 = vadd.f32 %v4951, %v6077
  %v6105 = vadd.f32 %v4952, %v6079
  %v6106 = vadd.f32 %v4953, %v6082
  %v6107 = vadd.f32 %v4954, %v6084
  %v6108 = vadd.f32 %v4955, %v6087
  %v6109 = vadd.f32 %v4956, %v6089
  %v6110 = vadd.f32 %v4957, %v6092
  %v6111 = vadd.f32 %v4958, %v6094
  %v6112 = vadd.f32 %v3703, %v6096
  %v6113 = vadd.f32 %v3704, %v6097
  %v6114 = vadd.f32 %v3705, %v6098
  %v6115 = vadd.f32 %v3706, %v6099
  %v6116 = vadd.f32 %v3707, %v6100
  %v6117 = vadd.f32 %v3708, %v6101
  %v6118 = vadd.f32 %v3709, %v6102
  %v6119 = vadd.f32 %v3710, %v6103
  %v6120 = vadd.f32 %v3711, %v6104
  %v6121 = vadd.f32 %v3712, %v6105
  %v6122 = vadd.f32 %v3713, %v6106
  %v6123 = vadd.f32 %v3714, %v6107
  %v6124 = vadd.f32 %v3715, %v6108
  %v6125 = vadd.f32 %v3716, %v6109
  %v6126 = vadd.f32 %v3717, %v6110
  %v6127 = vadd.f32 %v3718, %v6111
  %v6128 = vsel %vm223, %v6112, 0.0
  %6129 = vadd.xlane.f32.xlu0 %v6128
  %v6130 = vpop.xlane.xlu0 %6129
  %v6131 = vsel %vm223, %v6113, 0.0
  %6132 = vadd.xlane.f32.xlu0 %v6131
  %v6133 = vpop.xlane.xlu0 %6132
  %v6134 = vsel %vm223, %v6114, 0.0
  %6135 = vadd.xlane.f32.xlu0 %v6134
  %v6136 = vpop.xlane.xlu0 %6135
  %v6137 = vsel %vm223, %v6115, 0.0
  %6138 = vadd.xlane.f32.xlu0 %v6137
  %v6139 = vpop.xlane.xlu0 %6138
  %v6140 = vsel %vm223, %v6116, 0.0
  %6141 = vadd.xlane.f32.xlu0 %v6140
  %v6142 = vpop.xlane.xlu0 %6141
  %v6143 = vsel %vm223, %v6117, 0.0
  %6144 = vadd.xlane.f32.xlu0 %v6143
  %v6145 = vpop.xlane.xlu0 %6144
  %v6146 = vsel %vm223, %v6118, 0.0
  %6147 = vadd.xlane.f32.xlu0 %v6146
  %v6148 = vpop.xlane.xlu0 %6147
  %v6149 = vsel %vm223, %v6119, 0.0
  %6150 = vadd.xlane.f32.xlu0 %v6149
  %v6151 = vpop.xlane.xlu0 %6150
  %v6152 = vsel %vm223, %v6120, 0.0
  %6153 = vadd.xlane.f32.xlu0 %v6152
  %v6154 = vpop.xlane.xlu0 %6153
  %v6155 = vsel %vm223, %v6121, 0.0
  %6156 = vadd.xlane.f32.xlu0 %v6155
  %v6157 = vpop.xlane.xlu0 %6156
  %v6158 = vsel %vm223, %v6122, 0.0
  %6159 = vadd.xlane.f32.xlu0 %v6158
  %v6160 = vpop.xlane.xlu0 %6159
  %v6161 = vsel %vm223, %v6123, 0.0
  %6162 = vadd.xlane.f32.xlu0 %v6161
  %v6163 = vpop.xlane.xlu0 %6162
  %v6164 = vsel %vm223, %v6124, 0.0
  %6165 = vadd.xlane.f32.xlu0 %v6164
  %v6166 = vpop.xlane.xlu0 %6165
  %v6167 = vsel %vm223, %v6125, 0.0
  %6168 = vadd.xlane.f32.xlu0 %v6167
  %v6169 = vpop.xlane.xlu0 %6168
  %v6170 = vsel %vm223, %v6126, 0.0
  %6171 = vadd.xlane.f32.xlu0 %v6170
  %v6172 = vpop.xlane.xlu0 %6171
  %v6173 = vsel %vm223, %v6127, 0.0
  %6174 = vadd.xlane.f32.xlu0 %v6173
  %v6175 = vpop.xlane.xlu0 %6174
  %v6176 = vmul.f32 %v6130, %v2663
  %v6177 = vmul.f32 %v6133, %v2663
  %v6178 = vmul.f32 %v6136, %v2663
  %v6179 = vmul.f32 %v6139, %v2663
  %v6180 = vmul.f32 %v6142, %v2663
  %v6181 = vmul.f32 %v6145, %v2663
  %v6182 = vmul.f32 %v6148, %v2663
  %v6183 = vmul.f32 %v6151, %v2663
  %v6184 = vmul.f32 %v6154, %v2663
  %v6185 = vmul.f32 %v6157, %v2663
  %v6186 = vmul.f32 %v6160, %v2663
  %v6187 = vmul.f32 %v6163, %v2663
  %v6188 = vmul.f32 %v6166, %v2663
  %v6189 = vmul.f32 %v6169, %v2663
  %v6190 = vmul.f32 %v6172, %v2663
  %v6191 = vmul.f32 %v6175, %v2663
  %v6192 = vsub.f32 %v6112, %v6176
  %v6193 = vsub.f32 %v6113, %v6177
  %v6194 = vsub.f32 %v6114, %v6178
  %v6195 = vsub.f32 %v6115, %v6179
  %v6196 = vsub.f32 %v6116, %v6180
  %v6197 = vsub.f32 %v6117, %v6181
  %v6198 = vsub.f32 %v6118, %v6182
  %v6199 = vsub.f32 %v6119, %v6183
  %v6200 = vsub.f32 %v6120, %v6184
  %v6201 = vsub.f32 %v6121, %v6185
  %v6202 = vsub.f32 %v6122, %v6186
  %v6203 = vsub.f32 %v6123, %v6187
  %v6204 = vsub.f32 %v6124, %v6188
  %v6205 = vsub.f32 %v6125, %v6189
  %v6206 = vsub.f32 %v6126, %v6190
  %v6207 = vsub.f32 %v6127, %v6191
  %v6208 = vmul.f32 %v6192, %v6192
  %v6209 = vmul.f32 %v6193, %v6193
  %v6210 = vmul.f32 %v6194, %v6194
  %v6211 = vmul.f32 %v6195, %v6195
  %v6212 = vmul.f32 %v6196, %v6196
  %v6213 = vmul.f32 %v6197, %v6197
  %v6214 = vmul.f32 %v6198, %v6198
  %v6215 = vmul.f32 %v6199, %v6199
  %v6216 = vmul.f32 %v6200, %v6200
  %v6217 = vmul.f32 %v6201, %v6201
  %v6218 = vmul.f32 %v6202, %v6202
  %v6219 = vmul.f32 %v6203, %v6203
  %v6220 = vmul.f32 %v6204, %v6204
  %v6221 = vmul.f32 %v6205, %v6205
  %v6222 = vmul.f32 %v6206, %v6206
  %v6223 = vmul.f32 %v6207, %v6207
  %v6224 = vsel %vm223, %v6208, 0.0
  %6225 = vadd.xlane.f32.xlu0 %v6224
  %v6226 = vpop.xlane.xlu0 %6225
  %v6227 = vsel %vm223, %v6209, 0.0
  %6228 = vadd.xlane.f32.xlu0 %v6227
  %v6229 = vpop.xlane.xlu0 %6228
  %v6230 = vsel %vm223, %v6210, 0.0
  %6231 = vadd.xlane.f32.xlu0 %v6230
  %v6232 = vpop.xlane.xlu0 %6231
  %v6233 = vsel %vm223, %v6211, 0.0
  %6234 = vadd.xlane.f32.xlu0 %v6233
  %v6235 = vpop.xlane.xlu0 %6234
  %v6236 = vsel %vm223, %v6212, 0.0
  %6237 = vadd.xlane.f32.xlu0 %v6236
  %v6238 = vpop.xlane.xlu0 %6237
  %v6239 = vsel %vm223, %v6213, 0.0
  %6240 = vadd.xlane.f32.xlu0 %v6239
  %v6241 = vpop.xlane.xlu0 %6240
  %v6242 = vsel %vm223, %v6214, 0.0
  %6243 = vadd.xlane.f32.xlu0 %v6242
  %v6244 = vpop.xlane.xlu0 %6243
  %v6245 = vsel %vm223, %v6215, 0.0
  %6246 = vadd.xlane.f32.xlu0 %v6245
  %v6247 = vpop.xlane.xlu0 %6246
  %v6248 = vsel %vm223, %v6216, 0.0
  %6249 = vadd.xlane.f32.xlu0 %v6248
  %v6250 = vpop.xlane.xlu0 %6249
  %v6251 = vsel %vm223, %v6217, 0.0
  %6252 = vadd.xlane.f32.xlu0 %v6251
  %v6253 = vpop.xlane.xlu0 %6252
  %v6254 = vsel %vm223, %v6218, 0.0
  %6255 = vadd.xlane.f32.xlu0 %v6254
  %v6256 = vpop.xlane.xlu0 %6255
  %v6257 = vsel %vm223, %v6219, 0.0
  %6258 = vadd.xlane.f32.xlu0 %v6257
  %v6259 = vpop.xlane.xlu0 %6258
  %v6260 = vsel %vm223, %v6220, 0.0
  %6261 = vadd.xlane.f32.xlu0 %v6260
  %v6262 = vpop.xlane.xlu0 %6261
  %v6263 = vsel %vm223, %v6221, 0.0
  %6264 = vadd.xlane.f32.xlu0 %v6263
  %v6265 = vpop.xlane.xlu0 %6264
  %v6266 = vsel %vm223, %v6222, 0.0
  %6267 = vadd.xlane.f32.xlu0 %v6266
  %v6268 = vpop.xlane.xlu0 %6267
  %v6269 = vsel %vm223, %v6223, 0.0
  %6270 = vadd.xlane.f32.xlu0 %v6269
  %v6271 = vpop.xlane.xlu0 %6270
  %v6272 = vmul.f32 %v6226, %v2663
  %v6273 = vmul.f32 %v6229, %v2663
  %v6274 = vmul.f32 %v6232, %v2663
  %v6275 = vmul.f32 %v6235, %v2663
  %v6276 = vmul.f32 %v6238, %v2663
  %v6277 = vmul.f32 %v6241, %v2663
  %v6278 = vmul.f32 %v6244, %v2663
  %v6279 = vmul.f32 %v6247, %v2663
  %v6280 = vmul.f32 %v6250, %v2663
  %v6281 = vmul.f32 %v6253, %v2663
  %v6282 = vmul.f32 %v6256, %v2663
  %v6283 = vmul.f32 %v6259, %v2663
  %v6284 = vmul.f32 %v6262, %v2663
  %v6285 = vmul.f32 %v6265, %v2663
  %v6286 = vmul.f32 %v6268, %v2663
  %v6287 = vmul.f32 %v6271, %v2663
  %v6288 = vadd.f32 %v6272, 1e-05
  %v6289 = vadd.f32 %v6273, 1e-05
  %v6290 = vadd.f32 %v6274, 1e-05
  %v6291 = vadd.f32 %v6275, 1e-05
  %v6292 = vadd.f32 %v6276, 1e-05
  %v6293 = vadd.f32 %v6277, 1e-05
  %v6294 = vadd.f32 %v6278, 1e-05
  %v6295 = vadd.f32 %v6279, 1e-05
  %v6296 = vadd.f32 %v6280, 1e-05
  %v6297 = vadd.f32 %v6281, 1e-05
  %v6298 = vadd.f32 %v6282, 1e-05
  %v6299 = vadd.f32 %v6283, 1e-05
  %v6300 = vadd.f32 %v6284, 1e-05
  %v6301 = vadd.f32 %v6285, 1e-05
  %v6302 = vadd.f32 %v6286, 1e-05
  %v6303 = vadd.f32 %v6287, 1e-05
  %v6304 = vrsqrt.pop %v6288
  %v6305 = vmul.f32 %v6304, %v6288
  %v6306 = vmul.f32 %v6305, %v6304
  %v6307 = vmul.f32 0.5, %v6306
  %v6308 = vsub.f32 1.5, %v6307
  %v6309 = vmul.f32 %v6304, %v6308
  %vm6310 = vweird.f32 %v6288
  %vm6311 = vweird.f32 %v6304
  %vm6312 = vmor %vm6310, %vm6311
  %v6313 = vsel %vm6312, %v6304, %v6309
  %v6314 = vrsqrt.pop %v6289
  %v6315 = vmul.f32 %v6314, %v6289
  %v6316 = vmul.f32 %v6315, %v6314
  %v6317 = vmul.f32 0.5, %v6316
  %v6318 = vsub.f32 1.5, %v6317
  %v6319 = vmul.f32 %v6314, %v6318
  %vm6320 = vweird.f32 %v6289
  %vm6321 = vweird.f32 %v6314
  %vm6322 = vmor %vm6320, %vm6321
  %v6323 = vsel %vm6322, %v6314, %v6319
  %v6324 = vrsqrt.pop %v6290
  %v6325 = vmul.f32 %v6324, %v6290
  %v6326 = vmul.f32 %v6325, %v6324
  %v6327 = vmul.f32 0.5, %v6326
  %v6328 = vsub.f32 1.5, %v6327
  %v6329 = vmul.f32 %v6324, %v6328
  %vm6330 = vweird.f32 %v6290
  %vm6331 = vweird.f32 %v6324
  %vm6332 = vmor %vm6330, %vm6331
  %v6333 = vsel %vm6332, %v6324, %v6329
  %v6334 = vrsqrt.pop %v6291
  %v6335 = vmul.f32 %v6334, %v6291
  %v6336 = vmul.f32 %v6335, %v6334
  %v6337 = vmul.f32 0.5, %v6336
  %v6338 = vsub.f32 1.5, %v6337
  %v6339 = vmul.f32 %v6334, %v6338
  %vm6340 = vweird.f32 %v6291
  %vm6341 = vweird.f32 %v6334
  %vm6342 = vmor %vm6340, %vm6341
  %v6343 = vsel %vm6342, %v6334, %v6339
  %v6344 = vrsqrt.pop %v6292
  %v6345 = vmul.f32 %v6344, %v6292
  %v6346 = vmul.f32 %v6345, %v6344
  %v6347 = vmul.f32 0.5, %v6346
  %v6348 = vsub.f32 1.5, %v6347
  %v6349 = vmul.f32 %v6344, %v6348
  %vm6350 = vweird.f32 %v6292
  %vm6351 = vweird.f32 %v6344
  %vm6352 = vmor %vm6350, %vm6351
  %v6353 = vsel %vm6352, %v6344, %v6349
  %v6354 = vrsqrt.pop %v6293
  %v6355 = vmul.f32 %v6354, %v6293
  %v6356 = vmul.f32 %v6355, %v6354
  %v6357 = vmul.f32 0.5, %v6356
  %v6358 = vsub.f32 1.5, %v6357
  %v6359 = vmul.f32 %v6354, %v6358
  %vm6360 = vweird.f32 %v6293
  %vm6361 = vweird.f32 %v6354
  %vm6362 = vmor %vm6360, %vm6361
  %v6363 = vsel %vm6362, %v6354, %v6359
  %v6364 = vrsqrt.pop %v6294
  %v6365 = vmul.f32 %v6364, %v6294
  %v6366 = vmul.f32 %v6365, %v6364
  %v6367 = vmul.f32 0.5, %v6366
  %v6368 = vsub.f32 1.5, %v6367
  %v6369 = vmul.f32 %v6364, %v6368
  %vm6370 = vweird.f32 %v6294
  %vm6371 = vweird.f32 %v6364
  %vm6372 = vmor %vm6370, %vm6371
  %v6373 = vsel %vm6372, %v6364, %v6369
  %v6374 = vrsqrt.pop %v6295
  %v6375 = vmul.f32 %v6374, %v6295
  %v6376 = vmul.f32 %v6375, %v6374
  %v6377 = vmul.f32 0.5, %v6376
  %v6378 = vsub.f32 1.5, %v6377
  %v6379 = vmul.f32 %v6374, %v6378
  %vm6380 = vweird.f32 %v6295
  %vm6381 = vweird.f32 %v6374
  %vm6382 = vmor %vm6380, %vm6381
  %v6383 = vsel %vm6382, %v6374, %v6379
  %v6384 = vrsqrt.pop %v6296
  %v6385 = vmul.f32 %v6384, %v6296
  %v6386 = vmul.f32 %v6385, %v6384
  %v6387 = vmul.f32 0.5, %v6386
  %v6388 = vsub.f32 1.5, %v6387
  %v6389 = vmul.f32 %v6384, %v6388
  %vm6390 = vweird.f32 %v6296
  %vm6391 = vweird.f32 %v6384
  %vm6392 = vmor %vm6390, %vm6391
  %v6393 = vsel %vm6392, %v6384, %v6389
  %v6394 = vrsqrt.pop %v6297
  %v6395 = vmul.f32 %v6394, %v6297
  %v6396 = vmul.f32 %v6395, %v6394
  %v6397 = vmul.f32 0.5, %v6396
  %v6398 = vsub.f32 1.5, %v6397
  %v6399 = vmul.f32 %v6394, %v6398
  %vm6400 = vweird.f32 %v6297
  %vm6401 = vweird.f32 %v6394
  %vm6402 = vmor %vm6400, %vm6401
  %v6403 = vsel %vm6402, %v6394, %v6399
  %v6404 = vrsqrt.pop %v6298
  %v6405 = vmul.f32 %v6404, %v6298
  %v6406 = vmul.f32 %v6405, %v6404
  %v6407 = vmul.f32 0.5, %v6406
  %v6408 = vsub.f32 1.5, %v6407
  %v6409 = vmul.f32 %v6404, %v6408
  %vm6410 = vweird.f32 %v6298
  %vm6411 = vweird.f32 %v6404
  %vm6412 = vmor %vm6410, %vm6411
  %v6413 = vsel %vm6412, %v6404, %v6409
  %v6414 = vrsqrt.pop %v6299
  %v6415 = vmul.f32 %v6414, %v6299
  %v6416 = vmul.f32 %v6415, %v6414
  %v6417 = vmul.f32 0.5, %v6416
  %v6418 = vsub.f32 1.5, %v6417
  %v6419 = vmul.f32 %v6414, %v6418
  %vm6420 = vweird.f32 %v6299
  %vm6421 = vweird.f32 %v6414
  %vm6422 = vmor %vm6420, %vm6421
  %v6423 = vsel %vm6422, %v6414, %v6419
  %v6424 = vrsqrt.pop %v6300
  %v6425 = vmul.f32 %v6424, %v6300
  %v6426 = vmul.f32 %v6425, %v6424
  %v6427 = vmul.f32 0.5, %v6426
  %v6428 = vsub.f32 1.5, %v6427
  %v6429 = vmul.f32 %v6424, %v6428
  %vm6430 = vweird.f32 %v6300
  %vm6431 = vweird.f32 %v6424
  %vm6432 = vmor %vm6430, %vm6431
  %v6433 = vsel %vm6432, %v6424, %v6429
  %v6434 = vrsqrt.pop %v6301
  %v6435 = vmul.f32 %v6434, %v6301
  %v6436 = vmul.f32 %v6435, %v6434
  %v6437 = vmul.f32 0.5, %v6436
  %v6438 = vsub.f32 1.5, %v6437
  %v6439 = vmul.f32 %v6434, %v6438
  %vm6440 = vweird.f32 %v6301
  %vm6441 = vweird.f32 %v6434
  %vm6442 = vmor %vm6440, %vm6441
  %v6443 = vsel %vm6442, %v6434, %v6439
  %v6444 = vrsqrt.pop %v6302
  %v6445 = vmul.f32 %v6444, %v6302
  %v6446 = vmul.f32 %v6445, %v6444
  %v6447 = vmul.f32 0.5, %v6446
  %v6448 = vsub.f32 1.5, %v6447
  %v6449 = vmul.f32 %v6444, %v6448
  %vm6450 = vweird.f32 %v6302
  %vm6451 = vweird.f32 %v6444
  %vm6452 = vmor %vm6450, %vm6451
  %v6453 = vsel %vm6452, %v6444, %v6449
  %v6454 = vrsqrt.pop %v6303
  %v6455 = vmul.f32 %v6454, %v6303
  %v6456 = vmul.f32 %v6455, %v6454
  %v6457 = vmul.f32 0.5, %v6456
  %v6458 = vsub.f32 1.5, %v6457
  %v6459 = vmul.f32 %v6454, %v6458
  %vm6460 = vweird.f32 %v6303
  %vm6461 = vweird.f32 %v6454
  %vm6462 = vmor %vm6460, %vm6461
  %v6463 = vsel %vm6462, %v6454, %v6459
  %v6464 = vmul.f32 %v6192, %v6313
  %v6465 = vmul.f32 %v6193, %v6323
  %v6466 = vmul.f32 %v6194, %v6333
  %v6467 = vmul.f32 %v6195, %v6343
  %v6468 = vmul.f32 %v6196, %v6353
  %v6469 = vmul.f32 %v6197, %v6363
  %v6470 = vmul.f32 %v6198, %v6373
  %v6471 = vmul.f32 %v6199, %v6383
  %v6472 = vmul.f32 %v6200, %v6393
  %v6473 = vmul.f32 %v6201, %v6403
  %v6474 = vmul.f32 %v6202, %v6413
  %v6475 = vmul.f32 %v6203, %v6423
  %v6476 = vmul.f32 %v6204, %v6433
  %v6477 = vmul.f32 %v6205, %v6443
  %v6478 = vmul.f32 %v6206, %v6453
  %v6479 = vmul.f32 %v6207, %v6463
  %v6480 = vperm.slane %v3772, 2
  %v6481 = vmul.f32 %v6464, %v6480
  %v6482 = vmul.f32 %v6465, %v6480
  %v6483 = vmul.f32 %v6466, %v6480
  %v6484 = vmul.f32 %v6467, %v6480
  %v6485 = vmul.f32 %v6468, %v6480
  %v6486 = vmul.f32 %v6469, %v6480
  %v6487 = vmul.f32 %v6470, %v6480
  %v6488 = vmul.f32 %v6471, %v6480
  %v6489 = vmul.f32 %v6472, %v6480
  %v6490 = vmul.f32 %v6473, %v6480
  %v6491 = vmul.f32 %v6474, %v6480
  %v6492 = vmul.f32 %v6475, %v6480
  %v6493 = vmul.f32 %v6476, %v6480
  %v6494 = vmul.f32 %v6477, %v6480
  %v6495 = vmul.f32 %v6478, %v6480
  %v6496 = vmul.f32 %v6479, %v6480
  %v6497 = vperm.slane %v3772, 3
  %v6498 = vadd.f32 %v6481, %v6497
  %v6499 = vadd.f32 %v6482, %v6497
  %v6500 = vadd.f32 %v6483, %v6497
  %v6501 = vadd.f32 %v6484, %v6497
  %v6502 = vadd.f32 %v6485, %v6497
  %v6503 = vadd.f32 %v6486, %v6497
  %v6504 = vadd.f32 %v6487, %v6497
  %v6505 = vadd.f32 %v6488, %v6497
  %v6506 = vadd.f32 %v6489, %v6497
  %v6507 = vadd.f32 %v6490, %v6497
  %v6508 = vadd.f32 %v6491, %v6497
  %v6509 = vadd.f32 %v6492, %v6497
  %v6510 = vadd.f32 %v6493, %v6497
  %v6511 = vadd.f32 %v6494, %v6497
  %v6512 = vadd.f32 %v6495, %v6497
  %v6513 = vadd.f32 %v6496, %v6497
  %v6514 = vpack.c.bf16 %v6499, %v6498
  %v6515 = vpack.c.bf16 %v6501, %v6500
  %v6516 = vpack.c.bf16 %v6503, %v6502
  %v6517 = vpack.c.bf16 %v6505, %v6504
  %v6518 = vpack.c.bf16 %v6507, %v6506
  %v6519 = vpack.c.bf16 %v6509, %v6508
  %v6520 = vpack.c.bf16 %v6511, %v6510
  %v6521 = vpack.c.bf16 %v6513, %v6512
  %v6523 = vperm.slane %v3761, 0
  %v6529 = vunpack.c.l.b16 %v3756
  %v6530 = vunpack.c.l.b16 %v3757
  %v6531 = vunpack.c.l.b16 %v3758
  %v6532 = vunpack.c.l.b16 %v3759
  %v6533 = vpack.c.b16 %v6530, %v6529
  %v6534 = vpack.c.b16 %v6532, %v6531
  %v6538 = vsel %vm223, %v6514, 0
  %v6541 = vsel %vm223, %v6515, 0
  %v6544 = vsel %vm223, %v6516, 0
  %v6547 = vsel %vm223, %v6517, 0
  %v6550 = vsel %vm223, %v6518, 0
  %v6553 = vsel %vm223, %v6519, 0
  %v6556 = vsel %vm223, %v6520, 0
  %v6559 = vsel %vm223, %v6521, 0
  %6561 = vmatpush.bf16.msra.mxu0 0
  %6562 = vmatpush.bf16.msra.mxu0 0
  %6563 = vmatpush.bf16.msra.mxu0 0
  %6564 = vmatpush.bf16.msra.mxu0 0
  %6565 = vmatpush.bf16.msra.mxu0 0
  %6566 = vmatpush.bf16.msra.mxu0 0
  %6567 = vmatpush.bf16.msra.mxu0 %v6534
  %6568 = vmatpush.bf16.msra.mxu0 %v6533
  %6569 = vmatmul.bf16.gmra.mxu0 %v6538
  %v6570 = vpop.f32.mrf.mxu0
  %v6571 = vadd.f32 %v6523, %v6570
  %v6572 = vpop.f32.mrf.mxu0
  %v6573 = vadd.f32 %v6523, %v6572
  %6574 = vmatmul.bf16.gmra.mxu0 %v6541
  %v6575 = vpop.f32.mrf.mxu0
  %v6576 = vadd.f32 %v6523, %v6575
  %v6577 = vpop.f32.mrf.mxu0
  %v6578 = vadd.f32 %v6523, %v6577
  %6579 = vmatmul.bf16.gmra.mxu0 %v6544
  %v6580 = vpop.f32.mrf.mxu0
  %v6581 = vadd.f32 %v6523, %v6580
  %v6582 = vpop.f32.mrf.mxu0
  %v6583 = vadd.f32 %v6523, %v6582
  %6584 = vmatmul.bf16.gmra.mxu0 %v6547
  %v6585 = vpop.f32.mrf.mxu0
  %v6586 = vadd.f32 %v6523, %v6585
  %v6587 = vpop.f32.mrf.mxu0
  %v6588 = vadd.f32 %v6523, %v6587
  %6589 = vmatmul.bf16.gmra.mxu0 %v6550
  %v6590 = vpop.f32.mrf.mxu0
  %v6591 = vadd.f32 %v6523, %v6590
  %v6592 = vpop.f32.mrf.mxu0
  %v6593 = vadd.f32 %v6523, %v6592
  %6594 = vmatmul.bf16.gmra.mxu0 %v6553
  %v6595 = vpop.f32.mrf.mxu0
  %v6596 = vadd.f32 %v6523, %v6595
  %v6597 = vpop.f32.mrf.mxu0
  %v6598 = vadd.f32 %v6523, %v6597
  %6599 = vmatmul.bf16.gmra.mxu0 %v6556
  %v6600 = vpop.f32.mrf.mxu0
  %v6601 = vadd.f32 %v6523, %v6600
  %v6602 = vpop.f32.mrf.mxu0
  %v6603 = vadd.f32 %v6523, %v6602
  %6604 = vmatmul.bf16.gmra.mxu0 %v6559
  %v6605 = vpop.f32.mrf.mxu0
  %v6606 = vadd.f32 %v6523, %v6605
  %v6607 = vpop.f32.mrf.mxu0
  %v6608 = vadd.f32 %v6523, %v6607
  %6609 = vdwg.mxu0
  %v6610 = vmax.f32 %v6571, 0.0
  %v6611 = vmax.f32 %v6573, 0.0
  %v6612 = vmax.f32 %v6576, 0.0
  %v6613 = vmax.f32 %v6578, 0.0
  %v6614 = vmax.f32 %v6581, 0.0
  %v6615 = vmax.f32 %v6583, 0.0
  %v6616 = vmax.f32 %v6586, 0.0
  %v6617 = vmax.f32 %v6588, 0.0
  %v6618 = vmax.f32 %v6591, 0.0
  %v6619 = vmax.f32 %v6593, 0.0
  %v6620 = vmax.f32 %v6596, 0.0
  %v6621 = vmax.f32 %v6598, 0.0
  %v6622 = vmax.f32 %v6601, 0.0
  %v6623 = vmax.f32 %v6603, 0.0
  %v6624 = vmax.f32 %v6606, 0.0
  %v6625 = vmax.f32 %v6608, 0.0
  %v6626 = vpack.c.bf16 %v6611, %v6610
  %v6627 = vpack.c.bf16 %v6613, %v6612
  %v6628 = vpack.c.bf16 %v6615, %v6614
  %v6629 = vpack.c.bf16 %v6617, %v6616
  %v6630 = vpack.c.bf16 %v6619, %v6618
  %v6631 = vpack.c.bf16 %v6621, %v6620
  %v6632 = vpack.c.bf16 %v6623, %v6622
  %v6633 = vpack.c.bf16 %v6625, %v6624
  %v6634 = vperm.slane %v3772, 1
  %v6643 = vunpack.c.l.b16 %v3763
  %v6644 = vunpack.c.l.b16 %v3764
  %v6645 = vunpack.c.l.b16 %v3765
  %v6646 = vunpack.c.l.b16 %v3766
  %v6647 = vunpack.c.l.b16 %v3767
  %v6648 = vunpack.c.l.b16 %v3768
  %v6649 = vunpack.c.l.b16 %v3769
  %v6650 = vunpack.c.l.b16 %v3770
  %v6651 = vpack.c.b16 %v6644, %v6643
  %v6652 = vpack.c.b16 %v6646, %v6645
  %v6653 = vpack.c.b16 %v6648, %v6647
  %v6654 = vpack.c.b16 %v6650, %v6649
  %v6660 = vsel %vm3147, %v6626, 0
  %v6663 = vsel %vm3147, %v6627, 0
  %v6666 = vsel %vm3147, %v6628, 0
  %v6669 = vsel %vm3147, %v6629, 0
  %v6672 = vsel %vm3147, %v6630, 0
  %v6675 = vsel %vm3147, %v6631, 0
  %v6678 = vsel %vm3147, %v6632, 0
  %v6681 = vsel %vm3147, %v6633, 0
  %6683 = vmatpush.bf16.msra.mxu0 0
  %6684 = vmatpush.bf16.msra.mxu0 0
  %6685 = vmatpush.bf16.msra.mxu0 0
  %6686 = vmatpush.bf16.msra.mxu0 0
  %6687 = vmatpush.bf16.msra.mxu0 %v6654
  %6688 = vmatpush.bf16.msra.mxu0 %v6653
  %6689 = vmatpush.bf16.msra.mxu0 %v6652
  %6690 = vmatpush.bf16.msra.mxu0 %v6651
  %6691 = vmatmul.bf16.gmra.mxu0 %v6660
  %v6692 = vpop.f32.mrf.mxu0
  %v6693 = vadd.f32 %v6634, %v6692
  %v6694 = vpop.f32.mrf.mxu0
  %v6695 = vadd.f32 %v6634, %v6694
  %6696 = vmatmul.bf16.gmra.mxu0 %v6663
  %v6697 = vpop.f32.mrf.mxu0
  %v6698 = vadd.f32 %v6634, %v6697
  %v6699 = vpop.f32.mrf.mxu0
  %v6700 = vadd.f32 %v6634, %v6699
  %6701 = vmatmul.bf16.gmra.mxu0 %v6666
  %v6702 = vpop.f32.mrf.mxu0
  %v6703 = vadd.f32 %v6634, %v6702
  %v6704 = vpop.f32.mrf.mxu0
  %v6705 = vadd.f32 %v6634, %v6704
  %6706 = vmatmul.bf16.gmra.mxu0 %v6669
  %v6707 = vpop.f32.mrf.mxu0
  %v6708 = vadd.f32 %v6634, %v6707
  %v6709 = vpop.f32.mrf.mxu0
  %v6710 = vadd.f32 %v6634, %v6709
  %6711 = vmatmul.bf16.gmra.mxu0 %v6672
  %v6712 = vpop.f32.mrf.mxu0
  %v6713 = vadd.f32 %v6634, %v6712
  %v6714 = vpop.f32.mrf.mxu0
  %v6715 = vadd.f32 %v6634, %v6714
  %6716 = vmatmul.bf16.gmra.mxu0 %v6675
  %v6717 = vpop.f32.mrf.mxu0
  %v6718 = vadd.f32 %v6634, %v6717
  %v6719 = vpop.f32.mrf.mxu0
  %v6720 = vadd.f32 %v6634, %v6719
  %6721 = vmatmul.bf16.gmra.mxu0 %v6678
  %v6722 = vpop.f32.mrf.mxu0
  %v6723 = vadd.f32 %v6634, %v6722
  %v6724 = vpop.f32.mrf.mxu0
  %v6725 = vadd.f32 %v6634, %v6724
  %6726 = vmatmul.bf16.gmra.mxu0 %v6681
  %v6727 = vpop.f32.mrf.mxu0
  %v6728 = vadd.f32 %v6634, %v6727
  %v6729 = vpop.f32.mrf.mxu0
  %v6730 = vadd.f32 %v6634, %v6729
  %6731 = vdwg.mxu0
  %v6732 = vadd.f32 %v6498, %v6693
  %v6733 = vadd.f32 %v6499, %v6695
  %v6734 = vadd.f32 %v6500, %v6698
  %v6735 = vadd.f32 %v6501, %v6700
  %v6736 = vadd.f32 %v6502, %v6703
  %v6737 = vadd.f32 %v6503, %v6705
  %v6738 = vadd.f32 %v6504, %v6708
  %v6739 = vadd.f32 %v6505, %v6710
  %v6740 = vadd.f32 %v6506, %v6713
  %v6741 = vadd.f32 %v6507, %v6715
  %v6742 = vadd.f32 %v6508, %v6718
  %v6743 = vadd.f32 %v6509, %v6720
  %v6744 = vadd.f32 %v6510, %v6723
  %v6745 = vadd.f32 %v6511, %v6725
  %v6746 = vadd.f32 %v6512, %v6728
  %v6747 = vadd.f32 %v6513, %v6730
  %v6748 = vsel %vm223, %v6732, 0.0
  %6749 = vadd.xlane.f32.xlu0 %v6748
  %v6750 = vpop.xlane.xlu0 %6749
  %v6751 = vsel %vm223, %v6733, 0.0
  %6752 = vadd.xlane.f32.xlu0 %v6751
  %v6753 = vpop.xlane.xlu0 %6752
  %v6754 = vsel %vm223, %v6734, 0.0
  %6755 = vadd.xlane.f32.xlu0 %v6754
  %v6756 = vpop.xlane.xlu0 %6755
  %v6757 = vsel %vm223, %v6735, 0.0
  %6758 = vadd.xlane.f32.xlu0 %v6757
  %v6759 = vpop.xlane.xlu0 %6758
  %v6760 = vsel %vm223, %v6736, 0.0
  %6761 = vadd.xlane.f32.xlu0 %v6760
  %v6762 = vpop.xlane.xlu0 %6761
  %v6763 = vsel %vm223, %v6737, 0.0
  %6764 = vadd.xlane.f32.xlu0 %v6763
  %v6765 = vpop.xlane.xlu0 %6764
  %v6766 = vsel %vm223, %v6738, 0.0
  %6767 = vadd.xlane.f32.xlu0 %v6766
  %v6768 = vpop.xlane.xlu0 %6767
  %v6769 = vsel %vm223, %v6739, 0.0
  %6770 = vadd.xlane.f32.xlu0 %v6769
  %v6771 = vpop.xlane.xlu0 %6770
  %v6772 = vsel %vm223, %v6740, 0.0
  %6773 = vadd.xlane.f32.xlu0 %v6772
  %v6774 = vpop.xlane.xlu0 %6773
  %v6775 = vsel %vm223, %v6741, 0.0
  %6776 = vadd.xlane.f32.xlu0 %v6775
  %v6777 = vpop.xlane.xlu0 %6776
  %v6778 = vsel %vm223, %v6742, 0.0
  %6779 = vadd.xlane.f32.xlu0 %v6778
  %v6780 = vpop.xlane.xlu0 %6779
  %v6781 = vsel %vm223, %v6743, 0.0
  %6782 = vadd.xlane.f32.xlu0 %v6781
  %v6783 = vpop.xlane.xlu0 %6782
  %v6784 = vsel %vm223, %v6744, 0.0
  %6785 = vadd.xlane.f32.xlu0 %v6784
  %v6786 = vpop.xlane.xlu0 %6785
  %v6787 = vsel %vm223, %v6745, 0.0
  %6788 = vadd.xlane.f32.xlu0 %v6787
  %v6789 = vpop.xlane.xlu0 %6788
  %v6790 = vsel %vm223, %v6746, 0.0
  %6791 = vadd.xlane.f32.xlu0 %v6790
  %v6792 = vpop.xlane.xlu0 %6791
  %v6793 = vsel %vm223, %v6747, 0.0
  %6794 = vadd.xlane.f32.xlu0 %v6793
  %v6795 = vpop.xlane.xlu0 %6794
  %v6796 = vmul.f32 %v6750, %v2663
  %v6797 = vmul.f32 %v6753, %v2663
  %v6798 = vmul.f32 %v6756, %v2663
  %v6799 = vmul.f32 %v6759, %v2663
  %v6800 = vmul.f32 %v6762, %v2663
  %v6801 = vmul.f32 %v6765, %v2663
  %v6802 = vmul.f32 %v6768, %v2663
  %v6803 = vmul.f32 %v6771, %v2663
  %v6804 = vmul.f32 %v6774, %v2663
  %v6805 = vmul.f32 %v6777, %v2663
  %v6806 = vmul.f32 %v6780, %v2663
  %v6807 = vmul.f32 %v6783, %v2663
  %v6808 = vmul.f32 %v6786, %v2663
  %v6809 = vmul.f32 %v6789, %v2663
  %v6810 = vmul.f32 %v6792, %v2663
  %v6811 = vmul.f32 %v6795, %v2663
  %v6812 = vsub.f32 %v6732, %v6796
  %v6813 = vsub.f32 %v6733, %v6797
  %v6814 = vsub.f32 %v6734, %v6798
  %v6815 = vsub.f32 %v6735, %v6799
  %v6816 = vsub.f32 %v6736, %v6800
  %v6817 = vsub.f32 %v6737, %v6801
  %v6818 = vsub.f32 %v6738, %v6802
  %v6819 = vsub.f32 %v6739, %v6803
  %v6820 = vsub.f32 %v6740, %v6804
  %v6821 = vsub.f32 %v6741, %v6805
  %v6822 = vsub.f32 %v6742, %v6806
  %v6823 = vsub.f32 %v6743, %v6807
  %v6824 = vsub.f32 %v6744, %v6808
  %v6825 = vsub.f32 %v6745, %v6809
  %v6826 = vsub.f32 %v6746, %v6810
  %v6827 = vsub.f32 %v6747, %v6811
  %v6828 = vmul.f32 %v6812, %v6812
  %v6829 = vmul.f32 %v6813, %v6813
  %v6830 = vmul.f32 %v6814, %v6814
  %v6831 = vmul.f32 %v6815, %v6815
  %v6832 = vmul.f32 %v6816, %v6816
  %v6833 = vmul.f32 %v6817, %v6817
  %v6834 = vmul.f32 %v6818, %v6818
  %v6835 = vmul.f32 %v6819, %v6819
  %v6836 = vmul.f32 %v6820, %v6820
  %v6837 = vmul.f32 %v6821, %v6821
  %v6838 = vmul.f32 %v6822, %v6822
  %v6839 = vmul.f32 %v6823, %v6823
  %v6840 = vmul.f32 %v6824, %v6824
  %v6841 = vmul.f32 %v6825, %v6825
  %v6842 = vmul.f32 %v6826, %v6826
  %v6843 = vmul.f32 %v6827, %v6827
  %v6844 = vsel %vm223, %v6828, 0.0
  %6845 = vadd.xlane.f32.xlu0 %v6844
  %v6846 = vpop.xlane.xlu0 %6845
  %v6847 = vsel %vm223, %v6829, 0.0
  %6848 = vadd.xlane.f32.xlu0 %v6847
  %v6849 = vpop.xlane.xlu0 %6848
  %v6850 = vsel %vm223, %v6830, 0.0
  %6851 = vadd.xlane.f32.xlu0 %v6850
  %v6852 = vpop.xlane.xlu0 %6851
  %v6853 = vsel %vm223, %v6831, 0.0
  %6854 = vadd.xlane.f32.xlu0 %v6853
  %v6855 = vpop.xlane.xlu0 %6854
  %v6856 = vsel %vm223, %v6832, 0.0
  %6857 = vadd.xlane.f32.xlu0 %v6856
  %v6858 = vpop.xlane.xlu0 %6857
  %v6859 = vsel %vm223, %v6833, 0.0
  %6860 = vadd.xlane.f32.xlu0 %v6859
  %v6861 = vpop.xlane.xlu0 %6860
  %v6862 = vsel %vm223, %v6834, 0.0
  %6863 = vadd.xlane.f32.xlu0 %v6862
  %v6864 = vpop.xlane.xlu0 %6863
  %v6865 = vsel %vm223, %v6835, 0.0
  %6866 = vadd.xlane.f32.xlu0 %v6865
  %v6867 = vpop.xlane.xlu0 %6866
  %v6868 = vsel %vm223, %v6836, 0.0
  %6869 = vadd.xlane.f32.xlu0 %v6868
  %v6870 = vpop.xlane.xlu0 %6869
  %v6871 = vsel %vm223, %v6837, 0.0
  %6872 = vadd.xlane.f32.xlu0 %v6871
  %v6873 = vpop.xlane.xlu0 %6872
  %v6874 = vsel %vm223, %v6838, 0.0
  %6875 = vadd.xlane.f32.xlu0 %v6874
  %v6876 = vpop.xlane.xlu0 %6875
  %v6877 = vsel %vm223, %v6839, 0.0
  %6878 = vadd.xlane.f32.xlu0 %v6877
  %v6879 = vpop.xlane.xlu0 %6878
  %v6880 = vsel %vm223, %v6840, 0.0
  %6881 = vadd.xlane.f32.xlu0 %v6880
  %v6882 = vpop.xlane.xlu0 %6881
  %v6883 = vsel %vm223, %v6841, 0.0
  %6884 = vadd.xlane.f32.xlu0 %v6883
  %v6885 = vpop.xlane.xlu0 %6884
  %v6886 = vsel %vm223, %v6842, 0.0
  %6887 = vadd.xlane.f32.xlu0 %v6886
  %v6888 = vpop.xlane.xlu0 %6887
  %v6889 = vsel %vm223, %v6843, 0.0
  %6890 = vadd.xlane.f32.xlu0 %v6889
  %v6891 = vpop.xlane.xlu0 %6890
  %v6892 = vmul.f32 %v6846, %v2663
  %v6893 = vmul.f32 %v6849, %v2663
  %v6894 = vmul.f32 %v6852, %v2663
  %v6895 = vmul.f32 %v6855, %v2663
  %v6896 = vmul.f32 %v6858, %v2663
  %v6897 = vmul.f32 %v6861, %v2663
  %v6898 = vmul.f32 %v6864, %v2663
  %v6899 = vmul.f32 %v6867, %v2663
  %v6900 = vmul.f32 %v6870, %v2663
  %v6901 = vmul.f32 %v6873, %v2663
  %v6902 = vmul.f32 %v6876, %v2663
  %v6903 = vmul.f32 %v6879, %v2663
  %v6904 = vmul.f32 %v6882, %v2663
  %v6905 = vmul.f32 %v6885, %v2663
  %v6906 = vmul.f32 %v6888, %v2663
  %v6907 = vmul.f32 %v6891, %v2663
  %v6908 = vadd.f32 %v6892, 1e-05
  %v6909 = vadd.f32 %v6893, 1e-05
  %v6910 = vadd.f32 %v6894, 1e-05
  %v6911 = vadd.f32 %v6895, 1e-05
  %v6912 = vadd.f32 %v6896, 1e-05
  %v6913 = vadd.f32 %v6897, 1e-05
  %v6914 = vadd.f32 %v6898, 1e-05
  %v6915 = vadd.f32 %v6899, 1e-05
  %v6916 = vadd.f32 %v6900, 1e-05
  %v6917 = vadd.f32 %v6901, 1e-05
  %v6918 = vadd.f32 %v6902, 1e-05
  %v6919 = vadd.f32 %v6903, 1e-05
  %v6920 = vadd.f32 %v6904, 1e-05
  %v6921 = vadd.f32 %v6905, 1e-05
  %v6922 = vadd.f32 %v6906, 1e-05
  %v6923 = vadd.f32 %v6907, 1e-05
  %v6924 = vrsqrt.pop %v6908
  %v6925 = vmul.f32 %v6924, %v6908
  %v6926 = vmul.f32 %v6925, %v6924
  %v6927 = vmul.f32 0.5, %v6926
  %v6928 = vsub.f32 1.5, %v6927
  %v6929 = vmul.f32 %v6924, %v6928
  %vm6930 = vweird.f32 %v6908
  %vm6931 = vweird.f32 %v6924
  %vm6932 = vmor %vm6930, %vm6931
  %v6933 = vsel %vm6932, %v6924, %v6929
  %v6934 = vrsqrt.pop %v6909
  %v6935 = vmul.f32 %v6934, %v6909
  %v6936 = vmul.f32 %v6935, %v6934
  %v6937 = vmul.f32 0.5, %v6936
  %v6938 = vsub.f32 1.5, %v6937
  %v6939 = vmul.f32 %v6934, %v6938
  %vm6940 = vweird.f32 %v6909
  %vm6941 = vweird.f32 %v6934
  %vm6942 = vmor %vm6940, %vm6941
  %v6943 = vsel %vm6942, %v6934, %v6939
  %v6944 = vrsqrt.pop %v6910
  %v6945 = vmul.f32 %v6944, %v6910
  %v6946 = vmul.f32 %v6945, %v6944
  %v6947 = vmul.f32 0.5, %v6946
  %v6948 = vsub.f32 1.5, %v6947
  %v6949 = vmul.f32 %v6944, %v6948
  %vm6950 = vweird.f32 %v6910
  %vm6951 = vweird.f32 %v6944
  %vm6952 = vmor %vm6950, %vm6951
  %v6953 = vsel %vm6952, %v6944, %v6949
  %v6954 = vrsqrt.pop %v6911
  %v6955 = vmul.f32 %v6954, %v6911
  %v6956 = vmul.f32 %v6955, %v6954
  %v6957 = vmul.f32 0.5, %v6956
  %v6958 = vsub.f32 1.5, %v6957
  %v6959 = vmul.f32 %v6954, %v6958
  %vm6960 = vweird.f32 %v6911
  %vm6961 = vweird.f32 %v6954
  %vm6962 = vmor %vm6960, %vm6961
  %v6963 = vsel %vm6962, %v6954, %v6959
  %v6964 = vrsqrt.pop %v6912
  %v6965 = vmul.f32 %v6964, %v6912
  %v6966 = vmul.f32 %v6965, %v6964
  %v6967 = vmul.f32 0.5, %v6966
  %v6968 = vsub.f32 1.5, %v6967
  %v6969 = vmul.f32 %v6964, %v6968
  %vm6970 = vweird.f32 %v6912
  %vm6971 = vweird.f32 %v6964
  %vm6972 = vmor %vm6970, %vm6971
  %v6973 = vsel %vm6972, %v6964, %v6969
  %v6974 = vrsqrt.pop %v6913
  %v6975 = vmul.f32 %v6974, %v6913
  %v6976 = vmul.f32 %v6975, %v6974
  %v6977 = vmul.f32 0.5, %v6976
  %v6978 = vsub.f32 1.5, %v6977
  %v6979 = vmul.f32 %v6974, %v6978
  %vm6980 = vweird.f32 %v6913
  %vm6981 = vweird.f32 %v6974
  %vm6982 = vmor %vm6980, %vm6981
  %v6983 = vsel %vm6982, %v6974, %v6979
  %v6984 = vrsqrt.pop %v6914
  %v6985 = vmul.f32 %v6984, %v6914
  %v6986 = vmul.f32 %v6985, %v6984
  %v6987 = vmul.f32 0.5, %v6986
  %v6988 = vsub.f32 1.5, %v6987
  %v6989 = vmul.f32 %v6984, %v6988
  %vm6990 = vweird.f32 %v6914
  %vm6991 = vweird.f32 %v6984
  %vm6992 = vmor %vm6990, %vm6991
  %v6993 = vsel %vm6992, %v6984, %v6989
  %v6994 = vrsqrt.pop %v6915
  %v6995 = vmul.f32 %v6994, %v6915
  %v6996 = vmul.f32 %v6995, %v6994
  %v6997 = vmul.f32 0.5, %v6996
  %v6998 = vsub.f32 1.5, %v6997
  %v6999 = vmul.f32 %v6994, %v6998
  %vm7000 = vweird.f32 %v6915
  %vm7001 = vweird.f32 %v6994
  %vm7002 = vmor %vm7000, %vm7001
  %v7003 = vsel %vm7002, %v6994, %v6999
  %v7004 = vrsqrt.pop %v6916
  %v7005 = vmul.f32 %v7004, %v6916
  %v7006 = vmul.f32 %v7005, %v7004
  %v7007 = vmul.f32 0.5, %v7006
  %v7008 = vsub.f32 1.5, %v7007
  %v7009 = vmul.f32 %v7004, %v7008
  %vm7010 = vweird.f32 %v6916
  %vm7011 = vweird.f32 %v7004
  %vm7012 = vmor %vm7010, %vm7011
  %v7013 = vsel %vm7012, %v7004, %v7009
  %v7014 = vrsqrt.pop %v6917
  %v7015 = vmul.f32 %v7014, %v6917
  %v7016 = vmul.f32 %v7015, %v7014
  %v7017 = vmul.f32 0.5, %v7016
  %v7018 = vsub.f32 1.5, %v7017
  %v7019 = vmul.f32 %v7014, %v7018
  %vm7020 = vweird.f32 %v6917
  %vm7021 = vweird.f32 %v7014
  %vm7022 = vmor %vm7020, %vm7021
  %v7023 = vsel %vm7022, %v7014, %v7019
  %v7024 = vrsqrt.pop %v6918
  %v7025 = vmul.f32 %v7024, %v6918
  %v7026 = vmul.f32 %v7025, %v7024
  %v7027 = vmul.f32 0.5, %v7026
  %v7028 = vsub.f32 1.5, %v7027
  %v7029 = vmul.f32 %v7024, %v7028
  %vm7030 = vweird.f32 %v6918
  %vm7031 = vweird.f32 %v7024
  %vm7032 = vmor %vm7030, %vm7031
  %v7033 = vsel %vm7032, %v7024, %v7029
  %v7034 = vrsqrt.pop %v6919
  %v7035 = vmul.f32 %v7034, %v6919
  %v7036 = vmul.f32 %v7035, %v7034
  %v7037 = vmul.f32 0.5, %v7036
  %v7038 = vsub.f32 1.5, %v7037
  %v7039 = vmul.f32 %v7034, %v7038
  %vm7040 = vweird.f32 %v6919
  %vm7041 = vweird.f32 %v7034
  %vm7042 = vmor %vm7040, %vm7041
  %v7043 = vsel %vm7042, %v7034, %v7039
  %v7044 = vrsqrt.pop %v6920
  %v7045 = vmul.f32 %v7044, %v6920
  %v7046 = vmul.f32 %v7045, %v7044
  %v7047 = vmul.f32 0.5, %v7046
  %v7048 = vsub.f32 1.5, %v7047
  %v7049 = vmul.f32 %v7044, %v7048
  %vm7050 = vweird.f32 %v6920
  %vm7051 = vweird.f32 %v7044
  %vm7052 = vmor %vm7050, %vm7051
  %v7053 = vsel %vm7052, %v7044, %v7049
  %v7054 = vrsqrt.pop %v6921
  %v7055 = vmul.f32 %v7054, %v6921
  %v7056 = vmul.f32 %v7055, %v7054
  %v7057 = vmul.f32 0.5, %v7056
  %v7058 = vsub.f32 1.5, %v7057
  %v7059 = vmul.f32 %v7054, %v7058
  %vm7060 = vweird.f32 %v6921
  %vm7061 = vweird.f32 %v7054
  %vm7062 = vmor %vm7060, %vm7061
  %v7063 = vsel %vm7062, %v7054, %v7059
  %v7064 = vrsqrt.pop %v6922
  %v7065 = vmul.f32 %v7064, %v6922
  %v7066 = vmul.f32 %v7065, %v7064
  %v7067 = vmul.f32 0.5, %v7066
  %v7068 = vsub.f32 1.5, %v7067
  %v7069 = vmul.f32 %v7064, %v7068
  %vm7070 = vweird.f32 %v6922
  %vm7071 = vweird.f32 %v7064
  %vm7072 = vmor %vm7070, %vm7071
  %v7073 = vsel %vm7072, %v7064, %v7069
  %v7074 = vrsqrt.pop %v6923
  %v7075 = vmul.f32 %v7074, %v6923
  %v7076 = vmul.f32 %v7075, %v7074
  %v7077 = vmul.f32 0.5, %v7076
  %v7078 = vsub.f32 1.5, %v7077
  %v7079 = vmul.f32 %v7074, %v7078
  %vm7080 = vweird.f32 %v6923
  %vm7081 = vweird.f32 %v7074
  %vm7082 = vmor %vm7080, %vm7081
  %v7083 = vsel %vm7082, %v7074, %v7079
  %v7084 = vmul.f32 %v6812, %v6933
  %v7085 = vmul.f32 %v6813, %v6943
  %v7086 = vmul.f32 %v6814, %v6953
  %v7087 = vmul.f32 %v6815, %v6963
  %v7088 = vmul.f32 %v6816, %v6973
  %v7089 = vmul.f32 %v6817, %v6983
  %v7090 = vmul.f32 %v6818, %v6993
  %v7091 = vmul.f32 %v6819, %v7003
  %v7092 = vmul.f32 %v6820, %v7013
  %v7093 = vmul.f32 %v6821, %v7023
  %v7094 = vmul.f32 %v6822, %v7033
  %v7095 = vmul.f32 %v6823, %v7043
  %v7096 = vmul.f32 %v6824, %v7053
  %v7097 = vmul.f32 %v6825, %v7063
  %v7098 = vmul.f32 %v6826, %v7073
  %v7099 = vmul.f32 %v6827, %v7083
  %v7100 = vperm.slane %v3772, 4
  %v7101 = vmul.f32 %v7084, %v7100
  %v7102 = vmul.f32 %v7085, %v7100
  %v7103 = vmul.f32 %v7086, %v7100
  %v7104 = vmul.f32 %v7087, %v7100
  %v7105 = vmul.f32 %v7088, %v7100
  %v7106 = vmul.f32 %v7089, %v7100
  %v7107 = vmul.f32 %v7090, %v7100
  %v7108 = vmul.f32 %v7091, %v7100
  %v7109 = vmul.f32 %v7092, %v7100
  %v7110 = vmul.f32 %v7093, %v7100
  %v7111 = vmul.f32 %v7094, %v7100
  %v7112 = vmul.f32 %v7095, %v7100
  %v7113 = vmul.f32 %v7096, %v7100
  %v7114 = vmul.f32 %v7097, %v7100
  %v7115 = vmul.f32 %v7098, %v7100
  %v7116 = vmul.f32 %v7099, %v7100
  %v7117 = vperm.slane %v3772, 5
  %v7118 = vadd.f32 %v7101, %v7117
  %v7119 = vadd.f32 %v7102, %v7117
  %v7120 = vadd.f32 %v7103, %v7117
  %v7121 = vadd.f32 %v7104, %v7117
  %v7122 = vadd.f32 %v7105, %v7117
  %v7123 = vadd.f32 %v7106, %v7117
  %v7124 = vadd.f32 %v7107, %v7117
  %v7125 = vadd.f32 %v7108, %v7117
  %v7126 = vadd.f32 %v7109, %v7117
  %v7127 = vadd.f32 %v7110, %v7117
  %v7128 = vadd.f32 %v7111, %v7117
  %v7129 = vadd.f32 %v7112, %v7117
  %v7130 = vadd.f32 %v7113, %v7117
  %v7131 = vadd.f32 %v7114, %v7117
  %v7132 = vadd.f32 %v7115, %v7117
  %v7133 = vadd.f32 %v7116, %v7117
  %v7134 = vmul.f32 %v7118, %v3626
  %v7135 = vmul.f32 %v7119, %v3631
  %v7136 = vmul.f32 %v7120, %v3636
  %v7137 = vmul.f32 %v7121, %v3641
  %v7138 = vmul.f32 %v7122, %v3646
  %v7139 = vmul.f32 %v7123, %v3651
  %v7140 = vmul.f32 %v7124, %v3656
  %v7141 = vmul.f32 %v7125, %v3661
  %v7142 = vmul.f32 %v7126, %v3666
  %v7143 = vmul.f32 %v7127, %v3671
  %v7144 = vmul.f32 %v7128, %v3676
  %v7145 = vmul.f32 %v7129, %v3681
  %v7146 = vmul.f32 %v7130, %v3686
  %v7147 = vmul.f32 %v7131, %v3691
  %v7148 = vmul.f32 %v7132, %v3696
  %v7149 = vmul.f32 %v7133, %v3701
  %7166 = vst [vmem:[#allocation1] ss:$9 sm:$0xff] %v77
  %s7167 = scalar_lea.vmem [#allocation1], 1
  %7168 = vst [vmem:[%s7167] ss:$9 sm:$0xff] %v78
  %s7169 = scalar_lea.vmem [#allocation1], 2
  %7170 = vst [vmem:[%s7169] ss:$9 sm:$0xff] %v79
  %s7171 = scalar_lea.vmem [#allocation1], 3
  %7172 = vst [vmem:[%s7171] ss:$9 sm:$0xff] %v80
  %s7173 = scalar_lea.vmem [#allocation1], 4
  %7174 = vst [vmem:[%s7173] ss:$9 sm:$0xff] %v81
  %s7175 = scalar_lea.vmem [#allocation1], 5
  %7176 = vst [vmem:[%s7175] ss:$9 sm:$0xff] %v82
  %s7177 = scalar_lea.vmem [#allocation1], 6
  %7178 = vst [vmem:[%s7177] ss:$9 sm:$0xff] %v83
  %s7179 = scalar_lea.vmem [#allocation1], 7
  %7180 = vst [vmem:[%s7179] ss:$9 sm:$0xff] %v84
  %v7181 = vld [vmem:[#allocation1] sm:$0xff]
  %7182 = vst [vmem:[#allocation1] ss:$9 sm:$0xff] %v85
  %7183 = vst [vmem:[%s7167] ss:$9 sm:$0xff] %v86
  %7184 = vst [vmem:[%s7169] ss:$9 sm:$0xff] %v87
  %7185 = vst [vmem:[%s7171] ss:$9 sm:$0xff] %v88
  %7186 = vst [vmem:[%s7173] ss:$9 sm:$0xff] %v89
  %7187 = vst [vmem:[%s7175] ss:$9 sm:$0xff] %v90
  %7188 = vst [vmem:[%s7177] ss:$9 sm:$0xff] %v91
  %7189 = vst [vmem:[%s7179] ss:$9 sm:$0xff] %v92
  %v7190 = vld [vmem:[#allocation1] sm:$0xff]
  %v7193 = vsel %vm822, %v7181, 0.0
  %7194 = vadd.xlane.f32.xlu0 %v7193
  %v7195 = vpop.xlane.xlu0 %7194
  %v7196 = vsel %vm822, %v7190, 0.0
  %7197 = vadd.xlane.f32.xlu0 %v7196
  %v7198 = vpop.xlane.xlu0 %7197
  %v7199 = vmax.f32 %v7195, 1e-07
  %v7200 = vmax.f32 %v7198, 1e-07
  %v7201 = vsel %vm223, %v7134, 0.0
  %v7202 = vrot.slane %v7201, 4
  %v7203 = vadd.f32 %v7201, %v7202
  %v7204 = vrot.slane %v7203, 2
  %v7205 = vadd.f32 %v7203, %v7204
  %v7206 = vrot.slane %v7205, 1
  %v7207 = vadd.f32 %v7205, %v7206
  %v7208 = vsel %vm223, %v7135, 0.0
  %v7209 = vrot.slane %v7208, 4
  %v7210 = vadd.f32 %v7208, %v7209
  %v7211 = vrot.slane %v7210, 2
  %v7212 = vadd.f32 %v7210, %v7211
  %v7213 = vrot.slane %v7212, 1
  %v7214 = vadd.f32 %v7212, %v7213
  %v7215 = vsel %vm223, %v7136, 0.0
  %v7216 = vrot.slane %v7215, 4
  %v7217 = vadd.f32 %v7215, %v7216
  %v7218 = vrot.slane %v7217, 2
  %v7219 = vadd.f32 %v7217, %v7218
  %v7220 = vrot.slane %v7219, 1
  %v7221 = vadd.f32 %v7219, %v7220
  %v7222 = vsel %vm223, %v7137, 0.0
  %v7223 = vrot.slane %v7222, 4
  %v7224 = vadd.f32 %v7222, %v7223
  %v7225 = vrot.slane %v7224, 2
  %v7226 = vadd.f32 %v7224, %v7225
  %v7227 = vrot.slane %v7226, 1
  %v7228 = vadd.f32 %v7226, %v7227
  %v7229 = vsel %vm223, %v7138, 0.0
  %v7230 = vrot.slane %v7229, 4
  %v7231 = vadd.f32 %v7229, %v7230
  %v7232 = vrot.slane %v7231, 2
  %v7233 = vadd.f32 %v7231, %v7232
  %v7234 = vrot.slane %v7233, 1
  %v7235 = vadd.f32 %v7233, %v7234
  %v7236 = vsel %vm223, %v7139, 0.0
  %v7237 = vrot.slane %v7236, 4
  %v7238 = vadd.f32 %v7236, %v7237
  %v7239 = vrot.slane %v7238, 2
  %v7240 = vadd.f32 %v7238, %v7239
  %v7241 = vrot.slane %v7240, 1
  %v7242 = vadd.f32 %v7240, %v7241
  %v7243 = vsel %vm223, %v7140, 0.0
  %v7244 = vrot.slane %v7243, 4
  %v7245 = vadd.f32 %v7243, %v7244
  %v7246 = vrot.slane %v7245, 2
  %v7247 = vadd.f32 %v7245, %v7246
  %v7248 = vrot.slane %v7247, 1
  %v7249 = vadd.f32 %v7247, %v7248
  %v7250 = vsel %vm223, %v7141, 0.0
  %v7251 = vrot.slane %v7250, 4
  %v7252 = vadd.f32 %v7250, %v7251
  %v7253 = vrot.slane %v7252, 2
  %v7254 = vadd.f32 %v7252, %v7253
  %v7255 = vrot.slane %v7254, 1
  %v7256 = vadd.f32 %v7254, %v7255
  %v7257 = vsel %vm223, %v7142, 0.0
  %v7258 = vrot.slane %v7257, 4
  %v7259 = vadd.f32 %v7257, %v7258
  %v7260 = vrot.slane %v7259, 2
  %v7261 = vadd.f32 %v7259, %v7260
  %v7262 = vrot.slane %v7261, 1
  %v7263 = vadd.f32 %v7261, %v7262
  %v7264 = vsel %vm223, %v7143, 0.0
  %v7265 = vrot.slane %v7264, 4
  %v7266 = vadd.f32 %v7264, %v7265
  %v7267 = vrot.slane %v7266, 2
  %v7268 = vadd.f32 %v7266, %v7267
  %v7269 = vrot.slane %v7268, 1
  %v7270 = vadd.f32 %v7268, %v7269
  %v7271 = vsel %vm223, %v7144, 0.0
  %v7272 = vrot.slane %v7271, 4
  %v7273 = vadd.f32 %v7271, %v7272
  %v7274 = vrot.slane %v7273, 2
  %v7275 = vadd.f32 %v7273, %v7274
  %v7276 = vrot.slane %v7275, 1
  %v7277 = vadd.f32 %v7275, %v7276
  %v7278 = vsel %vm223, %v7145, 0.0
  %v7279 = vrot.slane %v7278, 4
  %v7280 = vadd.f32 %v7278, %v7279
  %v7281 = vrot.slane %v7280, 2
  %v7282 = vadd.f32 %v7280, %v7281
  %v7283 = vrot.slane %v7282, 1
  %v7284 = vadd.f32 %v7282, %v7283
  %v7285 = vsel %vm223, %v7146, 0.0
  %v7286 = vrot.slane %v7285, 4
  %v7287 = vadd.f32 %v7285, %v7286
  %v7288 = vrot.slane %v7287, 2
  %v7289 = vadd.f32 %v7287, %v7288
  %v7290 = vrot.slane %v7289, 1
  %v7291 = vadd.f32 %v7289, %v7290
  %v7292 = vsel %vm223, %v7147, 0.0
  %v7293 = vrot.slane %v7292, 4
  %v7294 = vadd.f32 %v7292, %v7293
  %v7295 = vrot.slane %v7294, 2
  %v7296 = vadd.f32 %v7294, %v7295
  %v7297 = vrot.slane %v7296, 1
  %v7298 = vadd.f32 %v7296, %v7297
  %v7299 = vsel %vm223, %v7148, 0.0
  %v7300 = vrot.slane %v7299, 4
  %v7301 = vadd.f32 %v7299, %v7300
  %v7302 = vrot.slane %v7301, 2
  %v7303 = vadd.f32 %v7301, %v7302
  %v7304 = vrot.slane %v7303, 1
  %v7305 = vadd.f32 %v7303, %v7304
  %v7306 = vsel %vm223, %v7149, 0.0
  %v7307 = vrot.slane %v7306, 4
  %v7308 = vadd.f32 %v7306, %v7307
  %v7309 = vrot.slane %v7308, 2
  %v7310 = vadd.f32 %v7308, %v7309
  %v7311 = vrot.slane %v7310, 1
  %v7312 = vadd.f32 %v7310, %v7311
  %v7315 = vrot.slane %v7199, 1
  %v7316 = vrot.slane %v7199, 2
  %v7317 = vrot.slane %v7199, 3
  %v7318 = vrot.slane %v7199, 4
  %v7319 = vrot.slane %v7199, 5
  %v7320 = vrot.slane %v7199, 6
  %v7321 = vrot.slane %v7199, 7
  %v7322 = vrot.slane %v7200, 1
  %v7323 = vrot.slane %v7200, 2
  %v7324 = vrot.slane %v7200, 3
  %v7325 = vrot.slane %v7200, 4
  %v7326 = vrot.slane %v7200, 5
  %v7327 = vrot.slane %v7200, 6
  %v7328 = vrot.slane %v7200, 7
  %v7345 = vrcp.pop %v7199
  %v7346 = vmul.f32 %v7199, %v7345
  %v7347 = vsub.f32 1.0, %v7346
  %v7348 = vmul.f32 %v7345, %v7347
  %v7349 = vadd.f32 %v7345, %v7348
  %vm7350 = vweird.f32 %v7199
  %vm7351 = vweird.f32 %v7345
  %vm7352 = vmor %vm7350, %vm7351
  %v7353 = vsel %vm7352, %v7345, %v7349
  %v7354 = vand.u32 2147483647, %v7199
  %vm7355 = vcmp.eq.f32.partialorder %v7354, 8.507059e+37
  %v7356 = vand.u32 %v7199, 2147483648
  %v7357 = vor.u32 1.1754944e-38, %v7356
  %v7358 = vsel %vm7355, %v7357, %v7353
  %v7359 = vmul.f32 %v7207, %v7358
  %v7360 = vrcp.pop %v7315
  %v7361 = vmul.f32 %v7315, %v7360
  %v7362 = vsub.f32 1.0, %v7361
  %v7363 = vmul.f32 %v7360, %v7362
  %v7364 = vadd.f32 %v7360, %v7363
  %vm7365 = vweird.f32 %v7315
  %vm7366 = vweird.f32 %v7360
  %vm7367 = vmor %vm7365, %vm7366
  %v7368 = vsel %vm7367, %v7360, %v7364
  %v7369 = vand.u32 2147483647, %v7315
  %vm7370 = vcmp.eq.f32.partialorder %v7369, 8.507059e+37
  %v7371 = vand.u32 %v7315, 2147483648
  %v7372 = vor.u32 1.1754944e-38, %v7371
  %v7373 = vsel %vm7370, %v7372, %v7368
  %v7374 = vmul.f32 %v7214, %v7373
  %v7375 = vrcp.pop %v7316
  %v7376 = vmul.f32 %v7316, %v7375
  %v7377 = vsub.f32 1.0, %v7376
  %v7378 = vmul.f32 %v7375, %v7377
  %v7379 = vadd.f32 %v7375, %v7378
  %vm7380 = vweird.f32 %v7316
  %vm7381 = vweird.f32 %v7375
  %vm7382 = vmor %vm7380, %vm7381
  %v7383 = vsel %vm7382, %v7375, %v7379
  %v7384 = vand.u32 2147483647, %v7316
  %vm7385 = vcmp.eq.f32.partialorder %v7384, 8.507059e+37
  %v7386 = vand.u32 %v7316, 2147483648
  %v7387 = vor.u32 1.1754944e-38, %v7386
  %v7388 = vsel %vm7385, %v7387, %v7383
  %v7389 = vmul.f32 %v7221, %v7388
  %v7390 = vrcp.pop %v7317
  %v7391 = vmul.f32 %v7317, %v7390
  %v7392 = vsub.f32 1.0, %v7391
  %v7393 = vmul.f32 %v7390, %v7392
  %v7394 = vadd.f32 %v7390, %v7393
  %vm7395 = vweird.f32 %v7317
  %vm7396 = vweird.f32 %v7390
  %vm7397 = vmor %vm7395, %vm7396
  %v7398 = vsel %vm7397, %v7390, %v7394
  %v7399 = vand.u32 2147483647, %v7317
  %vm7400 = vcmp.eq.f32.partialorder %v7399, 8.507059e+37
  %v7401 = vand.u32 %v7317, 2147483648
  %v7402 = vor.u32 1.1754944e-38, %v7401
  %v7403 = vsel %vm7400, %v7402, %v7398
  %v7404 = vmul.f32 %v7228, %v7403
  %v7405 = vrcp.pop %v7318
  %v7406 = vmul.f32 %v7318, %v7405
  %v7407 = vsub.f32 1.0, %v7406
  %v7408 = vmul.f32 %v7405, %v7407
  %v7409 = vadd.f32 %v7405, %v7408
  %vm7410 = vweird.f32 %v7318
  %vm7411 = vweird.f32 %v7405
  %vm7412 = vmor %vm7410, %vm7411
  %v7413 = vsel %vm7412, %v7405, %v7409
  %v7414 = vand.u32 2147483647, %v7318
  %vm7415 = vcmp.eq.f32.partialorder %v7414, 8.507059e+37
  %v7416 = vand.u32 %v7318, 2147483648
  %v7417 = vor.u32 1.1754944e-38, %v7416
  %v7418 = vsel %vm7415, %v7417, %v7413
  %v7419 = vmul.f32 %v7235, %v7418
  %v7420 = vrcp.pop %v7319
  %v7421 = vmul.f32 %v7319, %v7420
  %v7422 = vsub.f32 1.0, %v7421
  %v7423 = vmul.f32 %v7420, %v7422
  %v7424 = vadd.f32 %v7420, %v7423
  %vm7425 = vweird.f32 %v7319
  %vm7426 = vweird.f32 %v7420
  %vm7427 = vmor %vm7425, %vm7426
  %v7428 = vsel %vm7427, %v7420, %v7424
  %v7429 = vand.u32 2147483647, %v7319
  %vm7430 = vcmp.eq.f32.partialorder %v7429, 8.507059e+37
  %v7431 = vand.u32 %v7319, 2147483648
  %v7432 = vor.u32 1.1754944e-38, %v7431
  %v7433 = vsel %vm7430, %v7432, %v7428
  %v7434 = vmul.f32 %v7242, %v7433
  %v7435 = vrcp.pop %v7320
  %v7436 = vmul.f32 %v7320, %v7435
  %v7437 = vsub.f32 1.0, %v7436
  %v7438 = vmul.f32 %v7435, %v7437
  %v7439 = vadd.f32 %v7435, %v7438
  %vm7440 = vweird.f32 %v7320
  %vm7441 = vweird.f32 %v7435
  %vm7442 = vmor %vm7440, %vm7441
  %v7443 = vsel %vm7442, %v7435, %v7439
  %v7444 = vand.u32 2147483647, %v7320
  %vm7445 = vcmp.eq.f32.partialorder %v7444, 8.507059e+37
  %v7446 = vand.u32 %v7320, 2147483648
  %v7447 = vor.u32 1.1754944e-38, %v7446
  %v7448 = vsel %vm7445, %v7447, %v7443
  %v7449 = vmul.f32 %v7249, %v7448
  %v7450 = vrcp.pop %v7321
  %v7451 = vmul.f32 %v7321, %v7450
  %v7452 = vsub.f32 1.0, %v7451
  %v7453 = vmul.f32 %v7450, %v7452
  %v7454 = vadd.f32 %v7450, %v7453
  %vm7455 = vweird.f32 %v7321
  %vm7456 = vweird.f32 %v7450
  %vm7457 = vmor %vm7455, %vm7456
  %v7458 = vsel %vm7457, %v7450, %v7454
  %v7459 = vand.u32 2147483647, %v7321
  %vm7460 = vcmp.eq.f32.partialorder %v7459, 8.507059e+37
  %v7461 = vand.u32 %v7321, 2147483648
  %v7462 = vor.u32 1.1754944e-38, %v7461
  %v7463 = vsel %vm7460, %v7462, %v7458
  %v7464 = vmul.f32 %v7256, %v7463
  %v7465 = vrcp.pop %v7200
  %v7466 = vmul.f32 %v7200, %v7465
  %v7467 = vsub.f32 1.0, %v7466
  %v7468 = vmul.f32 %v7465, %v7467
  %v7469 = vadd.f32 %v7465, %v7468
  %vm7470 = vweird.f32 %v7200
  %vm7471 = vweird.f32 %v7465
  %vm7472 = vmor %vm7470, %vm7471
  %v7473 = vsel %vm7472, %v7465, %v7469
  %v7474 = vand.u32 2147483647, %v7200
  %vm7475 = vcmp.eq.f32.partialorder %v7474, 8.507059e+37
  %v7476 = vand.u32 %v7200, 2147483648
  %v7477 = vor.u32 1.1754944e-38, %v7476
  %v7478 = vsel %vm7475, %v7477, %v7473
  %v7479 = vmul.f32 %v7263, %v7478
  %v7480 = vrcp.pop %v7322
  %v7481 = vmul.f32 %v7322, %v7480
  %v7482 = vsub.f32 1.0, %v7481
  %v7483 = vmul.f32 %v7480, %v7482
  %v7484 = vadd.f32 %v7480, %v7483
  %vm7485 = vweird.f32 %v7322
  %vm7486 = vweird.f32 %v7480
  %vm7487 = vmor %vm7485, %vm7486
  %v7488 = vsel %vm7487, %v7480, %v7484
  %v7489 = vand.u32 2147483647, %v7322
  %vm7490 = vcmp.eq.f32.partialorder %v7489, 8.507059e+37
  %v7491 = vand.u32 %v7322, 2147483648
  %v7492 = vor.u32 1.1754944e-38, %v7491
  %v7493 = vsel %vm7490, %v7492, %v7488
  %v7494 = vmul.f32 %v7270, %v7493
  %v7495 = vrcp.pop %v7323
  %v7496 = vmul.f32 %v7323, %v7495
  %v7497 = vsub.f32 1.0, %v7496
  %v7498 = vmul.f32 %v7495, %v7497
  %v7499 = vadd.f32 %v7495, %v7498
  %vm7500 = vweird.f32 %v7323
  %vm7501 = vweird.f32 %v7495
  %vm7502 = vmor %vm7500, %vm7501
  %v7503 = vsel %vm7502, %v7495, %v7499
  %v7504 = vand.u32 2147483647, %v7323
  %vm7505 = vcmp.eq.f32.partialorder %v7504, 8.507059e+37
  %v7506 = vand.u32 %v7323, 2147483648
  %v7507 = vor.u32 1.1754944e-38, %v7506
  %v7508 = vsel %vm7505, %v7507, %v7503
  %v7509 = vmul.f32 %v7277, %v7508
  %v7510 = vrcp.pop %v7324
  %v7511 = vmul.f32 %v7324, %v7510
  %v7512 = vsub.f32 1.0, %v7511
  %v7513 = vmul.f32 %v7510, %v7512
  %v7514 = vadd.f32 %v7510, %v7513
  %vm7515 = vweird.f32 %v7324
  %vm7516 = vweird.f32 %v7510
  %vm7517 = vmor %vm7515, %vm7516
  %v7518 = vsel %vm7517, %v7510, %v7514
  %v7519 = vand.u32 2147483647, %v7324
  %vm7520 = vcmp.eq.f32.partialorder %v7519, 8.507059e+37
  %v7521 = vand.u32 %v7324, 2147483648
  %v7522 = vor.u32 1.1754944e-38, %v7521
  %v7523 = vsel %vm7520, %v7522, %v7518
  %v7524 = vmul.f32 %v7284, %v7523
  %v7525 = vrcp.pop %v7325
  %v7526 = vmul.f32 %v7325, %v7525
  %v7527 = vsub.f32 1.0, %v7526
  %v7528 = vmul.f32 %v7525, %v7527
  %v7529 = vadd.f32 %v7525, %v7528
  %vm7530 = vweird.f32 %v7325
  %vm7531 = vweird.f32 %v7525
  %vm7532 = vmor %vm7530, %vm7531
  %v7533 = vsel %vm7532, %v7525, %v7529
  %v7534 = vand.u32 2147483647, %v7325
  %vm7535 = vcmp.eq.f32.partialorder %v7534, 8.507059e+37
  %v7536 = vand.u32 %v7325, 2147483648
  %v7537 = vor.u32 1.1754944e-38, %v7536
  %v7538 = vsel %vm7535, %v7537, %v7533
  %v7539 = vmul.f32 %v7291, %v7538
  %v7540 = vrcp.pop %v7326
  %v7541 = vmul.f32 %v7326, %v7540
  %v7542 = vsub.f32 1.0, %v7541
  %v7543 = vmul.f32 %v7540, %v7542
  %v7544 = vadd.f32 %v7540, %v7543
  %vm7545 = vweird.f32 %v7326
  %vm7546 = vweird.f32 %v7540
  %vm7547 = vmor %vm7545, %vm7546
  %v7548 = vsel %vm7547, %v7540, %v7544
  %v7549 = vand.u32 2147483647, %v7326
  %vm7550 = vcmp.eq.f32.partialorder %v7549, 8.507059e+37
  %v7551 = vand.u32 %v7326, 2147483648
  %v7552 = vor.u32 1.1754944e-38, %v7551
  %v7553 = vsel %vm7550, %v7552, %v7548
  %v7554 = vmul.f32 %v7298, %v7553
  %v7555 = vrcp.pop %v7327
  %v7556 = vmul.f32 %v7327, %v7555
  %v7557 = vsub.f32 1.0, %v7556
  %v7558 = vmul.f32 %v7555, %v7557
  %v7559 = vadd.f32 %v7555, %v7558
  %vm7560 = vweird.f32 %v7327
  %vm7561 = vweird.f32 %v7555
  %vm7562 = vmor %vm7560, %vm7561
  %v7563 = vsel %vm7562, %v7555, %v7559
  %v7564 = vand.u32 2147483647, %v7327
  %vm7565 = vcmp.eq.f32.partialorder %v7564, 8.507059e+37
  %v7566 = vand.u32 %v7327, 2147483648
  %v7567 = vor.u32 1.1754944e-38, %v7566
  %v7568 = vsel %vm7565, %v7567, %v7563
  %v7569 = vmul.f32 %v7305, %v7568
  %v7570 = vrcp.pop %v7328
  %v7571 = vmul.f32 %v7328, %v7570
  %v7572 = vsub.f32 1.0, %v7571
  %v7573 = vmul.f32 %v7570, %v7572
  %v7574 = vadd.f32 %v7570, %v7573
  %vm7575 = vweird.f32 %v7328
  %vm7576 = vweird.f32 %v7570
  %vm7577 = vmor %vm7575, %vm7576
  %v7578 = vsel %vm7577, %v7570, %v7574
  %v7579 = vand.u32 2147483647, %v7328
  %vm7580 = vcmp.eq.f32.partialorder %v7579, 8.507059e+37
  %v7581 = vand.u32 %v7328, 2147483648
  %v7582 = vor.u32 1.1754944e-38, %v7581
  %v7583 = vsel %vm7580, %v7582, %v7578
  %v7584 = vmul.f32 %v7312, %v7583
  %v7587 = vrot.slane %v7524, 7
  %vm7588 = vcmask 1041409
  %v7589 = vsel %vm7588, %v7587, %v7404
  %vm7591 = vcmask 254976
  %7592 = vst.msk [vmem:[%s24] sm:$0x3] %vm7591, %v7589
  %v7593 = vld [vmem:[%s3] sm:$0x1]
  %v7594 = vld [vmem:[%s3 + $0x1] sm:$0x1]
  %v7595 = vsub.f32 %v7593, 1.0
  %v7596 = vsub.f32 %v7594, 1.0
  %v7597 = vmul.f32 %v7595, 1e+30
  %v7598 = vmul.f32 %v7596, 1e+30
  %v7599 = vld [vmem:[%s4] sm:$0xff]
  %v7600 = vld [vmem:[%s4 + $0x8] sm:$0xff]
  %7602 = vset.pattern.permute.xlu0 0
  %7603 = vperm.xlu0 %7602, %v7599
  %v7604 = vpop.permute.xlu0 %7603
  %7606 = vset.pattern.permute.xlu0 0
  %7607 = vperm.xlu0 %7606, %v7600
  %v7608 = vpop.permute.xlu0 %7607
  %v7609 = vrot.slane %v7604, 1
  %v7610 = vrot.slane %v7604, 2
  %v7611 = vrot.slane %v7604, 3
  %v7612 = vrot.slane %v7604, 4
  %v7613 = vrot.slane %v7604, 5
  %v7614 = vrot.slane %v7604, 6
  %v7615 = vrot.slane %v7604, 7
  %v7616 = vrot.slane %v7608, 1
  %v7617 = vrot.slane %v7608, 2
  %v7618 = vrot.slane %v7608, 3
  %v7619 = vrot.slane %v7608, 4
  %v7620 = vrot.slane %v7608, 5
  %v7621 = vrot.slane %v7608, 6
  %v7622 = vrot.slane %v7608, 7
  %v7639 = vmul.f32 %v7359, %v7604
  %v7640 = vmul.f32 %v7374, %v7609
  %v7641 = vmul.f32 %v7389, %v7610
  %v7642 = vmul.f32 %v7404, %v7611
  %v7643 = vmul.f32 %v7419, %v7612
  %v7644 = vmul.f32 %v7434, %v7613
  %v7645 = vmul.f32 %v7449, %v7614
  %v7646 = vmul.f32 %v7464, %v7615
  %v7647 = vmul.f32 %v7479, %v7608
  %v7648 = vmul.f32 %v7494, %v7616
  %v7649 = vmul.f32 %v7509, %v7617
  %v7650 = vmul.f32 %v7524, %v7618
  %v7651 = vmul.f32 %v7539, %v7619
  %v7652 = vmul.f32 %v7554, %v7620
  %v7653 = vmul.f32 %v7569, %v7621
  %v7654 = vmul.f32 %v7584, %v7622
  %v7655 = vld [vmem:[%s14] sm:$0xf]
  %v7656 = vld [vmem:[%s14 + $0x4] sm:$0xf]
  %v7657 = vld [vmem:[%s14 + $0x8] sm:$0xf]
  %v7658 = vld [vmem:[%s14 + $0xc] sm:$0xf]
  %v7659 = vld [vmem:[%s14 + $0x10] sm:$0xf]
  %v7660 = vld [vmem:[%s14 + $0x14] sm:$0xf]
  %v7661 = vld [vmem:[%s14 + $0x18] sm:$0xf]
  %v7662 = vld [vmem:[%s14 + $0x1c] sm:$0xf]
  %v7663 = vld [vmem:[%s15] sm:$0xf]
  %v7664 = vld [vmem:[%s15 + $0x4] sm:$0xf]
  %v7665 = vld [vmem:[%s15 + $0x8] sm:$0xf]
  %v7666 = vld [vmem:[%s15 + $0xc] sm:$0xf]
  %v7667 = vld [vmem:[%s15 + $0x10] sm:$0xf]
  %v7668 = vld [vmem:[%s15 + $0x14] sm:$0xf]
  %v7669 = vld [vmem:[%s15 + $0x18] sm:$0xf]
  %v7670 = vld [vmem:[%s15 + $0x1c] sm:$0xf]
  %v7671 = vld [vmem:[%s16] sm:$0xf]
  %v7672 = vld [vmem:[%s16 + $0x4] sm:$0xf]
  %v7673 = vld [vmem:[%s16 + $0x8] sm:$0xf]
  %v7674 = vld [vmem:[%s16 + $0xc] sm:$0xf]
  %v7675 = vld [vmem:[%s16 + $0x10] sm:$0xf]
  %v7676 = vld [vmem:[%s16 + $0x14] sm:$0xf]
  %v7677 = vld [vmem:[%s16 + $0x18] sm:$0xf]
  %v7678 = vld [vmem:[%s16 + $0x1c] sm:$0xf]
  %v7679 = vld [vmem:[%s18] sm:$0xf]
  %v7680 = vld [vmem:[%s18 + $0x4] sm:$0xf]
  %v7681 = vld [vmem:[%s18 + $0x8] sm:$0xf]
  %v7682 = vld [vmem:[%s18 + $0xc] sm:$0xf]
  %v7683 = vld [vmem:[%s17] sm:$0x3]
  %v7684 = vld [vmem:[%s17 + $0x2] sm:$0x3]
  %v7685 = vld [vmem:[%s17 + $0x4] sm:$0x3]
  %v7686 = vld [vmem:[%s19] sm:$0xf]
  %v7687 = vld [vmem:[%s19 + $0x4] sm:$0xf]
  %v7688 = vld [vmem:[%s19 + $0x8] sm:$0xf]
  %v7689 = vld [vmem:[%s19 + $0xc] sm:$0xf]
  %v7690 = vld [vmem:[%s20] sm:$0x1]
  %v7691 = vld [vmem:[%s21] sm:$0xf]
  %v7692 = vld [vmem:[%s21 + $0x4] sm:$0xf]
  %v7693 = vld [vmem:[%s21 + $0x8] sm:$0xf]
  %v7694 = vld [vmem:[%s21 + $0xc] sm:$0xf]
  %v7695 = vld [vmem:[%s21 + $0x10] sm:$0xf]
  %v7696 = vld [vmem:[%s21 + $0x14] sm:$0xf]
  %v7697 = vld [vmem:[%s21 + $0x18] sm:$0xf]
  %v7698 = vld [vmem:[%s21 + $0x1c] sm:$0xf]
  %v7699 = vld [vmem:[%s22] sm:$0x3f]
  %v7700 = vpack.c.bf16 %v7639, %v7639
  %v7701 = vpack.c.bf16 %v7640, %v7640
  %v7702 = vpack.c.bf16 %v7641, %v7641
  %v7703 = vpack.c.bf16 %v7642, %v7642
  %v7704 = vpack.c.bf16 %v7643, %v7643
  %v7705 = vpack.c.bf16 %v7644, %v7644
  %v7706 = vpack.c.bf16 %v7645, %v7645
  %v7707 = vpack.c.bf16 %v7646, %v7646
  %v7708 = vpack.c.bf16 %v7647, %v7647
  %v7709 = vpack.c.bf16 %v7648, %v7648
  %v7710 = vpack.c.bf16 %v7649, %v7649
  %v7711 = vpack.c.bf16 %v7650, %v7650
  %v7712 = vpack.c.bf16 %v7651, %v7651
  %v7713 = vpack.c.bf16 %v7652, %v7652
  %v7714 = vpack.c.bf16 %v7653, %v7653
  %v7715 = vpack.c.bf16 %v7654, %v7654
  %v7716 = vperm.slane %v7683, 0
  %v7733 = vunpack.c.l.b16 %v7700
  %v7734 = vunpack.c.l.b16 %v7701
  %v7735 = vunpack.c.l.b16 %v7702
  %v7736 = vunpack.c.l.b16 %v7703
  %v7737 = vunpack.c.l.b16 %v7704
  %v7738 = vunpack.c.l.b16 %v7705
  %v7739 = vunpack.c.l.b16 %v7706
  %v7740 = vunpack.c.l.b16 %v7707
  %v7741 = vunpack.c.l.b16 %v7708
  %v7742 = vunpack.c.l.b16 %v7709
  %v7743 = vunpack.c.l.b16 %v7710
  %v7744 = vunpack.c.l.b16 %v7711
  %v7745 = vunpack.c.l.b16 %v7712
  %v7746 = vunpack.c.l.b16 %v7713
  %v7747 = vunpack.c.l.b16 %v7714
  %v7748 = vunpack.c.l.b16 %v7715
  %v7749 = vrot.slane %v7734, 7
  %v7750 = vsel %vm7588, %v7749, %v7733
  %v7751 = vrot.slane %v7735, 6
  %vm7752 = vcmask 1042434
  %v7753 = vsel %vm7752, %v7751, %v7750
  %v7754 = vrot.slane %v7736, 5
  %vm7755 = vcmask 1043459
  %v7756 = vsel %vm7755, %v7754, %v7753
  %v7757 = vrot.slane %v7737, 4
  %vm7758 = vcmask 1044484
  %v7759 = vsel %vm7758, %v7757, %v7756
  %v7760 = vrot.slane %v7738, 3
  %vm7761 = vcmask 1045509
  %v7762 = vsel %vm7761, %v7760, %v7759
  %v7763 = vrot.slane %v7739, 2
  %vm7764 = vcmask 1046534
  %v7765 = vsel %vm7764, %v7763, %v7762
  %v7766 = vrot.slane %v7740, 1
  %vm7767 = vcmask 1047559
  %v7768 = vsel %vm7767, %v7766, %v7765
  %v7769 = vrot.slane %v7742, 7
  %v7770 = vsel %vm7588, %v7769, %v7741
  %v7771 = vrot.slane %v7743, 6
  %v7772 = vsel %vm7752, %v7771, %v7770
  %v7773 = vrot.slane %v7744, 5
  %v7774 = vsel %vm7755, %v7773, %v7772
  %v7775 = vrot.slane %v7745, 4
  %v7776 = vsel %vm7758, %v7775, %v7774
  %v7777 = vrot.slane %v7746, 3
  %v7778 = vsel %vm7761, %v7777, %v7776
  %v7779 = vrot.slane %v7747, 2
  %v7780 = vsel %vm7764, %v7779, %v7778
  %v7781 = vrot.slane %v7748, 1
  %v7782 = vsel %vm7767, %v7781, %v7780
  %v7783 = vpack.c.b16 %v7782, %v7768
  %v7788 = vunpack.c.l.b16 %v7655
  %v7789 = vunpack.c.l.b16 %v7656
  %v7790 = vunpack.c.l.b16 %v7657
  %v7791 = vunpack.c.l.b16 %v7658
  %v7792 = vpack.c.b16 %v7789, %v7788
  %v7793 = vpack.c.b16 %v7791, %v7790
  %v7797 = vsel %vm223, %v7783, 0
  %7799 = vmatpush.bf16.msra.mxu0 0
  %7800 = vmatpush.bf16.msra.mxu0 0
  %7801 = vmatpush.bf16.msra.mxu0 0
  %7802 = vmatpush.bf16.msra.mxu0 0
  %7803 = vmatpush.bf16.msra.mxu0 0
  %7804 = vmatpush.bf16.msra.mxu0 0
  %7805 = vmatpush.bf16.msra.mxu0 %v7793
  %7806 = vmatpush.bf16.msra.mxu0 %v7792
  %7807 = vmatmul.bf16.gmra.mxu0 %v7797
  %v7808 = vpop.f32.mrf.mxu0
  %v7809 = vadd.f32 %v7716, %v7808
  %v7810 = vpop.f32.mrf.mxu0
  %v7811 = vadd.f32 %v7716, %v7810
  %7812 = vdwg.mxu0
  %v7813 = vperm.slane %v7684, 0
  %v7818 = vunpack.c.l.b16 %v7663
  %v7819 = vunpack.c.l.b16 %v7664
  %v7820 = vunpack.c.l.b16 %v7665
  %v7821 = vunpack.c.l.b16 %v7666
  %v7822 = vpack.c.b16 %v7819, %v7818
  %v7823 = vpack.c.b16 %v7821, %v7820
  %7826 = vmatpush.bf16.msra.mxu0 0
  %7827 = vmatpush.bf16.msra.mxu0 0
  %7828 = vmatpush.bf16.msra.mxu0 0
  %7829 = vmatpush.bf16.msra.mxu0 0
  %7830 = vmatpush.bf16.msra.mxu0 0
  %7831 = vmatpush.bf16.msra.mxu0 0
  %7832 = vmatpush.bf16.msra.mxu0 %v7823
  %7833 = vmatpush.bf16.msra.mxu0 %v7822
  %7834 = vmatmul.bf16.gmra.mxu0 %v7797
  %v7835 = vpop.f32.mrf.mxu0
  %v7836 = vadd.f32 %v7813, %v7835
  %v7837 = vpop.f32.mrf.mxu0
  %v7838 = vadd.f32 %v7813, %v7837
  %7839 = vdwg.mxu0
  %v7840 = vperm.slane %v7685, 0
  %v7845 = vunpack.c.l.b16 %v7671
  %v7846 = vunpack.c.l.b16 %v7672
  %v7847 = vunpack.c.l.b16 %v7673
  %v7848 = vunpack.c.l.b16 %v7674
  %v7849 = vpack.c.b16 %v7846, %v7845
  %v7850 = vpack.c.b16 %v7848, %v7847
  %7853 = vmatpush.bf16.msra.mxu0 0
  %7854 = vmatpush.bf16.msra.mxu0 0
  %7855 = vmatpush.bf16.msra.mxu0 0
  %7856 = vmatpush.bf16.msra.mxu0 0
  %7857 = vmatpush.bf16.msra.mxu0 0
  %7858 = vmatpush.bf16.msra.mxu0 0
  %7859 = vmatpush.bf16.msra.mxu0 %v7850
  %7860 = vmatpush.bf16.msra.mxu0 %v7849
  %7861 = vmatmul.bf16.gmra.mxu0 %v7797
  %v7862 = vpop.f32.mrf.mxu0
  %v7863 = vadd.f32 %v7840, %v7862
  %v7864 = vpop.f32.mrf.mxu0
  %v7865 = vadd.f32 %v7840, %v7864
  %7866 = vdwg.mxu0
  %v7867 = vmul.f32 %v7809, 0.25
  %v7868 = vmul.f32 %v7811, 0.25
  %v7869 = vpack.c.bf16 %v7867, %v7867
  %v7870 = vpack.c.bf16 %v7868, %v7868
  %v7871 = vpack.c.bf16 %v7836, %v7836
  %v7872 = vpack.c.bf16 %v7838, %v7838
  %v7875 = vperm.slane %v7597, 0
  %v7876 = vperm.slane %v7598, 0
  %v7880 = vsel %vm517, %v7869, 0
  %v7883 = vsel %vm517, %v7871, 0
  %7885 = vmatpush.bf16.xpose.msra.mxu0 0
  %7886 = vmatpush.bf16.xpose.msra.mxu0 0
  %7887 = vmatpush.bf16.xpose.msra.mxu0 0
  %7888 = vmatpush.bf16.xpose.msra.mxu0 0
  %7889 = vmatpush.bf16.xpose.msra.mxu0 0
  %7890 = vmatpush.bf16.xpose.msra.mxu0 0
  %7891 = vmatpush.bf16.xpose.msra.mxu0 0
  %7892 = vmatpush.bf16.xpose.msra.mxu0 %v7883
  %7893 = vmatmul.bf16.gmra.mxu0 %v7880
  %v7894 = vpop.f32.mrf.mxu0
  %v7895 = vadd.f32 %v7875, %v7894
  %v7896 = vpop.f32.mrf.mxu0
  %7897 = vdwg.mxu0
  %v7899 = vsel %vm517, %v7870, 0
  %v7902 = vsel %vm517, %v7872, 0
  %7904 = vmatpush.bf16.xpose.msra.mxu0 0
  %7905 = vmatpush.bf16.xpose.msra.mxu0 0
  %7906 = vmatpush.bf16.xpose.msra.mxu0 0
  %7907 = vmatpush.bf16.xpose.msra.mxu0 0
  %7908 = vmatpush.bf16.xpose.msra.mxu0 0
  %7909 = vmatpush.bf16.xpose.msra.mxu0 0
  %7910 = vmatpush.bf16.xpose.msra.mxu0 0
  %7911 = vmatpush.bf16.xpose.msra.mxu0 %v7902
  %7912 = vmatmul.bf16.gmra.mxu0 %v7899
  %v7913 = vpop.f32.mrf.mxu0
  %v7914 = vadd.f32 %v7876, %v7913
  %v7915 = vpop.f32.mrf.mxu0
  %7916 = vdwg.mxu0
  %v7917 = vsel %vm822, %v7895, -inf
  %7918 = vmax.xlane.f32.xlu0 %v7917
  %v7919 = vpop.xlane.xlu0 %7918
  %v7920 = vsel %vm822, %v7914, -inf
  %7921 = vmax.xlane.f32.xlu0 %v7920
  %v7922 = vpop.xlane.xlu0 %7921
  %v7923 = vsub.f32 %v7895, %v7919
  %v7924 = vsub.f32 %v7914, %v7922
  %v7925 = vmul.f32 %v7923, 1.442695
  %v7926 = vpow.pop %v7925
  %v7927 = vmul.f32 %v7924, 1.442695
  %v7928 = vpow.pop %v7927
  %v7929 = vsel %vm822, %v7926, 0.0
  %7930 = vadd.xlane.f32.xlu0 %v7929
  %v7931 = vpop.xlane.xlu0 %7930
  %v7932 = vsel %vm822, %v7928, 0.0
  %7933 = vadd.xlane.f32.xlu0 %v7932
  %v7934 = vpop.xlane.xlu0 %7933
  %v7935 = vrcp.pop %v7931
  %v7936 = vrcp.pop %v7934
  %v7937 = vmul.f32 %v7926, %v7935
  %v7938 = vmul.f32 %v7928, %v7936
  %v7939 = vpack.c.bf16 %v7937, %v7937
  %v7940 = vpack.c.bf16 %v7938, %v7938
  %v7941 = vpack.c.bf16 %v7863, %v7863
  %v7942 = vpack.c.bf16 %v7865, %v7865
  %v7944 = vsel %vm822, %v7939, 0
  %v7947 = vsel %vm1034, %v7941, 0
  %7949 = vmatpush.bf16.msra.mxu0 0
  %7950 = vmatpush.bf16.msra.mxu0 0
  %7951 = vmatpush.bf16.msra.mxu0 0
  %7952 = vmatpush.bf16.msra.mxu0 0
  %7953 = vmatpush.bf16.msra.mxu0 0
  %7954 = vmatpush.bf16.msra.mxu0 0
  %7955 = vmatpush.bf16.msra.mxu0 0
  %7956 = vmatpush.bf16.msra.mxu0 %v7947
  %7957 = vmatmul.bf16.gmra.mxu0 %v7944
  %v7958 = vpop.f32.mrf.mxu0
  %v7959 = vadd.f32 0.0, %v7958
  %v7960 = vpop.f32.mrf.mxu0
  %7961 = vdwg.mxu0
  %v7963 = vsel %vm822, %v7940, 0
  %v7966 = vsel %vm1034, %v7942, 0
  %7968 = vmatpush.bf16.msra.mxu0 0
  %7969 = vmatpush.bf16.msra.mxu0 0
  %7970 = vmatpush.bf16.msra.mxu0 0
  %7971 = vmatpush.bf16.msra.mxu0 0
  %7972 = vmatpush.bf16.msra.mxu0 0
  %7973 = vmatpush.bf16.msra.mxu0 0
  %7974 = vmatpush.bf16.msra.mxu0 0
  %7975 = vmatpush.bf16.msra.mxu0 %v7966
  %7976 = vmatmul.bf16.gmra.mxu0 %v7963
  %v7977 = vpop.f32.mrf.mxu0
  %v7978 = vadd.f32 0.0, %v7977
  %v7979 = vpop.f32.mrf.mxu0
  %7980 = vdwg.mxu0
  %v7981 = vpack.c.bf16 %v7978, %v7959
  %v7984 = vunpack.c.l.b16 %v7679
  %v7985 = vunpack.c.l.b16 %v7680
  %v7986 = vpack.c.b16 %v7985, %v7984
  %v7989 = vsel %vm517, %v7981, 0
  %7991 = vmatpush.bf16.msra.mxu0 0
  %7992 = vmatpush.bf16.msra.mxu0 0
  %7993 = vmatpush.bf16.msra.mxu0 0
  %7994 = vmatpush.bf16.msra.mxu0 0
  %7995 = vmatpush.bf16.msra.mxu0 0
  %7996 = vmatpush.bf16.msra.mxu0 0
  %7997 = vmatpush.bf16.msra.mxu0 0
  %7998 = vmatpush.bf16.msra.mxu0 %v7986
  %7999 = vmatmul.bf16.gmra.mxu0 %v7989
  %v8000 = vpop.f32.mrf.mxu0
  %v8001 = vadd.f32 0.0, %v8000
  %v8002 = vpop.f32.mrf.mxu0
  %v8003 = vadd.f32 0.0, %v8002
  %8004 = vdwg.mxu0
  %v8005 = vperm.slane %v7699, 0
  %v8006 = vadd.f32 %v8005, %v8001
  %v8007 = vadd.f32 %v8005, %v8003
  %v8008 = vperm.slane %v7683, 1
  %v8013 = vunpack.c.l.b16 %v7659
  %v8014 = vunpack.c.l.b16 %v7660
  %v8015 = vunpack.c.l.b16 %v7661
  %v8016 = vunpack.c.l.b16 %v7662
  %v8017 = vpack.c.b16 %v8014, %v8013
  %v8018 = vpack.c.b16 %v8016, %v8015
  %8021 = vmatpush.bf16.msra.mxu0 0
  %8022 = vmatpush.bf16.msra.mxu0 0
  %8023 = vmatpush.bf16.msra.mxu0 0
  %8024 = vmatpush.bf16.msra.mxu0 0
  %8025 = vmatpush.bf16.msra.mxu0 0
  %8026 = vmatpush.bf16.msra.mxu0 0
  %8027 = vmatpush.bf16.msra.mxu0 %v8018
  %8028 = vmatpush.bf16.msra.mxu0 %v8017
  %8029 = vmatmul.bf16.gmra.mxu0 %v7797
  %v8030 = vpop.f32.mrf.mxu0
  %v8031 = vadd.f32 %v8008, %v8030
  %v8032 = vpop.f32.mrf.mxu0
  %v8033 = vadd.f32 %v8008, %v8032
  %8034 = vdwg.mxu0
  %v8035 = vperm.slane %v7684, 1
  %v8040 = vunpack.c.l.b16 %v7667
  %v8041 = vunpack.c.l.b16 %v7668
  %v8042 = vunpack.c.l.b16 %v7669
  %v8043 = vunpack.c.l.b16 %v7670
  %v8044 = vpack.c.b16 %v8041, %v8040
  %v8045 = vpack.c.b16 %v8043, %v8042
  %8048 = vmatpush.bf16.msra.mxu0 0
  %8049 = vmatpush.bf16.msra.mxu0 0
  %8050 = vmatpush.bf16.msra.mxu0 0
  %8051 = vmatpush.bf16.msra.mxu0 0
  %8052 = vmatpush.bf16.msra.mxu0 0
  %8053 = vmatpush.bf16.msra.mxu0 0
  %8054 = vmatpush.bf16.msra.mxu0 %v8045
  %8055 = vmatpush.bf16.msra.mxu0 %v8044
  %8056 = vmatmul.bf16.gmra.mxu0 %v7797
  %v8057 = vpop.f32.mrf.mxu0
  %v8058 = vadd.f32 %v8035, %v8057
  %v8059 = vpop.f32.mrf.mxu0
  %v8060 = vadd.f32 %v8035, %v8059
  %8061 = vdwg.mxu0
  %v8062 = vperm.slane %v7685, 1
  %v8067 = vunpack.c.l.b16 %v7675
  %v8068 = vunpack.c.l.b16 %v7676
  %v8069 = vunpack.c.l.b16 %v7677
  %v8070 = vunpack.c.l.b16 %v7678
  %v8071 = vpack.c.b16 %v8068, %v8067
  %v8072 = vpack.c.b16 %v8070, %v8069
  %8075 = vmatpush.bf16.msra.mxu0 0
  %8076 = vmatpush.bf16.msra.mxu0 0
  %8077 = vmatpush.bf16.msra.mxu0 0
  %8078 = vmatpush.bf16.msra.mxu0 0
  %8079 = vmatpush.bf16.msra.mxu0 0
  %8080 = vmatpush.bf16.msra.mxu0 0
  %8081 = vmatpush.bf16.msra.mxu0 %v8072
  %8082 = vmatpush.bf16.msra.mxu0 %v8071
  %8083 = vmatmul.bf16.gmra.mxu0 %v7797
  %v8084 = vpop.f32.mrf.mxu0
  %v8085 = vadd.f32 %v8062, %v8084
  %v8086 = vpop.f32.mrf.mxu0
  %v8087 = vadd.f32 %v8062, %v8086
  %8088 = vdwg.mxu0
  %v8089 = vmul.f32 %v8031, 0.25
  %v8090 = vmul.f32 %v8033, 0.25
  %v8091 = vpack.c.bf16 %v8089, %v8089
  %v8092 = vpack.c.bf16 %v8090, %v8090
  %v8093 = vpack.c.bf16 %v8058, %v8058
  %v8094 = vpack.c.bf16 %v8060, %v8060
  %v8096 = vsel %vm517, %v8091, 0
  %v8099 = vsel %vm517, %v8093, 0
  %8101 = vmatpush.bf16.xpose.msra.mxu0 0
  %8102 = vmatpush.bf16.xpose.msra.mxu0 0
  %8103 = vmatpush.bf16.xpose.msra.mxu0 0
  %8104 = vmatpush.bf16.xpose.msra.mxu0 0
  %8105 = vmatpush.bf16.xpose.msra.mxu0 0
  %8106 = vmatpush.bf16.xpose.msra.mxu0 0
  %8107 = vmatpush.bf16.xpose.msra.mxu0 0
  %8108 = vmatpush.bf16.xpose.msra.mxu0 %v8099
  %8109 = vmatmul.bf16.gmra.mxu0 %v8096
  %v8110 = vpop.f32.mrf.mxu0
  %v8111 = vadd.f32 %v7875, %v8110
  %v8112 = vpop.f32.mrf.mxu0
  %8113 = vdwg.mxu0
  %v8115 = vsel %vm517, %v8092, 0
  %v8118 = vsel %vm517, %v8094, 0
  %8120 = vmatpush.bf16.xpose.msra.mxu0 0
  %8121 = vmatpush.bf16.xpose.msra.mxu0 0
  %8122 = vmatpush.bf16.xpose.msra.mxu0 0
  %8123 = vmatpush.bf16.xpose.msra.mxu0 0
  %8124 = vmatpush.bf16.xpose.msra.mxu0 0
  %8125 = vmatpush.bf16.xpose.msra.mxu0 0
  %8126 = vmatpush.bf16.xpose.msra.mxu0 0
  %8127 = vmatpush.bf16.xpose.msra.mxu0 %v8118
  %8128 = vmatmul.bf16.gmra.mxu0 %v8115
  %v8129 = vpop.f32.mrf.mxu0
  %v8130 = vadd.f32 %v7876, %v8129
  %v8131 = vpop.f32.mrf.mxu0
  %8132 = vdwg.mxu0
  %v8133 = vsel %vm822, %v8111, -inf
  %8134 = vmax.xlane.f32.xlu0 %v8133
  %v8135 = vpop.xlane.xlu0 %8134
  %v8136 = vsel %vm822, %v8130, -inf
  %8137 = vmax.xlane.f32.xlu0 %v8136
  %v8138 = vpop.xlane.xlu0 %8137
  %v8139 = vsub.f32 %v8111, %v8135
  %v8140 = vsub.f32 %v8130, %v8138
  %v8141 = vmul.f32 %v8139, 1.442695
  %v8142 = vpow.pop %v8141
  %v8143 = vmul.f32 %v8140, 1.442695
  %v8144 = vpow.pop %v8143
  %v8145 = vsel %vm822, %v8142, 0.0
  %8146 = vadd.xlane.f32.xlu0 %v8145
  %v8147 = vpop.xlane.xlu0 %8146
  %v8148 = vsel %vm822, %v8144, 0.0
  %8149 = vadd.xlane.f32.xlu0 %v8148
  %v8150 = vpop.xlane.xlu0 %8149
  %v8151 = vrcp.pop %v8147
  %v8152 = vrcp.pop %v8150
  %v8153 = vmul.f32 %v8142, %v8151
  %v8154 = vmul.f32 %v8144, %v8152
  %v8155 = vpack.c.bf16 %v8153, %v8153
  %v8156 = vpack.c.bf16 %v8154, %v8154
  %v8157 = vpack.c.bf16 %v8085, %v8085
  %v8158 = vpack.c.bf16 %v8087, %v8087
  %v8160 = vsel %vm822, %v8155, 0
  %v8163 = vsel %vm1034, %v8157, 0
  %8165 = vmatpush.bf16.msra.mxu0 0
  %8166 = vmatpush.bf16.msra.mxu0 0
  %8167 = vmatpush.bf16.msra.mxu0 0
  %8168 = vmatpush.bf16.msra.mxu0 0
  %8169 = vmatpush.bf16.msra.mxu0 0
  %8170 = vmatpush.bf16.msra.mxu0 0
  %8171 = vmatpush.bf16.msra.mxu0 0
  %8172 = vmatpush.bf16.msra.mxu0 %v8163
  %8173 = vmatmul.bf16.gmra.mxu0 %v8160
  %v8174 = vpop.f32.mrf.mxu0
  %v8175 = vadd.f32 0.0, %v8174
  %v8176 = vpop.f32.mrf.mxu0
  %8177 = vdwg.mxu0
  %v8179 = vsel %vm822, %v8156, 0
  %v8182 = vsel %vm1034, %v8158, 0
  %8184 = vmatpush.bf16.msra.mxu0 0
  %8185 = vmatpush.bf16.msra.mxu0 0
  %8186 = vmatpush.bf16.msra.mxu0 0
  %8187 = vmatpush.bf16.msra.mxu0 0
  %8188 = vmatpush.bf16.msra.mxu0 0
  %8189 = vmatpush.bf16.msra.mxu0 0
  %8190 = vmatpush.bf16.msra.mxu0 0
  %8191 = vmatpush.bf16.msra.mxu0 %v8182
  %8192 = vmatmul.bf16.gmra.mxu0 %v8179
  %v8193 = vpop.f32.mrf.mxu0
  %v8194 = vadd.f32 0.0, %v8193
  %v8195 = vpop.f32.mrf.mxu0
  %8196 = vdwg.mxu0
  %v8197 = vpack.c.bf16 %v8194, %v8175
  %v8200 = vunpack.c.l.b16 %v7681
  %v8201 = vunpack.c.l.b16 %v7682
  %v8202 = vpack.c.b16 %v8201, %v8200
  %v8205 = vsel %vm517, %v8197, 0
  %8207 = vmatpush.bf16.msra.mxu0 0
  %8208 = vmatpush.bf16.msra.mxu0 0
  %8209 = vmatpush.bf16.msra.mxu0 0
  %8210 = vmatpush.bf16.msra.mxu0 0
  %8211 = vmatpush.bf16.msra.mxu0 0
  %8212 = vmatpush.bf16.msra.mxu0 0
  %8213 = vmatpush.bf16.msra.mxu0 0
  %8214 = vmatpush.bf16.msra.mxu0 %v8202
  %8215 = vmatmul.bf16.gmra.mxu0 %v8205
  %v8216 = vpop.f32.mrf.mxu0
  %v8217 = vadd.f32 0.0, %v8216
  %v8218 = vpop.f32.mrf.mxu0
  %v8219 = vadd.f32 0.0, %v8218
  %8220 = vdwg.mxu0
  %v8221 = vadd.f32 %v8006, %v8217
  %v8222 = vadd.f32 %v8007, %v8219
  %v8225 = vrot.slane %v8221, 1
  %v8226 = vrot.slane %v8221, 2
  %v8227 = vrot.slane %v8221, 3
  %v8228 = vrot.slane %v8221, 4
  %v8229 = vrot.slane %v8221, 5
  %v8230 = vrot.slane %v8221, 6
  %v8231 = vrot.slane %v8221, 7
  %v8232 = vrot.slane %v8222, 1
  %v8233 = vrot.slane %v8222, 2
  %v8234 = vrot.slane %v8222, 3
  %v8235 = vrot.slane %v8222, 4
  %v8236 = vrot.slane %v8222, 5
  %v8237 = vrot.slane %v8222, 6
  %v8238 = vrot.slane %v8222, 7
  %v8255 = vadd.f32 %v7639, %v8221
  %v8256 = vadd.f32 %v7640, %v8225
  %v8257 = vadd.f32 %v7641, %v8226
  %v8258 = vadd.f32 %v7642, %v8227
  %v8259 = vadd.f32 %v7643, %v8228
  %v8260 = vadd.f32 %v7644, %v8229
  %v8261 = vadd.f32 %v7645, %v8230
  %v8262 = vadd.f32 %v7646, %v8231
  %v8263 = vadd.f32 %v7647, %v8222
  %v8264 = vadd.f32 %v7648, %v8232
  %v8265 = vadd.f32 %v7649, %v8233
  %v8266 = vadd.f32 %v7650, %v8234
  %v8267 = vadd.f32 %v7651, %v8235
  %v8268 = vadd.f32 %v7652, %v8236
  %v8269 = vadd.f32 %v7653, %v8237
  %v8270 = vadd.f32 %v7654, %v8238
  %v8287 = vrot.slane %v8256, 7
  %v8288 = vsel %vm7588, %v8287, %v8255
  %v8289 = vrot.slane %v8257, 6
  %v8290 = vsel %vm7752, %v8289, %v8288
  %v8291 = vrot.slane %v8258, 5
  %v8292 = vsel %vm7755, %v8291, %v8290
  %v8293 = vrot.slane %v8259, 4
  %v8294 = vsel %vm7758, %v8293, %v8292
  %v8295 = vrot.slane %v8260, 3
  %v8296 = vsel %vm7761, %v8295, %v8294
  %v8297 = vrot.slane %v8261, 2
  %v8298 = vsel %vm7764, %v8297, %v8296
  %v8299 = vrot.slane %v8262, 1
  %v8300 = vsel %vm7767, %v8299, %v8298
  %v8301 = vrot.slane %v8264, 7
  %v8302 = vsel %vm7588, %v8301, %v8263
  %v8303 = vrot.slane %v8265, 6
  %v8304 = vsel %vm7752, %v8303, %v8302
  %v8305 = vrot.slane %v8266, 5
  %v8306 = vsel %vm7755, %v8305, %v8304
  %v8307 = vrot.slane %v8267, 4
  %v8308 = vsel %vm7758, %v8307, %v8306
  %v8309 = vrot.slane %v8268, 3
  %v8310 = vsel %vm7761, %v8309, %v8308
  %v8311 = vrot.slane %v8269, 2
  %v8312 = vsel %vm7764, %v8311, %v8310
  %v8313 = vrot.slane %v8270, 1
  %v8314 = vsel %vm7767, %v8313, %v8312
  %v8317 = vsel %vm223, %v8300, 0.0
  %8318 = vadd.xlane.f32.xlu0 %v8317
  %v8319 = vpop.xlane.xlu0 %8318
  %v8320 = vsel %vm223, %v8314, 0.0
  %8321 = vadd.xlane.f32.xlu0 %v8320
  %v8322 = vpop.xlane.xlu0 %8321
  %v8323 = vmul.f32 %v8319, %v2663
  %v8324 = vmul.f32 %v8322, %v2663
  %v8327 = vrot.slane %v8323, 1
  %v8328 = vrot.slane %v8323, 2
  %v8329 = vrot.slane %v8323, 3
  %v8330 = vrot.slane %v8323, 4
  %v8331 = vrot.slane %v8323, 5
  %v8332 = vrot.slane %v8323, 6
  %v8333 = vrot.slane %v8323, 7
  %v8334 = vrot.slane %v8324, 1
  %v8335 = vrot.slane %v8324, 2
  %v8336 = vrot.slane %v8324, 3
  %v8337 = vrot.slane %v8324, 4
  %v8338 = vrot.slane %v8324, 5
  %v8339 = vrot.slane %v8324, 6
  %v8340 = vrot.slane %v8324, 7
  %v8357 = vsub.f32 %v8255, %v8323
  %v8358 = vsub.f32 %v8256, %v8327
  %v8359 = vsub.f32 %v8257, %v8328
  %v8360 = vsub.f32 %v8258, %v8329
  %v8361 = vsub.f32 %v8259, %v8330
  %v8362 = vsub.f32 %v8260, %v8331
  %v8363 = vsub.f32 %v8261, %v8332
  %v8364 = vsub.f32 %v8262, %v8333
  %v8365 = vsub.f32 %v8263, %v8324
  %v8366 = vsub.f32 %v8264, %v8334
  %v8367 = vsub.f32 %v8265, %v8335
  %v8368 = vsub.f32 %v8266, %v8336
  %v8369 = vsub.f32 %v8267, %v8337
  %v8370 = vsub.f32 %v8268, %v8338
  %v8371 = vsub.f32 %v8269, %v8339
  %v8372 = vsub.f32 %v8270, %v8340
  %v8373 = vmul.f32 %v8357, %v8357
  %v8374 = vmul.f32 %v8358, %v8358
  %v8375 = vmul.f32 %v8359, %v8359
  %v8376 = vmul.f32 %v8360, %v8360
  %v8377 = vmul.f32 %v8361, %v8361
  %v8378 = vmul.f32 %v8362, %v8362
  %v8379 = vmul.f32 %v8363, %v8363
  %v8380 = vmul.f32 %v8364, %v8364
  %v8381 = vmul.f32 %v8365, %v8365
  %v8382 = vmul.f32 %v8366, %v8366
  %v8383 = vmul.f32 %v8367, %v8367
  %v8384 = vmul.f32 %v8368, %v8368
  %v8385 = vmul.f32 %v8369, %v8369
  %v8386 = vmul.f32 %v8370, %v8370
  %v8387 = vmul.f32 %v8371, %v8371
  %v8388 = vmul.f32 %v8372, %v8372
  %v8405 = vrot.slane %v8374, 7
  %v8406 = vsel %vm7588, %v8405, %v8373
  %v8407 = vrot.slane %v8375, 6
  %v8408 = vsel %vm7752, %v8407, %v8406
  %v8409 = vrot.slane %v8376, 5
  %v8410 = vsel %vm7755, %v8409, %v8408
  %v8411 = vrot.slane %v8377, 4
  %v8412 = vsel %vm7758, %v8411, %v8410
  %v8413 = vrot.slane %v8378, 3
  %v8414 = vsel %vm7761, %v8413, %v8412
  %v8415 = vrot.slane %v8379, 2
  %v8416 = vsel %vm7764, %v8415, %v8414
  %v8417 = vrot.slane %v8380, 1
  %v8418 = vsel %vm7767, %v8417, %v8416
  %v8419 = vrot.slane %v8382, 7
  %v8420 = vsel %vm7588, %v8419, %v8381
  %v8421 = vrot.slane %v8383, 6
  %v8422 = vsel %vm7752, %v8421, %v8420
  %v8423 = vrot.slane %v8384, 5
  %v8424 = vsel %vm7755, %v8423, %v8422
  %v8425 = vrot.slane %v8385, 4
  %v8426 = vsel %vm7758, %v8425, %v8424
  %v8427 = vrot.slane %v8386, 3
  %v8428 = vsel %vm7761, %v8427, %v8426
  %v8429 = vrot.slane %v8387, 2
  %v8430 = vsel %vm7764, %v8429, %v8428
  %v8431 = vrot.slane %v8388, 1
  %v8432 = vsel %vm7767, %v8431, %v8430
  %v8435 = vsel %vm223, %v8418, 0.0
  %8436 = vadd.xlane.f32.xlu0 %v8435
  %v8437 = vpop.xlane.xlu0 %8436
  %v8438 = vsel %vm223, %v8432, 0.0
  %8439 = vadd.xlane.f32.xlu0 %v8438
  %v8440 = vpop.xlane.xlu0 %8439
  %v8441 = vmul.f32 %v8437, %v2663
  %v8442 = vmul.f32 %v8440, %v2663
  %v8443 = vadd.f32 %v8441, 1e-05
  %v8444 = vadd.f32 %v8442, 1e-05
  %v8445 = vrsqrt.pop %v8443
  %v8446 = vmul.f32 %v8445, %v8443
  %v8447 = vmul.f32 %v8446, %v8445
  %v8448 = vmul.f32 0.5, %v8447
  %v8449 = vsub.f32 1.5, %v8448
  %v8450 = vmul.f32 %v8445, %v8449
  %vm8451 = vweird.f32 %v8443
  %vm8452 = vweird.f32 %v8445
  %vm8453 = vmor %vm8451, %vm8452
  %v8454 = vsel %vm8453, %v8445, %v8450
  %v8455 = vrsqrt.pop %v8444
  %v8456 = vmul.f32 %v8455, %v8444
  %v8457 = vmul.f32 %v8456, %v8455
  %v8458 = vmul.f32 0.5, %v8457
  %v8459 = vsub.f32 1.5, %v8458
  %v8460 = vmul.f32 %v8455, %v8459
  %vm8461 = vweird.f32 %v8444
  %vm8462 = vweird.f32 %v8455
  %vm8463 = vmor %vm8461, %vm8462
  %v8464 = vsel %vm8463, %v8455, %v8460
  %v8467 = vrot.slane %v8454, 1
  %v8468 = vrot.slane %v8454, 2
  %v8469 = vrot.slane %v8454, 3
  %v8470 = vrot.slane %v8454, 4
  %v8471 = vrot.slane %v8454, 5
  %v8472 = vrot.slane %v8454, 6
  %v8473 = vrot.slane %v8454, 7
  %v8474 = vrot.slane %v8464, 1
  %v8475 = vrot.slane %v8464, 2
  %v8476 = vrot.slane %v8464, 3
  %v8477 = vrot.slane %v8464, 4
  %v8478 = vrot.slane %v8464, 5
  %v8479 = vrot.slane %v8464, 6
  %v8480 = vrot.slane %v8464, 7
  %v8497 = vmul.f32 %v8357, %v8454
  %v8498 = vmul.f32 %v8358, %v8467
  %v8499 = vmul.f32 %v8359, %v8468
  %v8500 = vmul.f32 %v8360, %v8469
  %v8501 = vmul.f32 %v8361, %v8470
  %v8502 = vmul.f32 %v8362, %v8471
  %v8503 = vmul.f32 %v8363, %v8472
  %v8504 = vmul.f32 %v8364, %v8473
  %v8505 = vmul.f32 %v8365, %v8464
  %v8506 = vmul.f32 %v8366, %v8474
  %v8507 = vmul.f32 %v8367, %v8475
  %v8508 = vmul.f32 %v8368, %v8476
  %v8509 = vmul.f32 %v8369, %v8477
  %v8510 = vmul.f32 %v8370, %v8478
  %v8511 = vmul.f32 %v8371, %v8479
  %v8512 = vmul.f32 %v8372, %v8480
  %v8513 = vperm.slane %v7699, 2
  %v8514 = vmul.f32 %v8497, %v8513
  %v8515 = vmul.f32 %v8498, %v8513
  %v8516 = vmul.f32 %v8499, %v8513
  %v8517 = vmul.f32 %v8500, %v8513
  %v8518 = vmul.f32 %v8501, %v8513
  %v8519 = vmul.f32 %v8502, %v8513
  %v8520 = vmul.f32 %v8503, %v8513
  %v8521 = vmul.f32 %v8504, %v8513
  %v8522 = vmul.f32 %v8505, %v8513
  %v8523 = vmul.f32 %v8506, %v8513
  %v8524 = vmul.f32 %v8507, %v8513
  %v8525 = vmul.f32 %v8508, %v8513
  %v8526 = vmul.f32 %v8509, %v8513
  %v8527 = vmul.f32 %v8510, %v8513
  %v8528 = vmul.f32 %v8511, %v8513
  %v8529 = vmul.f32 %v8512, %v8513
  %v8530 = vperm.slane %v7699, 3
  %v8531 = vadd.f32 %v8514, %v8530
  %v8532 = vadd.f32 %v8515, %v8530
  %v8533 = vadd.f32 %v8516, %v8530
  %v8534 = vadd.f32 %v8517, %v8530
  %v8535 = vadd.f32 %v8518, %v8530
  %v8536 = vadd.f32 %v8519, %v8530
  %v8537 = vadd.f32 %v8520, %v8530
  %v8538 = vadd.f32 %v8521, %v8530
  %v8539 = vadd.f32 %v8522, %v8530
  %v8540 = vadd.f32 %v8523, %v8530
  %v8541 = vadd.f32 %v8524, %v8530
  %v8542 = vadd.f32 %v8525, %v8530
  %v8543 = vadd.f32 %v8526, %v8530
  %v8544 = vadd.f32 %v8527, %v8530
  %v8545 = vadd.f32 %v8528, %v8530
  %v8546 = vadd.f32 %v8529, %v8530
  %v8547 = vpack.c.bf16 %v8531, %v8531
  %v8548 = vpack.c.bf16 %v8532, %v8532
  %v8549 = vpack.c.bf16 %v8533, %v8533
  %v8550 = vpack.c.bf16 %v8534, %v8534
  %v8551 = vpack.c.bf16 %v8535, %v8535
  %v8552 = vpack.c.bf16 %v8536, %v8536
  %v8553 = vpack.c.bf16 %v8537, %v8537
  %v8554 = vpack.c.bf16 %v8538, %v8538
  %v8555 = vpack.c.bf16 %v8539, %v8539
  %v8556 = vpack.c.bf16 %v8540, %v8540
  %v8557 = vpack.c.bf16 %v8541, %v8541
  %v8558 = vpack.c.bf16 %v8542, %v8542
  %v8559 = vpack.c.bf16 %v8543, %v8543
  %v8560 = vpack.c.bf16 %v8544, %v8544
  %v8561 = vpack.c.bf16 %v8545, %v8545
  %v8562 = vpack.c.bf16 %v8546, %v8546
  %v8564 = vperm.slane %v7690, 0
  %v8582 = vunpack.c.l.b16 %v8547
  %v8583 = vunpack.c.l.b16 %v8548
  %v8584 = vunpack.c.l.b16 %v8549
  %v8585 = vunpack.c.l.b16 %v8550
  %v8586 = vunpack.c.l.b16 %v8551
  %v8587 = vunpack.c.l.b16 %v8552
  %v8588 = vunpack.c.l.b16 %v8553
  %v8589 = vunpack.c.l.b16 %v8554
  %v8590 = vunpack.c.l.b16 %v8555
  %v8591 = vunpack.c.l.b16 %v8556
  %v8592 = vunpack.c.l.b16 %v8557
  %v8593 = vunpack.c.l.b16 %v8558
  %v8594 = vunpack.c.l.b16 %v8559
  %v8595 = vunpack.c.l.b16 %v8560
  %v8596 = vunpack.c.l.b16 %v8561
  %v8597 = vunpack.c.l.b16 %v8562
  %v8598 = vrot.slane %v8583, 7
  %v8599 = vsel %vm7588, %v8598, %v8582
  %v8600 = vrot.slane %v8584, 6
  %v8601 = vsel %vm7752, %v8600, %v8599
  %v8602 = vrot.slane %v8585, 5
  %v8603 = vsel %vm7755, %v8602, %v8601
  %v8604 = vrot.slane %v8586, 4
  %v8605 = vsel %vm7758, %v8604, %v8603
  %v8606 = vrot.slane %v8587, 3
  %v8607 = vsel %vm7761, %v8606, %v8605
  %v8608 = vrot.slane %v8588, 2
  %v8609 = vsel %vm7764, %v8608, %v8607
  %v8610 = vrot.slane %v8589, 1
  %v8611 = vsel %vm7767, %v8610, %v8609
  %v8612 = vrot.slane %v8591, 7
  %v8613 = vsel %vm7588, %v8612, %v8590
  %v8614 = vrot.slane %v8592, 6
  %v8615 = vsel %vm7752, %v8614, %v8613
  %v8616 = vrot.slane %v8593, 5
  %v8617 = vsel %vm7755, %v8616, %v8615
  %v8618 = vrot.slane %v8594, 4
  %v8619 = vsel %vm7758, %v8618, %v8617
  %v8620 = vrot.slane %v8595, 3
  %v8621 = vsel %vm7761, %v8620, %v8619
  %v8622 = vrot.slane %v8596, 2
  %v8623 = vsel %vm7764, %v8622, %v8621
  %v8624 = vrot.slane %v8597, 1
  %v8625 = vsel %vm7767, %v8624, %v8623
  %v8626 = vpack.c.b16 %v8625, %v8611
  %v8631 = vunpack.c.l.b16 %v7686
  %v8632 = vunpack.c.l.b16 %v7687
  %v8633 = vunpack.c.l.b16 %v7688
  %v8634 = vunpack.c.l.b16 %v7689
  %v8635 = vpack.c.b16 %v8632, %v8631
  %v8636 = vpack.c.b16 %v8634, %v8633
  %v8640 = vsel %vm223, %v8626, 0
  %8642 = vmatpush.bf16.msra.mxu0 0
  %8643 = vmatpush.bf16.msra.mxu0 0
  %8644 = vmatpush.bf16.msra.mxu0 0
  %8645 = vmatpush.bf16.msra.mxu0 0
  %8646 = vmatpush.bf16.msra.mxu0 0
  %8647 = vmatpush.bf16.msra.mxu0 0
  %8648 = vmatpush.bf16.msra.mxu0 %v8636
  %8649 = vmatpush.bf16.msra.mxu0 %v8635
  %8650 = vmatmul.bf16.gmra.mxu0 %v8640
  %v8651 = vpop.f32.mrf.mxu0
  %v8652 = vadd.f32 %v8564, %v8651
  %v8653 = vpop.f32.mrf.mxu0
  %v8654 = vadd.f32 %v8564, %v8653
  %8655 = vdwg.mxu0
  %v8656 = vmax.f32 %v8652, 0.0
  %v8657 = vmax.f32 %v8654, 0.0
  %v8658 = vpack.c.bf16 %v8657, %v8656
  %v8659 = vperm.slane %v7699, 1
  %v8668 = vunpack.c.l.b16 %v7691
  %v8669 = vunpack.c.l.b16 %v7692
  %v8670 = vunpack.c.l.b16 %v7693
  %v8671 = vunpack.c.l.b16 %v7694
  %v8672 = vunpack.c.l.b16 %v7695
  %v8673 = vunpack.c.l.b16 %v7696
  %v8674 = vunpack.c.l.b16 %v7697
  %v8675 = vunpack.c.l.b16 %v7698
  %v8676 = vpack.c.b16 %v8669, %v8668
  %v8677 = vpack.c.b16 %v8671, %v8670
  %v8678 = vpack.c.b16 %v8673, %v8672
  %v8679 = vpack.c.b16 %v8675, %v8674
  %v8685 = vsel %vm3147, %v8658, 0
  %8687 = vmatpush.bf16.msra.mxu0 0
  %8688 = vmatpush.bf16.msra.mxu0 0
  %8689 = vmatpush.bf16.msra.mxu0 0
  %8690 = vmatpush.bf16.msra.mxu0 0
  %8691 = vmatpush.bf16.msra.mxu0 %v8679
  %8692 = vmatpush.bf16.msra.mxu0 %v8678
  %8693 = vmatpush.bf16.msra.mxu0 %v8677
  %8694 = vmatpush.bf16.msra.mxu0 %v8676
  %8695 = vmatmul.bf16.gmra.mxu0 %v8685
  %v8696 = vpop.f32.mrf.mxu0
  %v8697 = vadd.f32 %v8659, %v8696
  %v8698 = vpop.f32.mrf.mxu0
  %v8699 = vadd.f32 %v8659, %v8698
  %8700 = vdwg.mxu0
  %v8703 = vrot.slane %v8697, 1
  %v8704 = vrot.slane %v8697, 2
  %v8705 = vrot.slane %v8697, 3
  %v8706 = vrot.slane %v8697, 4
  %v8707 = vrot.slane %v8697, 5
  %v8708 = vrot.slane %v8697, 6
  %v8709 = vrot.slane %v8697, 7
  %v8710 = vrot.slane %v8699, 1
  %v8711 = vrot.slane %v8699, 2
  %v8712 = vrot.slane %v8699, 3
  %v8713 = vrot.slane %v8699, 4
  %v8714 = vrot.slane %v8699, 5
  %v8715 = vrot.slane %v8699, 6
  %v8716 = vrot.slane %v8699, 7
  %v8733 = vadd.f32 %v8531, %v8697
  %v8734 = vadd.f32 %v8532, %v8703
  %v8735 = vadd.f32 %v8533, %v8704
  %v8736 = vadd.f32 %v8534, %v8705
  %v8737 = vadd.f32 %v8535, %v8706
  %v8738 = vadd.f32 %v8536, %v8707
  %v8739 = vadd.f32 %v8537, %v8708
  %v8740 = vadd.f32 %v8538, %v8709
  %v8741 = vadd.f32 %v8539, %v8699
  %v8742 = vadd.f32 %v8540, %v8710
  %v8743 = vadd.f32 %v8541, %v8711
  %v8744 = vadd.f32 %v8542, %v8712
  %v8745 = vadd.f32 %v8543, %v8713
  %v8746 = vadd.f32 %v8544, %v8714
  %v8747 = vadd.f32 %v8545, %v8715
  %v8748 = vadd.f32 %v8546, %v8716
  %v8765 = vrot.slane %v8734, 7
  %v8766 = vsel %vm7588, %v8765, %v8733
  %v8767 = vrot.slane %v8735, 6
  %v8768 = vsel %vm7752, %v8767, %v8766
  %v8769 = vrot.slane %v8736, 5
  %v8770 = vsel %vm7755, %v8769, %v8768
  %v8771 = vrot.slane %v8737, 4
  %v8772 = vsel %vm7758, %v8771, %v8770
  %v8773 = vrot.slane %v8738, 3
  %v8774 = vsel %vm7761, %v8773, %v8772
  %v8775 = vrot.slane %v8739, 2
  %v8776 = vsel %vm7764, %v8775, %v8774
  %v8777 = vrot.slane %v8740, 1
  %v8778 = vsel %vm7767, %v8777, %v8776
  %v8779 = vrot.slane %v8742, 7
  %v8780 = vsel %vm7588, %v8779, %v8741
  %v8781 = vrot.slane %v8743, 6
  %v8782 = vsel %vm7752, %v8781, %v8780
  %v8783 = vrot.slane %v8744, 5
  %v8784 = vsel %vm7755, %v8783, %v8782
  %v8785 = vrot.slane %v8745, 4
  %v8786 = vsel %vm7758, %v8785, %v8784
  %v8787 = vrot.slane %v8746, 3
  %v8788 = vsel %vm7761, %v8787, %v8786
  %v8789 = vrot.slane %v8747, 2
  %v8790 = vsel %vm7764, %v8789, %v8788
  %v8791 = vrot.slane %v8748, 1
  %v8792 = vsel %vm7767, %v8791, %v8790
  %v8795 = vsel %vm223, %v8778, 0.0
  %8796 = vadd.xlane.f32.xlu0 %v8795
  %v8797 = vpop.xlane.xlu0 %8796
  %v8798 = vsel %vm223, %v8792, 0.0
  %8799 = vadd.xlane.f32.xlu0 %v8798
  %v8800 = vpop.xlane.xlu0 %8799
  %v8801 = vmul.f32 %v8797, %v2663
  %v8802 = vmul.f32 %v8800, %v2663
  %v8805 = vrot.slane %v8801, 1
  %v8806 = vrot.slane %v8801, 2
  %v8807 = vrot.slane %v8801, 3
  %v8808 = vrot.slane %v8801, 4
  %v8809 = vrot.slane %v8801, 5
  %v8810 = vrot.slane %v8801, 6
  %v8811 = vrot.slane %v8801, 7
  %v8812 = vrot.slane %v8802, 1
  %v8813 = vrot.slane %v8802, 2
  %v8814 = vrot.slane %v8802, 3
  %v8815 = vrot.slane %v8802, 4
  %v8816 = vrot.slane %v8802, 5
  %v8817 = vrot.slane %v8802, 6
  %v8818 = vrot.slane %v8802, 7
  %v8835 = vsub.f32 %v8733, %v8801
  %v8836 = vsub.f32 %v8734, %v8805
  %v8837 = vsub.f32 %v8735, %v8806
  %v8838 = vsub.f32 %v8736, %v8807
  %v8839 = vsub.f32 %v8737, %v8808
  %v8840 = vsub.f32 %v8738, %v8809
  %v8841 = vsub.f32 %v8739, %v8810
  %v8842 = vsub.f32 %v8740, %v8811
  %v8843 = vsub.f32 %v8741, %v8802
  %v8844 = vsub.f32 %v8742, %v8812
  %v8845 = vsub.f32 %v8743, %v8813
  %v8846 = vsub.f32 %v8744, %v8814
  %v8847 = vsub.f32 %v8745, %v8815
  %v8848 = vsub.f32 %v8746, %v8816
  %v8849 = vsub.f32 %v8747, %v8817
  %v8850 = vsub.f32 %v8748, %v8818
  %v8851 = vmul.f32 %v8835, %v8835
  %v8852 = vmul.f32 %v8836, %v8836
  %v8853 = vmul.f32 %v8837, %v8837
  %v8854 = vmul.f32 %v8838, %v8838
  %v8855 = vmul.f32 %v8839, %v8839
  %v8856 = vmul.f32 %v8840, %v8840
  %v8857 = vmul.f32 %v8841, %v8841
  %v8858 = vmul.f32 %v8842, %v8842
  %v8859 = vmul.f32 %v8843, %v8843
  %v8860 = vmul.f32 %v8844, %v8844
  %v8861 = vmul.f32 %v8845, %v8845
  %v8862 = vmul.f32 %v8846, %v8846
  %v8863 = vmul.f32 %v8847, %v8847
  %v8864 = vmul.f32 %v8848, %v8848
  %v8865 = vmul.f32 %v8849, %v8849
  %v8866 = vmul.f32 %v8850, %v8850
  %v8883 = vrot.slane %v8852, 7
  %v8884 = vsel %vm7588, %v8883, %v8851
  %v8885 = vrot.slane %v8853, 6
  %v8886 = vsel %vm7752, %v8885, %v8884
  %v8887 = vrot.slane %v8854, 5
  %v8888 = vsel %vm7755, %v8887, %v8886
  %v8889 = vrot.slane %v8855, 4
  %v8890 = vsel %vm7758, %v8889, %v8888
  %v8891 = vrot.slane %v8856, 3
  %v8892 = vsel %vm7761, %v8891, %v8890
  %v8893 = vrot.slane %v8857, 2
  %v8894 = vsel %vm7764, %v8893, %v8892
  %v8895 = vrot.slane %v8858, 1
  %v8896 = vsel %vm7767, %v8895, %v8894
  %v8897 = vrot.slane %v8860, 7
  %v8898 = vsel %vm7588, %v8897, %v8859
  %v8899 = vrot.slane %v8861, 6
  %v8900 = vsel %vm7752, %v8899, %v8898
  %v8901 = vrot.slane %v8862, 5
  %v8902 = vsel %vm7755, %v8901, %v8900
  %v8903 = vrot.slane %v8863, 4
  %v8904 = vsel %vm7758, %v8903, %v8902
  %v8905 = vrot.slane %v8864, 3
  %v8906 = vsel %vm7761, %v8905, %v8904
  %v8907 = vrot.slane %v8865, 2
  %v8908 = vsel %vm7764, %v8907, %v8906
  %v8909 = vrot.slane %v8866, 1
  %v8910 = vsel %vm7767, %v8909, %v8908
  %v8913 = vsel %vm223, %v8896, 0.0
  %8914 = vadd.xlane.f32.xlu0 %v8913
  %v8915 = vpop.xlane.xlu0 %8914
  %v8916 = vsel %vm223, %v8910, 0.0
  %8917 = vadd.xlane.f32.xlu0 %v8916
  %v8918 = vpop.xlane.xlu0 %8917
  %v8919 = vmul.f32 %v8915, %v2663
  %v8920 = vmul.f32 %v8918, %v2663
  %v8921 = vadd.f32 %v8919, 1e-05
  %v8922 = vadd.f32 %v8920, 1e-05
  %v8923 = vrsqrt.pop %v8921
  %v8924 = vmul.f32 %v8923, %v8921
  %v8925 = vmul.f32 %v8924, %v8923
  %v8926 = vmul.f32 0.5, %v8925
  %v8927 = vsub.f32 1.5, %v8926
  %v8928 = vmul.f32 %v8923, %v8927
  %vm8929 = vweird.f32 %v8921
  %vm8930 = vweird.f32 %v8923
  %vm8931 = vmor %vm8929, %vm8930
  %v8932 = vsel %vm8931, %v8923, %v8928
  %v8933 = vrsqrt.pop %v8922
  %v8934 = vmul.f32 %v8933, %v8922
  %v8935 = vmul.f32 %v8934, %v8933
  %v8936 = vmul.f32 0.5, %v8935
  %v8937 = vsub.f32 1.5, %v8936
  %v8938 = vmul.f32 %v8933, %v8937
  %vm8939 = vweird.f32 %v8922
  %vm8940 = vweird.f32 %v8933
  %vm8941 = vmor %vm8939, %vm8940
  %v8942 = vsel %vm8941, %v8933, %v8938
  %v8945 = vrot.slane %v8932, 1
  %v8946 = vrot.slane %v8932, 2
  %v8947 = vrot.slane %v8932, 3
  %v8948 = vrot.slane %v8932, 4
  %v8949 = vrot.slane %v8932, 5
  %v8950 = vrot.slane %v8932, 6
  %v8951 = vrot.slane %v8932, 7
  %v8952 = vrot.slane %v8942, 1
  %v8953 = vrot.slane %v8942, 2
  %v8954 = vrot.slane %v8942, 3
  %v8955 = vrot.slane %v8942, 4
  %v8956 = vrot.slane %v8942, 5
  %v8957 = vrot.slane %v8942, 6
  %v8958 = vrot.slane %v8942, 7
  %v8975 = vmul.f32 %v8835, %v8932
  %v8976 = vmul.f32 %v8836, %v8945
  %v8977 = vmul.f32 %v8837, %v8946
  %v8978 = vmul.f32 %v8838, %v8947
  %v8979 = vmul.f32 %v8839, %v8948
  %v8980 = vmul.f32 %v8840, %v8949
  %v8981 = vmul.f32 %v8841, %v8950
  %v8982 = vmul.f32 %v8842, %v8951
  %v8983 = vmul.f32 %v8843, %v8942
  %v8984 = vmul.f32 %v8844, %v8952
  %v8985 = vmul.f32 %v8845, %v8953
  %v8986 = vmul.f32 %v8846, %v8954
  %v8987 = vmul.f32 %v8847, %v8955
  %v8988 = vmul.f32 %v8848, %v8956
  %v8989 = vmul.f32 %v8849, %v8957
  %v8990 = vmul.f32 %v8850, %v8958
  %v8991 = vperm.slane %v7699, 4
  %v8992 = vmul.f32 %v8975, %v8991
  %v8993 = vmul.f32 %v8976, %v8991
  %v8994 = vmul.f32 %v8977, %v8991
  %v8995 = vmul.f32 %v8978, %v8991
  %v8996 = vmul.f32 %v8979, %v8991
  %v8997 = vmul.f32 %v8980, %v8991
  %v8998 = vmul.f32 %v8981, %v8991
  %v8999 = vmul.f32 %v8982, %v8991
  %v9000 = vmul.f32 %v8983, %v8991
  %v9001 = vmul.f32 %v8984, %v8991
  %v9002 = vmul.f32 %v8985, %v8991
  %v9003 = vmul.f32 %v8986, %v8991
  %v9004 = vmul.f32 %v8987, %v8991
  %v9005 = vmul.f32 %v8988, %v8991
  %v9006 = vmul.f32 %v8989, %v8991
  %v9007 = vmul.f32 %v8990, %v8991
  %v9008 = vperm.slane %v7699, 5
  %v9009 = vadd.f32 %v8992, %v9008
  %v9010 = vadd.f32 %v8993, %v9008
  %v9011 = vadd.f32 %v8994, %v9008
  %v9012 = vadd.f32 %v8995, %v9008
  %v9013 = vadd.f32 %v8996, %v9008
  %v9014 = vadd.f32 %v8997, %v9008
  %v9015 = vadd.f32 %v8998, %v9008
  %v9016 = vadd.f32 %v8999, %v9008
  %v9017 = vadd.f32 %v9000, %v9008
  %v9018 = vadd.f32 %v9001, %v9008
  %v9019 = vadd.f32 %v9002, %v9008
  %v9020 = vadd.f32 %v9003, %v9008
  %v9021 = vadd.f32 %v9004, %v9008
  %v9022 = vadd.f32 %v9005, %v9008
  %v9023 = vadd.f32 %v9006, %v9008
  %v9024 = vadd.f32 %v9007, %v9008
  %v9025 = vmul.f32 %v9009, %v7604
  %v9026 = vmul.f32 %v9010, %v7609
  %v9027 = vmul.f32 %v9011, %v7610
  %v9028 = vmul.f32 %v9012, %v7611
  %v9029 = vmul.f32 %v9013, %v7612
  %v9030 = vmul.f32 %v9014, %v7613
  %v9031 = vmul.f32 %v9015, %v7614
  %v9032 = vmul.f32 %v9016, %v7615
  %v9033 = vmul.f32 %v9017, %v7608
  %v9034 = vmul.f32 %v9018, %v7616
  %v9035 = vmul.f32 %v9019, %v7617
  %v9036 = vmul.f32 %v9020, %v7618
  %v9037 = vmul.f32 %v9021, %v7619
  %v9038 = vmul.f32 %v9022, %v7620
  %v9039 = vmul.f32 %v9023, %v7621
  %v9040 = vmul.f32 %v9024, %v7622
  %s9041 = scalar_lea.vmem %s14, 32
  %v9042 = vld [vmem:[%s9041] sm:$0xf]
  %v9043 = vld [vmem:[%s9041 + $0x4] sm:$0xf]
  %v9044 = vld [vmem:[%s9041 + $0x8] sm:$0xf]
  %v9045 = vld [vmem:[%s9041 + $0xc] sm:$0xf]
  %v9046 = vld [vmem:[%s9041 + $0x10] sm:$0xf]
  %v9047 = vld [vmem:[%s9041 + $0x14] sm:$0xf]
  %v9048 = vld [vmem:[%s9041 + $0x18] sm:$0xf]
  %v9049 = vld [vmem:[%s9041 + $0x1c] sm:$0xf]
  %s9050 = scalar_lea.vmem %s15, 32
  %v9051 = vld [vmem:[%s9050] sm:$0xf]
  %v9052 = vld [vmem:[%s9050 + $0x4] sm:$0xf]
  %v9053 = vld [vmem:[%s9050 + $0x8] sm:$0xf]
  %v9054 = vld [vmem:[%s9050 + $0xc] sm:$0xf]
  %v9055 = vld [vmem:[%s9050 + $0x10] sm:$0xf]
  %v9056 = vld [vmem:[%s9050 + $0x14] sm:$0xf]
  %v9057 = vld [vmem:[%s9050 + $0x18] sm:$0xf]
  %v9058 = vld [vmem:[%s9050 + $0x1c] sm:$0xf]
  %s9059 = scalar_lea.vmem %s16, 32
  %v9060 = vld [vmem:[%s9059] sm:$0xf]
  %v9061 = vld [vmem:[%s9059 + $0x4] sm:$0xf]
  %v9062 = vld [vmem:[%s9059 + $0x8] sm:$0xf]
  %v9063 = vld [vmem:[%s9059 + $0xc] sm:$0xf]
  %v9064 = vld [vmem:[%s9059 + $0x10] sm:$0xf]
  %v9065 = vld [vmem:[%s9059 + $0x14] sm:$0xf]
  %v9066 = vld [vmem:[%s9059 + $0x18] sm:$0xf]
  %v9067 = vld [vmem:[%s9059 + $0x1c] sm:$0xf]
  %s9068 = scalar_lea.vmem %s18, 16
  %v9069 = vld [vmem:[%s9068] sm:$0xf]
  %v9070 = vld [vmem:[%s9068 + $0x4] sm:$0xf]
  %v9071 = vld [vmem:[%s9068 + $0x8] sm:$0xf]
  %v9072 = vld [vmem:[%s9068 + $0xc] sm:$0xf]
  %s9073 = scalar_lea.vmem %s17, 6
  %v9074 = vld [vmem:[%s9073] sm:$0x3]
  %v9075 = vld [vmem:[%s9073 + $0x2] sm:$0x3]
  %v9076 = vld [vmem:[%s9073 + $0x4] sm:$0x3]
  %s9077 = scalar_lea.vmem %s19, 16
  %v9078 = vld [vmem:[%s9077] sm:$0xf]
  %v9079 = vld [vmem:[%s9077 + $0x4] sm:$0xf]
  %v9080 = vld [vmem:[%s9077 + $0x8] sm:$0xf]
  %v9081 = vld [vmem:[%s9077 + $0xc] sm:$0xf]
  %s9082 = scalar_lea.vmem %s20, 1
  %v9083 = vld [vmem:[%s9082] sm:$0x1]
  %s9084 = scalar_lea.vmem %s21, 32
  %v9085 = vld [vmem:[%s9084] sm:$0xf]
  %v9086 = vld [vmem:[%s9084 + $0x4] sm:$0xf]
  %v9087 = vld [vmem:[%s9084 + $0x8] sm:$0xf]
  %v9088 = vld [vmem:[%s9084 + $0xc] sm:$0xf]
  %v9089 = vld [vmem:[%s9084 + $0x10] sm:$0xf]
  %v9090 = vld [vmem:[%s9084 + $0x14] sm:$0xf]
  %v9091 = vld [vmem:[%s9084 + $0x18] sm:$0xf]
  %v9092 = vld [vmem:[%s9084 + $0x1c] sm:$0xf]
  %s9093 = scalar_lea.vmem %s22, 8
  %v9094 = vld [vmem:[%s9093] sm:$0x3f]
  %v9095 = vpack.c.bf16 %v9025, %v9025
  %v9096 = vpack.c.bf16 %v9026, %v9026
  %v9097 = vpack.c.bf16 %v9027, %v9027
  %v9098 = vpack.c.bf16 %v9028, %v9028
  %v9099 = vpack.c.bf16 %v9029, %v9029
  %v9100 = vpack.c.bf16 %v9030, %v9030
  %v9101 = vpack.c.bf16 %v9031, %v9031
  %v9102 = vpack.c.bf16 %v9032, %v9032
  %v9103 = vpack.c.bf16 %v9033, %v9033
  %v9104 = vpack.c.bf16 %v9034, %v9034
  %v9105 = vpack.c.bf16 %v9035, %v9035
  %v9106 = vpack.c.bf16 %v9036, %v9036
  %v9107 = vpack.c.bf16 %v9037, %v9037
  %v9108 = vpack.c.bf16 %v9038, %v9038
  %v9109 = vpack.c.bf16 %v9039, %v9039
  %v9110 = vpack.c.bf16 %v9040, %v9040
  %v9111 = vperm.slane %v9074, 0
  %v9128 = vunpack.c.l.b16 %v9095
  %v9129 = vunpack.c.l.b16 %v9096
  %v9130 = vunpack.c.l.b16 %v9097
  %v9131 = vunpack.c.l.b16 %v9098
  %v9132 = vunpack.c.l.b16 %v9099
  %v9133 = vunpack.c.l.b16 %v9100
  %v9134 = vunpack.c.l.b16 %v9101
  %v9135 = vunpack.c.l.b16 %v9102
  %v9136 = vunpack.c.l.b16 %v9103
  %v9137 = vunpack.c.l.b16 %v9104
  %v9138 = vunpack.c.l.b16 %v9105
  %v9139 = vunpack.c.l.b16 %v9106
  %v9140 = vunpack.c.l.b16 %v9107
  %v9141 = vunpack.c.l.b16 %v9108
  %v9142 = vunpack.c.l.b16 %v9109
  %v9143 = vunpack.c.l.b16 %v9110
  %v9144 = vrot.slane %v9129, 7
  %v9145 = vsel %vm7588, %v9144, %v9128
  %v9146 = vrot.slane %v9130, 6
  %v9147 = vsel %vm7752, %v9146, %v9145
  %v9148 = vrot.slane %v9131, 5
  %v9149 = vsel %vm7755, %v9148, %v9147
  %v9150 = vrot.slane %v9132, 4
  %v9151 = vsel %vm7758, %v9150, %v9149
  %v9152 = vrot.slane %v9133, 3
  %v9153 = vsel %vm7761, %v9152, %v9151
  %v9154 = vrot.slane %v9134, 2
  %v9155 = vsel %vm7764, %v9154, %v9153
  %v9156 = vrot.slane %v9135, 1
  %v9157 = vsel %vm7767, %v9156, %v9155
  %v9158 = vrot.slane %v9137, 7
  %v9159 = vsel %vm7588, %v9158, %v9136
  %v9160 = vrot.slane %v9138, 6
  %v9161 = vsel %vm7752, %v9160, %v9159
  %v9162 = vrot.slane %v9139, 5
  %v9163 = vsel %vm7755, %v9162, %v9161
  %v9164 = vrot.slane %v9140, 4
  %v9165 = vsel %vm7758, %v9164, %v9163
  %v9166 = vrot.slane %v9141, 3
  %v9167 = vsel %vm7761, %v9166, %v9165
  %v9168 = vrot.slane %v9142, 2
  %v9169 = vsel %vm7764, %v9168, %v9167
  %v9170 = vrot.slane %v9143, 1
  %v9171 = vsel %vm7767, %v9170, %v9169
  %v9172 = vpack.c.b16 %v9171, %v9157
  %v9177 = vunpack.c.l.b16 %v9042
  %v9178 = vunpack.c.l.b16 %v9043
  %v9179 = vunpack.c.l.b16 %v9044
  %v9180 = vunpack.c.l.b16 %v9045
  %v9181 = vpack.c.b16 %v9178, %v9177
  %v9182 = vpack.c.b16 %v9180, %v9179
  %v9186 = vsel %vm223, %v9172, 0
  %9188 = vmatpush.bf16.msra.mxu0 0
  %9189 = vmatpush.bf16.msra.mxu0 0
  %9190 = vmatpush.bf16.msra.mxu0 0
  %9191 = vmatpush.bf16.msra.mxu0 0
  %9192 = vmatpush.bf16.msra.mxu0 0
  %9193 = vmatpush.bf16.msra.mxu0 0
  %9194 = vmatpush.bf16.msra.mxu0 %v9182
  %9195 = vmatpush.bf16.msra.mxu0 %v9181
  %9196 = vmatmul.bf16.gmra.mxu0 %v9186
  %v9197 = vpop.f32.mrf.mxu0
  %v9198 = vadd.f32 %v9111, %v9197
  %v9199 = vpop.f32.mrf.mxu0
  %v9200 = vadd.f32 %v9111, %v9199
  %9201 = vdwg.mxu0
  %v9202 = vperm.slane %v9075, 0
  %v9207 = vunpack.c.l.b16 %v9051
  %v9208 = vunpack.c.l.b16 %v9052
  %v9209 = vunpack.c.l.b16 %v9053
  %v9210 = vunpack.c.l.b16 %v9054
  %v9211 = vpack.c.b16 %v9208, %v9207
  %v9212 = vpack.c.b16 %v9210, %v9209
  %9215 = vmatpush.bf16.msra.mxu0 0
  %9216 = vmatpush.bf16.msra.mxu0 0
  %9217 = vmatpush.bf16.msra.mxu0 0
  %9218 = vmatpush.bf16.msra.mxu0 0
  %9219 = vmatpush.bf16.msra.mxu0 0
  %9220 = vmatpush.bf16.msra.mxu0 0
  %9221 = vmatpush.bf16.msra.mxu0 %v9212
  %9222 = vmatpush.bf16.msra.mxu0 %v9211
  %9223 = vmatmul.bf16.gmra.mxu0 %v9186
  %v9224 = vpop.f32.mrf.mxu0
  %v9225 = vadd.f32 %v9202, %v9224
  %v9226 = vpop.f32.mrf.mxu0
  %v9227 = vadd.f32 %v9202, %v9226
  %9228 = vdwg.mxu0
  %v9229 = vperm.slane %v9076, 0
  %v9234 = vunpack.c.l.b16 %v9060
  %v9235 = vunpack.c.l.b16 %v9061
  %v9236 = vunpack.c.l.b16 %v9062
  %v9237 = vunpack.c.l.b16 %v9063
  %v9238 = vpack.c.b16 %v9235, %v9234
  %v9239 = vpack.c.b16 %v9237, %v9236
  %9242 = vmatpush.bf16.msra.mxu0 0
  %9243 = vmatpush.bf16.msra.mxu0 0
  %9244 = vmatpush.bf16.msra.mxu0 0
  %9245 = vmatpush.bf16.msra.mxu0 0
  %9246 = vmatpush.bf16.msra.mxu0 0
  %9247 = vmatpush.bf16.msra.mxu0 0
  %9248 = vmatpush.bf16.msra.mxu0 %v9239
  %9249 = vmatpush.bf16.msra.mxu0 %v9238
  %9250 = vmatmul.bf16.gmra.mxu0 %v9186
  %v9251 = vpop.f32.mrf.mxu0
  %v9252 = vadd.f32 %v9229, %v9251
  %v9253 = vpop.f32.mrf.mxu0
  %v9254 = vadd.f32 %v9229, %v9253
  %9255 = vdwg.mxu0
  %v9256 = vmul.f32 %v9198, 0.25
  %v9257 = vmul.f32 %v9200, 0.25
  %v9258 = vpack.c.bf16 %v9256, %v9256
  %v9259 = vpack.c.bf16 %v9257, %v9257
  %v9260 = vpack.c.bf16 %v9225, %v9225
  %v9261 = vpack.c.bf16 %v9227, %v9227
  %v9263 = vsel %vm517, %v9258, 0
  %v9266 = vsel %vm517, %v9260, 0
  %9268 = vmatpush.bf16.xpose.msra.mxu0 0
  %9269 = vmatpush.bf16.xpose.msra.mxu0 0
  %9270 = vmatpush.bf16.xpose.msra.mxu0 0
  %9271 = vmatpush.bf16.xpose.msra.mxu0 0
  %9272 = vmatpush.bf16.xpose.msra.mxu0 0
  %9273 = vmatpush.bf16.xpose.msra.mxu0 0
  %9274 = vmatpush.bf16.xpose.msra.mxu0 0
  %9275 = vmatpush.bf16.xpose.msra.mxu0 %v9266
  %9276 = vmatmul.bf16.gmra.mxu0 %v9263
  %v9277 = vpop.f32.mrf.mxu0
  %v9278 = vadd.f32 %v7875, %v9277
  %v9279 = vpop.f32.mrf.mxu0
  %9280 = vdwg.mxu0
  %v9282 = vsel %vm517, %v9259, 0
  %v9285 = vsel %vm517, %v9261, 0
  %9287 = vmatpush.bf16.xpose.msra.mxu0 0
  %9288 = vmatpush.bf16.xpose.msra.mxu0 0
  %9289 = vmatpush.bf16.xpose.msra.mxu0 0
  %9290 = vmatpush.bf16.xpose.msra.mxu0 0
  %9291 = vmatpush.bf16.xpose.msra.mxu0 0
  %9292 = vmatpush.bf16.xpose.msra.mxu0 0
  %9293 = vmatpush.bf16.xpose.msra.mxu0 0
  %9294 = vmatpush.bf16.xpose.msra.mxu0 %v9285
  %9295 = vmatmul.bf16.gmra.mxu0 %v9282
  %v9296 = vpop.f32.mrf.mxu0
  %v9297 = vadd.f32 %v7876, %v9296
  %v9298 = vpop.f32.mrf.mxu0
  %9299 = vdwg.mxu0
  %v9300 = vsel %vm822, %v9278, -inf
  %9301 = vmax.xlane.f32.xlu0 %v9300
  %v9302 = vpop.xlane.xlu0 %9301
  %v9303 = vsel %vm822, %v9297, -inf
  %9304 = vmax.xlane.f32.xlu0 %v9303
  %v9305 = vpop.xlane.xlu0 %9304
  %v9306 = vsub.f32 %v9278, %v9302
  %v9307 = vsub.f32 %v9297, %v9305
  %v9308 = vmul.f32 %v9306, 1.442695
  %v9309 = vpow.pop %v9308
  %v9310 = vmul.f32 %v9307, 1.442695
  %v9311 = vpow.pop %v9310
  %v9312 = vsel %vm822, %v9309, 0.0
  %9313 = vadd.xlane.f32.xlu0 %v9312
  %v9314 = vpop.xlane.xlu0 %9313
  %v9315 = vsel %vm822, %v9311, 0.0
  %9316 = vadd.xlane.f32.xlu0 %v9315
  %v9317 = vpop.xlane.xlu0 %9316
  %v9318 = vrcp.pop %v9314
  %v9319 = vrcp.pop %v9317
  %v9320 = vmul.f32 %v9309, %v9318
  %v9321 = vmul.f32 %v9311, %v9319
  %v9322 = vpack.c.bf16 %v9320, %v9320
  %v9323 = vpack.c.bf16 %v9321, %v9321
  %v9324 = vpack.c.bf16 %v9252, %v9252
  %v9325 = vpack.c.bf16 %v9254, %v9254
  %v9327 = vsel %vm822, %v9322, 0
  %v9330 = vsel %vm1034, %v9324, 0
  %9332 = vmatpush.bf16.msra.mxu0 0
  %9333 = vmatpush.bf16.msra.mxu0 0
  %9334 = vmatpush.bf16.msra.mxu0 0
  %9335 = vmatpush.bf16.msra.mxu0 0
  %9336 = vmatpush.bf16.msra.mxu0 0
  %9337 = vmatpush.bf16.msra.mxu0 0
  %9338 = vmatpush.bf16.msra.mxu0 0
  %9339 = vmatpush.bf16.msra.mxu0 %v9330
  %9340 = vmatmul.bf16.gmra.mxu0 %v9327
  %v9341 = vpop.f32.mrf.mxu0
  %v9342 = vadd.f32 0.0, %v9341
  %v9343 = vpop.f32.mrf.mxu0
  %9344 = vdwg.mxu0
  %v9346 = vsel %vm822, %v9323, 0
  %v9349 = vsel %vm1034, %v9325, 0
  %9351 = vmatpush.bf16.msra.mxu0 0
  %9352 = vmatpush.bf16.msra.mxu0 0
  %9353 = vmatpush.bf16.msra.mxu0 0
  %9354 = vmatpush.bf16.msra.mxu0 0
  %9355 = vmatpush.bf16.msra.mxu0 0
  %9356 = vmatpush.bf16.msra.mxu0 0
  %9357 = vmatpush.bf16.msra.mxu0 0
  %9358 = vmatpush.bf16.msra.mxu0 %v9349
  %9359 = vmatmul.bf16.gmra.mxu0 %v9346
  %v9360 = vpop.f32.mrf.mxu0
  %v9361 = vadd.f32 0.0, %v9360
  %v9362 = vpop.f32.mrf.mxu0
  %9363 = vdwg.mxu0
  %v9364 = vpack.c.bf16 %v9361, %v9342
  %v9367 = vunpack.c.l.b16 %v9069
  %v9368 = vunpack.c.l.b16 %v9070
  %v9369 = vpack.c.b16 %v9368, %v9367
  %v9372 = vsel %vm517, %v9364, 0
  %9374 = vmatpush.bf16.msra.mxu0 0
  %9375 = vmatpush.bf16.msra.mxu0 0
  %9376 = vmatpush.bf16.msra.mxu0 0
  %9377 = vmatpush.bf16.msra.mxu0 0
  %9378 = vmatpush.bf16.msra.mxu0 0
  %9379 = vmatpush.bf16.msra.mxu0 0
  %9380 = vmatpush.bf16.msra.mxu0 0
  %9381 = vmatpush.bf16.msra.mxu0 %v9369
  %9382 = vmatmul.bf16.gmra.mxu0 %v9372
  %v9383 = vpop.f32.mrf.mxu0
  %v9384 = vadd.f32 0.0, %v9383
  %v9385 = vpop.f32.mrf.mxu0
  %v9386 = vadd.f32 0.0, %v9385
  %9387 = vdwg.mxu0
  %v9388 = vperm.slane %v9094, 0
  %v9389 = vadd.f32 %v9388, %v9384
  %v9390 = vadd.f32 %v9388, %v9386
  %v9391 = vperm.slane %v9074, 1
  %v9396 = vunpack.c.l.b16 %v9046
  %v9397 = vunpack.c.l.b16 %v9047
  %v9398 = vunpack.c.l.b16 %v9048
  %v9399 = vunpack.c.l.b16 %v9049
  %v9400 = vpack.c.b16 %v9397, %v9396
  %v9401 = vpack.c.b16 %v9399, %v9398
  %9404 = vmatpush.bf16.msra.mxu0 0
  %9405 = vmatpush.bf16.msra.mxu0 0
  %9406 = vmatpush.bf16.msra.mxu0 0
  %9407 = vmatpush.bf16.msra.mxu0 0
  %9408 = vmatpush.bf16.msra.mxu0 0
  %9409 = vmatpush.bf16.msra.mxu0 0
  %9410 = vmatpush.bf16.msra.mxu0 %v9401
  %9411 = vmatpush.bf16.msra.mxu0 %v9400
  %9412 = vmatmul.bf16.gmra.mxu0 %v9186
  %v9413 = vpop.f32.mrf.mxu0
  %v9414 = vadd.f32 %v9391, %v9413
  %v9415 = vpop.f32.mrf.mxu0
  %v9416 = vadd.f32 %v9391, %v9415
  %9417 = vdwg.mxu0
  %v9418 = vperm.slane %v9075, 1
  %v9423 = vunpack.c.l.b16 %v9055
  %v9424 = vunpack.c.l.b16 %v9056
  %v9425 = vunpack.c.l.b16 %v9057
  %v9426 = vunpack.c.l.b16 %v9058
  %v9427 = vpack.c.b16 %v9424, %v9423
  %v9428 = vpack.c.b16 %v9426, %v9425
  %9431 = vmatpush.bf16.msra.mxu0 0
  %9432 = vmatpush.bf16.msra.mxu0 0
  %9433 = vmatpush.bf16.msra.mxu0 0
  %9434 = vmatpush.bf16.msra.mxu0 0
  %9435 = vmatpush.bf16.msra.mxu0 0
  %9436 = vmatpush.bf16.msra.mxu0 0
  %9437 = vmatpush.bf16.msra.mxu0 %v9428
  %9438 = vmatpush.bf16.msra.mxu0 %v9427
  %9439 = vmatmul.bf16.gmra.mxu0 %v9186
  %v9440 = vpop.f32.mrf.mxu0
  %v9441 = vadd.f32 %v9418, %v9440
  %v9442 = vpop.f32.mrf.mxu0
  %v9443 = vadd.f32 %v9418, %v9442
  %9444 = vdwg.mxu0
  %v9445 = vperm.slane %v9076, 1
  %v9450 = vunpack.c.l.b16 %v9064
  %v9451 = vunpack.c.l.b16 %v9065
  %v9452 = vunpack.c.l.b16 %v9066
  %v9453 = vunpack.c.l.b16 %v9067
  %v9454 = vpack.c.b16 %v9451, %v9450
  %v9455 = vpack.c.b16 %v9453, %v9452
  %9458 = vmatpush.bf16.msra.mxu0 0
  %9459 = vmatpush.bf16.msra.mxu0 0
  %9460 = vmatpush.bf16.msra.mxu0 0
  %9461 = vmatpush.bf16.msra.mxu0 0
  %9462 = vmatpush.bf16.msra.mxu0 0
  %9463 = vmatpush.bf16.msra.mxu0 0
  %9464 = vmatpush.bf16.msra.mxu0 %v9455
  %9465 = vmatpush.bf16.msra.mxu0 %v9454
  %9466 = vmatmul.bf16.gmra.mxu0 %v9186
  %v9467 = vpop.f32.mrf.mxu0
  %v9468 = vadd.f32 %v9445, %v9467
  %v9469 = vpop.f32.mrf.mxu0
  %v9470 = vadd.f32 %v9445, %v9469
  %9471 = vdwg.mxu0
  %v9472 = vmul.f32 %v9414, 0.25
  %v9473 = vmul.f32 %v9416, 0.25
  %v9474 = vpack.c.bf16 %v9472, %v9472
  %v9475 = vpack.c.bf16 %v9473, %v9473
  %v9476 = vpack.c.bf16 %v9441, %v9441
  %v9477 = vpack.c.bf16 %v9443, %v9443
  %v9479 = vsel %vm517, %v9474, 0
  %v9482 = vsel %vm517, %v9476, 0
  %9484 = vmatpush.bf16.xpose.msra.mxu0 0
  %9485 = vmatpush.bf16.xpose.msra.mxu0 0
  %9486 = vmatpush.bf16.xpose.msra.mxu0 0
  %9487 = vmatpush.bf16.xpose.msra.mxu0 0
  %9488 = vmatpush.bf16.xpose.msra.mxu0 0
  %9489 = vmatpush.bf16.xpose.msra.mxu0 0
  %9490 = vmatpush.bf16.xpose.msra.mxu0 0
  %9491 = vmatpush.bf16.xpose.msra.mxu0 %v9482
  %9492 = vmatmul.bf16.gmra.mxu0 %v9479
  %v9493 = vpop.f32.mrf.mxu0
  %v9494 = vadd.f32 %v7875, %v9493
  %v9495 = vpop.f32.mrf.mxu0
  %9496 = vdwg.mxu0
  %v9498 = vsel %vm517, %v9475, 0
  %v9501 = vsel %vm517, %v9477, 0
  %9503 = vmatpush.bf16.xpose.msra.mxu0 0
  %9504 = vmatpush.bf16.xpose.msra.mxu0 0
  %9505 = vmatpush.bf16.xpose.msra.mxu0 0
  %9506 = vmatpush.bf16.xpose.msra.mxu0 0
  %9507 = vmatpush.bf16.xpose.msra.mxu0 0
  %9508 = vmatpush.bf16.xpose.msra.mxu0 0
  %9509 = vmatpush.bf16.xpose.msra.mxu0 0
  %9510 = vmatpush.bf16.xpose.msra.mxu0 %v9501
  %9511 = vmatmul.bf16.gmra.mxu0 %v9498
  %v9512 = vpop.f32.mrf.mxu0
  %v9513 = vadd.f32 %v7876, %v9512
  %v9514 = vpop.f32.mrf.mxu0
  %9515 = vdwg.mxu0
  %v9516 = vsel %vm822, %v9494, -inf
  %9517 = vmax.xlane.f32.xlu0 %v9516
  %v9518 = vpop.xlane.xlu0 %9517
  %v9519 = vsel %vm822, %v9513, -inf
  %9520 = vmax.xlane.f32.xlu0 %v9519
  %v9521 = vpop.xlane.xlu0 %9520
  %v9522 = vsub.f32 %v9494, %v9518
  %v9523 = vsub.f32 %v9513, %v9521
  %v9524 = vmul.f32 %v9522, 1.442695
  %v9525 = vpow.pop %v9524
  %v9526 = vmul.f32 %v9523, 1.442695
  %v9527 = vpow.pop %v9526
  %v9528 = vsel %vm822, %v9525, 0.0
  %9529 = vadd.xlane.f32.xlu0 %v9528
  %v9530 = vpop.xlane.xlu0 %9529
  %v9531 = vsel %vm822, %v9527, 0.0
  %9532 = vadd.xlane.f32.xlu0 %v9531
  %v9533 = vpop.xlane.xlu0 %9532
  %v9534 = vrcp.pop %v9530
  %v9535 = vrcp.pop %v9533
  %v9536 = vmul.f32 %v9525, %v9534
  %v9537 = vmul.f32 %v9527, %v9535
  %v9538 = vpack.c.bf16 %v9536, %v9536
  %v9539 = vpack.c.bf16 %v9537, %v9537
  %v9540 = vpack.c.bf16 %v9468, %v9468
  %v9541 = vpack.c.bf16 %v9470, %v9470
  %v9543 = vsel %vm822, %v9538, 0
  %v9546 = vsel %vm1034, %v9540, 0
  %9548 = vmatpush.bf16.msra.mxu0 0
  %9549 = vmatpush.bf16.msra.mxu0 0
  %9550 = vmatpush.bf16.msra.mxu0 0
  %9551 = vmatpush.bf16.msra.mxu0 0
  %9552 = vmatpush.bf16.msra.mxu0 0
  %9553 = vmatpush.bf16.msra.mxu0 0
  %9554 = vmatpush.bf16.msra.mxu0 0
  %9555 = vmatpush.bf16.msra.mxu0 %v9546
  %9556 = vmatmul.bf16.gmra.mxu0 %v9543
  %v9557 = vpop.f32.mrf.mxu0
  %v9558 = vadd.f32 0.0, %v9557
  %v9559 = vpop.f32.mrf.mxu0
  %9560 = vdwg.mxu0
  %v9562 = vsel %vm822, %v9539, 0
  %v9565 = vsel %vm1034, %v9541, 0
  %9567 = vmatpush.bf16.msra.mxu0 0
  %9568 = vmatpush.bf16.msra.mxu0 0
  %9569 = vmatpush.bf16.msra.mxu0 0
  %9570 = vmatpush.bf16.msra.mxu0 0
  %9571 = vmatpush.bf16.msra.mxu0 0
  %9572 = vmatpush.bf16.msra.mxu0 0
  %9573 = vmatpush.bf16.msra.mxu0 0
  %9574 = vmatpush.bf16.msra.mxu0 %v9565
  %9575 = vmatmul.bf16.gmra.mxu0 %v9562
  %v9576 = vpop.f32.mrf.mxu0
  %v9577 = vadd.f32 0.0, %v9576
  %v9578 = vpop.f32.mrf.mxu0
  %9579 = vdwg.mxu0
  %v9580 = vpack.c.bf16 %v9577, %v9558
  %v9583 = vunpack.c.l.b16 %v9071
  %v9584 = vunpack.c.l.b16 %v9072
  %v9585 = vpack.c.b16 %v9584, %v9583
  %v9588 = vsel %vm517, %v9580, 0
  %9590 = vmatpush.bf16.msra.mxu0 0
  %9591 = vmatpush.bf16.msra.mxu0 0
  %9592 = vmatpush.bf16.msra.mxu0 0
  %9593 = vmatpush.bf16.msra.mxu0 0
  %9594 = vmatpush.bf16.msra.mxu0 0
  %9595 = vmatpush.bf16.msra.mxu0 0
  %9596 = vmatpush.bf16.msra.mxu0 0
  %9597 = vmatpush.bf16.msra.mxu0 %v9585
  %9598 = vmatmul.bf16.gmra.mxu0 %v9588
  %v9599 = vpop.f32.mrf.mxu0
  %v9600 = vadd.f32 0.0, %v9599
  %v9601 = vpop.f32.mrf.mxu0
  %v9602 = vadd.f32 0.0, %v9601
  %9603 = vdwg.mxu0
  %v9604 = vadd.f32 %v9389, %v9600
  %v9605 = vadd.f32 %v9390, %v9602
  %v9608 = vrot.slane %v9604, 1
  %v9609 = vrot.slane %v9604, 2
  %v9610 = vrot.slane %v9604, 3
  %v9611 = vrot.slane %v9604, 4
  %v9612 = vrot.slane %v9604, 5
  %v9613 = vrot.slane %v9604, 6
  %v9614 = vrot.slane %v9604, 7
  %v9615 = vrot.slane %v9605, 1
  %v9616 = vrot.slane %v9605, 2
  %v9617 = vrot.slane %v9605, 3
  %v9618 = vrot.slane %v9605, 4
  %v9619 = vrot.slane %v9605, 5
  %v9620 = vrot.slane %v9605, 6
  %v9621 = vrot.slane %v9605, 7
  %v9638 = vadd.f32 %v9025, %v9604
  %v9639 = vadd.f32 %v9026, %v9608
  %v9640 = vadd.f32 %v9027, %v9609
  %v9641 = vadd.f32 %v9028, %v9610
  %v9642 = vadd.f32 %v9029, %v9611
  %v9643 = vadd.f32 %v9030, %v9612
  %v9644 = vadd.f32 %v9031, %v9613
  %v9645 = vadd.f32 %v9032, %v9614
  %v9646 = vadd.f32 %v9033, %v9605
  %v9647 = vadd.f32 %v9034, %v9615
  %v9648 = vadd.f32 %v9035, %v9616
  %v9649 = vadd.f32 %v9036, %v9617
  %v9650 = vadd.f32 %v9037, %v9618
  %v9651 = vadd.f32 %v9038, %v9619
  %v9652 = vadd.f32 %v9039, %v9620
  %v9653 = vadd.f32 %v9040, %v9621
  %v9670 = vrot.slane %v9639, 7
  %v9671 = vsel %vm7588, %v9670, %v9638
  %v9672 = vrot.slane %v9640, 6
  %v9673 = vsel %vm7752, %v9672, %v9671
  %v9674 = vrot.slane %v9641, 5
  %v9675 = vsel %vm7755, %v9674, %v9673
  %v9676 = vrot.slane %v9642, 4
  %v9677 = vsel %vm7758, %v9676, %v9675
  %v9678 = vrot.slane %v9643, 3
  %v9679 = vsel %vm7761, %v9678, %v9677
  %v9680 = vrot.slane %v9644, 2
  %v9681 = vsel %vm7764, %v9680, %v9679
  %v9682 = vrot.slane %v9645, 1
  %v9683 = vsel %vm7767, %v9682, %v9681
  %v9684 = vrot.slane %v9647, 7
  %v9685 = vsel %vm7588, %v9684, %v9646
  %v9686 = vrot.slane %v9648, 6
  %v9687 = vsel %vm7752, %v9686, %v9685
  %v9688 = vrot.slane %v9649, 5
  %v9689 = vsel %vm7755, %v9688, %v9687
  %v9690 = vrot.slane %v9650, 4
  %v9691 = vsel %vm7758, %v9690, %v9689
  %v9692 = vrot.slane %v9651, 3
  %v9693 = vsel %vm7761, %v9692, %v9691
  %v9694 = vrot.slane %v9652, 2
  %v9695 = vsel %vm7764, %v9694, %v9693
  %v9696 = vrot.slane %v9653, 1
  %v9697 = vsel %vm7767, %v9696, %v9695
  %v9700 = vsel %vm223, %v9683, 0.0
  %9701 = vadd.xlane.f32.xlu0 %v9700
  %v9702 = vpop.xlane.xlu0 %9701
  %v9703 = vsel %vm223, %v9697, 0.0
  %9704 = vadd.xlane.f32.xlu0 %v9703
  %v9705 = vpop.xlane.xlu0 %9704
  %v9706 = vmul.f32 %v9702, %v2663
  %v9707 = vmul.f32 %v9705, %v2663
  %v9710 = vrot.slane %v9706, 1
  %v9711 = vrot.slane %v9706, 2
  %v9712 = vrot.slane %v9706, 3
  %v9713 = vrot.slane %v9706, 4
  %v9714 = vrot.slane %v9706, 5
  %v9715 = vrot.slane %v9706, 6
  %v9716 = vrot.slane %v9706, 7
  %v9717 = vrot.slane %v9707, 1
  %v9718 = vrot.slane %v9707, 2
  %v9719 = vrot.slane %v9707, 3
  %v9720 = vrot.slane %v9707, 4
  %v9721 = vrot.slane %v9707, 5
  %v9722 = vrot.slane %v9707, 6
  %v9723 = vrot.slane %v9707, 7
  %v9740 = vsub.f32 %v9638, %v9706
  %v9741 = vsub.f32 %v9639, %v9710
  %v9742 = vsub.f32 %v9640, %v9711
  %v9743 = vsub.f32 %v9641, %v9712
  %v9744 = vsub.f32 %v9642, %v9713
  %v9745 = vsub.f32 %v9643, %v9714
  %v9746 = vsub.f32 %v9644, %v9715
  %v9747 = vsub.f32 %v9645, %v9716
  %v9748 = vsub.f32 %v9646, %v9707
  %v9749 = vsub.f32 %v9647, %v9717
  %v9750 = vsub.f32 %v9648, %v9718
  %v9751 = vsub.f32 %v9649, %v9719
  %v9752 = vsub.f32 %v9650, %v9720
  %v9753 = vsub.f32 %v9651, %v9721
  %v9754 = vsub.f32 %v9652, %v9722
  %v9755 = vsub.f32 %v9653, %v9723
  %v9756 = vmul.f32 %v9740, %v9740
  %v9757 = vmul.f32 %v9741, %v9741
  %v9758 = vmul.f32 %v9742, %v9742
  %v9759 = vmul.f32 %v9743, %v9743
  %v9760 = vmul.f32 %v9744, %v9744
  %v9761 = vmul.f32 %v9745, %v9745
  %v9762 = vmul.f32 %v9746, %v9746
  %v9763 = vmul.f32 %v9747, %v9747
  %v9764 = vmul.f32 %v9748, %v9748
  %v9765 = vmul.f32 %v9749, %v9749
  %v9766 = vmul.f32 %v9750, %v9750
  %v9767 = vmul.f32 %v9751, %v9751
  %v9768 = vmul.f32 %v9752, %v9752
  %v9769 = vmul.f32 %v9753, %v9753
  %v9770 = vmul.f32 %v9754, %v9754
  %v9771 = vmul.f32 %v9755, %v9755
  %v9788 = vrot.slane %v9757, 7
  %v9789 = vsel %vm7588, %v9788, %v9756
  %v9790 = vrot.slane %v9758, 6
  %v9791 = vsel %vm7752, %v9790, %v9789
  %v9792 = vrot.slane %v9759, 5
  %v9793 = vsel %vm7755, %v9792, %v9791
  %v9794 = vrot.slane %v9760, 4
  %v9795 = vsel %vm7758, %v9794, %v9793
  %v9796 = vrot.slane %v9761, 3
  %v9797 = vsel %vm7761, %v9796, %v9795
  %v9798 = vrot.slane %v9762, 2
  %v9799 = vsel %vm7764, %v9798, %v9797
  %v9800 = vrot.slane %v9763, 1
  %v9801 = vsel %vm7767, %v9800, %v9799
  %v9802 = vrot.slane %v9765, 7
  %v9803 = vsel %vm7588, %v9802, %v9764
  %v9804 = vrot.slane %v9766, 6
  %v9805 = vsel %vm7752, %v9804, %v9803
  %v9806 = vrot.slane %v9767, 5
  %v9807 = vsel %vm7755, %v9806, %v9805
  %v9808 = vrot.slane %v9768, 4
  %v9809 = vsel %vm7758, %v9808, %v9807
  %v9810 = vrot.slane %v9769, 3
  %v9811 = vsel %vm7761, %v9810, %v9809
  %v9812 = vrot.slane %v9770, 2
  %v9813 = vsel %vm7764, %v9812, %v9811
  %v9814 = vrot.slane %v9771, 1
  %v9815 = vsel %vm7767, %v9814, %v9813
  %v9818 = vsel %vm223, %v9801, 0.0
  %9819 = vadd.xlane.f32.xlu0 %v9818
  %v9820 = vpop.xlane.xlu0 %9819
  %v9821 = vsel %vm223, %v9815, 0.0
  %9822 = vadd.xlane.f32.xlu0 %v9821
  %v9823 = vpop.xlane.xlu0 %9822
  %v9824 = vmul.f32 %v9820, %v2663
  %v9825 = vmul.f32 %v9823, %v2663
  %v9826 = vadd.f32 %v9824, 1e-05
  %v9827 = vadd.f32 %v9825, 1e-05
  %v9828 = vrsqrt.pop %v9826
  %v9829 = vmul.f32 %v9828, %v9826
  %v9830 = vmul.f32 %v9829, %v9828
  %v9831 = vmul.f32 0.5, %v9830
  %v9832 = vsub.f32 1.5, %v9831
  %v9833 = vmul.f32 %v9828, %v9832
  %vm9834 = vweird.f32 %v9826
  %vm9835 = vweird.f32 %v9828
  %vm9836 = vmor %vm9834, %vm9835
  %v9837 = vsel %vm9836, %v9828, %v9833
  %v9838 = vrsqrt.pop %v9827
  %v9839 = vmul.f32 %v9838, %v9827
  %v9840 = vmul.f32 %v9839, %v9838
  %v9841 = vmul.f32 0.5, %v9840
  %v9842 = vsub.f32 1.5, %v9841
  %v9843 = vmul.f32 %v9838, %v9842
  %vm9844 = vweird.f32 %v9827
  %vm9845 = vweird.f32 %v9838
  %vm9846 = vmor %vm9844, %vm9845
  %v9847 = vsel %vm9846, %v9838, %v9843
  %v9850 = vrot.slane %v9837, 1
  %v9851 = vrot.slane %v9837, 2
  %v9852 = vrot.slane %v9837, 3
  %v9853 = vrot.slane %v9837, 4
  %v9854 = vrot.slane %v9837, 5
  %v9855 = vrot.slane %v9837, 6
  %v9856 = vrot.slane %v9837, 7
  %v9857 = vrot.slane %v9847, 1
  %v9858 = vrot.slane %v9847, 2
  %v9859 = vrot.slane %v9847, 3
  %v9860 = vrot.slane %v9847, 4
  %v9861 = vrot.slane %v9847, 5
  %v9862 = vrot.slane %v9847, 6
  %v9863 = vrot.slane %v9847, 7
  %v9880 = vmul.f32 %v9740, %v9837
  %v9881 = vmul.f32 %v9741, %v9850
  %v9882 = vmul.f32 %v9742, %v9851
  %v9883 = vmul.f32 %v9743, %v9852
  %v9884 = vmul.f32 %v9744, %v9853
  %v9885 = vmul.f32 %v9745, %v9854
  %v9886 = vmul.f32 %v9746, %v9855
  %v9887 = vmul.f32 %v9747, %v9856
  %v9888 = vmul.f32 %v9748, %v9847
  %v9889 = vmul.f32 %v9749, %v9857
  %v9890 = vmul.f32 %v9750, %v9858
  %v9891 = vmul.f32 %v9751, %v9859
  %v9892 = vmul.f32 %v9752, %v9860
  %v9893 = vmul.f32 %v9753, %v9861
  %v9894 = vmul.f32 %v9754, %v9862
  %v9895 = vmul.f32 %v9755, %v9863
  %v9896 = vperm.slane %v9094, 2
  %v9897 = vmul.f32 %v9880, %v9896
  %v9898 = vmul.f32 %v9881, %v9896
  %v9899 = vmul.f32 %v9882, %v9896
  %v9900 = vmul.f32 %v9883, %v9896
  %v9901 = vmul.f32 %v9884, %v9896
  %v9902 = vmul.f32 %v9885, %v9896
  %v9903 = vmul.f32 %v9886, %v9896
  %v9904 = vmul.f32 %v9887, %v9896
  %v9905 = vmul.f32 %v9888, %v9896
  %v9906 = vmul.f32 %v9889, %v9896
  %v9907 = vmul.f32 %v9890, %v9896
  %v9908 = vmul.f32 %v9891, %v9896
  %v9909 = vmul.f32 %v9892, %v9896
  %v9910 = vmul.f32 %v9893, %v9896
  %v9911 = vmul.f32 %v9894, %v9896
  %v9912 = vmul.f32 %v9895, %v9896
  %v9913 = vperm.slane %v9094, 3
  %v9914 = vadd.f32 %v9897, %v9913
  %v9915 = vadd.f32 %v9898, %v9913
  %v9916 = vadd.f32 %v9899, %v9913
  %v9917 = vadd.f32 %v9900, %v9913
  %v9918 = vadd.f32 %v9901, %v9913
  %v9919 = vadd.f32 %v9902, %v9913
  %v9920 = vadd.f32 %v9903, %v9913
  %v9921 = vadd.f32 %v9904, %v9913
  %v9922 = vadd.f32 %v9905, %v9913
  %v9923 = vadd.f32 %v9906, %v9913
  %v9924 = vadd.f32 %v9907, %v9913
  %v9925 = vadd.f32 %v9908, %v9913
  %v9926 = vadd.f32 %v9909, %v9913
  %v9927 = vadd.f32 %v9910, %v9913
  %v9928 = vadd.f32 %v9911, %v9913
  %v9929 = vadd.f32 %v9912, %v9913
  %v9930 = vpack.c.bf16 %v9914, %v9914
  %v9931 = vpack.c.bf16 %v9915, %v9915
  %v9932 = vpack.c.bf16 %v9916, %v9916
  %v9933 = vpack.c.bf16 %v9917, %v9917
  %v9934 = vpack.c.bf16 %v9918, %v9918
  %v9935 = vpack.c.bf16 %v9919, %v9919
  %v9936 = vpack.c.bf16 %v9920, %v9920
  %v9937 = vpack.c.bf16 %v9921, %v9921
  %v9938 = vpack.c.bf16 %v9922, %v9922
  %v9939 = vpack.c.bf16 %v9923, %v9923
  %v9940 = vpack.c.bf16 %v9924, %v9924
  %v9941 = vpack.c.bf16 %v9925, %v9925
  %v9942 = vpack.c.bf16 %v9926, %v9926
  %v9943 = vpack.c.bf16 %v9927, %v9927
  %v9944 = vpack.c.bf16 %v9928, %v9928
  %v9945 = vpack.c.bf16 %v9929, %v9929
  %v9947 = vperm.slane %v9083, 0
  %v9965 = vunpack.c.l.b16 %v9930
  %v9966 = vunpack.c.l.b16 %v9931
  %v9967 = vunpack.c.l.b16 %v9932
  %v9968 = vunpack.c.l.b16 %v9933
  %v9969 = vunpack.c.l.b16 %v9934
  %v9970 = vunpack.c.l.b16 %v9935
  %v9971 = vunpack.c.l.b16 %v9936
  %v9972 = vunpack.c.l.b16 %v9937
  %v9973 = vunpack.c.l.b16 %v9938
  %v9974 = vunpack.c.l.b16 %v9939
  %v9975 = vunpack.c.l.b16 %v9940
  %v9976 = vunpack.c.l.b16 %v9941
  %v9977 = vunpack.c.l.b16 %v9942
  %v9978 = vunpack.c.l.b16 %v9943
  %v9979 = vunpack.c.l.b16 %v9944
  %v9980 = vunpack.c.l.b16 %v9945
  %v9981 = vrot.slane %v9966, 7
  %v9982 = vsel %vm7588, %v9981, %v9965
  %v9983 = vrot.slane %v9967, 6
  %v9984 = vsel %vm7752, %v9983, %v9982
  %v9985 = vrot.slane %v9968, 5
  %v9986 = vsel %vm7755, %v9985, %v9984
  %v9987 = vrot.slane %v9969, 4
  %v9988 = vsel %vm7758, %v9987, %v9986
  %v9989 = vrot.slane %v9970, 3
  %v9990 = vsel %vm7761, %v9989, %v9988
  %v9991 = vrot.slane %v9971, 2
  %v9992 = vsel %vm7764, %v9991, %v9990
  %v9993 = vrot.slane %v9972, 1
  %v9994 = vsel %vm7767, %v9993, %v9992
  %v9995 = vrot.slane %v9974, 7
  %v9996 = vsel %vm7588, %v9995, %v9973
  %v9997 = vrot.slane %v9975, 6
  %v9998 = vsel %vm7752, %v9997, %v9996
  %v9999 = vrot.slane %v9976, 5
  %v10000 = vsel %vm7755, %v9999, %v9998
  %v10001 = vrot.slane %v9977, 4
  %v10002 = vsel %vm7758, %v10001, %v10000
  %v10003 = vrot.slane %v9978, 3
  %v10004 = vsel %vm7761, %v10003, %v10002
  %v10005 = vrot.slane %v9979, 2
  %v10006 = vsel %vm7764, %v10005, %v10004
  %v10007 = vrot.slane %v9980, 1
  %v10008 = vsel %vm7767, %v10007, %v10006
  %v10009 = vpack.c.b16 %v10008, %v9994
  %v10014 = vunpack.c.l.b16 %v9078
  %v10015 = vunpack.c.l.b16 %v9079
  %v10016 = vunpack.c.l.b16 %v9080
  %v10017 = vunpack.c.l.b16 %v9081
  %v10018 = vpack.c.b16 %v10015, %v10014
  %v10019 = vpack.c.b16 %v10017, %v10016
  %v10023 = vsel %vm223, %v10009, 0
  %10025 = vmatpush.bf16.msra.mxu0 0
  %10026 = vmatpush.bf16.msra.mxu0 0
  %10027 = vmatpush.bf16.msra.mxu0 0
  %10028 = vmatpush.bf16.msra.mxu0 0
  %10029 = vmatpush.bf16.msra.mxu0 0
  %10030 = vmatpush.bf16.msra.mxu0 0
  %10031 = vmatpush.bf16.msra.mxu0 %v10019
  %10032 = vmatpush.bf16.msra.mxu0 %v10018
  %10033 = vmatmul.bf16.gmra.mxu0 %v10023
  %v10034 = vpop.f32.mrf.mxu0
  %v10035 = vadd.f32 %v9947, %v10034
  %v10036 = vpop.f32.mrf.mxu0
  %v10037 = vadd.f32 %v9947, %v10036
  %10038 = vdwg.mxu0
  %v10039 = vmax.f32 %v10035, 0.0
  %v10040 = vmax.f32 %v10037, 0.0
  %v10041 = vpack.c.bf16 %v10040, %v10039
  %v10042 = vperm.slane %v9094, 1
  %v10051 = vunpack.c.l.b16 %v9085
  %v10052 = vunpack.c.l.b16 %v9086
  %v10053 = vunpack.c.l.b16 %v9087
  %v10054 = vunpack.c.l.b16 %v9088
  %v10055 = vunpack.c.l.b16 %v9089
  %v10056 = vunpack.c.l.b16 %v9090
  %v10057 = vunpack.c.l.b16 %v9091
  %v10058 = vunpack.c.l.b16 %v9092
  %v10059 = vpack.c.b16 %v10052, %v10051
  %v10060 = vpack.c.b16 %v10054, %v10053
  %v10061 = vpack.c.b16 %v10056, %v10055
  %v10062 = vpack.c.b16 %v10058, %v10057
  %v10068 = vsel %vm3147, %v10041, 0
  %10070 = vmatpush.bf16.msra.mxu0 0
  %10071 = vmatpush.bf16.msra.mxu0 0
  %10072 = vmatpush.bf16.msra.mxu0 0
  %10073 = vmatpush.bf16.msra.mxu0 0
  %10074 = vmatpush.bf16.msra.mxu0 %v10062
  %10075 = vmatpush.bf16.msra.mxu0 %v10061
  %10076 = vmatpush.bf16.msra.mxu0 %v10060
  %10077 = vmatpush.bf16.msra.mxu0 %v10059
  %10078 = vmatmul.bf16.gmra.mxu0 %v10068
  %v10079 = vpop.f32.mrf.mxu0
  %v10080 = vadd.f32 %v10042, %v10079
  %v10081 = vpop.f32.mrf.mxu0
  %v10082 = vadd.f32 %v10042, %v10081
  %10083 = vdwg.mxu0
  %v10086 = vrot.slane %v10080, 1
  %v10087 = vrot.slane %v10080, 2
  %v10088 = vrot.slane %v10080, 3
  %v10089 = vrot.slane %v10080, 4
  %v10090 = vrot.slane %v10080, 5
  %v10091 = vrot.slane %v10080, 6
  %v10092 = vrot.slane %v10080, 7
  %v10093 = vrot.slane %v10082, 1
  %v10094 = vrot.slane %v10082, 2
  %v10095 = vrot.slane %v10082, 3
  %v10096 = vrot.slane %v10082, 4
  %v10097 = vrot.slane %v10082, 5
  %v10098 = vrot.slane %v10082, 6
  %v10099 = vrot.slane %v10082, 7
  %v10116 = vadd.f32 %v9914, %v10080
  %v10117 = vadd.f32 %v9915, %v10086
  %v10118 = vadd.f32 %v9916, %v10087
  %v10119 = vadd.f32 %v9917, %v10088
  %v10120 = vadd.f32 %v9918, %v10089
  %v10121 = vadd.f32 %v9919, %v10090
  %v10122 = vadd.f32 %v9920, %v10091
  %v10123 = vadd.f32 %v9921, %v10092
  %v10124 = vadd.f32 %v9922, %v10082
  %v10125 = vadd.f32 %v9923, %v10093
  %v10126 = vadd.f32 %v9924, %v10094
  %v10127 = vadd.f32 %v9925, %v10095
  %v10128 = vadd.f32 %v9926, %v10096
  %v10129 = vadd.f32 %v9927, %v10097
  %v10130 = vadd.f32 %v9928, %v10098
  %v10131 = vadd.f32 %v9929, %v10099
  %v10148 = vrot.slane %v10117, 7
  %v10149 = vsel %vm7588, %v10148, %v10116
  %v10150 = vrot.slane %v10118, 6
  %v10151 = vsel %vm7752, %v10150, %v10149
  %v10152 = vrot.slane %v10119, 5
  %v10153 = vsel %vm7755, %v10152, %v10151
  %v10154 = vrot.slane %v10120, 4
  %v10155 = vsel %vm7758, %v10154, %v10153
  %v10156 = vrot.slane %v10121, 3
  %v10157 = vsel %vm7761, %v10156, %v10155
  %v10158 = vrot.slane %v10122, 2
  %v10159 = vsel %vm7764, %v10158, %v10157
  %v10160 = vrot.slane %v10123, 1
  %v10161 = vsel %vm7767, %v10160, %v10159
  %v10162 = vrot.slane %v10125, 7
  %v10163 = vsel %vm7588, %v10162, %v10124
  %v10164 = vrot.slane %v10126, 6
  %v10165 = vsel %vm7752, %v10164, %v10163
  %v10166 = vrot.slane %v10127, 5
  %v10167 = vsel %vm7755, %v10166, %v10165
  %v10168 = vrot.slane %v10128, 4
  %v10169 = vsel %vm7758, %v10168, %v10167
  %v10170 = vrot.slane %v10129, 3
  %v10171 = vsel %vm7761, %v10170, %v10169
  %v10172 = vrot.slane %v10130, 2
  %v10173 = vsel %vm7764, %v10172, %v10171
  %v10174 = vrot.slane %v10131, 1
  %v10175 = vsel %vm7767, %v10174, %v10173
  %v10178 = vsel %vm223, %v10161, 0.0
  %10179 = vadd.xlane.f32.xlu0 %v10178
  %v10180 = vpop.xlane.xlu0 %10179
  %v10181 = vsel %vm223, %v10175, 0.0
  %10182 = vadd.xlane.f32.xlu0 %v10181
  %v10183 = vpop.xlane.xlu0 %10182
  %v10184 = vmul.f32 %v10180, %v2663
  %v10185 = vmul.f32 %v10183, %v2663
  %v10188 = vrot.slane %v10184, 1
  %v10189 = vrot.slane %v10184, 2
  %v10190 = vrot.slane %v10184, 3
  %v10191 = vrot.slane %v10184, 4
  %v10192 = vrot.slane %v10184, 5
  %v10193 = vrot.slane %v10184, 6
  %v10194 = vrot.slane %v10184, 7
  %v10195 = vrot.slane %v10185, 1
  %v10196 = vrot.slane %v10185, 2
  %v10197 = vrot.slane %v10185, 3
  %v10198 = vrot.slane %v10185, 4
  %v10199 = vrot.slane %v10185, 5
  %v10200 = vrot.slane %v10185, 6
  %v10201 = vrot.slane %v10185, 7
  %v10218 = vsub.f32 %v10116, %v10184
  %v10219 = vsub.f32 %v10117, %v10188
  %v10220 = vsub.f32 %v10118, %v10189
  %v10221 = vsub.f32 %v10119, %v10190
  %v10222 = vsub.f32 %v10120, %v10191
  %v10223 = vsub.f32 %v10121, %v10192
  %v10224 = vsub.f32 %v10122, %v10193
  %v10225 = vsub.f32 %v10123, %v10194
  %v10226 = vsub.f32 %v10124, %v10185
  %v10227 = vsub.f32 %v10125, %v10195
  %v10228 = vsub.f32 %v10126, %v10196
  %v10229 = vsub.f32 %v10127, %v10197
  %v10230 = vsub.f32 %v10128, %v10198
  %v10231 = vsub.f32 %v10129, %v10199
  %v10232 = vsub.f32 %v10130, %v10200
  %v10233 = vsub.f32 %v10131, %v10201
  %v10234 = vmul.f32 %v10218, %v10218
  %v10235 = vmul.f32 %v10219, %v10219
  %v10236 = vmul.f32 %v10220, %v10220
  %v10237 = vmul.f32 %v10221, %v10221
  %v10238 = vmul.f32 %v10222, %v10222
  %v10239 = vmul.f32 %v10223, %v10223
  %v10240 = vmul.f32 %v10224, %v10224
  %v10241 = vmul.f32 %v10225, %v10225
  %v10242 = vmul.f32 %v10226, %v10226
  %v10243 = vmul.f32 %v10227, %v10227
  %v10244 = vmul.f32 %v10228, %v10228
  %v10245 = vmul.f32 %v10229, %v10229
  %v10246 = vmul.f32 %v10230, %v10230
  %v10247 = vmul.f32 %v10231, %v10231
  %v10248 = vmul.f32 %v10232, %v10232
  %v10249 = vmul.f32 %v10233, %v10233
  %v10266 = vrot.slane %v10235, 7
  %v10267 = vsel %vm7588, %v10266, %v10234
  %v10268 = vrot.slane %v10236, 6
  %v10269 = vsel %vm7752, %v10268, %v10267
  %v10270 = vrot.slane %v10237, 5
  %v10271 = vsel %vm7755, %v10270, %v10269
  %v10272 = vrot.slane %v10238, 4
  %v10273 = vsel %vm7758, %v10272, %v10271
  %v10274 = vrot.slane %v10239, 3
  %v10275 = vsel %vm7761, %v10274, %v10273
  %v10276 = vrot.slane %v10240, 2
  %v10277 = vsel %vm7764, %v10276, %v10275
  %v10278 = vrot.slane %v10241, 1
  %v10279 = vsel %vm7767, %v10278, %v10277
  %v10280 = vrot.slane %v10243, 7
  %v10281 = vsel %vm7588, %v10280, %v10242
  %v10282 = vrot.slane %v10244, 6
  %v10283 = vsel %vm7752, %v10282, %v10281
  %v10284 = vrot.slane %v10245, 5
  %v10285 = vsel %vm7755, %v10284, %v10283
  %v10286 = vrot.slane %v10246, 4
  %v10287 = vsel %vm7758, %v10286, %v10285
  %v10288 = vrot.slane %v10247, 3
  %v10289 = vsel %vm7761, %v10288, %v10287
  %v10290 = vrot.slane %v10248, 2
  %v10291 = vsel %vm7764, %v10290, %v10289
  %v10292 = vrot.slane %v10249, 1
  %v10293 = vsel %vm7767, %v10292, %v10291
  %v10296 = vsel %vm223, %v10279, 0.0
  %10297 = vadd.xlane.f32.xlu0 %v10296
  %v10298 = vpop.xlane.xlu0 %10297
  %v10299 = vsel %vm223, %v10293, 0.0
  %10300 = vadd.xlane.f32.xlu0 %v10299
  %v10301 = vpop.xlane.xlu0 %10300
  %v10302 = vmul.f32 %v10298, %v2663
  %v10303 = vmul.f32 %v10301, %v2663
  %v10304 = vadd.f32 %v10302, 1e-05
  %v10305 = vadd.f32 %v10303, 1e-05
  %v10306 = vrsqrt.pop %v10304
  %v10307 = vmul.f32 %v10306, %v10304
  %v10308 = vmul.f32 %v10307, %v10306
  %v10309 = vmul.f32 0.5, %v10308
  %v10310 = vsub.f32 1.5, %v10309
  %v10311 = vmul.f32 %v10306, %v10310
  %vm10312 = vweird.f32 %v10304
  %vm10313 = vweird.f32 %v10306
  %vm10314 = vmor %vm10312, %vm10313
  %v10315 = vsel %vm10314, %v10306, %v10311
  %v10316 = vrsqrt.pop %v10305
  %v10317 = vmul.f32 %v10316, %v10305
  %v10318 = vmul.f32 %v10317, %v10316
  %v10319 = vmul.f32 0.5, %v10318
  %v10320 = vsub.f32 1.5, %v10319
  %v10321 = vmul.f32 %v10316, %v10320
  %vm10322 = vweird.f32 %v10305
  %vm10323 = vweird.f32 %v10316
  %vm10324 = vmor %vm10322, %vm10323
  %v10325 = vsel %vm10324, %v10316, %v10321
  %v10328 = vrot.slane %v10315, 1
  %v10329 = vrot.slane %v10315, 2
  %v10330 = vrot.slane %v10315, 3
  %v10331 = vrot.slane %v10315, 4
  %v10332 = vrot.slane %v10315, 5
  %v10333 = vrot.slane %v10315, 6
  %v10334 = vrot.slane %v10315, 7
  %v10335 = vrot.slane %v10325, 1
  %v10336 = vrot.slane %v10325, 2
  %v10337 = vrot.slane %v10325, 3
  %v10338 = vrot.slane %v10325, 4
  %v10339 = vrot.slane %v10325, 5
  %v10340 = vrot.slane %v10325, 6
  %v10341 = vrot.slane %v10325, 7
  %v10358 = vmul.f32 %v10218, %v10315
  %v10359 = vmul.f32 %v10219, %v10328
  %v10360 = vmul.f32 %v10220, %v10329
  %v10361 = vmul.f32 %v10221, %v10330
  %v10362 = vmul.f32 %v10222, %v10331
  %v10363 = vmul.f32 %v10223, %v10332
  %v10364 = vmul.f32 %v10224, %v10333
  %v10365 = vmul.f32 %v10225, %v10334
  %v10366 = vmul.f32 %v10226, %v10325
  %v10367 = vmul.f32 %v10227, %v10335
  %v10368 = vmul.f32 %v10228, %v10336
  %v10369 = vmul.f32 %v10229, %v10337
  %v10370 = vmul.f32 %v10230, %v10338
  %v10371 = vmul.f32 %v10231, %v10339
  %v10372 = vmul.f32 %v10232, %v10340
  %v10373 = vmul.f32 %v10233, %v10341
  %v10374 = vperm.slane %v9094, 4
  %v10375 = vmul.f32 %v10358, %v10374
  %v10376 = vmul.f32 %v10359, %v10374
  %v10377 = vmul.f32 %v10360, %v10374
  %v10378 = vmul.f32 %v10361, %v10374
  %v10379 = vmul.f32 %v10362, %v10374
  %v10380 = vmul.f32 %v10363, %v10374
  %v10381 = vmul.f32 %v10364, %v10374
  %v10382 = vmul.f32 %v10365, %v10374
  %v10383 = vmul.f32 %v10366, %v10374
  %v10384 = vmul.f32 %v10367, %v10374
  %v10385 = vmul.f32 %v10368, %v10374
  %v10386 = vmul.f32 %v10369, %v10374
  %v10387 = vmul.f32 %v10370, %v10374
  %v10388 = vmul.f32 %v10371, %v10374
  %v10389 = vmul.f32 %v10372, %v10374
  %v10390 = vmul.f32 %v10373, %v10374
  %v10391 = vperm.slane %v9094, 5
  %v10392 = vadd.f32 %v10375, %v10391
  %v10393 = vadd.f32 %v10376, %v10391
  %v10394 = vadd.f32 %v10377, %v10391
  %v10395 = vadd.f32 %v10378, %v10391
  %v10396 = vadd.f32 %v10379, %v10391
  %v10397 = vadd.f32 %v10380, %v10391
  %v10398 = vadd.f32 %v10381, %v10391
  %v10399 = vadd.f32 %v10382, %v10391
  %v10400 = vadd.f32 %v10383, %v10391
  %v10401 = vadd.f32 %v10384, %v10391
  %v10402 = vadd.f32 %v10385, %v10391
  %v10403 = vadd.f32 %v10386, %v10391
  %v10404 = vadd.f32 %v10387, %v10391
  %v10405 = vadd.f32 %v10388, %v10391
  %v10406 = vadd.f32 %v10389, %v10391
  %v10407 = vadd.f32 %v10390, %v10391
  %v10408 = vmul.f32 %v10392, %v7604
  %v10409 = vmul.f32 %v10393, %v7609
  %v10410 = vmul.f32 %v10394, %v7610
  %v10411 = vmul.f32 %v10395, %v7611
  %v10412 = vmul.f32 %v10396, %v7612
  %v10413 = vmul.f32 %v10397, %v7613
  %v10414 = vmul.f32 %v10398, %v7614
  %v10415 = vmul.f32 %v10399, %v7615
  %v10416 = vmul.f32 %v10400, %v7608
  %v10417 = vmul.f32 %v10401, %v7616
  %v10418 = vmul.f32 %v10402, %v7617
  %v10419 = vmul.f32 %v10403, %v7618
  %v10420 = vmul.f32 %v10404, %v7619
  %v10421 = vmul.f32 %v10405, %v7620
  %v10422 = vmul.f32 %v10406, %v7621
  %v10423 = vmul.f32 %v10407, %v7622
  %v10440 = vrot.slane %v10409, 7
  %v10441 = vsel %vm7588, %v10440, %v10408
  %v10442 = vrot.slane %v10410, 6
  %v10443 = vsel %vm7752, %v10442, %v10441
  %v10444 = vrot.slane %v10411, 5
  %v10445 = vsel %vm7755, %v10444, %v10443
  %v10446 = vrot.slane %v10412, 4
  %v10447 = vsel %vm7758, %v10446, %v10445
  %v10448 = vrot.slane %v10413, 3
  %v10449 = vsel %vm7761, %v10448, %v10447
  %v10450 = vrot.slane %v10414, 2
  %v10451 = vsel %vm7764, %v10450, %v10449
  %v10452 = vrot.slane %v10415, 1
  %v10453 = vsel %vm7767, %v10452, %v10451
  %v10454 = vrot.slane %v10417, 7
  %v10455 = vsel %vm7588, %v10454, %v10416
  %v10456 = vrot.slane %v10418, 6
  %v10457 = vsel %vm7752, %v10456, %v10455
  %v10458 = vrot.slane %v10419, 5
  %v10459 = vsel %vm7755, %v10458, %v10457
  %v10460 = vrot.slane %v10420, 4
  %v10461 = vsel %vm7758, %v10460, %v10459
  %v10462 = vrot.slane %v10421, 3
  %v10463 = vsel %vm7761, %v10462, %v10461
  %v10464 = vrot.slane %v10422, 2
  %v10465 = vsel %vm7764, %v10464, %v10463
  %v10466 = vrot.slane %v10423, 1
  %v10467 = vsel %vm7767, %v10466, %v10465
  %10470 = vst.msk [vmem:[%s23] sm:$0xff] %vm223, %v10453
  %10471 = vst.msk [vmem:[%s23 + $0x8] sm:$0xff] %vm223, %v10467
  // Predicated region
  $region94: #{mem_net_forward.1} parent=0 // pred_check
    _
  $region95: #{mem_net_forward.1} parent=0 // pred_check_branch
    %10473 = sbr.rel (0) target = $region97
  $region96: #{mem_net_forward.1} parent=0 // pred_region
    _
  $region97: #{mem_net_forward.1} parent=0 // pred_fallthru
    _
  // Predicated region
  $region98: #{mem_net_forward.1} parent=0 // pred_check
    _
  $region99: #{mem_net_forward.1} parent=0 // pred_check_branch
    %10475 = sbr.rel (0) target = $region101
  $region100: #{mem_net_forward.1} parent=0 // pred_region
    _
  $region101: #{mem_net_forward.1} parent=0 // pred_fallthru
    _
  // Predicated region
  $region102: #{mem_net_forward.1} parent=0 // pred_check
    _
  $region103: #{mem_net_forward.1} parent=0 // pred_check_branch
    %10477 = sbr.rel (0) target = $region105
  $region104: #{mem_net_forward.1} parent=0 // pred_region
    _
  $region105: #{mem_net_forward.1} parent=0 // pred_fallthru
    _
  // Predicated region
  $region106: #{mem_net_forward.1} parent=0 // pred_check
    _
  $region107: #{mem_net_forward.1} parent=0 // pred_check_branch
    %10479 = sbr.rel (0) target = $region109
  $region108: #{mem_net_forward.1} parent=0 // pred_region
    _
  $region109: #{mem_net_forward.1} parent=0 // pred_fallthru
    _

</llo_original>
